<compile_context>
chip_gen: v7x
topology: tpu7x:2x2x1
jax: 0.10.0
libtpu: 0.0.40
codegen_flags: <defaults>
</compile_context>

<pallas_src>
import functools

import jax
import jax.numpy as jnp
from jax import lax
from jax.experimental import pallas as pl
from jax.experimental.pallas import tpu as pltpu
import numpy as np


# ----------------------------------------------------------------------------
# Pallas kernel
# ----------------------------------------------------------------------------
def skip_lstm_kernel(
    x_ref,                         # (L, Bp, Cin)
    wihf_ref, whhf_ref, bf_ref,    # (Cin, 4H), (H, 4H), (1, 4H)   fwd LSTM
    wihb_ref, whhb_ref, bb_ref,    # (Cin, 4H), (H, 4H), (1, 4H)   bwd LSTM
    w1a_ref, w1b_ref, b1_ref,      # (H, H), (H, H), (1, H)        outputConv1 split fwd/bwd
    wid_ref, bid_ref,              # (Cin, H), (1, H)              identMap1
    w2_ref, b2_ref,                # (H, O), (1, O)                outputConv2
    out_ref,                       # (L, Bp, O)
    hf_ref, hb_ref,                # scratch (L, Bp, H)  fwd / bwd hidden states
    gxf_ref, gxb_ref,              # scratch (L, Bp, 4H) precomputed input gates
    *, unroll,
):
    L, Bp, Cin = x_ref.shape
    H = whhf_ref.shape[0]
    O = out_ref.shape[-1]

    # Hoisted recurrent weights (loaded once, live across the loop).
    whhf = whhf_ref[...]
    whhb = whhb_ref[...]

    # ---- hoisted input projections: one big matmul per direction ----------
    # Biases folded in here so the recurrent loop has no broadcasts.
    x2d = x_ref[...].reshape(L * Bp, Cin)
    gxf_ref[...] = (
        jnp.dot(x2d, wihf_ref[...], preferred_element_type=jnp.float32)
        + bf_ref[...]
    ).reshape(L, Bp, 4 * H)
    gxb_ref[...] = (
        jnp.dot(x2d, wihb_ref[...], preferred_element_type=jnp.float32)
        + bb_ref[...]
    ).reshape(L, Bp, 4 * H)

    def cell(gates, c):
        # PyTorch gate order: i, f, g, o
        i = jax.nn.sigmoid(gates[:, 0:H])
        f = jax.nn.sigmoid(gates[:, H:2 * H])
        g = jnp.tanh(gates[:, 2 * H:3 * H])
        o = jax.nn.sigmoid(gates[:, 3 * H:4 * H])
        c_new = f * c + i * g
        h_new = o * jnp.tanh(c_new)
        return h_new, c_new

    zeros = jnp.zeros((Bp, H), jnp.float32)

    # ---- fused fwd/bwd recurrence: two independent chains per iteration ----
    def body(j, carry):
        hf, cf, hb, cb = carry
        tb = L - 1 - j
        gf = gxf_ref[j] + jnp.dot(hf, whhf, preferred_element_type=jnp.float32)
        gb = gxb_ref[tb] + jnp.dot(hb, whhb, preferred_element_type=jnp.float32)
        hf, cf = cell(gf, cf)
        hb, cb = cell(gb, cb)
        hf_ref[j] = hf
        hb_ref[tb] = hb
        return (hf, cf, hb, cb)

    lax.fori_loop(0, L, body, (zeros, zeros, zeros, zeros), unroll=unroll)

    # ---- batched output head (off the critical recurrence path) -----------
    #   y1  = conv1(concat(h_fwd, h_bwd))   (1x1 conv == matmul, split weights)
    #   yid = identMap1(x)
    #   y   = tanh((y1 + yid) / 1.41421)
    #   out = conv2(y)
    inv_sqrt2 = jnp.float32(1.0 / 1.41421)
    hf2d = hf_ref[...].reshape(L * Bp, H)
    hb2d = hb_ref[...].reshape(L * Bp, H)
    y1 = (jnp.dot(hf2d, w1a_ref[...], preferred_element_type=jnp.float32)
          + jnp.dot(hb2d, w1b_ref[...], preferred_element_type=jnp.float32)
          + b1_ref[...])
    yid = jnp.dot(x2d, wid_ref[...], preferred_element_type=jnp.float32) + bid_ref[...]
    y = jnp.tanh((y1 + yid) * inv_sqrt2)
    out2d = jnp.dot(y, w2_ref[...], preferred_element_type=jnp.float32) + b2_ref[...]
    out_ref[...] = out2d.reshape(L, Bp, O)   # single bulk store


# ----------------------------------------------------------------------------
# Wrapper: parameter setup (weight-norm reparam), layout plumbing, pallas_call
# ----------------------------------------------------------------------------
def weight_norm(v, g):
    """PyTorch nn.utils.weight_norm with dim=0: w = g * v / ||v|| (per row)."""
    axes = tuple(range(1, v.ndim))
    return g * v / jnp.sqrt(jnp.sum(v * v, axis=axes, keepdims=True))


def make_params(key, in_channels, out_channels, hidden):
    ks = jax.random.split(key, 24)
    H, Cin, O = hidden, in_channels, out_channels
    s = 0.2
    p = {}
    # forward LSTM weights are weight-normed (weight_ih_l0 / weight_hh_l0)
    p["v_ih_f"] = s * jax.random.normal(ks[0], (4 * H, Cin), jnp.float32)
    p["g_ih_f"] = 0.5 + 0.5 * jax.random.uniform(ks[1], (4 * H, 1), jnp.float32)
    p["v_hh_f"] = s * jax.random.normal(ks[2], (4 * H, H), jnp.float32)
    p["g_hh_f"] = 0.5 + 0.5 * jax.random.uniform(ks[3], (4 * H, 1), jnp.float32)
    p["b_ih_f"] = s * jax.random.normal(ks[4], (4 * H,), jnp.float32)
    p["b_hh_f"] = s * jax.random.normal(ks[5], (4 * H,), jnp.float32)
    # reverse-direction LSTM weights.  nn.utils.weight_norm(name='weight_ih_l0')
    # only reparametrizes the exactly-named forward params, so *_reverse stay plain.
    p["w_ih_b"] = s * jax.random.normal(ks[6], (4 * H, Cin), jnp.float32)
    p["w_hh_b"] = s * jax.random.normal(ks[7], (4 * H, H), jnp.float32)
    p["b_ih_b"] = s * jax.random.normal(ks[8], (4 * H,), jnp.float32)
    p["b_hh_b"] = s * jax.random.normal(ks[9], (4 * H,), jnp.float32)
    # outputConv1 (weight-normed), kernel_size=1
    p["v_c1"] = s * jax.random.normal(ks[10], (H, 2 * H, 1), jnp.float32)
    p["g_c1"] = 0.5 + 0.5 * jax.random.uniform(ks[11], (H, 1, 1), jnp.float32)
    p["b_c1"] = s * jax.random.normal(ks[12], (H,), jnp.float32)
    # outputConv2 (weight-normed)
    p["v_c2"] = s * jax.random.normal(ks[13], (O, H, 1), jnp.float32)
    p["g_c2"] = 0.5 + 0.5 * jax.random.uniform(ks[14], (O, 1, 1), jnp.float32)
    p["b_c2"] = s * jax.random.normal(ks[15], (O,), jnp.float32)
    # identMap1 (plain conv)
    p["w_id"] = s * jax.random.normal(ks[16], (H, Cin, 1), jnp.float32)
    p["b_id"] = s * jax.random.normal(ks[17], (H,), jnp.float32)
    return p


def effective_weights(p):
    eff = {}
    eff["w_ih_f"] = weight_norm(p["v_ih_f"], p["g_ih_f"])          # (4H, Cin)
    eff["w_hh_f"] = weight_norm(p["v_hh_f"], p["g_hh_f"])          # (4H, H)
    eff["b_f"] = p["b_ih_f"] + p["b_hh_f"]                         # (4H,)
    eff["w_ih_b"] = p["w_ih_b"]
    eff["w_hh_b"] = p["w_hh_b"]
    eff["b_b"] = p["b_ih_b"] + p["b_hh_b"]
    eff["w1"] = weight_norm(p["v_c1"], p["g_c1"])[:, :, 0]          # (H, 2H)
    eff["b1"] = p["b_c1"]
    eff["w2"] = weight_norm(p["v_c2"], p["g_c2"])[:, :, 0]          # (O, H)
    eff["b2"] = p["b_c2"]
    eff["wid"] = p["w_id"][:, :, 0]                                 # (H, Cin)
    eff["bid"] = p["b_id"]
    return eff


def skip_lstm_forward(x_ncl, eff, *, batch_tile=8):
    """x_ncl: (B, Cin, L) -> (B, Cout, L), matching the PyTorch module."""
    B, Cin, L = x_ncl.shape
    H = eff["w_hh_f"].shape[1]
    O = eff["w2"].shape[0]

    # Time-major + sublane-pad the batch to a multiple of 8.
    Bp = ((B + batch_tile - 1) // batch_tile) * batch_tile
    x_lbc = jnp.transpose(x_ncl, (2, 0, 1)).astype(jnp.float32)  # (L, B, Cin)
    if Bp != B:
        x_lbc = jnp.pad(x_lbc, ((0, 0), (0, Bp - B), (0, 0)))

    wihf_t = eff["w_ih_f"].T.astype(jnp.float32)      # (Cin, 4H)
    whhf_t = eff["w_hh_f"].T.astype(jnp.float32)      # (H, 4H)
    bf = eff["b_f"][None, :].astype(jnp.float32)      # (1, 4H)
    wihb_t = eff["w_ih_b"].T.astype(jnp.float32)
    whhb_t = eff["w_hh_b"].T.astype(jnp.float32)
    bb = eff["b_b"][None, :].astype(jnp.float32)
    w1a_t = eff["w1"][:, :H].T.astype(jnp.float32)    # (H, H) acts on fwd hiddens
    w1b_t = eff["w1"][:, H:].T.astype(jnp.float32)    # (H, H) acts on bwd hiddens
    b1 = eff["b1"][None, :].astype(jnp.float32)
    wid_t = eff["wid"].T.astype(jnp.float32)          # (Cin, H)
    bid = eff["bid"][None, :].astype(jnp.float32)
    w2_t = eff["w2"].T.astype(jnp.float32)            # (H, O)
    b2 = eff["b2"][None, :].astype(jnp.float32)
    # TODO(synk): optionally cast weights to bf16 on v6e/v7x (keep f32 accum);
    # kept f32 here so the same kernel is exact on v5e.

    grid = (Bp // batch_tile,)
    w_map = lambda i: (0, 0)
    in_specs = [
        pl.BlockSpec((L, batch_tile, Cin), lambda i: (0, i, 0)),   # x
        pl.BlockSpec((Cin, 4 * H), w_map),                         # wihf
        pl.BlockSpec((H, 4 * H), w_map),                           # whhf
        pl.BlockSpec((1, 4 * H), w_map),                           # bf
        pl.BlockSpec((Cin, 4 * H), w_map),                         # wihb
        pl.BlockSpec((H, 4 * H), w_map),                           # whhb
        pl.BlockSpec((1, 4 * H), w_map),                           # bb
        pl.BlockSpec((H, H), w_map),                               # w1a
        pl.BlockSpec((H, H), w_map),                               # w1b
        pl.BlockSpec((1, H), w_map),                               # b1
        pl.BlockSpec((Cin, H), w_map),                             # wid
        pl.BlockSpec((1, H), w_map),                               # bid
        pl.BlockSpec((H, O), w_map),                               # w2
        pl.BlockSpec((1, O), w_map),                               # b2
    ]
    out_specs = pl.BlockSpec((L, batch_tile, O), lambda i: (0, i, 0))
    scratch_shapes = [
        pltpu.VMEM((L, batch_tile, H), jnp.float32),       # hf
        pltpu.VMEM((L, batch_tile, H), jnp.float32),       # hb
        pltpu.VMEM((L, batch_tile, 4 * H), jnp.float32),   # gxf
        pltpu.VMEM((L, batch_tile, 4 * H), jnp.float32),   # gxb
    ]

    # Fully unroll short sequences so the LLO scheduler can co-issue across
    # iterations; cap unroll for long sequences to bound code size.
    unroll = True if L <= 64 else 8
    kernel = functools.partial(skip_lstm_kernel, unroll=unroll)

    out_lbo = pl.pallas_call(
        kernel,
        out_shape=jax.ShapeDtypeStruct((L, Bp, O), jnp.float32),
        grid=grid,
        in_specs=in_specs,
        out_specs=out_specs,
        scratch_shapes=scratch_shapes,
        compiler_params=pltpu.CompilerParams(
            dimension_semantics=("parallel",)),
    )(x_lbc, wihf_t, whhf_t, bf, wihb_t, whhb_t, bb,
      w1a_t, w1b_t, b1, wid_t, bid, w2_t, b2)

    out_lbo = out_lbo[:, :B, :]                        # drop batch padding
    return jnp.transpose(out_lbo, (1, 2, 0))           # (B, O, L)


# ----------------------------------------------------------------------------
# Pure-JAX reference (mirrors PyTorch forward) for a sanity check
# ----------------------------------------------------------------------------
def ref_forward(x_ncl, eff):
    B, Cin, L = x_ncl.shape
    H = eff["w_hh_f"].shape[1]
    xs = jnp.transpose(x_ncl, (0, 2, 1))  # (B, L, Cin)

    def make_step(wih, whh, b):
        def step(x_t, h, c):
            gates = x_t @ wih.T + h @ whh.T + b
            i = jax.nn.sigmoid(gates[:, :H])
            f = jax.nn.sigmoid(gates[:, H:2 * H])
            g = jnp.tanh(gates[:, 2 * H:3 * H])
            o = jax.nn.sigmoid(gates[:, 3 * H:])
            c = f * c + i * g
            h = o * jnp.tanh(c)
            return h, c
        return step

    step_f = make_step(eff["w_ih_f"], eff["w_hh_f"], eff["b_f"])
    step_b = make_step(eff["w_ih_b"], eff["w_hh_b"], eff["b_b"])

    h = jnp.zeros((B, H)); c = jnp.zeros((B, H))
    hf = [None] * L
    for t in range(L):
        h, c = step_f(xs[:, t], h, c)
        hf[t] = h
    h = jnp.zeros((B, H)); c = jnp.zeros((B, H))
    hb = [None] * L
    for t in range(L - 1, -1, -1):
        h, c = step_b(xs[:, t], h, c)
        hb[t] = h

    y = jnp.stack([jnp.concatenate([hf[t], hb[t]], -1) for t in range(L)], 1)  # (B,L,2H)
    y = jnp.transpose(y, (0, 2, 1))  # (B, 2H, L)

    def conv1x1(w, b, z):
        return jnp.einsum("oc,bcl->bol", w, z) + b[None, :, None]

    y = jnp.tanh((conv1x1(eff["w1"], eff["b1"], y)
                  + conv1x1(eff["wid"], eff["bid"], x_ncl)) / 1.41421)
    return conv1x1(eff["w2"], eff["b2"], y)


# ----------------------------------------------------------------------------
if __name__ == "__main__":
    B, Cin, L = 2, 4, 16
    H, O = 32, 4

    key = jax.random.PRNGKey(0)
    k_x, k_p = jax.random.split(key)
    x = jax.random.normal(k_x, (B, Cin, L), jnp.float32)   # PyTorch NCL layout

    params = make_params(k_p, Cin, O, H)
    eff = effective_weights(params)

    out = skip_lstm_forward(x, eff)
    out = jax.block_until_ready(out)
    assert out.shape == (B, O, L)

    ref = jax.block_until_ready(ref_forward(x, eff))
    np.testing.assert_allclose(np.asarray(out), np.asarray(ref),
                               rtol=3e-2, atol=3e-2)

    print("KERNEL_OK")
</pallas_src>

<mosaic_0001>
module attributes {stable_mosaic.version = 11 : i64} {
  func.func @skip_lstm_kernel(%arg0: i32, %arg1: memref<16x8x4xf32, #tpu.memory_space<vmem>>, %arg2: memref<4x128xf32, #tpu.memory_space<vmem>>, %arg3: memref<32x128xf32, #tpu.memory_space<vmem>>, %arg4: memref<1x128xf32, #tpu.memory_space<vmem>>, %arg5: memref<4x128xf32, #tpu.memory_space<vmem>>, %arg6: memref<32x128xf32, #tpu.memory_space<vmem>>, %arg7: memref<1x128xf32, #tpu.memory_space<vmem>>, %arg8: memref<32x32xf32, #tpu.memory_space<vmem>>, %arg9: memref<32x32xf32, #tpu.memory_space<vmem>>, %arg10: memref<1x32xf32, #tpu.memory_space<vmem>>, %arg11: memref<4x32xf32, #tpu.memory_space<vmem>>, %arg12: memref<1x32xf32, #tpu.memory_space<vmem>>, %arg13: memref<32x4xf32, #tpu.memory_space<vmem>>, %arg14: memref<1x4xf32, #tpu.memory_space<vmem>>, %arg15: memref<16x8x4xf32, #tpu.memory_space<vmem>>, %arg16: memref<16x8x32xf32, #tpu.memory_space<vmem>>, %arg17: memref<16x8x32xf32, #tpu.memory_space<vmem>>, %arg18: memref<16x8x128xf32, #tpu.memory_space<vmem>>, %arg19: memref<16x8x128xf32, #tpu.memory_space<vmem>>) attributes {dimension_semantics = [#tpu.dimension_semantics<parallel>], iteration_bounds = array<i64: 1>, scalar_prefetch = 0 : i64, scratch_operands = 4 : i64, tpu.core_type = #tpu.core_type<tc>, window_params = [{transform_indices = @transform_0, window_bounds = array<i64: 16, 8, 4>}, {pipeline_mode = #tpu.pipeline_mode<synchronous>, transform_indices = @transform_1, window_bounds = array<i64: 4, 128>}, {pipeline_mode = #tpu.pipeline_mode<synchronous>, transform_indices = @transform_2, window_bounds = array<i64: 32, 128>}, {pipeline_mode = #tpu.pipeline_mode<synchronous>, transform_indices = @transform_3, window_bounds = array<i64: 1, 128>}, {pipeline_mode = #tpu.pipeline_mode<synchronous>, transform_indices = @transform_4, window_bounds = array<i64: 4, 128>}, {pipeline_mode = #tpu.pipeline_mode<synchronous>, transform_indices = @transform_5, window_bounds = array<i64: 32, 128>}, {pipeline_mode = #tpu.pipeline_mode<synchronous>, transform_indices = @transform_6, window_bounds = array<i64: 1, 128>}, {pipeline_mode = #tpu.pipeline_mode<synchronous>, transform_indices = @transform_7, window_bounds = array<i64: 32, 32>}, {pipeline_mode = #tpu.pipeline_mode<synchronous>, transform_indices = @transform_8, window_bounds = array<i64: 32, 32>}, {pipeline_mode = #tpu.pipeline_mode<synchronous>, transform_indices = @transform_9, window_bounds = array<i64: 1, 32>}, {pipeline_mode = #tpu.pipeline_mode<synchronous>, transform_indices = @transform_10, window_bounds = array<i64: 4, 32>}, {pipeline_mode = #tpu.pipeline_mode<synchronous>, transform_indices = @transform_11, window_bounds = array<i64: 1, 32>}, {pipeline_mode = #tpu.pipeline_mode<synchronous>, transform_indices = @transform_12, window_bounds = array<i64: 32, 4>}, {pipeline_mode = #tpu.pipeline_mode<synchronous>, transform_indices = @transform_13, window_bounds = array<i64: 1, 4>}, {transform_indices = @transform_14, window_bounds = array<i64: 16, 8, 4>}]} {
    %c0 = arith.constant 0 : index
    %c0_0 = arith.constant 0 : index
    %0 = vector.load %arg3[%c0, %c0_0] : memref<32x128xf32, #tpu.memory_space<vmem>>, vector<32x128xf32>
    %c0_1 = arith.constant 0 : index
    %c0_2 = arith.constant 0 : index
    %1 = vector.load %arg6[%c0_1, %c0_2] : memref<32x128xf32, #tpu.memory_space<vmem>>, vector<32x128xf32>
    %c0_3 = arith.constant 0 : index
    %c0_4 = arith.constant 0 : index
    %c0_5 = arith.constant 0 : index
    %2 = vector.load %arg1[%c0_3, %c0_4, %c0_5] : memref<16x8x4xf32, #tpu.memory_space<vmem>>, vector<16x8x4xf32>
    %3 = vector.shape_cast %2 : vector<16x8x4xf32> to vector<128x4xf32>
    %c0_6 = arith.constant 0 : index
    %c0_7 = arith.constant 0 : index
    %4 = vector.load %arg2[%c0_6, %c0_7] : memref<4x128xf32, #tpu.memory_space<vmem>>, vector<4x128xf32>
    %cst = arith.constant dense<0.000000e+00> : vector<128x128xf32>
    %5 = tpu.matmul %3, %4, %cst {dimension_numbers = #tpu.dot_dimension_numbers<[1], [0], [0], [1], [0, 0, 1, 1], [], []>} : vector<128x4xf32>, vector<4x128xf32>, vector<128x128xf32> -> vector<128x128xf32>
    %c0_8 = arith.constant 0 : index
    %c0_9 = arith.constant 0 : index
    %6 = vector.load %arg4[%c0_8, %c0_9] : memref<1x128xf32, #tpu.memory_space<vmem>>, vector<1x128xf32>
    %7 = vector.broadcast %6 : vector<1x128xf32> to vector<128x128xf32>
    %8 = arith.addf %5, %7 : vector<128x128xf32>
    %9 = vector.shape_cast %8 : vector<128x128xf32> to vector<16x8x128xf32>
    %c0_10 = arith.constant 0 : index
    %c0_11 = arith.constant 0 : index
    %c0_12 = arith.constant 0 : index
    %10 = vector.load %arg18[%c0_10, %c0_11, %c0_12] : memref<16x8x128xf32, #tpu.memory_space<vmem>>, vector<16x8x128xf32>
    tpu.vector_store %arg18[%c0_10, %c0_11, %c0_12], %9 {strides = array<i32>} : memref<16x8x128xf32, #tpu.memory_space<vmem>>, vector<16x8x128xf32>,
    %c0_13 = arith.constant 0 : index
    %c0_14 = arith.constant 0 : index
    %11 = vector.load %arg5[%c0_13, %c0_14] : memref<4x128xf32, #tpu.memory_space<vmem>>, vector<4x128xf32>
    %cst_15 = arith.constant dense<0.000000e+00> : vector<128x128xf32>
    %12 = tpu.matmul %3, %11, %cst_15 {dimension_numbers = #tpu.dot_dimension_numbers<[1], [0], [0], [1], [0, 0, 1, 1], [], []>} : vector<128x4xf32>, vector<4x128xf32>, vector<128x128xf32> -> vector<128x128xf32>
    %c0_16 = arith.constant 0 : index
    %c0_17 = arith.constant 0 : index
    %13 = vector.load %arg7[%c0_16, %c0_17] : memref<1x128xf32, #tpu.memory_space<vmem>>, vector<1x128xf32>
    %14 = vector.broadcast %13 : vector<1x128xf32> to vector<128x128xf32>
    %15 = arith.addf %12, %14 : vector<128x128xf32>
    %16 = vector.shape_cast %15 : vector<128x128xf32> to vector<16x8x128xf32>
    %c0_18 = arith.constant 0 : index
    %c0_19 = arith.constant 0 : index
    %c0_20 = arith.constant 0 : index
    %17 = vector.load %arg19[%c0_18, %c0_19, %c0_20] : memref<16x8x128xf32, #tpu.memory_space<vmem>>, vector<16x8x128xf32>
    tpu.vector_store %arg19[%c0_18, %c0_19, %c0_20], %16 {strides = array<i32>} : memref<16x8x128xf32, #tpu.memory_space<vmem>>, vector<16x8x128xf32>,
    %cst_21 = arith.constant 0.000000e+00 : f32
    %18 = vector.broadcast %cst_21 : f32 to vector<8x32xf32>
    %c0_i32 = arith.constant 0 : i32
    %c15_i32 = arith.constant 15 : i32
    %19 = arith.subi %c15_i32, %c0_i32 : i32
    %20 = arith.index_cast %c0_i32 : i32 to index
    %c0_22 = arith.constant 0 : index
    %c0_23 = arith.constant 0 : index
    %21 = vector.load %arg18[%20, %c0_22, %c0_23] : memref<16x8x128xf32, #tpu.memory_space<vmem>>, vector<1x8x128xf32>
    %22 = vector.shape_cast %21 : vector<1x8x128xf32> to vector<8x128xf32>
    %cst_24 = arith.constant dense<0.000000e+00> : vector<8x128xf32>
    %23 = tpu.matmul %18, %0, %cst_24 {dimension_numbers = #tpu.dot_dimension_numbers<[1], [0], [0], [1], [0, 0, 1, 1], [], []>} : vector<8x32xf32>, vector<32x128xf32>, vector<8x128xf32> -> vector<8x128xf32>
    %24 = arith.addf %22, %23 : vector<8x128xf32>
    %25 = arith.index_cast %19 : i32 to index
    %c0_25 = arith.constant 0 : index
    %c0_26 = arith.constant 0 : index
    %26 = vector.load %arg19[%25, %c0_25, %c0_26] : memref<16x8x128xf32, #tpu.memory_space<vmem>>, vector<1x8x128xf32>
    %27 = vector.shape_cast %26 : vector<1x8x128xf32> to vector<8x128xf32>
    %cst_27 = arith.constant dense<0.000000e+00> : vector<8x128xf32>
    %28 = tpu.matmul %18, %1, %cst_27 {dimension_numbers = #tpu.dot_dimension_numbers<[1], [0], [0], [1], [0, 0, 1, 1], [], []>} : vector<8x32xf32>, vector<32x128xf32>, vector<8x128xf32> -> vector<8x128xf32>
    %29 = arith.addf %27, %28 : vector<8x128xf32>
    %30 = vector.extract_strided_slice %24 {offsets = [0, 0], sizes = [8, 32], strides = [1, 1]} : vector<8x128xf32> to vector<8x32xf32>
    %31 = arith.negf %30 : vector<8x32xf32>
    %32 = math.exp %31 : vector<8x32xf32>
    %cst_28 = arith.constant 1.000000e+00 : f32
    %33 = vector.broadcast %cst_28 : f32 to vector<8x32xf32>
    %34 = arith.addf %33, %32 : vector<8x32xf32>
    %35 = arith.divf %33, %34 : vector<8x32xf32>
    %36 = vector.extract_strided_slice %24 {offsets = [0, 32], sizes = [8, 32], strides = [1, 1]} : vector<8x128xf32> to vector<8x32xf32>
    %37 = arith.negf %36 : vector<8x32xf32>
    %38 = math.exp %37 : vector<8x32xf32>
    %cst_29 = arith.constant 1.000000e+00 : f32
    %39 = vector.broadcast %cst_29 : f32 to vector<8x32xf32>
    %40 = arith.addf %39, %38 : vector<8x32xf32>
    %41 = arith.divf %39, %40 : vector<8x32xf32>
    %42 = vector.extract_strided_slice %24 {offsets = [0, 64], sizes = [8, 32], strides = [1, 1]} : vector<8x128xf32> to vector<8x32xf32>
    %43 = math.tanh %42 : vector<8x32xf32>
    %44 = vector.extract_strided_slice %24 {offsets = [0, 96], sizes = [8, 32], strides = [1, 1]} : vector<8x128xf32> to vector<8x32xf32>
    %45 = arith.negf %44 : vector<8x32xf32>
    %46 = math.exp %45 : vector<8x32xf32>
    %cst_30 = arith.constant 1.000000e+00 : f32
    %47 = vector.broadcast %cst_30 : f32 to vector<8x32xf32>
    %48 = arith.addf %47, %46 : vector<8x32xf32>
    %49 = arith.divf %47, %48 : vector<8x32xf32>
    %50 = arith.mulf %41, %18 : vector<8x32xf32>
    %51 = arith.mulf %35, %43 : vector<8x32xf32>
    %52 = arith.addf %50, %51 : vector<8x32xf32>
    %53 = math.tanh %52 : vector<8x32xf32>
    %54 = arith.mulf %49, %53 : vector<8x32xf32>
    %55 = vector.extract_strided_slice %29 {offsets = [0, 0], sizes = [8, 32], strides = [1, 1]} : vector<8x128xf32> to vector<8x32xf32>
    %56 = arith.negf %55 : vector<8x32xf32>
    %57 = math.exp %56 : vector<8x32xf32>
    %cst_31 = arith.constant 1.000000e+00 : f32
    %58 = vector.broadcast %cst_31 : f32 to vector<8x32xf32>
    %59 = arith.addf %58, %57 : vector<8x32xf32>
    %60 = arith.divf %58, %59 : vector<8x32xf32>
    %61 = vector.extract_strided_slice %29 {offsets = [0, 32], sizes = [8, 32], strides = [1, 1]} : vector<8x128xf32> to vector<8x32xf32>
    %62 = arith.negf %61 : vector<8x32xf32>
    %63 = math.exp %62 : vector<8x32xf32>
    %cst_32 = arith.constant 1.000000e+00 : f32
    %64 = vector.broadcast %cst_32 : f32 to vector<8x32xf32>
    %65 = arith.addf %64, %63 : vector<8x32xf32>
    %66 = arith.divf %64, %65 : vector<8x32xf32>
    %67 = vector.extract_strided_slice %29 {offsets = [0, 64], sizes = [8, 32], strides = [1, 1]} : vector<8x128xf32> to vector<8x32xf32>
    %68 = math.tanh %67 : vector<8x32xf32>
    %69 = vector.extract_strided_slice %29 {offsets = [0, 96], sizes = [8, 32], strides = [1, 1]} : vector<8x128xf32> to vector<8x32xf32>
    %70 = arith.negf %69 : vector<8x32xf32>
    %71 = math.exp %70 : vector<8x32xf32>
    %cst_33 = arith.constant 1.000000e+00 : f32
    %72 = vector.broadcast %cst_33 : f32 to vector<8x32xf32>
    %73 = arith.addf %72, %71 : vector<8x32xf32>
    %74 = arith.divf %72, %73 : vector<8x32xf32>
    %75 = arith.mulf %66, %18 : vector<8x32xf32>
    %76 = arith.mulf %60, %68 : vector<8x32xf32>
    %77 = arith.addf %75, %76 : vector<8x32xf32>
    %78 = math.tanh %77 : vector<8x32xf32>
    %79 = arith.mulf %74, %78 : vector<8x32xf32>
    %80 = arith.index_cast %c0_i32 : i32 to index
    %c0_34 = arith.constant 0 : index
    %c0_35 = arith.constant 0 : index
    %81 = vector.load %arg16[%80, %c0_34, %c0_35] : memref<16x8x32xf32, #tpu.memory_space<vmem>>, vector<1x8x32xf32>
    %82 = vector.shape_cast %81 : vector<1x8x32xf32> to vector<8x32xf32>
    %83 = vector.shape_cast %54 : vector<8x32xf32> to vector<1x8x32xf32>
    tpu.vector_store %arg16[%80, %c0_34, %c0_35], %83 {strides = array<i32>} : memref<16x8x32xf32, #tpu.memory_space<vmem>>, vector<1x8x32xf32>,
    %84 = arith.index_cast %19 : i32 to index
    %c0_36 = arith.constant 0 : index
    %c0_37 = arith.constant 0 : index
    %85 = vector.load %arg17[%84, %c0_36, %c0_37] : memref<16x8x32xf32, #tpu.memory_space<vmem>>, vector<1x8x32xf32>
    %86 = vector.shape_cast %85 : vector<1x8x32xf32> to vector<8x32xf32>
    %87 = vector.shape_cast %79 : vector<8x32xf32> to vector<1x8x32xf32>
    tpu.vector_store %arg17[%84, %c0_36, %c0_37], %87 {strides = array<i32>} : memref<16x8x32xf32, #tpu.memory_space<vmem>>, vector<1x8x32xf32>,
    %c1_i32 = arith.constant 1 : i32
    %c15_i32_38 = arith.constant 15 : i32
    %88 = arith.subi %c15_i32_38, %c1_i32 : i32
    %89 = arith.index_cast %c1_i32 : i32 to index
    %c0_39 = arith.constant 0 : index
    %c0_40 = arith.constant 0 : index
    %90 = vector.load %arg18[%89, %c0_39, %c0_40] : memref<16x8x128xf32, #tpu.memory_space<vmem>>, vector<1x8x128xf32>
    %91 = vector.shape_cast %90 : vector<1x8x128xf32> to vector<8x128xf32>
    %cst_41 = arith.constant dense<0.000000e+00> : vector<8x128xf32>
    %92 = tpu.matmul %54, %0, %cst_41 {dimension_numbers = #tpu.dot_dimension_numbers<[1], [0], [0], [1], [0, 0, 1, 1], [], []>} : vector<8x32xf32>, vector<32x128xf32>, vector<8x128xf32> -> vector<8x128xf32>
    %93 = arith.addf %91, %92 : vector<8x128xf32>
    %94 = arith.index_cast %88 : i32 to index
    %c0_42 = arith.constant 0 : index
    %c0_43 = arith.constant 0 : index
    %95 = vector.load %arg19[%94, %c0_42, %c0_43] : memref<16x8x128xf32, #tpu.memory_space<vmem>>, vector<1x8x128xf32>
    %96 = vector.shape_cast %95 : vector<1x8x128xf32> to vector<8x128xf32>
    %cst_44 = arith.constant dense<0.000000e+00> : vector<8x128xf32>
    %97 = tpu.matmul %79, %1, %cst_44 {dimension_numbers = #tpu.dot_dimension_numbers<[1], [0], [0], [1], [0, 0, 1, 1], [], []>} : vector<8x32xf32>, vector<32x128xf32>, vector<8x128xf32> -> vector<8x128xf32>
    %98 = arith.addf %96, %97 : vector<8x128xf32>
    %99 = vector.extract_strided_slice %93 {offsets = [0, 0], sizes = [8, 32], strides = [1, 1]} : vector<8x128xf32> to vector<8x32xf32>
    %100 = arith.negf %99 : vector<8x32xf32>
    %101 = math.exp %100 : vector<8x32xf32>
    %cst_45 = arith.constant 1.000000e+00 : f32
    %102 = vector.broadcast %cst_45 : f32 to vector<8x32xf32>
    %103 = arith.addf %102, %101 : vector<8x32xf32>
    %104 = arith.divf %102, %103 : vector<8x32xf32>
    %105 = vector.extract_strided_slice %93 {offsets = [0, 32], sizes = [8, 32], strides = [1, 1]} : vector<8x128xf32> to vector<8x32xf32>
    %106 = arith.negf %105 : vector<8x32xf32>
    %107 = math.exp %106 : vector<8x32xf32>
    %cst_46 = arith.constant 1.000000e+00 : f32
    %108 = vector.broadcast %cst_46 : f32 to vector<8x32xf32>
    %109 = arith.addf %108, %107 : vector<8x32xf32>
    %110 = arith.divf %108, %109 : vector<8x32xf32>
    %111 = vector.extract_strided_slice %93 {offsets = [0, 64], sizes = [8, 32], strides = [1, 1]} : vector<8x128xf32> to vector<8x32xf32>
    %112 = math.tanh %111 : vector<8x32xf32>
    %113 = vector.extract_strided_slice %93 {offsets = [0, 96], sizes = [8, 32], strides = [1, 1]} : vector<8x128xf32> to vector<8x32xf32>
    %114 = arith.negf %113 : vector<8x32xf32>
    %115 = math.exp %114 : vector<8x32xf32>
    %cst_47 = arith.constant 1.000000e+00 : f32
    %116 = vector.broadcast %cst_47 : f32 to vector<8x32xf32>
    %117 = arith.addf %116, %115 : vector<8x32xf32>
    %118 = arith.divf %116, %117 : vector<8x32xf32>
    %119 = arith.mulf %110, %52 : vector<8x32xf32>
    %120 = arith.mulf %104, %112 : vector<8x32xf32>
    %121 = arith.addf %119, %120 : vector<8x32xf32>
    %122 = math.tanh %121 : vector<8x32xf32>
    %123 = arith.mulf %118, %122 : vector<8x32xf32>
    %124 = vector.extract_strided_slice %98 {offsets = [0, 0], sizes = [8, 32], strides = [1, 1]} : vector<8x128xf32> to vector<8x32xf32>
    %125 = arith.negf %124 : vector<8x32xf32>
    %126 = math.exp %125 : vector<8x32xf32>
    %cst_48 = arith.constant 1.000000e+00 : f32
    %127 = vector.broadcast %cst_48 : f32 to vector<8x32xf32>
    %128 = arith.addf %127, %126 : vector<8x32xf32>
    %129 = arith.divf %127, %128 : vector<8x32xf32>
    %130 = vector.extract_strided_slice %98 {offsets = [0, 32], sizes = [8, 32], strides = [1, 1]} : vector<8x128xf32> to vector<8x32xf32>
    %131 = arith.negf %130 : vector<8x32xf32>
    %132 = math.exp %131 : vector<8x32xf32>
    %cst_49 = arith.constant 1.000000e+00 : f32
    %133 = vector.broadcast %cst_49 : f32 to vector<8x32xf32>
    %134 = arith.addf %133, %132 : vector<8x32xf32>
    %135 = arith.divf %133, %134 : vector<8x32xf32>
    %136 = vector.extract_strided_slice %98 {offsets = [0, 64], sizes = [8, 32], strides = [1, 1]} : vector<8x128xf32> to vector<8x32xf32>
    %137 = math.tanh %136 : vector<8x32xf32>
    %138 = vector.extract_strided_slice %98 {offsets = [0, 96], sizes = [8, 32], strides = [1, 1]} : vector<8x128xf32> to vector<8x32xf32>
    %139 = arith.negf %138 : vector<8x32xf32>
    %140 = math.exp %139 : vector<8x32xf32>
    %cst_50 = arith.constant 1.000000e+00 : f32
    %141 = vector.broadcast %cst_50 : f32 to vector<8x32xf32>
    %142 = arith.addf %141, %140 : vector<8x32xf32>
    %143 = arith.divf %141, %142 : vector<8x32xf32>
    %144 = arith.mulf %135, %77 : vector<8x32xf32>
    %145 = arith.mulf %129, %137 : vector<8x32xf32>
    %146 = arith.addf %144, %145 : vector<8x32xf32>
    %147 = math.tanh %146 : vector<8x32xf32>
    %148 = arith.mulf %143, %147 : vector<8x32xf32>
    %149 = arith.index_cast %c1_i32 : i32 to index
    %c0_51 = arith.constant 0 : index
    %c0_52 = arith.constant 0 : index
    %150 = vector.load %arg16[%149, %c0_51, %c0_52] : memref<16x8x32xf32, #tpu.memory_space<vmem>>, vector<1x8x32xf32>
    %151 = vector.shape_cast %150 : vector<1x8x32xf32> to vector<8x32xf32>
    %152 = vector.shape_cast %123 : vector<8x32xf32> to vector<1x8x32xf32>
    tpu.vector_store %arg16[%149, %c0_51, %c0_52], %152 {strides = array<i32>} : memref<16x8x32xf32, #tpu.memory_space<vmem>>, vector<1x8x32xf32>,
    %153 = arith.index_cast %88 : i32 to index
    %c0_53 = arith.constant 0 : index
    %c0_54 = arith.constant 0 : index
    %154 = vector.load %arg17[%153, %c0_53, %c0_54] : memref<16x8x32xf32, #tpu.memory_space<vmem>>, vector<1x8x32xf32>
    %155 = vector.shape_cast %154 : vector<1x8x32xf32> to vector<8x32xf32>
    %156 = vector.shape_cast %148 : vector<8x32xf32> to vector<1x8x32xf32>
    tpu.vector_store %arg17[%153, %c0_53, %c0_54], %156 {strides = array<i32>} : memref<16x8x32xf32, #tpu.memory_space<vmem>>, vector<1x8x32xf32>,
    %c2_i32 = arith.constant 2 : i32
    %c15_i32_55 = arith.constant 15 : i32
    %157 = arith.subi %c15_i32_55, %c2_i32 : i32
    %158 = arith.index_cast %c2_i32 : i32 to index
    %c0_56 = arith.constant 0 : index
    %c0_57 = arith.constant 0 : index
    %159 = vector.load %arg18[%158, %c0_56, %c0_57] : memref<16x8x128xf32, #tpu.memory_space<vmem>>, vector<1x8x128xf32>
    %160 = vector.shape_cast %159 : vector<1x8x128xf32> to vector<8x128xf32>
    %cst_58 = arith.constant dense<0.000000e+00> : vector<8x128xf32>
    %161 = tpu.matmul %123, %0, %cst_58 {dimension_numbers = #tpu.dot_dimension_numbers<[1], [0], [0], [1], [0, 0, 1, 1], [], []>} : vector<8x32xf32>, vector<32x128xf32>, vector<8x128xf32> -> vector<8x128xf32>
    %162 = arith.addf %160, %161 : vector<8x128xf32>
    %163 = arith.index_cast %157 : i32 to index
    %c0_59 = arith.constant 0 : index
    %c0_60 = arith.constant 0 : index
    %164 = vector.load %arg19[%163, %c0_59, %c0_60] : memref<16x8x128xf32, #tpu.memory_space<vmem>>, vector<1x8x128xf32>
    %165 = vector.shape_cast %164 : vector<1x8x128xf32> to vector<8x128xf32>
    %cst_61 = arith.constant dense<0.000000e+00> : vector<8x128xf32>
    %166 = tpu.matmul %148, %1, %cst_61 {dimension_numbers = #tpu.dot_dimension_numbers<[1], [0], [0], [1], [0, 0, 1, 1], [], []>} : vector<8x32xf32>, vector<32x128xf32>, vector<8x128xf32> -> vector<8x128xf32>
    %167 = arith.addf %165, %166 : vector<8x128xf32>
    %168 = vector.extract_strided_slice %162 {offsets = [0, 0], sizes = [8, 32], strides = [1, 1]} : vector<8x128xf32> to vector<8x32xf32>
    %169 = arith.negf %168 : vector<8x32xf32>
    %170 = math.exp %169 : vector<8x32xf32>
    %cst_62 = arith.constant 1.000000e+00 : f32
    %171 = vector.broadcast %cst_62 : f32 to vector<8x32xf32>
    %172 = arith.addf %171, %170 : vector<8x32xf32>
    %173 = arith.divf %171, %172 : vector<8x32xf32>
    %174 = vector.extract_strided_slice %162 {offsets = [0, 32], sizes = [8, 32], strides = [1, 1]} : vector<8x128xf32> to vector<8x32xf32>
    %175 = arith.negf %174 : vector<8x32xf32>
    %176 = math.exp %175 : vector<8x32xf32>
    %cst_63 = arith.constant 1.000000e+00 : f32
    %177 = vector.broadcast %cst_63 : f32 to vector<8x32xf32>
    %178 = arith.addf %177, %176 : vector<8x32xf32>
    %179 = arith.divf %177, %178 : vector<8x32xf32>
    %180 = vector.extract_strided_slice %162 {offsets = [0, 64], sizes = [8, 32], strides = [1, 1]} : vector<8x128xf32> to vector<8x32xf32>
    %181 = math.tanh %180 : vector<8x32xf32>
    %182 = vector.extract_strided_slice %162 {offsets = [0, 96], sizes = [8, 32], strides = [1, 1]} : vector<8x128xf32> to vector<8x32xf32>
    %183 = arith.negf %182 : vector<8x32xf32>
    %184 = math.exp %183 : vector<8x32xf32>
    %cst_64 = arith.constant 1.000000e+00 : f32
    %185 = vector.broadcast %cst_64 : f32 to vector<8x32xf32>
    %186 = arith.addf %185, %184 : vector<8x32xf32>
    %187 = arith.divf %185, %186 : vector<8x32xf32>
    %188 = arith.mulf %179, %121 : vector<8x32xf32>
    %189 = arith.mulf %173, %181 : vector<8x32xf32>
    %190 = arith.addf %188, %189 : vector<8x32xf32>
    %191 = math.tanh %190 : vector<8x32xf32>
    %192 = arith.mulf %187, %191 : vector<8x32xf32>
    %193 = vector.extract_strided_slice %167 {offsets = [0, 0], sizes = [8, 32], strides = [1, 1]} : vector<8x128xf32> to vector<8x32xf32>
    %194 = arith.negf %193 : vector<8x32xf32>
    %195 = math.exp %194 : vector<8x32xf32>
    %cst_65 = arith.constant 1.000000e+00 : f32
    %196 = vector.broadcast %cst_65 : f32 to vector<8x32xf32>
    %197 = arith.addf %196, %195 : vector<8x32xf32>
    %198 = arith.divf %196, %197 : vector<8x32xf32>
    %199 = vector.extract_strided_slice %167 {offsets = [0, 32], sizes = [8, 32], strides = [1, 1]} : vector<8x128xf32> to vector<8x32xf32>
    %200 = arith.negf %199 : vector<8x32xf32>
    %201 = math.exp %200 : vector<8x32xf32>
    %cst_66 = arith.constant 1.000000e+00 : f32
    %202 = vector.broadcast %cst_66 : f32 to vector<8x32xf32>
    %203 = arith.addf %202, %201 : vector<8x32xf32>
    %204 = arith.divf %202, %203 : vector<8x32xf32>
    %205 = vector.extract_strided_slice %167 {offsets = [0, 64], sizes = [8, 32], strides = [1, 1]} : vector<8x128xf32> to vector<8x32xf32>
    %206 = math.tanh %205 : vector<8x32xf32>
    %207 = vector.extract_strided_slice %167 {offsets = [0, 96], sizes = [8, 32], strides = [1, 1]} : vector<8x128xf32> to vector<8x32xf32>
    %208 = arith.negf %207 : vector<8x32xf32>
    %209 = math.exp %208 : vector<8x32xf32>
    %cst_67 = arith.constant 1.000000e+00 : f32
    %210 = vector.broadcast %cst_67 : f32 to vector<8x32xf32>
    %211 = arith.addf %210, %209 : vector<8x32xf32>
    %212 = arith.divf %210, %211 : vector<8x32xf32>
    %213 = arith.mulf %204, %146 : vector<8x32xf32>
    %214 = arith.mulf %198, %206 : vector<8x32xf32>
    %215 = arith.addf %213, %214 : vector<8x32xf32>
    %216 = math.tanh %215 : vector<8x32xf32>
    %217 = arith.mulf %212, %216 : vector<8x32xf32>
    %218 = arith.index_cast %c2_i32 : i32 to index
    %c0_68 = arith.constant 0 : index
    %c0_69 = arith.constant 0 : index
    %219 = vector.load %arg16[%218, %c0_68, %c0_69] : memref<16x8x32xf32, #tpu.memory_space<vmem>>, vector<1x8x32xf32>
    %220 = vector.shape_cast %219 : vector<1x8x32xf32> to vector<8x32xf32>
    %221 = vector.shape_cast %192 : vector<8x32xf32> to vector<1x8x32xf32>
    tpu.vector_store %arg16[%218, %c0_68, %c0_69], %221 {strides = array<i32>} : memref<16x8x32xf32, #tpu.memory_space<vmem>>, vector<1x8x32xf32>,
    %222 = arith.index_cast %157 : i32 to index
    %c0_70 = arith.constant 0 : index
    %c0_71 = arith.constant 0 : index
    %223 = vector.load %arg17[%222, %c0_70, %c0_71] : memref<16x8x32xf32, #tpu.memory_space<vmem>>, vector<1x8x32xf32>
    %224 = vector.shape_cast %223 : vector<1x8x32xf32> to vector<8x32xf32>
    %225 = vector.shape_cast %217 : vector<8x32xf32> to vector<1x8x32xf32>
    tpu.vector_store %arg17[%222, %c0_70, %c0_71], %225 {strides = array<i32>} : memref<16x8x32xf32, #tpu.memory_space<vmem>>, vector<1x8x32xf32>,
    %c3_i32 = arith.constant 3 : i32
    %c15_i32_72 = arith.constant 15 : i32
    %226 = arith.subi %c15_i32_72, %c3_i32 : i32
    %227 = arith.index_cast %c3_i32 : i32 to index
    %c0_73 = arith.constant 0 : index
    %c0_74 = arith.constant 0 : index
    %228 = vector.load %arg18[%227, %c0_73, %c0_74] : memref<16x8x128xf32, #tpu.memory_space<vmem>>, vector<1x8x128xf32>
    %229 = vector.shape_cast %228 : vector<1x8x128xf32> to vector<8x128xf32>
    %cst_75 = arith.constant dense<0.000000e+00> : vector<8x128xf32>
    %230 = tpu.matmul %192, %0, %cst_75 {dimension_numbers = #tpu.dot_dimension_numbers<[1], [0], [0], [1], [0, 0, 1, 1], [], []>} : vector<8x32xf32>, vector<32x128xf32>, vector<8x128xf32> -> vector<8x128xf32>
    %231 = arith.addf %229, %230 : vector<8x128xf32>
    %232 = arith.index_cast %226 : i32 to index
    %c0_76 = arith.constant 0 : index
    %c0_77 = arith.constant 0 : index
    %233 = vector.load %arg19[%232, %c0_76, %c0_77] : memref<16x8x128xf32, #tpu.memory_space<vmem>>, vector<1x8x128xf32>
    %234 = vector.shape_cast %233 : vector<1x8x128xf32> to vector<8x128xf32>
    %cst_78 = arith.constant dense<0.000000e+00> : vector<8x128xf32>
    %235 = tpu.matmul %217, %1, %cst_78 {dimension_numbers = #tpu.dot_dimension_numbers<[1], [0], [0], [1], [0, 0, 1, 1], [], []>} : vector<8x32xf32>, vector<32x128xf32>, vector<8x128xf32> -> vector<8x128xf32>
    %236 = arith.addf %234, %235 : vector<8x128xf32>
    %237 = vector.extract_strided_slice %231 {offsets = [0, 0], sizes = [8, 32], strides = [1, 1]} : vector<8x128xf32> to vector<8x32xf32>
    %238 = arith.negf %237 : vector<8x32xf32>
    %239 = math.exp %238 : vector<8x32xf32>
    %cst_79 = arith.constant 1.000000e+00 : f32
    %240 = vector.broadcast %cst_79 : f32 to vector<8x32xf32>
    %241 = arith.addf %240, %239 : vector<8x32xf32>
    %242 = arith.divf %240, %241 : vector<8x32xf32>
    %243 = vector.extract_strided_slice %231 {offsets = [0, 32], sizes = [8, 32], strides = [1, 1]} : vector<8x128xf32> to vector<8x32xf32>
    %244 = arith.negf %243 : vector<8x32xf32>
    %245 = math.exp %244 : vector<8x32xf32>
    %cst_80 = arith.constant 1.000000e+00 : f32
    %246 = vector.broadcast %cst_80 : f32 to vector<8x32xf32>
    %247 = arith.addf %246, %245 : vector<8x32xf32>
    %248 = arith.divf %246, %247 : vector<8x32xf32>
    %249 = vector.extract_strided_slice %231 {offsets = [0, 64], sizes = [8, 32], strides = [1, 1]} : vector<8x128xf32> to vector<8x32xf32>
    %250 = math.tanh %249 : vector<8x32xf32>
    %251 = vector.extract_strided_slice %231 {offsets = [0, 96], sizes = [8, 32], strides = [1, 1]} : vector<8x128xf32> to vector<8x32xf32>
    %252 = arith.negf %251 : vector<8x32xf32>
    %253 = math.exp %252 : vector<8x32xf32>
    %cst_81 = arith.constant 1.000000e+00 : f32
    %254 = vector.broadcast %cst_81 : f32 to vector<8x32xf32>
    %255 = arith.addf %254, %253 : vector<8x32xf32>
    %256 = arith.divf %254, %255 : vector<8x32xf32>
    %257 = arith.mulf %248, %190 : vector<8x32xf32>
    %258 = arith.mulf %242, %250 : vector<8x32xf32>
    %259 = arith.addf %257, %258 : vector<8x32xf32>
    %260 = math.tanh %259 : vector<8x32xf32>
    %261 = arith.mulf %256, %260 : vector<8x32xf32>
    %262 = vector.extract_strided_slice %236 {offsets = [0, 0], sizes = [8, 32], strides = [1, 1]} : vector<8x128xf32> to vector<8x32xf32>
    %263 = arith.negf %262 : vector<8x32xf32>
    %264 = math.exp %263 : vector<8x32xf32>
    %cst_82 = arith.constant 1.000000e+00 : f32
    %265 = vector.broadcast %cst_82 : f32 to vector<8x32xf32>
    %266 = arith.addf %265, %264 : vector<8x32xf32>
    %267 = arith.divf %265, %266 : vector<8x32xf32>
    %268 = vector.extract_strided_slice %236 {offsets = [0, 32], sizes = [8, 32], strides = [1, 1]} : vector<8x128xf32> to vector<8x32xf32>
    %269 = arith.negf %268 : vector<8x32xf32>
    %270 = math.exp %269 : vector<8x32xf32>
    %cst_83 = arith.constant 1.000000e+00 : f32
    %271 = vector.broadcast %cst_83 : f32 to vector<8x32xf32>
    %272 = arith.addf %271, %270 : vector<8x32xf32>
    %273 = arith.divf %271, %272 : vector<8x32xf32>
    %274 = vector.extract_strided_slice %236 {offsets = [0, 64], sizes = [8, 32], strides = [1, 1]} : vector<8x128xf32> to vector<8x32xf32>
    %275 = math.tanh %274 : vector<8x32xf32>
    %276 = vector.extract_strided_slice %236 {offsets = [0, 96], sizes = [8, 32], strides = [1, 1]} : vector<8x128xf32> to vector<8x32xf32>
    %277 = arith.negf %276 : vector<8x32xf32>
    %278 = math.exp %277 : vector<8x32xf32>
    %cst_84 = arith.constant 1.000000e+00 : f32
    %279 = vector.broadcast %cst_84 : f32 to vector<8x32xf32>
    %280 = arith.addf %279, %278 : vector<8x32xf32>
    %281 = arith.divf %279, %280 : vector<8x32xf32>
    %282 = arith.mulf %273, %215 : vector<8x32xf32>
    %283 = arith.mulf %267, %275 : vector<8x32xf32>
    %284 = arith.addf %282, %283 : vector<8x32xf32>
    %285 = math.tanh %284 : vector<8x32xf32>
    %286 = arith.mulf %281, %285 : vector<8x32xf32>
    %287 = arith.index_cast %c3_i32 : i32 to index
    %c0_85 = arith.constant 0 : index
    %c0_86 = arith.constant 0 : index
    %288 = vector.load %arg16[%287, %c0_85, %c0_86] : memref<16x8x32xf32, #tpu.memory_space<vmem>>, vector<1x8x32xf32>
    %289 = vector.shape_cast %288 : vector<1x8x32xf32> to vector<8x32xf32>
    %290 = vector.shape_cast %261 : vector<8x32xf32> to vector<1x8x32xf32>
    tpu.vector_store %arg16[%287, %c0_85, %c0_86], %290 {strides = array<i32>} : memref<16x8x32xf32, #tpu.memory_space<vmem>>, vector<1x8x32xf32>,
    %291 = arith.index_cast %226 : i32 to index
    %c0_87 = arith.constant 0 : index
    %c0_88 = arith.constant 0 : index
    %292 = vector.load %arg17[%291, %c0_87, %c0_88] : memref<16x8x32xf32, #tpu.memory_space<vmem>>, vector<1x8x32xf32>
    %293 = vector.shape_cast %292 : vector<1x8x32xf32> to vector<8x32xf32>
    %294 = vector.shape_cast %286 : vector<8x32xf32> to vector<1x8x32xf32>
    tpu.vector_store %arg17[%291, %c0_87, %c0_88], %294 {strides = array<i32>} : memref<16x8x32xf32, #tpu.memory_space<vmem>>, vector<1x8x32xf32>,
    %c4_i32 = arith.constant 4 : i32
    %c15_i32_89 = arith.constant 15 : i32
    %295 = arith.subi %c15_i32_89, %c4_i32 : i32
    %296 = arith.index_cast %c4_i32 : i32 to index
    %c0_90 = arith.constant 0 : index
    %c0_91 = arith.constant 0 : index
    %297 = vector.load %arg18[%296, %c0_90, %c0_91] : memref<16x8x128xf32, #tpu.memory_space<vmem>>, vector<1x8x128xf32>
    %298 = vector.shape_cast %297 : vector<1x8x128xf32> to vector<8x128xf32>
    %cst_92 = arith.constant dense<0.000000e+00> : vector<8x128xf32>
    %299 = tpu.matmul %261, %0, %cst_92 {dimension_numbers = #tpu.dot_dimension_numbers<[1], [0], [0], [1], [0, 0, 1, 1], [], []>} : vector<8x32xf32>, vector<32x128xf32>, vector<8x128xf32> -> vector<8x128xf32>
    %300 = arith.addf %298, %299 : vector<8x128xf32>
    %301 = arith.index_cast %295 : i32 to index
    %c0_93 = arith.constant 0 : index
    %c0_94 = arith.constant 0 : index
    %302 = vector.load %arg19[%301, %c0_93, %c0_94] : memref<16x8x128xf32, #tpu.memory_space<vmem>>, vector<1x8x128xf32>
    %303 = vector.shape_cast %302 : vector<1x8x128xf32> to vector<8x128xf32>
    %cst_95 = arith.constant dense<0.000000e+00> : vector<8x128xf32>
    %304 = tpu.matmul %286, %1, %cst_95 {dimension_numbers = #tpu.dot_dimension_numbers<[1], [0], [0], [1], [0, 0, 1, 1], [], []>} : vector<8x32xf32>, vector<32x128xf32>, vector<8x128xf32> -> vector<8x128xf32>
    %305 = arith.addf %303, %304 : vector<8x128xf32>
    %306 = vector.extract_strided_slice %300 {offsets = [0, 0], sizes = [8, 32], strides = [1, 1]} : vector<8x128xf32> to vector<8x32xf32>
    %307 = arith.negf %306 : vector<8x32xf32>
    %308 = math.exp %307 : vector<8x32xf32>
    %cst_96 = arith.constant 1.000000e+00 : f32
    %309 = vector.broadcast %cst_96 : f32 to vector<8x32xf32>
    %310 = arith.addf %309, %308 : vector<8x32xf32>
    %311 = arith.divf %309, %310 : vector<8x32xf32>
    %312 = vector.extract_strided_slice %300 {offsets = [0, 32], sizes = [8, 32], strides = [1, 1]} : vector<8x128xf32> to vector<8x32xf32>
    %313 = arith.negf %312 : vector<8x32xf32>
    %314 = math.exp %313 : vector<8x32xf32>
    %cst_97 = arith.constant 1.000000e+00 : f32
    %315 = vector.broadcast %cst_97 : f32 to vector<8x32xf32>
    %316 = arith.addf %315, %314 : vector<8x32xf32>
    %317 = arith.divf %315, %316 : vector<8x32xf32>
    %318 = vector.extract_strided_slice %300 {offsets = [0, 64], sizes = [8, 32], strides = [1, 1]} : vector<8x128xf32> to vector<8x32xf32>
    %319 = math.tanh %318 : vector<8x32xf32>
    %320 = vector.extract_strided_slice %300 {offsets = [0, 96], sizes = [8, 32], strides = [1, 1]} : vector<8x128xf32> to vector<8x32xf32>
    %321 = arith.negf %320 : vector<8x32xf32>
    %322 = math.exp %321 : vector<8x32xf32>
    %cst_98 = arith.constant 1.000000e+00 : f32
    %323 = vector.broadcast %cst_98 : f32 to vector<8x32xf32>
    %324 = arith.addf %323, %322 : vector<8x32xf32>
    %325 = arith.divf %323, %324 : vector<8x32xf32>
    %326 = arith.mulf %317, %259 : vector<8x32xf32>
    %327 = arith.mulf %311, %319 : vector<8x32xf32>
    %328 = arith.addf %326, %327 : vector<8x32xf32>
    %329 = math.tanh %328 : vector<8x32xf32>
    %330 = arith.mulf %325, %329 : vector<8x32xf32>
    %331 = vector.extract_strided_slice %305 {offsets = [0, 0], sizes = [8, 32], strides = [1, 1]} : vector<8x128xf32> to vector<8x32xf32>
    %332 = arith.negf %331 : vector<8x32xf32>
    %333 = math.exp %332 : vector<8x32xf32>
    %cst_99 = arith.constant 1.000000e+00 : f32
    %334 = vector.broadcast %cst_99 : f32 to vector<8x32xf32>
    %335 = arith.addf %334, %333 : vector<8x32xf32>
    %336 = arith.divf %334, %335 : vector<8x32xf32>
    %337 = vector.extract_strided_slice %305 {offsets = [0, 32], sizes = [8, 32], strides = [1, 1]} : vector<8x128xf32> to vector<8x32xf32>
    %338 = arith.negf %337 : vector<8x32xf32>
    %339 = math.exp %338 : vector<8x32xf32>
    %cst_100 = arith.constant 1.000000e+00 : f32
    %340 = vector.broadcast %cst_100 : f32 to vector<8x32xf32>
    %341 = arith.addf %340, %339 : vector<8x32xf32>
    %342 = arith.divf %340, %341 : vector<8x32xf32>
    %343 = vector.extract_strided_slice %305 {offsets = [0, 64], sizes = [8, 32], strides = [1, 1]} : vector<8x128xf32> to vector<8x32xf32>
    %344 = math.tanh %343 : vector<8x32xf32>
    %345 = vector.extract_strided_slice %305 {offsets = [0, 96], sizes = [8, 32], strides = [1, 1]} : vector<8x128xf32> to vector<8x32xf32>
    %346 = arith.negf %345 : vector<8x32xf32>
    %347 = math.exp %346 : vector<8x32xf32>
    %cst_101 = arith.constant 1.000000e+00 : f32
    %348 = vector.broadcast %cst_101 : f32 to vector<8x32xf32>
    %349 = arith.addf %348, %347 : vector<8x32xf32>
    %350 = arith.divf %348, %349 : vector<8x32xf32>
    %351 = arith.mulf %342, %284 : vector<8x32xf32>
    %352 = arith.mulf %336, %344 : vector<8x32xf32>
    %353 = arith.addf %351, %352 : vector<8x32xf32>
    %354 = math.tanh %353 : vector<8x32xf32>
    %355 = arith.mulf %350, %354 : vector<8x32xf32>
    %356 = arith.index_cast %c4_i32 : i32 to index
    %c0_102 = arith.constant 0 : index
    %c0_103 = arith.constant 0 : index
    %357 = vector.load %arg16[%356, %c0_102, %c0_103] : memref<16x8x32xf32, #tpu.memory_space<vmem>>, vector<1x8x32xf32>
    %358 = vector.shape_cast %357 : vector<1x8x32xf32> to vector<8x32xf32>
    %359 = vector.shape_cast %330 : vector<8x32xf32> to vector<1x8x32xf32>
    tpu.vector_store %arg16[%356, %c0_102, %c0_103], %359 {strides = array<i32>} : memref<16x8x32xf32, #tpu.memory_space<vmem>>, vector<1x8x32xf32>,
    %360 = arith.index_cast %295 : i32 to index
    %c0_104 = arith.constant 0 : index
    %c0_105 = arith.constant 0 : index
    %361 = vector.load %arg17[%360, %c0_104, %c0_105] : memref<16x8x32xf32, #tpu.memory_space<vmem>>, vector<1x8x32xf32>
    %362 = vector.shape_cast %361 : vector<1x8x32xf32> to vector<8x32xf32>
    %363 = vector.shape_cast %355 : vector<8x32xf32> to vector<1x8x32xf32>
    tpu.vector_store %arg17[%360, %c0_104, %c0_105], %363 {strides = array<i32>} : memref<16x8x32xf32, #tpu.memory_space<vmem>>, vector<1x8x32xf32>,
    %c5_i32 = arith.constant 5 : i32
    %c15_i32_106 = arith.constant 15 : i32
    %364 = arith.subi %c15_i32_106, %c5_i32 : i32
    %365 = arith.index_cast %c5_i32 : i32 to index
    %c0_107 = arith.constant 0 : index
    %c0_108 = arith.constant 0 : index
    %366 = vector.load %arg18[%365, %c0_107, %c0_108] : memref<16x8x128xf32, #tpu.memory_space<vmem>>, vector<1x8x128xf32>
    %367 = vector.shape_cast %366 : vector<1x8x128xf32> to vector<8x128xf32>
    %cst_109 = arith.constant dense<0.000000e+00> : vector<8x128xf32>
    %368 = tpu.matmul %330, %0, %cst_109 {dimension_numbers = #tpu.dot_dimension_numbers<[1], [0], [0], [1], [0, 0, 1, 1], [], []>} : vector<8x32xf32>, vector<32x128xf32>, vector<8x128xf32> -> vector<8x128xf32>
    %369 = arith.addf %367, %368 : vector<8x128xf32>
    %370 = arith.index_cast %364 : i32 to index
    %c0_110 = arith.constant 0 : index
    %c0_111 = arith.constant 0 : index
    %371 = vector.load %arg19[%370, %c0_110, %c0_111] : memref<16x8x128xf32, #tpu.memory_space<vmem>>, vector<1x8x128xf32>
    %372 = vector.shape_cast %371 : vector<1x8x128xf32> to vector<8x128xf32>
    %cst_112 = arith.constant dense<0.000000e+00> : vector<8x128xf32>
    %373 = tpu.matmul %355, %1, %cst_112 {dimension_numbers = #tpu.dot_dimension_numbers<[1], [0], [0], [1], [0, 0, 1, 1], [], []>} : vector<8x32xf32>, vector<32x128xf32>, vector<8x128xf32> -> vector<8x128xf32>
    %374 = arith.addf %372, %373 : vector<8x128xf32>
    %375 = vector.extract_strided_slice %369 {offsets = [0, 0], sizes = [8, 32], strides = [1, 1]} : vector<8x128xf32> to vector<8x32xf32>
    %376 = arith.negf %375 : vector<8x32xf32>
    %377 = math.exp %376 : vector<8x32xf32>
    %cst_113 = arith.constant 1.000000e+00 : f32
    %378 = vector.broadcast %cst_113 : f32 to vector<8x32xf32>
    %379 = arith.addf %378, %377 : vector<8x32xf32>
    %380 = arith.divf %378, %379 : vector<8x32xf32>
    %381 = vector.extract_strided_slice %369 {offsets = [0, 32], sizes = [8, 32], strides = [1, 1]} : vector<8x128xf32> to vector<8x32xf32>
    %382 = arith.negf %381 : vector<8x32xf32>
    %383 = math.exp %382 : vector<8x32xf32>
    %cst_114 = arith.constant 1.000000e+00 : f32
    %384 = vector.broadcast %cst_114 : f32 to vector<8x32xf32>
    %385 = arith.addf %384, %383 : vector<8x32xf32>
    %386 = arith.divf %384, %385 : vector<8x32xf32>
    %387 = vector.extract_strided_slice %369 {offsets = [0, 64], sizes = [8, 32], strides = [1, 1]} : vector<8x128xf32> to vector<8x32xf32>
    %388 = math.tanh %387 : vector<8x32xf32>
    %389 = vector.extract_strided_slice %369 {offsets = [0, 96], sizes = [8, 32], strides = [1, 1]} : vector<8x128xf32> to vector<8x32xf32>
    %390 = arith.negf %389 : vector<8x32xf32>
    %391 = math.exp %390 : vector<8x32xf32>
    %cst_115 = arith.constant 1.000000e+00 : f32
    %392 = vector.broadcast %cst_115 : f32 to vector<8x32xf32>
    %393 = arith.addf %392, %391 : vector<8x32xf32>
    %394 = arith.divf %392, %393 : vector<8x32xf32>
    %395 = arith.mulf %386, %328 : vector<8x32xf32>
    %396 = arith.mulf %380, %388 : vector<8x32xf32>
    %397 = arith.addf %395, %396 : vector<8x32xf32>
    %398 = math.tanh %397 : vector<8x32xf32>
    %399 = arith.mulf %394, %398 : vector<8x32xf32>
    %400 = vector.extract_strided_slice %374 {offsets = [0, 0], sizes = [8, 32], strides = [1, 1]} : vector<8x128xf32> to vector<8x32xf32>
    %401 = arith.negf %400 : vector<8x32xf32>
    %402 = math.exp %401 : vector<8x32xf32>
    %cst_116 = arith.constant 1.000000e+00 : f32
    %403 = vector.broadcast %cst_116 : f32 to vector<8x32xf32>
    %404 = arith.addf %403, %402 : vector<8x32xf32>
    %405 = arith.divf %403, %404 : vector<8x32xf32>
    %406 = vector.extract_strided_slice %374 {offsets = [0, 32], sizes = [8, 32], strides = [1, 1]} : vector<8x128xf32> to vector<8x32xf32>
    %407 = arith.negf %406 : vector<8x32xf32>
    %408 = math.exp %407 : vector<8x32xf32>
    %cst_117 = arith.constant 1.000000e+00 : f32
    %409 = vector.broadcast %cst_117 : f32 to vector<8x32xf32>
    %410 = arith.addf %409, %408 : vector<8x32xf32>
    %411 = arith.divf %409, %410 : vector<8x32xf32>
    %412 = vector.extract_strided_slice %374 {offsets = [0, 64], sizes = [8, 32], strides = [1, 1]} : vector<8x128xf32> to vector<8x32xf32>
    %413 = math.tanh %412 : vector<8x32xf32>
    %414 = vector.extract_strided_slice %374 {offsets = [0, 96], sizes = [8, 32], strides = [1, 1]} : vector<8x128xf32> to vector<8x32xf32>
    %415 = arith.negf %414 : vector<8x32xf32>
    %416 = math.exp %415 : vector<8x32xf32>
    %cst_118 = arith.constant 1.000000e+00 : f32
    %417 = vector.broadcast %cst_118 : f32 to vector<8x32xf32>
    %418 = arith.addf %417, %416 : vector<8x32xf32>
    %419 = arith.divf %417, %418 : vector<8x32xf32>
    %420 = arith.mulf %411, %353 : vector<8x32xf32>
    %421 = arith.mulf %405, %413 : vector<8x32xf32>
    %422 = arith.addf %420, %421 : vector<8x32xf32>
    %423 = math.tanh %422 : vector<8x32xf32>
    %424 = arith.mulf %419, %423 : vector<8x32xf32>
    %425 = arith.index_cast %c5_i32 : i32 to index
    %c0_119 = arith.constant 0 : index
    %c0_120 = arith.constant 0 : index
    %426 = vector.load %arg16[%425, %c0_119, %c0_120] : memref<16x8x32xf32, #tpu.memory_space<vmem>>, vector<1x8x32xf32>
    %427 = vector.shape_cast %426 : vector<1x8x32xf32> to vector<8x32xf32>
    %428 = vector.shape_cast %399 : vector<8x32xf32> to vector<1x8x32xf32>
    tpu.vector_store %arg16[%425, %c0_119, %c0_120], %428 {strides = array<i32>} : memref<16x8x32xf32, #tpu.memory_space<vmem>>, vector<1x8x32xf32>,
    %429 = arith.index_cast %364 : i32 to index
    %c0_121 = arith.constant 0 : index
    %c0_122 = arith.constant 0 : index
    %430 = vector.load %arg17[%429, %c0_121, %c0_122] : memref<16x8x32xf32, #tpu.memory_space<vmem>>, vector<1x8x32xf32>
    %431 = vector.shape_cast %430 : vector<1x8x32xf32> to vector<8x32xf32>
    %432 = vector.shape_cast %424 : vector<8x32xf32> to vector<1x8x32xf32>
    tpu.vector_store %arg17[%429, %c0_121, %c0_122], %432 {strides = array<i32>} : memref<16x8x32xf32, #tpu.memory_space<vmem>>, vector<1x8x32xf32>,
    %c6_i32 = arith.constant 6 : i32
    %c15_i32_123 = arith.constant 15 : i32
    %433 = arith.subi %c15_i32_123, %c6_i32 : i32
    %434 = arith.index_cast %c6_i32 : i32 to index
    %c0_124 = arith.constant 0 : index
    %c0_125 = arith.constant 0 : index
    %435 = vector.load %arg18[%434, %c0_124, %c0_125] : memref<16x8x128xf32, #tpu.memory_space<vmem>>, vector<1x8x128xf32>
    %436 = vector.shape_cast %435 : vector<1x8x128xf32> to vector<8x128xf32>
    %cst_126 = arith.constant dense<0.000000e+00> : vector<8x128xf32>
    %437 = tpu.matmul %399, %0, %cst_126 {dimension_numbers = #tpu.dot_dimension_numbers<[1], [0], [0], [1], [0, 0, 1, 1], [], []>} : vector<8x32xf32>, vector<32x128xf32>, vector<8x128xf32> -> vector<8x128xf32>
    %438 = arith.addf %436, %437 : vector<8x128xf32>
    %439 = arith.index_cast %433 : i32 to index
    %c0_127 = arith.constant 0 : index
    %c0_128 = arith.constant 0 : index
    %440 = vector.load %arg19[%439, %c0_127, %c0_128] : memref<16x8x128xf32, #tpu.memory_space<vmem>>, vector<1x8x128xf32>
    %441 = vector.shape_cast %440 : vector<1x8x128xf32> to vector<8x128xf32>
    %cst_129 = arith.constant dense<0.000000e+00> : vector<8x128xf32>
    %442 = tpu.matmul %424, %1, %cst_129 {dimension_numbers = #tpu.dot_dimension_numbers<[1], [0], [0], [1], [0, 0, 1, 1], [], []>} : vector<8x32xf32>, vector<32x128xf32>, vector<8x128xf32> -> vector<8x128xf32>
    %443 = arith.addf %441, %442 : vector<8x128xf32>
    %444 = vector.extract_strided_slice %438 {offsets = [0, 0], sizes = [8, 32], strides = [1, 1]} : vector<8x128xf32> to vector<8x32xf32>
    %445 = arith.negf %444 : vector<8x32xf32>
    %446 = math.exp %445 : vector<8x32xf32>
    %cst_130 = arith.constant 1.000000e+00 : f32
    %447 = vector.broadcast %cst_130 : f32 to vector<8x32xf32>
    %448 = arith.addf %447, %446 : vector<8x32xf32>
    %449 = arith.divf %447, %448 : vector<8x32xf32>
    %450 = vector.extract_strided_slice %438 {offsets = [0, 32], sizes = [8, 32], strides = [1, 1]} : vector<8x128xf32> to vector<8x32xf32>
    %451 = arith.negf %450 : vector<8x32xf32>
    %452 = math.exp %451 : vector<8x32xf32>
    %cst_131 = arith.constant 1.000000e+00 : f32
    %453 = vector.broadcast %cst_131 : f32 to vector<8x32xf32>
    %454 = arith.addf %453, %452 : vector<8x32xf32>
    %455 = arith.divf %453, %454 : vector<8x32xf32>
    %456 = vector.extract_strided_slice %438 {offsets = [0, 64], sizes = [8, 32], strides = [1, 1]} : vector<8x128xf32> to vector<8x32xf32>
    %457 = math.tanh %456 : vector<8x32xf32>
    %458 = vector.extract_strided_slice %438 {offsets = [0, 96], sizes = [8, 32], strides = [1, 1]} : vector<8x128xf32> to vector<8x32xf32>
    %459 = arith.negf %458 : vector<8x32xf32>
    %460 = math.exp %459 : vector<8x32xf32>
    %cst_132 = arith.constant 1.000000e+00 : f32
    %461 = vector.broadcast %cst_132 : f32 to vector<8x32xf32>
    %462 = arith.addf %461, %460 : vector<8x32xf32>
    %463 = arith.divf %461, %462 : vector<8x32xf32>
    %464 = arith.mulf %455, %397 : vector<8x32xf32>
    %465 = arith.mulf %449, %457 : vector<8x32xf32>
    %466 = arith.addf %464, %465 : vector<8x32xf32>
    %467 = math.tanh %466 : vector<8x32xf32>
    %468 = arith.mulf %463, %467 : vector<8x32xf32>
    %469 = vector.extract_strided_slice %443 {offsets = [0, 0], sizes = [8, 32], strides = [1, 1]} : vector<8x128xf32> to vector<8x32xf32>
    %470 = arith.negf %469 : vector<8x32xf32>
    %471 = math.exp %470 : vector<8x32xf32>
    %cst_133 = arith.constant 1.000000e+00 : f32
    %472 = vector.broadcast %cst_133 : f32 to vector<8x32xf32>
    %473 = arith.addf %472, %471 : vector<8x32xf32>
    %474 = arith.divf %472, %473 : vector<8x32xf32>
    %475 = vector.extract_strided_slice %443 {offsets = [0, 32], sizes = [8, 32], strides = [1, 1]} : vector<8x128xf32> to vector<8x32xf32>
    %476 = arith.negf %475 : vector<8x32xf32>
    %477 = math.exp %476 : vector<8x32xf32>
    %cst_134 = arith.constant 1.000000e+00 : f32
    %478 = vector.broadcast %cst_134 : f32 to vector<8x32xf32>
    %479 = arith.addf %478, %477 : vector<8x32xf32>
    %480 = arith.divf %478, %479 : vector<8x32xf32>
    %481 = vector.extract_strided_slice %443 {offsets = [0, 64], sizes = [8, 32], strides = [1, 1]} : vector<8x128xf32> to vector<8x32xf32>
    %482 = math.tanh %481 : vector<8x32xf32>
    %483 = vector.extract_strided_slice %443 {offsets = [0, 96], sizes = [8, 32], strides = [1, 1]} : vector<8x128xf32> to vector<8x32xf32>
    %484 = arith.negf %483 : vector<8x32xf32>
    %485 = math.exp %484 : vector<8x32xf32>
    %cst_135 = arith.constant 1.000000e+00 : f32
    %486 = vector.broadcast %cst_135 : f32 to vector<8x32xf32>
    %487 = arith.addf %486, %485 : vector<8x32xf32>
    %488 = arith.divf %486, %487 : vector<8x32xf32>
    %489 = arith.mulf %480, %422 : vector<8x32xf32>
    %490 = arith.mulf %474, %482 : vector<8x32xf32>
    %491 = arith.addf %489, %490 : vector<8x32xf32>
    %492 = math.tanh %491 : vector<8x32xf32>
    %493 = arith.mulf %488, %492 : vector<8x32xf32>
    %494 = arith.index_cast %c6_i32 : i32 to index
    %c0_136 = arith.constant 0 : index
    %c0_137 = arith.constant 0 : index
    %495 = vector.load %arg16[%494, %c0_136, %c0_137] : memref<16x8x32xf32, #tpu.memory_space<vmem>>, vector<1x8x32xf32>
    %496 = vector.shape_cast %495 : vector<1x8x32xf32> to vector<8x32xf32>
    %497 = vector.shape_cast %468 : vector<8x32xf32> to vector<1x8x32xf32>
    tpu.vector_store %arg16[%494, %c0_136, %c0_137], %497 {strides = array<i32>} : memref<16x8x32xf32, #tpu.memory_space<vmem>>, vector<1x8x32xf32>,
    %498 = arith.index_cast %433 : i32 to index
    %c0_138 = arith.constant 0 : index
    %c0_139 = arith.constant 0 : index
    %499 = vector.load %arg17[%498, %c0_138, %c0_139] : memref<16x8x32xf32, #tpu.memory_space<vmem>>, vector<1x8x32xf32>
    %500 = vector.shape_cast %499 : vector<1x8x32xf32> to vector<8x32xf32>
    %501 = vector.shape_cast %493 : vector<8x32xf32> to vector<1x8x32xf32>
    tpu.vector_store %arg17[%498, %c0_138, %c0_139], %501 {strides = array<i32>} : memref<16x8x32xf32, #tpu.memory_space<vmem>>, vector<1x8x32xf32>,
    %c7_i32 = arith.constant 7 : i32
    %c15_i32_140 = arith.constant 15 : i32
    %502 = arith.subi %c15_i32_140, %c7_i32 : i32
    %503 = arith.index_cast %c7_i32 : i32 to index
    %c0_141 = arith.constant 0 : index
    %c0_142 = arith.constant 0 : index
    %504 = vector.load %arg18[%503, %c0_141, %c0_142] : memref<16x8x128xf32, #tpu.memory_space<vmem>>, vector<1x8x128xf32>
    %505 = vector.shape_cast %504 : vector<1x8x128xf32> to vector<8x128xf32>
    %cst_143 = arith.constant dense<0.000000e+00> : vector<8x128xf32>
    %506 = tpu.matmul %468, %0, %cst_143 {dimension_numbers = #tpu.dot_dimension_numbers<[1], [0], [0], [1], [0, 0, 1, 1], [], []>} : vector<8x32xf32>, vector<32x128xf32>, vector<8x128xf32> -> vector<8x128xf32>
    %507 = arith.addf %505, %506 : vector<8x128xf32>
    %508 = arith.index_cast %502 : i32 to index
    %c0_144 = arith.constant 0 : index
    %c0_145 = arith.constant 0 : index
    %509 = vector.load %arg19[%508, %c0_144, %c0_145] : memref<16x8x128xf32, #tpu.memory_space<vmem>>, vector<1x8x128xf32>
    %510 = vector.shape_cast %509 : vector<1x8x128xf32> to vector<8x128xf32>
    %cst_146 = arith.constant dense<0.000000e+00> : vector<8x128xf32>
    %511 = tpu.matmul %493, %1, %cst_146 {dimension_numbers = #tpu.dot_dimension_numbers<[1], [0], [0], [1], [0, 0, 1, 1], [], []>} : vector<8x32xf32>, vector<32x128xf32>, vector<8x128xf32> -> vector<8x128xf32>
    %512 = arith.addf %510, %511 : vector<8x128xf32>
    %513 = vector.extract_strided_slice %507 {offsets = [0, 0], sizes = [8, 32], strides = [1, 1]} : vector<8x128xf32> to vector<8x32xf32>
    %514 = arith.negf %513 : vector<8x32xf32>
    %515 = math.exp %514 : vector<8x32xf32>
    %cst_147 = arith.constant 1.000000e+00 : f32
    %516 = vector.broadcast %cst_147 : f32 to vector<8x32xf32>
    %517 = arith.addf %516, %515 : vector<8x32xf32>
    %518 = arith.divf %516, %517 : vector<8x32xf32>
    %519 = vector.extract_strided_slice %507 {offsets = [0, 32], sizes = [8, 32], strides = [1, 1]} : vector<8x128xf32> to vector<8x32xf32>
    %520 = arith.negf %519 : vector<8x32xf32>
    %521 = math.exp %520 : vector<8x32xf32>
    %cst_148 = arith.constant 1.000000e+00 : f32
    %522 = vector.broadcast %cst_148 : f32 to vector<8x32xf32>
    %523 = arith.addf %522, %521 : vector<8x32xf32>
    %524 = arith.divf %522, %523 : vector<8x32xf32>
    %525 = vector.extract_strided_slice %507 {offsets = [0, 64], sizes = [8, 32], strides = [1, 1]} : vector<8x128xf32> to vector<8x32xf32>
    %526 = math.tanh %525 : vector<8x32xf32>
    %527 = vector.extract_strided_slice %507 {offsets = [0, 96], sizes = [8, 32], strides = [1, 1]} : vector<8x128xf32> to vector<8x32xf32>
    %528 = arith.negf %527 : vector<8x32xf32>
    %529 = math.exp %528 : vector<8x32xf32>
    %cst_149 = arith.constant 1.000000e+00 : f32
    %530 = vector.broadcast %cst_149 : f32 to vector<8x32xf32>
    %531 = arith.addf %530, %529 : vector<8x32xf32>
    %532 = arith.divf %530, %531 : vector<8x32xf32>
    %533 = arith.mulf %524, %466 : vector<8x32xf32>
    %534 = arith.mulf %518, %526 : vector<8x32xf32>
    %535 = arith.addf %533, %534 : vector<8x32xf32>
    %536 = math.tanh %535 : vector<8x32xf32>
    %537 = arith.mulf %532, %536 : vector<8x32xf32>
    %538 = vector.extract_strided_slice %512 {offsets = [0, 0], sizes = [8, 32], strides = [1, 1]} : vector<8x128xf32> to vector<8x32xf32>
    %539 = arith.negf %538 : vector<8x32xf32>
    %540 = math.exp %539 : vector<8x32xf32>
    %cst_150 = arith.constant 1.000000e+00 : f32
    %541 = vector.broadcast %cst_150 : f32 to vector<8x32xf32>
    %542 = arith.addf %541, %540 : vector<8x32xf32>
    %543 = arith.divf %541, %542 : vector<8x32xf32>
    %544 = vector.extract_strided_slice %512 {offsets = [0, 32], sizes = [8, 32], strides = [1, 1]} : vector<8x128xf32> to vector<8x32xf32>
    %545 = arith.negf %544 : vector<8x32xf32>
    %546 = math.exp %545 : vector<8x32xf32>
    %cst_151 = arith.constant 1.000000e+00 : f32
    %547 = vector.broadcast %cst_151 : f32 to vector<8x32xf32>
    %548 = arith.addf %547, %546 : vector<8x32xf32>
    %549 = arith.divf %547, %548 : vector<8x32xf32>
    %550 = vector.extract_strided_slice %512 {offsets = [0, 64], sizes = [8, 32], strides = [1, 1]} : vector<8x128xf32> to vector<8x32xf32>
    %551 = math.tanh %550 : vector<8x32xf32>
    %552 = vector.extract_strided_slice %512 {offsets = [0, 96], sizes = [8, 32], strides = [1, 1]} : vector<8x128xf32> to vector<8x32xf32>
    %553 = arith.negf %552 : vector<8x32xf32>
    %554 = math.exp %553 : vector<8x32xf32>
    %cst_152 = arith.constant 1.000000e+00 : f32
    %555 = vector.broadcast %cst_152 : f32 to vector<8x32xf32>
    %556 = arith.addf %555, %554 : vector<8x32xf32>
    %557 = arith.divf %555, %556 : vector<8x32xf32>
    %558 = arith.mulf %549, %491 : vector<8x32xf32>
    %559 = arith.mulf %543, %551 : vector<8x32xf32>
    %560 = arith.addf %558, %559 : vector<8x32xf32>
    %561 = math.tanh %560 : vector<8x32xf32>
    %562 = arith.mulf %557, %561 : vector<8x32xf32>
    %563 = arith.index_cast %c7_i32 : i32 to index
    %c0_153 = arith.constant 0 : index
    %c0_154 = arith.constant 0 : index
    %564 = vector.load %arg16[%563, %c0_153, %c0_154] : memref<16x8x32xf32, #tpu.memory_space<vmem>>, vector<1x8x32xf32>
    %565 = vector.shape_cast %564 : vector<1x8x32xf32> to vector<8x32xf32>
    %566 = vector.shape_cast %537 : vector<8x32xf32> to vector<1x8x32xf32>
    tpu.vector_store %arg16[%563, %c0_153, %c0_154], %566 {strides = array<i32>} : memref<16x8x32xf32, #tpu.memory_space<vmem>>, vector<1x8x32xf32>,
    %567 = arith.index_cast %502 : i32 to index
    %c0_155 = arith.constant 0 : index
    %c0_156 = arith.constant 0 : index
    %568 = vector.load %arg17[%567, %c0_155, %c0_156] : memref<16x8x32xf32, #tpu.memory_space<vmem>>, vector<1x8x32xf32>
    %569 = vector.shape_cast %568 : vector<1x8x32xf32> to vector<8x32xf32>
    %570 = vector.shape_cast %562 : vector<8x32xf32> to vector<1x8x32xf32>
    tpu.vector_store %arg17[%567, %c0_155, %c0_156], %570 {strides = array<i32>} : memref<16x8x32xf32, #tpu.memory_space<vmem>>, vector<1x8x32xf32>,
    %c8_i32 = arith.constant 8 : i32
    %c15_i32_157 = arith.constant 15 : i32
    %571 = arith.subi %c15_i32_157, %c8_i32 : i32
    %572 = arith.index_cast %c8_i32 : i32 to index
    %c0_158 = arith.constant 0 : index
    %c0_159 = arith.constant 0 : index
    %573 = vector.load %arg18[%572, %c0_158, %c0_159] : memref<16x8x128xf32, #tpu.memory_space<vmem>>, vector<1x8x128xf32>
    %574 = vector.shape_cast %573 : vector<1x8x128xf32> to vector<8x128xf32>
    %cst_160 = arith.constant dense<0.000000e+00> : vector<8x128xf32>
    %575 = tpu.matmul %537, %0, %cst_160 {dimension_numbers = #tpu.dot_dimension_numbers<[1], [0], [0], [1], [0, 0, 1, 1], [], []>} : vector<8x32xf32>, vector<32x128xf32>, vector<8x128xf32> -> vector<8x128xf32>
    %576 = arith.addf %574, %575 : vector<8x128xf32>
    %577 = arith.index_cast %571 : i32 to index
    %c0_161 = arith.constant 0 : index
    %c0_162 = arith.constant 0 : index
    %578 = vector.load %arg19[%577, %c0_161, %c0_162] : memref<16x8x128xf32, #tpu.memory_space<vmem>>, vector<1x8x128xf32>
    %579 = vector.shape_cast %578 : vector<1x8x128xf32> to vector<8x128xf32>
    %cst_163 = arith.constant dense<0.000000e+00> : vector<8x128xf32>
    %580 = tpu.matmul %562, %1, %cst_163 {dimension_numbers = #tpu.dot_dimension_numbers<[1], [0], [0], [1], [0, 0, 1, 1], [], []>} : vector<8x32xf32>, vector<32x128xf32>, vector<8x128xf32> -> vector<8x128xf32>
    %581 = arith.addf %579, %580 : vector<8x128xf32>
    %582 = vector.extract_strided_slice %576 {offsets = [0, 0], sizes = [8, 32], strides = [1, 1]} : vector<8x128xf32> to vector<8x32xf32>
    %583 = arith.negf %582 : vector<8x32xf32>
    %584 = math.exp %583 : vector<8x32xf32>
    %cst_164 = arith.constant 1.000000e+00 : f32
    %585 = vector.broadcast %cst_164 : f32 to vector<8x32xf32>
    %586 = arith.addf %585, %584 : vector<8x32xf32>
    %587 = arith.divf %585, %586 : vector<8x32xf32>
    %588 = vector.extract_strided_slice %576 {offsets = [0, 32], sizes = [8, 32], strides = [1, 1]} : vector<8x128xf32> to vector<8x32xf32>
    %589 = arith.negf %588 : vector<8x32xf32>
    %590 = math.exp %589 : vector<8x32xf32>
    %cst_165 = arith.constant 1.000000e+00 : f32
    %591 = vector.broadcast %cst_165 : f32 to vector<8x32xf32>
    %592 = arith.addf %591, %590 : vector<8x32xf32>
    %593 = arith.divf %591, %592 : vector<8x32xf32>
    %594 = vector.extract_strided_slice %576 {offsets = [0, 64], sizes = [8, 32], strides = [1, 1]} : vector<8x128xf32> to vector<8x32xf32>
    %595 = math.tanh %594 : vector<8x32xf32>
    %596 = vector.extract_strided_slice %576 {offsets = [0, 96], sizes = [8, 32], strides = [1, 1]} : vector<8x128xf32> to vector<8x32xf32>
    %597 = arith.negf %596 : vector<8x32xf32>
    %598 = math.exp %597 : vector<8x32xf32>
    %cst_166 = arith.constant 1.000000e+00 : f32
    %599 = vector.broadcast %cst_166 : f32 to vector<8x32xf32>
    %600 = arith.addf %599, %598 : vector<8x32xf32>
    %601 = arith.divf %599, %600 : vector<8x32xf32>
    %602 = arith.mulf %593, %535 : vector<8x32xf32>
    %603 = arith.mulf %587, %595 : vector<8x32xf32>
    %604 = arith.addf %602, %603 : vector<8x32xf32>
    %605 = math.tanh %604 : vector<8x32xf32>
    %606 = arith.mulf %601, %605 : vector<8x32xf32>
    %607 = vector.extract_strided_slice %581 {offsets = [0, 0], sizes = [8, 32], strides = [1, 1]} : vector<8x128xf32> to vector<8x32xf32>
    %608 = arith.negf %607 : vector<8x32xf32>
    %609 = math.exp %608 : vector<8x32xf32>
    %cst_167 = arith.constant 1.000000e+00 : f32
    %610 = vector.broadcast %cst_167 : f32 to vector<8x32xf32>
    %611 = arith.addf %610, %609 : vector<8x32xf32>
    %612 = arith.divf %610, %611 : vector<8x32xf32>
    %613 = vector.extract_strided_slice %581 {offsets = [0, 32], sizes = [8, 32], strides = [1, 1]} : vector<8x128xf32> to vector<8x32xf32>
    %614 = arith.negf %613 : vector<8x32xf32>
    %615 = math.exp %614 : vector<8x32xf32>
    %cst_168 = arith.constant 1.000000e+00 : f32
    %616 = vector.broadcast %cst_168 : f32 to vector<8x32xf32>
    %617 = arith.addf %616, %615 : vector<8x32xf32>
    %618 = arith.divf %616, %617 : vector<8x32xf32>
    %619 = vector.extract_strided_slice %581 {offsets = [0, 64], sizes = [8, 32], strides = [1, 1]} : vector<8x128xf32> to vector<8x32xf32>
    %620 = math.tanh %619 : vector<8x32xf32>
    %621 = vector.extract_strided_slice %581 {offsets = [0, 96], sizes = [8, 32], strides = [1, 1]} : vector<8x128xf32> to vector<8x32xf32>
    %622 = arith.negf %621 : vector<8x32xf32>
    %623 = math.exp %622 : vector<8x32xf32>
    %cst_169 = arith.constant 1.000000e+00 : f32
    %624 = vector.broadcast %cst_169 : f32 to vector<8x32xf32>
    %625 = arith.addf %624, %623 : vector<8x32xf32>
    %626 = arith.divf %624, %625 : vector<8x32xf32>
    %627 = arith.mulf %618, %560 : vector<8x32xf32>
    %628 = arith.mulf %612, %620 : vector<8x32xf32>
    %629 = arith.addf %627, %628 : vector<8x32xf32>
    %630 = math.tanh %629 : vector<8x32xf32>
    %631 = arith.mulf %626, %630 : vector<8x32xf32>
    %632 = arith.index_cast %c8_i32 : i32 to index
    %c0_170 = arith.constant 0 : index
    %c0_171 = arith.constant 0 : index
    %633 = vector.load %arg16[%632, %c0_170, %c0_171] : memref<16x8x32xf32, #tpu.memory_space<vmem>>, vector<1x8x32xf32>
    %634 = vector.shape_cast %633 : vector<1x8x32xf32> to vector<8x32xf32>
    %635 = vector.shape_cast %606 : vector<8x32xf32> to vector<1x8x32xf32>
    tpu.vector_store %arg16[%632, %c0_170, %c0_171], %635 {strides = array<i32>} : memref<16x8x32xf32, #tpu.memory_space<vmem>>, vector<1x8x32xf32>,
    %636 = arith.index_cast %571 : i32 to index
    %c0_172 = arith.constant 0 : index
    %c0_173 = arith.constant 0 : index
    %637 = vector.load %arg17[%636, %c0_172, %c0_173] : memref<16x8x32xf32, #tpu.memory_space<vmem>>, vector<1x8x32xf32>
    %638 = vector.shape_cast %637 : vector<1x8x32xf32> to vector<8x32xf32>
    %639 = vector.shape_cast %631 : vector<8x32xf32> to vector<1x8x32xf32>
    tpu.vector_store %arg17[%636, %c0_172, %c0_173], %639 {strides = array<i32>} : memref<16x8x32xf32, #tpu.memory_space<vmem>>, vector<1x8x32xf32>,
    %c9_i32 = arith.constant 9 : i32
    %c15_i32_174 = arith.constant 15 : i32
    %640 = arith.subi %c15_i32_174, %c9_i32 : i32
    %641 = arith.index_cast %c9_i32 : i32 to index
    %c0_175 = arith.constant 0 : index
    %c0_176 = arith.constant 0 : index
    %642 = vector.load %arg18[%641, %c0_175, %c0_176] : memref<16x8x128xf32, #tpu.memory_space<vmem>>, vector<1x8x128xf32>
    %643 = vector.shape_cast %642 : vector<1x8x128xf32> to vector<8x128xf32>
    %cst_177 = arith.constant dense<0.000000e+00> : vector<8x128xf32>
    %644 = tpu.matmul %606, %0, %cst_177 {dimension_numbers = #tpu.dot_dimension_numbers<[1], [0], [0], [1], [0, 0, 1, 1], [], []>} : vector<8x32xf32>, vector<32x128xf32>, vector<8x128xf32> -> vector<8x128xf32>
    %645 = arith.addf %643, %644 : vector<8x128xf32>
    %646 = arith.index_cast %640 : i32 to index
    %c0_178 = arith.constant 0 : index
    %c0_179 = arith.constant 0 : index
    %647 = vector.load %arg19[%646, %c0_178, %c0_179] : memref<16x8x128xf32, #tpu.memory_space<vmem>>, vector<1x8x128xf32>
    %648 = vector.shape_cast %647 : vector<1x8x128xf32> to vector<8x128xf32>
    %cst_180 = arith.constant dense<0.000000e+00> : vector<8x128xf32>
    %649 = tpu.matmul %631, %1, %cst_180 {dimension_numbers = #tpu.dot_dimension_numbers<[1], [0], [0], [1], [0, 0, 1, 1], [], []>} : vector<8x32xf32>, vector<32x128xf32>, vector<8x128xf32> -> vector<8x128xf32>
    %650 = arith.addf %648, %649 : vector<8x128xf32>
    %651 = vector.extract_strided_slice %645 {offsets = [0, 0], sizes = [8, 32], strides = [1, 1]} : vector<8x128xf32> to vector<8x32xf32>
    %652 = arith.negf %651 : vector<8x32xf32>
    %653 = math.exp %652 : vector<8x32xf32>
    %cst_181 = arith.constant 1.000000e+00 : f32
    %654 = vector.broadcast %cst_181 : f32 to vector<8x32xf32>
    %655 = arith.addf %654, %653 : vector<8x32xf32>
    %656 = arith.divf %654, %655 : vector<8x32xf32>
    %657 = vector.extract_strided_slice %645 {offsets = [0, 32], sizes = [8, 32], strides = [1, 1]} : vector<8x128xf32> to vector<8x32xf32>
    %658 = arith.negf %657 : vector<8x32xf32>
    %659 = math.exp %658 : vector<8x32xf32>
    %cst_182 = arith.constant 1.000000e+00 : f32
    %660 = vector.broadcast %cst_182 : f32 to vector<8x32xf32>
    %661 = arith.addf %660, %659 : vector<8x32xf32>
    %662 = arith.divf %660, %661 : vector<8x32xf32>
    %663 = vector.extract_strided_slice %645 {offsets = [0, 64], sizes = [8, 32], strides = [1, 1]} : vector<8x128xf32> to vector<8x32xf32>
    %664 = math.tanh %663 : vector<8x32xf32>
    %665 = vector.extract_strided_slice %645 {offsets = [0, 96], sizes = [8, 32], strides = [1, 1]} : vector<8x128xf32> to vector<8x32xf32>
    %666 = arith.negf %665 : vector<8x32xf32>
    %667 = math.exp %666 : vector<8x32xf32>
    %cst_183 = arith.constant 1.000000e+00 : f32
    %668 = vector.broadcast %cst_183 : f32 to vector<8x32xf32>
    %669 = arith.addf %668, %667 : vector<8x32xf32>
    %670 = arith.divf %668, %669 : vector<8x32xf32>
    %671 = arith.mulf %662, %604 : vector<8x32xf32>
    %672 = arith.mulf %656, %664 : vector<8x32xf32>
    %673 = arith.addf %671, %672 : vector<8x32xf32>
    %674 = math.tanh %673 : vector<8x32xf32>
    %675 = arith.mulf %670, %674 : vector<8x32xf32>
    %676 = vector.extract_strided_slice %650 {offsets = [0, 0], sizes = [8, 32], strides = [1, 1]} : vector<8x128xf32> to vector<8x32xf32>
    %677 = arith.negf %676 : vector<8x32xf32>
    %678 = math.exp %677 : vector<8x32xf32>
    %cst_184 = arith.constant 1.000000e+00 : f32
    %679 = vector.broadcast %cst_184 : f32 to vector<8x32xf32>
    %680 = arith.addf %679, %678 : vector<8x32xf32>
    %681 = arith.divf %679, %680 : vector<8x32xf32>
    %682 = vector.extract_strided_slice %650 {offsets = [0, 32], sizes = [8, 32], strides = [1, 1]} : vector<8x128xf32> to vector<8x32xf32>
    %683 = arith.negf %682 : vector<8x32xf32>
    %684 = math.exp %683 : vector<8x32xf32>
    %cst_185 = arith.constant 1.000000e+00 : f32
    %685 = vector.broadcast %cst_185 : f32 to vector<8x32xf32>
    %686 = arith.addf %685, %684 : vector<8x32xf32>
    %687 = arith.divf %685, %686 : vector<8x32xf32>
    %688 = vector.extract_strided_slice %650 {offsets = [0, 64], sizes = [8, 32], strides = [1, 1]} : vector<8x128xf32> to vector<8x32xf32>
    %689 = math.tanh %688 : vector<8x32xf32>
    %690 = vector.extract_strided_slice %650 {offsets = [0, 96], sizes = [8, 32], strides = [1, 1]} : vector<8x128xf32> to vector<8x32xf32>
    %691 = arith.negf %690 : vector<8x32xf32>
    %692 = math.exp %691 : vector<8x32xf32>
    %cst_186 = arith.constant 1.000000e+00 : f32
    %693 = vector.broadcast %cst_186 : f32 to vector<8x32xf32>
    %694 = arith.addf %693, %692 : vector<8x32xf32>
    %695 = arith.divf %693, %694 : vector<8x32xf32>
    %696 = arith.mulf %687, %629 : vector<8x32xf32>
    %697 = arith.mulf %681, %689 : vector<8x32xf32>
    %698 = arith.addf %696, %697 : vector<8x32xf32>
    %699 = math.tanh %698 : vector<8x32xf32>
    %700 = arith.mulf %695, %699 : vector<8x32xf32>
    %701 = arith.index_cast %c9_i32 : i32 to index
    %c0_187 = arith.constant 0 : index
    %c0_188 = arith.constant 0 : index
    %702 = vector.load %arg16[%701, %c0_187, %c0_188] : memref<16x8x32xf32, #tpu.memory_space<vmem>>, vector<1x8x32xf32>
    %703 = vector.shape_cast %702 : vector<1x8x32xf32> to vector<8x32xf32>
    %704 = vector.shape_cast %675 : vector<8x32xf32> to vector<1x8x32xf32>
    tpu.vector_store %arg16[%701, %c0_187, %c0_188], %704 {strides = array<i32>} : memref<16x8x32xf32, #tpu.memory_space<vmem>>, vector<1x8x32xf32>,
    %705 = arith.index_cast %640 : i32 to index
    %c0_189 = arith.constant 0 : index
    %c0_190 = arith.constant 0 : index
    %706 = vector.load %arg17[%705, %c0_189, %c0_190] : memref<16x8x32xf32, #tpu.memory_space<vmem>>, vector<1x8x32xf32>
    %707 = vector.shape_cast %706 : vector<1x8x32xf32> to vector<8x32xf32>
    %708 = vector.shape_cast %700 : vector<8x32xf32> to vector<1x8x32xf32>
    tpu.vector_store %arg17[%705, %c0_189, %c0_190], %708 {strides = array<i32>} : memref<16x8x32xf32, #tpu.memory_space<vmem>>, vector<1x8x32xf32>,
    %c10_i32 = arith.constant 10 : i32
    %c15_i32_191 = arith.constant 15 : i32
    %709 = arith.subi %c15_i32_191, %c10_i32 : i32
    %710 = arith.index_cast %c10_i32 : i32 to index
    %c0_192 = arith.constant 0 : index
    %c0_193 = arith.constant 0 : index
    %711 = vector.load %arg18[%710, %c0_192, %c0_193] : memref<16x8x128xf32, #tpu.memory_space<vmem>>, vector<1x8x128xf32>
    %712 = vector.shape_cast %711 : vector<1x8x128xf32> to vector<8x128xf32>
    %cst_194 = arith.constant dense<0.000000e+00> : vector<8x128xf32>
    %713 = tpu.matmul %675, %0, %cst_194 {dimension_numbers = #tpu.dot_dimension_numbers<[1], [0], [0], [1], [0, 0, 1, 1], [], []>} : vector<8x32xf32>, vector<32x128xf32>, vector<8x128xf32> -> vector<8x128xf32>
    %714 = arith.addf %712, %713 : vector<8x128xf32>
    %715 = arith.index_cast %709 : i32 to index
    %c0_195 = arith.constant 0 : index
    %c0_196 = arith.constant 0 : index
    %716 = vector.load %arg19[%715, %c0_195, %c0_196] : memref<16x8x128xf32, #tpu.memory_space<vmem>>, vector<1x8x128xf32>
    %717 = vector.shape_cast %716 : vector<1x8x128xf32> to vector<8x128xf32>
    %cst_197 = arith.constant dense<0.000000e+00> : vector<8x128xf32>
    %718 = tpu.matmul %700, %1, %cst_197 {dimension_numbers = #tpu.dot_dimension_numbers<[1], [0], [0], [1], [0, 0, 1, 1], [], []>} : vector<8x32xf32>, vector<32x128xf32>, vector<8x128xf32> -> vector<8x128xf32>
    %719 = arith.addf %717, %718 : vector<8x128xf32>
    %720 = vector.extract_strided_slice %714 {offsets = [0, 0], sizes = [8, 32], strides = [1, 1]} : vector<8x128xf32> to vector<8x32xf32>
    %721 = arith.negf %720 : vector<8x32xf32>
    %722 = math.exp %721 : vector<8x32xf32>
    %cst_198 = arith.constant 1.000000e+00 : f32
    %723 = vector.broadcast %cst_198 : f32 to vector<8x32xf32>
    %724 = arith.addf %723, %722 : vector<8x32xf32>
    %725 = arith.divf %723, %724 : vector<8x32xf32>
    %726 = vector.extract_strided_slice %714 {offsets = [0, 32], sizes = [8, 32], strides = [1, 1]} : vector<8x128xf32> to vector<8x32xf32>
    %727 = arith.negf %726 : vector<8x32xf32>
    %728 = math.exp %727 : vector<8x32xf32>
    %cst_199 = arith.constant 1.000000e+00 : f32
    %729 = vector.broadcast %cst_199 : f32 to vector<8x32xf32>
    %730 = arith.addf %729, %728 : vector<8x32xf32>
    %731 = arith.divf %729, %730 : vector<8x32xf32>
    %732 = vector.extract_strided_slice %714 {offsets = [0, 64], sizes = [8, 32], strides = [1, 1]} : vector<8x128xf32> to vector<8x32xf32>
    %733 = math.tanh %732 : vector<8x32xf32>
    %734 = vector.extract_strided_slice %714 {offsets = [0, 96], sizes = [8, 32], strides = [1, 1]} : vector<8x128xf32> to vector<8x32xf32>
    %735 = arith.negf %734 : vector<8x32xf32>
    %736 = math.exp %735 : vector<8x32xf32>
    %cst_200 = arith.constant 1.000000e+00 : f32
    %737 = vector.broadcast %cst_200 : f32 to vector<8x32xf32>
    %738 = arith.addf %737, %736 : vector<8x32xf32>
    %739 = arith.divf %737, %738 : vector<8x32xf32>
    %740 = arith.mulf %731, %673 : vector<8x32xf32>
    %741 = arith.mulf %725, %733 : vector<8x32xf32>
    %742 = arith.addf %740, %741 : vector<8x32xf32>
    %743 = math.tanh %742 : vector<8x32xf32>
    %744 = arith.mulf %739, %743 : vector<8x32xf32>
    %745 = vector.extract_strided_slice %719 {offsets = [0, 0], sizes = [8, 32], strides = [1, 1]} : vector<8x128xf32> to vector<8x32xf32>
    %746 = arith.negf %745 : vector<8x32xf32>
    %747 = math.exp %746 : vector<8x32xf32>
    %cst_201 = arith.constant 1.000000e+00 : f32
    %748 = vector.broadcast %cst_201 : f32 to vector<8x32xf32>
    %749 = arith.addf %748, %747 : vector<8x32xf32>
    %750 = arith.divf %748, %749 : vector<8x32xf32>
    %751 = vector.extract_strided_slice %719 {offsets = [0, 32], sizes = [8, 32], strides = [1, 1]} : vector<8x128xf32> to vector<8x32xf32>
    %752 = arith.negf %751 : vector<8x32xf32>
    %753 = math.exp %752 : vector<8x32xf32>
    %cst_202 = arith.constant 1.000000e+00 : f32
    %754 = vector.broadcast %cst_202 : f32 to vector<8x32xf32>
    %755 = arith.addf %754, %753 : vector<8x32xf32>
    %756 = arith.divf %754, %755 : vector<8x32xf32>
    %757 = vector.extract_strided_slice %719 {offsets = [0, 64], sizes = [8, 32], strides = [1, 1]} : vector<8x128xf32> to vector<8x32xf32>
    %758 = math.tanh %757 : vector<8x32xf32>
    %759 = vector.extract_strided_slice %719 {offsets = [0, 96], sizes = [8, 32], strides = [1, 1]} : vector<8x128xf32> to vector<8x32xf32>
    %760 = arith.negf %759 : vector<8x32xf32>
    %761 = math.exp %760 : vector<8x32xf32>
    %cst_203 = arith.constant 1.000000e+00 : f32
    %762 = vector.broadcast %cst_203 : f32 to vector<8x32xf32>
    %763 = arith.addf %762, %761 : vector<8x32xf32>
    %764 = arith.divf %762, %763 : vector<8x32xf32>
    %765 = arith.mulf %756, %698 : vector<8x32xf32>
    %766 = arith.mulf %750, %758 : vector<8x32xf32>
    %767 = arith.addf %765, %766 : vector<8x32xf32>
    %768 = math.tanh %767 : vector<8x32xf32>
    %769 = arith.mulf %764, %768 : vector<8x32xf32>
    %770 = arith.index_cast %c10_i32 : i32 to index
    %c0_204 = arith.constant 0 : index
    %c0_205 = arith.constant 0 : index
    %771 = vector.load %arg16[%770, %c0_204, %c0_205] : memref<16x8x32xf32, #tpu.memory_space<vmem>>, vector<1x8x32xf32>
    %772 = vector.shape_cast %771 : vector<1x8x32xf32> to vector<8x32xf32>
    %773 = vector.shape_cast %744 : vector<8x32xf32> to vector<1x8x32xf32>
    tpu.vector_store %arg16[%770, %c0_204, %c0_205], %773 {strides = array<i32>} : memref<16x8x32xf32, #tpu.memory_space<vmem>>, vector<1x8x32xf32>,
    %774 = arith.index_cast %709 : i32 to index
    %c0_206 = arith.constant 0 : index
    %c0_207 = arith.constant 0 : index
    %775 = vector.load %arg17[%774, %c0_206, %c0_207] : memref<16x8x32xf32, #tpu.memory_space<vmem>>, vector<1x8x32xf32>
    %776 = vector.shape_cast %775 : vector<1x8x32xf32> to vector<8x32xf32>
    %777 = vector.shape_cast %769 : vector<8x32xf32> to vector<1x8x32xf32>
    tpu.vector_store %arg17[%774, %c0_206, %c0_207], %777 {strides = array<i32>} : memref<16x8x32xf32, #tpu.memory_space<vmem>>, vector<1x8x32xf32>,
    %c11_i32 = arith.constant 11 : i32
    %c15_i32_208 = arith.constant 15 : i32
    %778 = arith.subi %c15_i32_208, %c11_i32 : i32
    %779 = arith.index_cast %c11_i32 : i32 to index
    %c0_209 = arith.constant 0 : index
    %c0_210 = arith.constant 0 : index
    %780 = vector.load %arg18[%779, %c0_209, %c0_210] : memref<16x8x128xf32, #tpu.memory_space<vmem>>, vector<1x8x128xf32>
    %781 = vector.shape_cast %780 : vector<1x8x128xf32> to vector<8x128xf32>
    %cst_211 = arith.constant dense<0.000000e+00> : vector<8x128xf32>
    %782 = tpu.matmul %744, %0, %cst_211 {dimension_numbers = #tpu.dot_dimension_numbers<[1], [0], [0], [1], [0, 0, 1, 1], [], []>} : vector<8x32xf32>, vector<32x128xf32>, vector<8x128xf32> -> vector<8x128xf32>
    %783 = arith.addf %781, %782 : vector<8x128xf32>
    %784 = arith.index_cast %778 : i32 to index
    %c0_212 = arith.constant 0 : index
    %c0_213 = arith.constant 0 : index
    %785 = vector.load %arg19[%784, %c0_212, %c0_213] : memref<16x8x128xf32, #tpu.memory_space<vmem>>, vector<1x8x128xf32>
    %786 = vector.shape_cast %785 : vector<1x8x128xf32> to vector<8x128xf32>
    %cst_214 = arith.constant dense<0.000000e+00> : vector<8x128xf32>
    %787 = tpu.matmul %769, %1, %cst_214 {dimension_numbers = #tpu.dot_dimension_numbers<[1], [0], [0], [1], [0, 0, 1, 1], [], []>} : vector<8x32xf32>, vector<32x128xf32>, vector<8x128xf32> -> vector<8x128xf32>
    %788 = arith.addf %786, %787 : vector<8x128xf32>
    %789 = vector.extract_strided_slice %783 {offsets = [0, 0], sizes = [8, 32], strides = [1, 1]} : vector<8x128xf32> to vector<8x32xf32>
    %790 = arith.negf %789 : vector<8x32xf32>
    %791 = math.exp %790 : vector<8x32xf32>
    %cst_215 = arith.constant 1.000000e+00 : f32
    %792 = vector.broadcast %cst_215 : f32 to vector<8x32xf32>
    %793 = arith.addf %792, %791 : vector<8x32xf32>
    %794 = arith.divf %792, %793 : vector<8x32xf32>
    %795 = vector.extract_strided_slice %783 {offsets = [0, 32], sizes = [8, 32], strides = [1, 1]} : vector<8x128xf32> to vector<8x32xf32>
    %796 = arith.negf %795 : vector<8x32xf32>
    %797 = math.exp %796 : vector<8x32xf32>
    %cst_216 = arith.constant 1.000000e+00 : f32
    %798 = vector.broadcast %cst_216 : f32 to vector<8x32xf32>
    %799 = arith.addf %798, %797 : vector<8x32xf32>
    %800 = arith.divf %798, %799 : vector<8x32xf32>
    %801 = vector.extract_strided_slice %783 {offsets = [0, 64], sizes = [8, 32], strides = [1, 1]} : vector<8x128xf32> to vector<8x32xf32>
    %802 = math.tanh %801 : vector<8x32xf32>
    %803 = vector.extract_strided_slice %783 {offsets = [0, 96], sizes = [8, 32], strides = [1, 1]} : vector<8x128xf32> to vector<8x32xf32>
    %804 = arith.negf %803 : vector<8x32xf32>
    %805 = math.exp %804 : vector<8x32xf32>
    %cst_217 = arith.constant 1.000000e+00 : f32
    %806 = vector.broadcast %cst_217 : f32 to vector<8x32xf32>
    %807 = arith.addf %806, %805 : vector<8x32xf32>
    %808 = arith.divf %806, %807 : vector<8x32xf32>
    %809 = arith.mulf %800, %742 : vector<8x32xf32>
    %810 = arith.mulf %794, %802 : vector<8x32xf32>
    %811 = arith.addf %809, %810 : vector<8x32xf32>
    %812 = math.tanh %811 : vector<8x32xf32>
    %813 = arith.mulf %808, %812 : vector<8x32xf32>
    %814 = vector.extract_strided_slice %788 {offsets = [0, 0], sizes = [8, 32], strides = [1, 1]} : vector<8x128xf32> to vector<8x32xf32>
    %815 = arith.negf %814 : vector<8x32xf32>
    %816 = math.exp %815 : vector<8x32xf32>
    %cst_218 = arith.constant 1.000000e+00 : f32
    %817 = vector.broadcast %cst_218 : f32 to vector<8x32xf32>
    %818 = arith.addf %817, %816 : vector<8x32xf32>
    %819 = arith.divf %817, %818 : vector<8x32xf32>
    %820 = vector.extract_strided_slice %788 {offsets = [0, 32], sizes = [8, 32], strides = [1, 1]} : vector<8x128xf32> to vector<8x32xf32>
    %821 = arith.negf %820 : vector<8x32xf32>
    %822 = math.exp %821 : vector<8x32xf32>
    %cst_219 = arith.constant 1.000000e+00 : f32
    %823 = vector.broadcast %cst_219 : f32 to vector<8x32xf32>
    %824 = arith.addf %823, %822 : vector<8x32xf32>
    %825 = arith.divf %823, %824 : vector<8x32xf32>
    %826 = vector.extract_strided_slice %788 {offsets = [0, 64], sizes = [8, 32], strides = [1, 1]} : vector<8x128xf32> to vector<8x32xf32>
    %827 = math.tanh %826 : vector<8x32xf32>
    %828 = vector.extract_strided_slice %788 {offsets = [0, 96], sizes = [8, 32], strides = [1, 1]} : vector<8x128xf32> to vector<8x32xf32>
    %829 = arith.negf %828 : vector<8x32xf32>
    %830 = math.exp %829 : vector<8x32xf32>
    %cst_220 = arith.constant 1.000000e+00 : f32
    %831 = vector.broadcast %cst_220 : f32 to vector<8x32xf32>
    %832 = arith.addf %831, %830 : vector<8x32xf32>
    %833 = arith.divf %831, %832 : vector<8x32xf32>
    %834 = arith.mulf %825, %767 : vector<8x32xf32>
    %835 = arith.mulf %819, %827 : vector<8x32xf32>
    %836 = arith.addf %834, %835 : vector<8x32xf32>
    %837 = math.tanh %836 : vector<8x32xf32>
    %838 = arith.mulf %833, %837 : vector<8x32xf32>
    %839 = arith.index_cast %c11_i32 : i32 to index
    %c0_221 = arith.constant 0 : index
    %c0_222 = arith.constant 0 : index
    %840 = vector.load %arg16[%839, %c0_221, %c0_222] : memref<16x8x32xf32, #tpu.memory_space<vmem>>, vector<1x8x32xf32>
    %841 = vector.shape_cast %840 : vector<1x8x32xf32> to vector<8x32xf32>
    %842 = vector.shape_cast %813 : vector<8x32xf32> to vector<1x8x32xf32>
    tpu.vector_store %arg16[%839, %c0_221, %c0_222], %842 {strides = array<i32>} : memref<16x8x32xf32, #tpu.memory_space<vmem>>, vector<1x8x32xf32>,
    %843 = arith.index_cast %778 : i32 to index
    %c0_223 = arith.constant 0 : index
    %c0_224 = arith.constant 0 : index
    %844 = vector.load %arg17[%843, %c0_223, %c0_224] : memref<16x8x32xf32, #tpu.memory_space<vmem>>, vector<1x8x32xf32>
    %845 = vector.shape_cast %844 : vector<1x8x32xf32> to vector<8x32xf32>
    %846 = vector.shape_cast %838 : vector<8x32xf32> to vector<1x8x32xf32>
    tpu.vector_store %arg17[%843, %c0_223, %c0_224], %846 {strides = array<i32>} : memref<16x8x32xf32, #tpu.memory_space<vmem>>, vector<1x8x32xf32>,
    %c12_i32 = arith.constant 12 : i32
    %c15_i32_225 = arith.constant 15 : i32
    %847 = arith.subi %c15_i32_225, %c12_i32 : i32
    %848 = arith.index_cast %c12_i32 : i32 to index
    %c0_226 = arith.constant 0 : index
    %c0_227 = arith.constant 0 : index
    %849 = vector.load %arg18[%848, %c0_226, %c0_227] : memref<16x8x128xf32, #tpu.memory_space<vmem>>, vector<1x8x128xf32>
    %850 = vector.shape_cast %849 : vector<1x8x128xf32> to vector<8x128xf32>
    %cst_228 = arith.constant dense<0.000000e+00> : vector<8x128xf32>
    %851 = tpu.matmul %813, %0, %cst_228 {dimension_numbers = #tpu.dot_dimension_numbers<[1], [0], [0], [1], [0, 0, 1, 1], [], []>} : vector<8x32xf32>, vector<32x128xf32>, vector<8x128xf32> -> vector<8x128xf32>
    %852 = arith.addf %850, %851 : vector<8x128xf32>
    %853 = arith.index_cast %847 : i32 to index
    %c0_229 = arith.constant 0 : index
    %c0_230 = arith.constant 0 : index
    %854 = vector.load %arg19[%853, %c0_229, %c0_230] : memref<16x8x128xf32, #tpu.memory_space<vmem>>, vector<1x8x128xf32>
    %855 = vector.shape_cast %854 : vector<1x8x128xf32> to vector<8x128xf32>
    %cst_231 = arith.constant dense<0.000000e+00> : vector<8x128xf32>
    %856 = tpu.matmul %838, %1, %cst_231 {dimension_numbers = #tpu.dot_dimension_numbers<[1], [0], [0], [1], [0, 0, 1, 1], [], []>} : vector<8x32xf32>, vector<32x128xf32>, vector<8x128xf32> -> vector<8x128xf32>
    %857 = arith.addf %855, %856 : vector<8x128xf32>
    %858 = vector.extract_strided_slice %852 {offsets = [0, 0], sizes = [8, 32], strides = [1, 1]} : vector<8x128xf32> to vector<8x32xf32>
    %859 = arith.negf %858 : vector<8x32xf32>
    %860 = math.exp %859 : vector<8x32xf32>
    %cst_232 = arith.constant 1.000000e+00 : f32
    %861 = vector.broadcast %cst_232 : f32 to vector<8x32xf32>
    %862 = arith.addf %861, %860 : vector<8x32xf32>
    %863 = arith.divf %861, %862 : vector<8x32xf32>
    %864 = vector.extract_strided_slice %852 {offsets = [0, 32], sizes = [8, 32], strides = [1, 1]} : vector<8x128xf32> to vector<8x32xf32>
    %865 = arith.negf %864 : vector<8x32xf32>
    %866 = math.exp %865 : vector<8x32xf32>
    %cst_233 = arith.constant 1.000000e+00 : f32
    %867 = vector.broadcast %cst_233 : f32 to vector<8x32xf32>
    %868 = arith.addf %867, %866 : vector<8x32xf32>
    %869 = arith.divf %867, %868 : vector<8x32xf32>
    %870 = vector.extract_strided_slice %852 {offsets = [0, 64], sizes = [8, 32], strides = [1, 1]} : vector<8x128xf32> to vector<8x32xf32>
    %871 = math.tanh %870 : vector<8x32xf32>
    %872 = vector.extract_strided_slice %852 {offsets = [0, 96], sizes = [8, 32], strides = [1, 1]} : vector<8x128xf32> to vector<8x32xf32>
    %873 = arith.negf %872 : vector<8x32xf32>
    %874 = math.exp %873 : vector<8x32xf32>
    %cst_234 = arith.constant 1.000000e+00 : f32
    %875 = vector.broadcast %cst_234 : f32 to vector<8x32xf32>
    %876 = arith.addf %875, %874 : vector<8x32xf32>
    %877 = arith.divf %875, %876 : vector<8x32xf32>
    %878 = arith.mulf %869, %811 : vector<8x32xf32>
    %879 = arith.mulf %863, %871 : vector<8x32xf32>
    %880 = arith.addf %878, %879 : vector<8x32xf32>
    %881 = math.tanh %880 : vector<8x32xf32>
    %882 = arith.mulf %877, %881 : vector<8x32xf32>
    %883 = vector.extract_strided_slice %857 {offsets = [0, 0], sizes = [8, 32], strides = [1, 1]} : vector<8x128xf32> to vector<8x32xf32>
    %884 = arith.negf %883 : vector<8x32xf32>
    %885 = math.exp %884 : vector<8x32xf32>
    %cst_235 = arith.constant 1.000000e+00 : f32
    %886 = vector.broadcast %cst_235 : f32 to vector<8x32xf32>
    %887 = arith.addf %886, %885 : vector<8x32xf32>
    %888 = arith.divf %886, %887 : vector<8x32xf32>
    %889 = vector.extract_strided_slice %857 {offsets = [0, 32], sizes = [8, 32], strides = [1, 1]} : vector<8x128xf32> to vector<8x32xf32>
    %890 = arith.negf %889 : vector<8x32xf32>
    %891 = math.exp %890 : vector<8x32xf32>
    %cst_236 = arith.constant 1.000000e+00 : f32
    %892 = vector.broadcast %cst_236 : f32 to vector<8x32xf32>
    %893 = arith.addf %892, %891 : vector<8x32xf32>
    %894 = arith.divf %892, %893 : vector<8x32xf32>
    %895 = vector.extract_strided_slice %857 {offsets = [0, 64], sizes = [8, 32], strides = [1, 1]} : vector<8x128xf32> to vector<8x32xf32>
    %896 = math.tanh %895 : vector<8x32xf32>
    %897 = vector.extract_strided_slice %857 {offsets = [0, 96], sizes = [8, 32], strides = [1, 1]} : vector<8x128xf32> to vector<8x32xf32>
    %898 = arith.negf %897 : vector<8x32xf32>
    %899 = math.exp %898 : vector<8x32xf32>
    %cst_237 = arith.constant 1.000000e+00 : f32
    %900 = vector.broadcast %cst_237 : f32 to vector<8x32xf32>
    %901 = arith.addf %900, %899 : vector<8x32xf32>
    %902 = arith.divf %900, %901 : vector<8x32xf32>
    %903 = arith.mulf %894, %836 : vector<8x32xf32>
    %904 = arith.mulf %888, %896 : vector<8x32xf32>
    %905 = arith.addf %903, %904 : vector<8x32xf32>
    %906 = math.tanh %905 : vector<8x32xf32>
    %907 = arith.mulf %902, %906 : vector<8x32xf32>
    %908 = arith.index_cast %c12_i32 : i32 to index
    %c0_238 = arith.constant 0 : index
    %c0_239 = arith.constant 0 : index
    %909 = vector.load %arg16[%908, %c0_238, %c0_239] : memref<16x8x32xf32, #tpu.memory_space<vmem>>, vector<1x8x32xf32>
    %910 = vector.shape_cast %909 : vector<1x8x32xf32> to vector<8x32xf32>
    %911 = vector.shape_cast %882 : vector<8x32xf32> to vector<1x8x32xf32>
    tpu.vector_store %arg16[%908, %c0_238, %c0_239], %911 {strides = array<i32>} : memref<16x8x32xf32, #tpu.memory_space<vmem>>, vector<1x8x32xf32>,
    %912 = arith.index_cast %847 : i32 to index
    %c0_240 = arith.constant 0 : index
    %c0_241 = arith.constant 0 : index
    %913 = vector.load %arg17[%912, %c0_240, %c0_241] : memref<16x8x32xf32, #tpu.memory_space<vmem>>, vector<1x8x32xf32>
    %914 = vector.shape_cast %913 : vector<1x8x32xf32> to vector<8x32xf32>
    %915 = vector.shape_cast %907 : vector<8x32xf32> to vector<1x8x32xf32>
    tpu.vector_store %arg17[%912, %c0_240, %c0_241], %915 {strides = array<i32>} : memref<16x8x32xf32, #tpu.memory_space<vmem>>, vector<1x8x32xf32>,
    %c13_i32 = arith.constant 13 : i32
    %c15_i32_242 = arith.constant 15 : i32
    %916 = arith.subi %c15_i32_242, %c13_i32 : i32
    %917 = arith.index_cast %c13_i32 : i32 to index
    %c0_243 = arith.constant 0 : index
    %c0_244 = arith.constant 0 : index
    %918 = vector.load %arg18[%917, %c0_243, %c0_244] : memref<16x8x128xf32, #tpu.memory_space<vmem>>, vector<1x8x128xf32>
    %919 = vector.shape_cast %918 : vector<1x8x128xf32> to vector<8x128xf32>
    %cst_245 = arith.constant dense<0.000000e+00> : vector<8x128xf32>
    %920 = tpu.matmul %882, %0, %cst_245 {dimension_numbers = #tpu.dot_dimension_numbers<[1], [0], [0], [1], [0, 0, 1, 1], [], []>} : vector<8x32xf32>, vector<32x128xf32>, vector<8x128xf32> -> vector<8x128xf32>
    %921 = arith.addf %919, %920 : vector<8x128xf32>
    %922 = arith.index_cast %916 : i32 to index
    %c0_246 = arith.constant 0 : index
    %c0_247 = arith.constant 0 : index
    %923 = vector.load %arg19[%922, %c0_246, %c0_247] : memref<16x8x128xf32, #tpu.memory_space<vmem>>, vector<1x8x128xf32>
    %924 = vector.shape_cast %923 : vector<1x8x128xf32> to vector<8x128xf32>
    %cst_248 = arith.constant dense<0.000000e+00> : vector<8x128xf32>
    %925 = tpu.matmul %907, %1, %cst_248 {dimension_numbers = #tpu.dot_dimension_numbers<[1], [0], [0], [1], [0, 0, 1, 1], [], []>} : vector<8x32xf32>, vector<32x128xf32>, vector<8x128xf32> -> vector<8x128xf32>
    %926 = arith.addf %924, %925 : vector<8x128xf32>
    %927 = vector.extract_strided_slice %921 {offsets = [0, 0], sizes = [8, 32], strides = [1, 1]} : vector<8x128xf32> to vector<8x32xf32>
    %928 = arith.negf %927 : vector<8x32xf32>
    %929 = math.exp %928 : vector<8x32xf32>
    %cst_249 = arith.constant 1.000000e+00 : f32
    %930 = vector.broadcast %cst_249 : f32 to vector<8x32xf32>
    %931 = arith.addf %930, %929 : vector<8x32xf32>
    %932 = arith.divf %930, %931 : vector<8x32xf32>
    %933 = vector.extract_strided_slice %921 {offsets = [0, 32], sizes = [8, 32], strides = [1, 1]} : vector<8x128xf32> to vector<8x32xf32>
    %934 = arith.negf %933 : vector<8x32xf32>
    %935 = math.exp %934 : vector<8x32xf32>
    %cst_250 = arith.constant 1.000000e+00 : f32
    %936 = vector.broadcast %cst_250 : f32 to vector<8x32xf32>
    %937 = arith.addf %936, %935 : vector<8x32xf32>
    %938 = arith.divf %936, %937 : vector<8x32xf32>
    %939 = vector.extract_strided_slice %921 {offsets = [0, 64], sizes = [8, 32], strides = [1, 1]} : vector<8x128xf32> to vector<8x32xf32>
    %940 = math.tanh %939 : vector<8x32xf32>
    %941 = vector.extract_strided_slice %921 {offsets = [0, 96], sizes = [8, 32], strides = [1, 1]} : vector<8x128xf32> to vector<8x32xf32>
    %942 = arith.negf %941 : vector<8x32xf32>
    %943 = math.exp %942 : vector<8x32xf32>
    %cst_251 = arith.constant 1.000000e+00 : f32
    %944 = vector.broadcast %cst_251 : f32 to vector<8x32xf32>
    %945 = arith.addf %944, %943 : vector<8x32xf32>
    %946 = arith.divf %944, %945 : vector<8x32xf32>
    %947 = arith.mulf %938, %880 : vector<8x32xf32>
    %948 = arith.mulf %932, %940 : vector<8x32xf32>
    %949 = arith.addf %947, %948 : vector<8x32xf32>
    %950 = math.tanh %949 : vector<8x32xf32>
    %951 = arith.mulf %946, %950 : vector<8x32xf32>
    %952 = vector.extract_strided_slice %926 {offsets = [0, 0], sizes = [8, 32], strides = [1, 1]} : vector<8x128xf32> to vector<8x32xf32>
    %953 = arith.negf %952 : vector<8x32xf32>
    %954 = math.exp %953 : vector<8x32xf32>
    %cst_252 = arith.constant 1.000000e+00 : f32
    %955 = vector.broadcast %cst_252 : f32 to vector<8x32xf32>
    %956 = arith.addf %955, %954 : vector<8x32xf32>
    %957 = arith.divf %955, %956 : vector<8x32xf32>
    %958 = vector.extract_strided_slice %926 {offsets = [0, 32], sizes = [8, 32], strides = [1, 1]} : vector<8x128xf32> to vector<8x32xf32>
    %959 = arith.negf %958 : vector<8x32xf32>
    %960 = math.exp %959 : vector<8x32xf32>
    %cst_253 = arith.constant 1.000000e+00 : f32
    %961 = vector.broadcast %cst_253 : f32 to vector<8x32xf32>
    %962 = arith.addf %961, %960 : vector<8x32xf32>
    %963 = arith.divf %961, %962 : vector<8x32xf32>
    %964 = vector.extract_strided_slice %926 {offsets = [0, 64], sizes = [8, 32], strides = [1, 1]} : vector<8x128xf32> to vector<8x32xf32>
    %965 = math.tanh %964 : vector<8x32xf32>
    %966 = vector.extract_strided_slice %926 {offsets = [0, 96], sizes = [8, 32], strides = [1, 1]} : vector<8x128xf32> to vector<8x32xf32>
    %967 = arith.negf %966 : vector<8x32xf32>
    %968 = math.exp %967 : vector<8x32xf32>
    %cst_254 = arith.constant 1.000000e+00 : f32
    %969 = vector.broadcast %cst_254 : f32 to vector<8x32xf32>
    %970 = arith.addf %969, %968 : vector<8x32xf32>
    %971 = arith.divf %969, %970 : vector<8x32xf32>
    %972 = arith.mulf %963, %905 : vector<8x32xf32>
    %973 = arith.mulf %957, %965 : vector<8x32xf32>
    %974 = arith.addf %972, %973 : vector<8x32xf32>
    %975 = math.tanh %974 : vector<8x32xf32>
    %976 = arith.mulf %971, %975 : vector<8x32xf32>
    %977 = arith.index_cast %c13_i32 : i32 to index
    %c0_255 = arith.constant 0 : index
    %c0_256 = arith.constant 0 : index
    %978 = vector.load %arg16[%977, %c0_255, %c0_256] : memref<16x8x32xf32, #tpu.memory_space<vmem>>, vector<1x8x32xf32>
    %979 = vector.shape_cast %978 : vector<1x8x32xf32> to vector<8x32xf32>
    %980 = vector.shape_cast %951 : vector<8x32xf32> to vector<1x8x32xf32>
    tpu.vector_store %arg16[%977, %c0_255, %c0_256], %980 {strides = array<i32>} : memref<16x8x32xf32, #tpu.memory_space<vmem>>, vector<1x8x32xf32>,
    %981 = arith.index_cast %916 : i32 to index
    %c0_257 = arith.constant 0 : index
    %c0_258 = arith.constant 0 : index
    %982 = vector.load %arg17[%981, %c0_257, %c0_258] : memref<16x8x32xf32, #tpu.memory_space<vmem>>, vector<1x8x32xf32>
    %983 = vector.shape_cast %982 : vector<1x8x32xf32> to vector<8x32xf32>
    %984 = vector.shape_cast %976 : vector<8x32xf32> to vector<1x8x32xf32>
    tpu.vector_store %arg17[%981, %c0_257, %c0_258], %984 {strides = array<i32>} : memref<16x8x32xf32, #tpu.memory_space<vmem>>, vector<1x8x32xf32>,
    %c14_i32 = arith.constant 14 : i32
    %c15_i32_259 = arith.constant 15 : i32
    %985 = arith.subi %c15_i32_259, %c14_i32 : i32
    %986 = arith.index_cast %c14_i32 : i32 to index
    %c0_260 = arith.constant 0 : index
    %c0_261 = arith.constant 0 : index
    %987 = vector.load %arg18[%986, %c0_260, %c0_261] : memref<16x8x128xf32, #tpu.memory_space<vmem>>, vector<1x8x128xf32>
    %988 = vector.shape_cast %987 : vector<1x8x128xf32> to vector<8x128xf32>
    %cst_262 = arith.constant dense<0.000000e+00> : vector<8x128xf32>
    %989 = tpu.matmul %951, %0, %cst_262 {dimension_numbers = #tpu.dot_dimension_numbers<[1], [0], [0], [1], [0, 0, 1, 1], [], []>} : vector<8x32xf32>, vector<32x128xf32>, vector<8x128xf32> -> vector<8x128xf32>
    %990 = arith.addf %988, %989 : vector<8x128xf32>
    %991 = arith.index_cast %985 : i32 to index
    %c0_263 = arith.constant 0 : index
    %c0_264 = arith.constant 0 : index
    %992 = vector.load %arg19[%991, %c0_263, %c0_264] : memref<16x8x128xf32, #tpu.memory_space<vmem>>, vector<1x8x128xf32>
    %993 = vector.shape_cast %992 : vector<1x8x128xf32> to vector<8x128xf32>
    %cst_265 = arith.constant dense<0.000000e+00> : vector<8x128xf32>
    %994 = tpu.matmul %976, %1, %cst_265 {dimension_numbers = #tpu.dot_dimension_numbers<[1], [0], [0], [1], [0, 0, 1, 1], [], []>} : vector<8x32xf32>, vector<32x128xf32>, vector<8x128xf32> -> vector<8x128xf32>
    %995 = arith.addf %993, %994 : vector<8x128xf32>
    %996 = vector.extract_strided_slice %990 {offsets = [0, 0], sizes = [8, 32], strides = [1, 1]} : vector<8x128xf32> to vector<8x32xf32>
    %997 = arith.negf %996 : vector<8x32xf32>
    %998 = math.exp %997 : vector<8x32xf32>
    %cst_266 = arith.constant 1.000000e+00 : f32
    %999 = vector.broadcast %cst_266 : f32 to vector<8x32xf32>
    %1000 = arith.addf %999, %998 : vector<8x32xf32>
    %1001 = arith.divf %999, %1000 : vector<8x32xf32>
    %1002 = vector.extract_strided_slice %990 {offsets = [0, 32], sizes = [8, 32], strides = [1, 1]} : vector<8x128xf32> to vector<8x32xf32>
    %1003 = arith.negf %1002 : vector<8x32xf32>
    %1004 = math.exp %1003 : vector<8x32xf32>
    %cst_267 = arith.constant 1.000000e+00 : f32
    %1005 = vector.broadcast %cst_267 : f32 to vector<8x32xf32>
    %1006 = arith.addf %1005, %1004 : vector<8x32xf32>
    %1007 = arith.divf %1005, %1006 : vector<8x32xf32>
    %1008 = vector.extract_strided_slice %990 {offsets = [0, 64], sizes = [8, 32], strides = [1, 1]} : vector<8x128xf32> to vector<8x32xf32>
    %1009 = math.tanh %1008 : vector<8x32xf32>
    %1010 = vector.extract_strided_slice %990 {offsets = [0, 96], sizes = [8, 32], strides = [1, 1]} : vector<8x128xf32> to vector<8x32xf32>
    %1011 = arith.negf %1010 : vector<8x32xf32>
    %1012 = math.exp %1011 : vector<8x32xf32>
    %cst_268 = arith.constant 1.000000e+00 : f32
    %1013 = vector.broadcast %cst_268 : f32 to vector<8x32xf32>
    %1014 = arith.addf %1013, %1012 : vector<8x32xf32>
    %1015 = arith.divf %1013, %1014 : vector<8x32xf32>
    %1016 = arith.mulf %1007, %949 : vector<8x32xf32>
    %1017 = arith.mulf %1001, %1009 : vector<8x32xf32>
    %1018 = arith.addf %1016, %1017 : vector<8x32xf32>
    %1019 = math.tanh %1018 : vector<8x32xf32>
    %1020 = arith.mulf %1015, %1019 : vector<8x32xf32>
    %1021 = vector.extract_strided_slice %995 {offsets = [0, 0], sizes = [8, 32], strides = [1, 1]} : vector<8x128xf32> to vector<8x32xf32>
    %1022 = arith.negf %1021 : vector<8x32xf32>
    %1023 = math.exp %1022 : vector<8x32xf32>
    %cst_269 = arith.constant 1.000000e+00 : f32
    %1024 = vector.broadcast %cst_269 : f32 to vector<8x32xf32>
    %1025 = arith.addf %1024, %1023 : vector<8x32xf32>
    %1026 = arith.divf %1024, %1025 : vector<8x32xf32>
    %1027 = vector.extract_strided_slice %995 {offsets = [0, 32], sizes = [8, 32], strides = [1, 1]} : vector<8x128xf32> to vector<8x32xf32>
    %1028 = arith.negf %1027 : vector<8x32xf32>
    %1029 = math.exp %1028 : vector<8x32xf32>
    %cst_270 = arith.constant 1.000000e+00 : f32
    %1030 = vector.broadcast %cst_270 : f32 to vector<8x32xf32>
    %1031 = arith.addf %1030, %1029 : vector<8x32xf32>
    %1032 = arith.divf %1030, %1031 : vector<8x32xf32>
    %1033 = vector.extract_strided_slice %995 {offsets = [0, 64], sizes = [8, 32], strides = [1, 1]} : vector<8x128xf32> to vector<8x32xf32>
    %1034 = math.tanh %1033 : vector<8x32xf32>
    %1035 = vector.extract_strided_slice %995 {offsets = [0, 96], sizes = [8, 32], strides = [1, 1]} : vector<8x128xf32> to vector<8x32xf32>
    %1036 = arith.negf %1035 : vector<8x32xf32>
    %1037 = math.exp %1036 : vector<8x32xf32>
    %cst_271 = arith.constant 1.000000e+00 : f32
    %1038 = vector.broadcast %cst_271 : f32 to vector<8x32xf32>
    %1039 = arith.addf %1038, %1037 : vector<8x32xf32>
    %1040 = arith.divf %1038, %1039 : vector<8x32xf32>
    %1041 = arith.mulf %1032, %974 : vector<8x32xf32>
    %1042 = arith.mulf %1026, %1034 : vector<8x32xf32>
    %1043 = arith.addf %1041, %1042 : vector<8x32xf32>
    %1044 = math.tanh %1043 : vector<8x32xf32>
    %1045 = arith.mulf %1040, %1044 : vector<8x32xf32>
    %1046 = arith.index_cast %c14_i32 : i32 to index
    %c0_272 = arith.constant 0 : index
    %c0_273 = arith.constant 0 : index
    %1047 = vector.load %arg16[%1046, %c0_272, %c0_273] : memref<16x8x32xf32, #tpu.memory_space<vmem>>, vector<1x8x32xf32>
    %1048 = vector.shape_cast %1047 : vector<1x8x32xf32> to vector<8x32xf32>
    %1049 = vector.shape_cast %1020 : vector<8x32xf32> to vector<1x8x32xf32>
    tpu.vector_store %arg16[%1046, %c0_272, %c0_273], %1049 {strides = array<i32>} : memref<16x8x32xf32, #tpu.memory_space<vmem>>, vector<1x8x32xf32>,
    %1050 = arith.index_cast %985 : i32 to index
    %c0_274 = arith.constant 0 : index
    %c0_275 = arith.constant 0 : index
    %1051 = vector.load %arg17[%1050, %c0_274, %c0_275] : memref<16x8x32xf32, #tpu.memory_space<vmem>>, vector<1x8x32xf32>
    %1052 = vector.shape_cast %1051 : vector<1x8x32xf32> to vector<8x32xf32>
    %1053 = vector.shape_cast %1045 : vector<8x32xf32> to vector<1x8x32xf32>
    tpu.vector_store %arg17[%1050, %c0_274, %c0_275], %1053 {strides = array<i32>} : memref<16x8x32xf32, #tpu.memory_space<vmem>>, vector<1x8x32xf32>,
    %c15_i32_276 = arith.constant 15 : i32
    %c15_i32_277 = arith.constant 15 : i32
    %1054 = arith.subi %c15_i32_277, %c15_i32_276 : i32
    %1055 = arith.index_cast %c15_i32_276 : i32 to index
    %c0_278 = arith.constant 0 : index
    %c0_279 = arith.constant 0 : index
    %1056 = vector.load %arg18[%1055, %c0_278, %c0_279] : memref<16x8x128xf32, #tpu.memory_space<vmem>>, vector<1x8x128xf32>
    %1057 = vector.shape_cast %1056 : vector<1x8x128xf32> to vector<8x128xf32>
    %cst_280 = arith.constant dense<0.000000e+00> : vector<8x128xf32>
    %1058 = tpu.matmul %1020, %0, %cst_280 {dimension_numbers = #tpu.dot_dimension_numbers<[1], [0], [0], [1], [0, 0, 1, 1], [], []>} : vector<8x32xf32>, vector<32x128xf32>, vector<8x128xf32> -> vector<8x128xf32>
    %1059 = arith.addf %1057, %1058 : vector<8x128xf32>
    %1060 = arith.index_cast %1054 : i32 to index
    %c0_281 = arith.constant 0 : index
    %c0_282 = arith.constant 0 : index
    %1061 = vector.load %arg19[%1060, %c0_281, %c0_282] : memref<16x8x128xf32, #tpu.memory_space<vmem>>, vector<1x8x128xf32>
    %1062 = vector.shape_cast %1061 : vector<1x8x128xf32> to vector<8x128xf32>
    %cst_283 = arith.constant dense<0.000000e+00> : vector<8x128xf32>
    %1063 = tpu.matmul %1045, %1, %cst_283 {dimension_numbers = #tpu.dot_dimension_numbers<[1], [0], [0], [1], [0, 0, 1, 1], [], []>} : vector<8x32xf32>, vector<32x128xf32>, vector<8x128xf32> -> vector<8x128xf32>
    %1064 = arith.addf %1062, %1063 : vector<8x128xf32>
    %1065 = vector.extract_strided_slice %1059 {offsets = [0, 0], sizes = [8, 32], strides = [1, 1]} : vector<8x128xf32> to vector<8x32xf32>
    %1066 = arith.negf %1065 : vector<8x32xf32>
    %1067 = math.exp %1066 : vector<8x32xf32>
    %cst_284 = arith.constant 1.000000e+00 : f32
    %1068 = vector.broadcast %cst_284 : f32 to vector<8x32xf32>
    %1069 = arith.addf %1068, %1067 : vector<8x32xf32>
    %1070 = arith.divf %1068, %1069 : vector<8x32xf32>
    %1071 = vector.extract_strided_slice %1059 {offsets = [0, 32], sizes = [8, 32], strides = [1, 1]} : vector<8x128xf32> to vector<8x32xf32>
    %1072 = arith.negf %1071 : vector<8x32xf32>
    %1073 = math.exp %1072 : vector<8x32xf32>
    %cst_285 = arith.constant 1.000000e+00 : f32
    %1074 = vector.broadcast %cst_285 : f32 to vector<8x32xf32>
    %1075 = arith.addf %1074, %1073 : vector<8x32xf32>
    %1076 = arith.divf %1074, %1075 : vector<8x32xf32>
    %1077 = vector.extract_strided_slice %1059 {offsets = [0, 64], sizes = [8, 32], strides = [1, 1]} : vector<8x128xf32> to vector<8x32xf32>
    %1078 = math.tanh %1077 : vector<8x32xf32>
    %1079 = vector.extract_strided_slice %1059 {offsets = [0, 96], sizes = [8, 32], strides = [1, 1]} : vector<8x128xf32> to vector<8x32xf32>
    %1080 = arith.negf %1079 : vector<8x32xf32>
    %1081 = math.exp %1080 : vector<8x32xf32>
    %cst_286 = arith.constant 1.000000e+00 : f32
    %1082 = vector.broadcast %cst_286 : f32 to vector<8x32xf32>
    %1083 = arith.addf %1082, %1081 : vector<8x32xf32>
    %1084 = arith.divf %1082, %1083 : vector<8x32xf32>
    %1085 = arith.mulf %1076, %1018 : vector<8x32xf32>
    %1086 = arith.mulf %1070, %1078 : vector<8x32xf32>
    %1087 = arith.addf %1085, %1086 : vector<8x32xf32>
    %1088 = math.tanh %1087 : vector<8x32xf32>
    %1089 = arith.mulf %1084, %1088 : vector<8x32xf32>
    %1090 = vector.extract_strided_slice %1064 {offsets = [0, 0], sizes = [8, 32], strides = [1, 1]} : vector<8x128xf32> to vector<8x32xf32>
    %1091 = arith.negf %1090 : vector<8x32xf32>
    %1092 = math.exp %1091 : vector<8x32xf32>
    %cst_287 = arith.constant 1.000000e+00 : f32
    %1093 = vector.broadcast %cst_287 : f32 to vector<8x32xf32>
    %1094 = arith.addf %1093, %1092 : vector<8x32xf32>
    %1095 = arith.divf %1093, %1094 : vector<8x32xf32>
    %1096 = vector.extract_strided_slice %1064 {offsets = [0, 32], sizes = [8, 32], strides = [1, 1]} : vector<8x128xf32> to vector<8x32xf32>
    %1097 = arith.negf %1096 : vector<8x32xf32>
    %1098 = math.exp %1097 : vector<8x32xf32>
    %cst_288 = arith.constant 1.000000e+00 : f32
    %1099 = vector.broadcast %cst_288 : f32 to vector<8x32xf32>
    %1100 = arith.addf %1099, %1098 : vector<8x32xf32>
    %1101 = arith.divf %1099, %1100 : vector<8x32xf32>
    %1102 = vector.extract_strided_slice %1064 {offsets = [0, 64], sizes = [8, 32], strides = [1, 1]} : vector<8x128xf32> to vector<8x32xf32>
    %1103 = math.tanh %1102 : vector<8x32xf32>
    %1104 = vector.extract_strided_slice %1064 {offsets = [0, 96], sizes = [8, 32], strides = [1, 1]} : vector<8x128xf32> to vector<8x32xf32>
    %1105 = arith.negf %1104 : vector<8x32xf32>
    %1106 = math.exp %1105 : vector<8x32xf32>
    %cst_289 = arith.constant 1.000000e+00 : f32
    %1107 = vector.broadcast %cst_289 : f32 to vector<8x32xf32>
    %1108 = arith.addf %1107, %1106 : vector<8x32xf32>
    %1109 = arith.divf %1107, %1108 : vector<8x32xf32>
    %1110 = arith.mulf %1101, %1043 : vector<8x32xf32>
    %1111 = arith.mulf %1095, %1103 : vector<8x32xf32>
    %1112 = arith.addf %1110, %1111 : vector<8x32xf32>
    %1113 = math.tanh %1112 : vector<8x32xf32>
    %1114 = arith.mulf %1109, %1113 : vector<8x32xf32>
    %1115 = arith.index_cast %c15_i32_276 : i32 to index
    %c0_290 = arith.constant 0 : index
    %c0_291 = arith.constant 0 : index
    %1116 = vector.load %arg16[%1115, %c0_290, %c0_291] : memref<16x8x32xf32, #tpu.memory_space<vmem>>, vector<1x8x32xf32>
    %1117 = vector.shape_cast %1116 : vector<1x8x32xf32> to vector<8x32xf32>
    %1118 = vector.shape_cast %1089 : vector<8x32xf32> to vector<1x8x32xf32>
    tpu.vector_store %arg16[%1115, %c0_290, %c0_291], %1118 {strides = array<i32>} : memref<16x8x32xf32, #tpu.memory_space<vmem>>, vector<1x8x32xf32>,
    %1119 = arith.index_cast %1054 : i32 to index
    %c0_292 = arith.constant 0 : index
    %c0_293 = arith.constant 0 : index
    %1120 = vector.load %arg17[%1119, %c0_292, %c0_293] : memref<16x8x32xf32, #tpu.memory_space<vmem>>, vector<1x8x32xf32>
    %1121 = vector.shape_cast %1120 : vector<1x8x32xf32> to vector<8x32xf32>
    %1122 = vector.shape_cast %1114 : vector<8x32xf32> to vector<1x8x32xf32>
    tpu.vector_store %arg17[%1119, %c0_292, %c0_293], %1122 {strides = array<i32>} : memref<16x8x32xf32, #tpu.memory_space<vmem>>, vector<1x8x32xf32>,
    %c16_i32 = arith.constant 16 : i32
    %c0_294 = arith.constant 0 : index
    %c0_295 = arith.constant 0 : index
    %c0_296 = arith.constant 0 : index
    %1123 = vector.load %arg16[%c0_294, %c0_295, %c0_296] : memref<16x8x32xf32, #tpu.memory_space<vmem>>, vector<16x8x32xf32>
    %1124 = vector.shape_cast %1123 : vector<16x8x32xf32> to vector<128x32xf32>
    %c0_297 = arith.constant 0 : index
    %c0_298 = arith.constant 0 : index
    %c0_299 = arith.constant 0 : index
    %1125 = vector.load %arg17[%c0_297, %c0_298, %c0_299] : memref<16x8x32xf32, #tpu.memory_space<vmem>>, vector<16x8x32xf32>
    %1126 = vector.shape_cast %1125 : vector<16x8x32xf32> to vector<128x32xf32>
    %c0_300 = arith.constant 0 : index
    %c0_301 = arith.constant 0 : index
    %1127 = vector.load %arg8[%c0_300, %c0_301] : memref<32x32xf32, #tpu.memory_space<vmem>>, vector<32x32xf32>
    %cst_302 = arith.constant dense<0.000000e+00> : vector<128x32xf32>
    %1128 = tpu.matmul %1124, %1127, %cst_302 {dimension_numbers = #tpu.dot_dimension_numbers<[1], [0], [0], [1], [0, 0, 1, 1], [], []>} : vector<128x32xf32>, vector<32x32xf32>, vector<128x32xf32> -> vector<128x32xf32>
    %c0_303 = arith.constant 0 : index
    %c0_304 = arith.constant 0 : index
    %1129 = vector.load %arg9[%c0_303, %c0_304] : memref<32x32xf32, #tpu.memory_space<vmem>>, vector<32x32xf32>
    %cst_305 = arith.constant dense<0.000000e+00> : vector<128x32xf32>
    %1130 = tpu.matmul %1126, %1129, %cst_305 {dimension_numbers = #tpu.dot_dimension_numbers<[1], [0], [0], [1], [0, 0, 1, 1], [], []>} : vector<128x32xf32>, vector<32x32xf32>, vector<128x32xf32> -> vector<128x32xf32>
    %1131 = arith.addf %1128, %1130 : vector<128x32xf32>
    %c0_306 = arith.constant 0 : index
    %c0_307 = arith.constant 0 : index
    %1132 = vector.load %arg10[%c0_306, %c0_307] : memref<1x32xf32, #tpu.memory_space<vmem>>, vector<1x32xf32>
    %1133 = vector.broadcast %1132 : vector<1x32xf32> to vector<128x32xf32>
    %1134 = arith.addf %1131, %1133 : vector<128x32xf32>
    %c0_308 = arith.constant 0 : index
    %c0_309 = arith.constant 0 : index
    %1135 = vector.load %arg11[%c0_308, %c0_309] : memref<4x32xf32, #tpu.memory_space<vmem>>, vector<4x32xf32>
    %cst_310 = arith.constant dense<0.000000e+00> : vector<128x32xf32>
    %1136 = tpu.matmul %3, %1135, %cst_310 {dimension_numbers = #tpu.dot_dimension_numbers<[1], [0], [0], [1], [0, 0, 1, 1], [], []>} : vector<128x4xf32>, vector<4x32xf32>, vector<128x32xf32> -> vector<128x32xf32>
    %c0_311 = arith.constant 0 : index
    %c0_312 = arith.constant 0 : index
    %1137 = vector.load %arg12[%c0_311, %c0_312] : memref<1x32xf32, #tpu.memory_space<vmem>>, vector<1x32xf32>
    %1138 = vector.broadcast %1137 : vector<1x32xf32> to vector<128x32xf32>
    %1139 = arith.addf %1136, %1138 : vector<128x32xf32>
    %1140 = arith.addf %1134, %1139 : vector<128x32xf32>
    %cst_313 = arith.constant 0.707108557 : f32
    %1141 = vector.broadcast %cst_313 : f32 to vector<128x32xf32>
    %1142 = arith.mulf %1140, %1141 : vector<128x32xf32>
    %1143 = math.tanh %1142 : vector<128x32xf32>
    %c0_314 = arith.constant 0 : index
    %c0_315 = arith.constant 0 : index
    %1144 = vector.load %arg13[%c0_314, %c0_315] : memref<32x4xf32, #tpu.memory_space<vmem>>, vector<32x4xf32>
    %cst_316 = arith.constant dense<0.000000e+00> : vector<128x4xf32>
    %1145 = tpu.matmul %1143, %1144, %cst_316 {dimension_numbers = #tpu.dot_dimension_numbers<[1], [0], [0], [1], [0, 0, 1, 1], [], []>} : vector<128x32xf32>, vector<32x4xf32>, vector<128x4xf32> -> vector<128x4xf32>
    %c0_317 = arith.constant 0 : index
    %c0_318 = arith.constant 0 : index
    %1146 = vector.load %arg14[%c0_317, %c0_318] : memref<1x4xf32, #tpu.memory_space<vmem>>, vector<1x4xf32>
    %1147 = vector.broadcast %1146 : vector<1x4xf32> to vector<128x4xf32>
    %1148 = arith.addf %1145, %1147 : vector<128x4xf32>
    %1149 = vector.shape_cast %1148 : vector<128x4xf32> to vector<16x8x4xf32>
    %c0_319 = arith.constant 0 : index
    %c0_320 = arith.constant 0 : index
    %c0_321 = arith.constant 0 : index
    %1150 = vector.load %arg15[%c0_319, %c0_320, %c0_321] : memref<16x8x4xf32, #tpu.memory_space<vmem>>, vector<16x8x4xf32>
    tpu.vector_store %arg15[%c0_319, %c0_320, %c0_321], %1149 {strides = array<i32>} : memref<16x8x4xf32, #tpu.memory_space<vmem>>, vector<16x8x4xf32>,
    return
  }
  func.func @transform_0(%arg0: i32) -> (i32, i32, i32) {
    %c0_i32 = arith.constant 0 : i32
    %c0_i32_0 = arith.constant 0 : i32
    %c0_i32_1 = arith.constant 0 : i32
    return %c0_i32, %arg0, %c0_i32_0 : i32, i32, i32
  }
  func.func @transform_1(%arg0: i32) -> (i32, i32) {
    %c0_i32 = arith.constant 0 : i32
    %c0_i32_0 = arith.constant 0 : i32
    %c0_i32_1 = arith.constant 0 : i32
    return %c0_i32, %c0_i32_0 : i32, i32
  }
  func.func @transform_2(%arg0: i32) -> (i32, i32) {
    %c0_i32 = arith.constant 0 : i32
    %c0_i32_0 = arith.constant 0 : i32
    %c0_i32_1 = arith.constant 0 : i32
    return %c0_i32, %c0_i32_0 : i32, i32
  }
  func.func @transform_3(%arg0: i32) -> (i32, i32) {
    %c0_i32 = arith.constant 0 : i32
    %c0_i32_0 = arith.constant 0 : i32
    %c0_i32_1 = arith.constant 0 : i32
    return %c0_i32, %c0_i32_0 : i32, i32
  }
  func.func @transform_4(%arg0: i32) -> (i32, i32) {
    %c0_i32 = arith.constant 0 : i32
    %c0_i32_0 = arith.constant 0 : i32
    %c0_i32_1 = arith.constant 0 : i32
    return %c0_i32, %c0_i32_0 : i32, i32
  }
  func.func @transform_5(%arg0: i32) -> (i32, i32) {
    %c0_i32 = arith.constant 0 : i32
    %c0_i32_0 = arith.constant 0 : i32
    %c0_i32_1 = arith.constant 0 : i32
    return %c0_i32, %c0_i32_0 : i32, i32
  }
  func.func @transform_6(%arg0: i32) -> (i32, i32) {
    %c0_i32 = arith.constant 0 : i32
    %c0_i32_0 = arith.constant 0 : i32
    %c0_i32_1 = arith.constant 0 : i32
    return %c0_i32, %c0_i32_0 : i32, i32
  }
  func.func @transform_7(%arg0: i32) -> (i32, i32) {
    %c0_i32 = arith.constant 0 : i32
    %c0_i32_0 = arith.constant 0 : i32
    %c0_i32_1 = arith.constant 0 : i32
    return %c0_i32, %c0_i32_0 : i32, i32
  }
  func.func @transform_8(%arg0: i32) -> (i32, i32) {
    %c0_i32 = arith.constant 0 : i32
    %c0_i32_0 = arith.constant 0 : i32
    %c0_i32_1 = arith.constant 0 : i32
    return %c0_i32, %c0_i32_0 : i32, i32
  }
  func.func @transform_9(%arg0: i32) -> (i32, i32) {
    %c0_i32 = arith.constant 0 : i32
    %c0_i32_0 = arith.constant 0 : i32
    %c0_i32_1 = arith.constant 0 : i32
    return %c0_i32, %c0_i32_0 : i32, i32
  }
  func.func @transform_10(%arg0: i32) -> (i32, i32) {
    %c0_i32 = arith.constant 0 : i32
    %c0_i32_0 = arith.constant 0 : i32
    %c0_i32_1 = arith.constant 0 : i32
    return %c0_i32, %c0_i32_0 : i32, i32
  }
  func.func @transform_11(%arg0: i32) -> (i32, i32) {
    %c0_i32 = arith.constant 0 : i32
    %c0_i32_0 = arith.constant 0 : i32
    %c0_i32_1 = arith.constant 0 : i32
    return %c0_i32, %c0_i32_0 : i32, i32
  }
  func.func @transform_12(%arg0: i32) -> (i32, i32) {
    %c0_i32 = arith.constant 0 : i32
    %c0_i32_0 = arith.constant 0 : i32
    %c0_i32_1 = arith.constant 0 : i32
    return %c0_i32, %c0_i32_0 : i32, i32
  }
  func.func @transform_13(%arg0: i32) -> (i32, i32) {
    %c0_i32 = arith.constant 0 : i32
    %c0_i32_0 = arith.constant 0 : i32
    %c0_i32_1 = arith.constant 0 : i32
    return %c0_i32, %c0_i32_0 : i32, i32
  }
  func.func @transform_14(%arg0: i32) -> (i32, i32, i32) {
    %c0_i32 = arith.constant 0 : i32
    %c0_i32_0 = arith.constant 0 : i32
    %c0_i32_1 = arith.constant 0 : i32
    return %c0_i32, %arg0, %c0_i32_0 : i32, i32, i32
  }
}

</mosaic_0001>

<llo_original>
// kernel: tpu_custom_call.1
$region0: #{tpu_custom_call.1}
  #allocation0 [shape = 'u32[]', space=smem, size = 0x4, offset = 0x4, fixed_abs, tag = 'smem constant byte address 0x4 - core index']
  #allocation1 [shape = 'u32[144,128]{1,0:T(1,128)}', space=vmem, size = 0x12000, scoped, tag = 'internal scratch']
  #allocation2 [shape = 'f32[16,8,32]{2,1,0:T(8,128)}', space=vmem, size = 0x10000, scoped, tag = 'scratch operand']
  #allocation3 [shape = 'f32[16,8,32]{2,1,0:T(8,128)}', space=vmem, size = 0x10000, scoped, tag = 'scratch operand']
  #allocation4 [shape = 'f32[16,8,128]{2,1,0:T(8,128)}', space=vmem, size = 0x10000, scoped, tag = 'scratch operand']
  #allocation5 [shape = 'f32[16,8,128]{2,1,0:T(8,128)}', space=vmem, size = 0x10000, scoped, tag = 'scratch operand']
  %s0 = inlined_call_operand.vmem [shape: f32[16,8,4], index: 0, kind: input, shape index: {}]
  %s1 = inlined_call_operand.vmem [shape: f32[4,128], index: 1, kind: input, shape index: {}]
  %s2 = inlined_call_operand.vmem [shape: f32[32,128], index: 2, kind: input, shape index: {}]
  %s3 = inlined_call_operand.vmem [shape: f32[1,128], index: 3, kind: input, shape index: {}]
  %s4 = inlined_call_operand.vmem [shape: f32[4,128], index: 4, kind: input, shape index: {}]
  %s5 = inlined_call_operand.vmem [shape: f32[32,128], index: 5, kind: input, shape index: {}]
  %s6 = inlined_call_operand.vmem [shape: f32[1,128], index: 6, kind: input, shape index: {}]
  %s7 = inlined_call_operand.vmem [shape: f32[32,32], index: 7, kind: input, shape index: {}]
  %s8 = inlined_call_operand.vmem [shape: f32[32,32], index: 8, kind: input, shape index: {}]
  %s9 = inlined_call_operand.vmem [shape: f32[1,32], index: 9, kind: input, shape index: {}]
  %s10 = inlined_call_operand.vmem [shape: f32[4,32], index: 10, kind: input, shape index: {}]
  %s11 = inlined_call_operand.vmem [shape: f32[1,32], index: 11, kind: input, shape index: {}]
  %s12 = inlined_call_operand.vmem [shape: f32[32,4], index: 12, kind: input, shape index: {}]
  %s13 = inlined_call_operand.vmem [shape: f32[1,4], index: 13, kind: input, shape index: {}]
  %s14 = inlined_call_operand.vmem [shape: f32[16,8,4], index: 14, kind: output, shape index: {}]
  %s15 = sld [smem:[#allocation0]]
  $region66: #{tpu_custom_call.1} parent=0
    _
  %s17 = ssub.s32 1, %s15
  %s18 = scalar_select 0, %s17, %s15
  // Predicated region
  $region2: #{tpu_custom_call.1} parent=0 // pred_check
    _
  $region3: #{tpu_custom_call.1} parent=0 // pred_check_branch
    %20 = sbr.rel (0) target = $region5
  $region4: #{tpu_custom_call.1} parent=0 // pred_region
    _
  $region5: #{tpu_custom_call.1} parent=0 // pred_fallthru
    _
  // Predicated region
  $region6: #{tpu_custom_call.1} parent=0 // pred_check
    _
  $region7: #{tpu_custom_call.1} parent=0 // pred_check_branch
    %22 = sbr.rel (0) target = $region9
  $region8: #{tpu_custom_call.1} parent=0 // pred_region
    _
  $region9: #{tpu_custom_call.1} parent=0 // pred_fallthru
    _
  // Predicated region
  $region10: #{tpu_custom_call.1} parent=0 // pred_check
    _
  $region11: #{tpu_custom_call.1} parent=0 // pred_check_branch
    %24 = sbr.rel (0) target = $region13
  $region12: #{tpu_custom_call.1} parent=0 // pred_region
    _
  $region13: #{tpu_custom_call.1} parent=0 // pred_fallthru
    _
  // Predicated region
  $region14: #{tpu_custom_call.1} parent=0 // pred_check
    _
  $region15: #{tpu_custom_call.1} parent=0 // pred_check_branch
    %26 = sbr.rel (0) target = $region17
  $region16: #{tpu_custom_call.1} parent=0 // pred_region
    _
  $region17: #{tpu_custom_call.1} parent=0 // pred_fallthru
    _
  // Predicated region
  $region18: #{tpu_custom_call.1} parent=0 // pred_check
    _
  $region19: #{tpu_custom_call.1} parent=0 // pred_check_branch
    %28 = sbr.rel (0) target = $region21
  $region20: #{tpu_custom_call.1} parent=0 // pred_region
    _
  $region21: #{tpu_custom_call.1} parent=0 // pred_fallthru
    _
  // Predicated region
  $region22: #{tpu_custom_call.1} parent=0 // pred_check
    _
  $region23: #{tpu_custom_call.1} parent=0 // pred_check_branch
    %30 = sbr.rel (0) target = $region25
  $region24: #{tpu_custom_call.1} parent=0 // pred_region
    _
  $region25: #{tpu_custom_call.1} parent=0 // pred_fallthru
    _
  // Predicated region
  $region26: #{tpu_custom_call.1} parent=0 // pred_check
    _
  $region27: #{tpu_custom_call.1} parent=0 // pred_check_branch
    %32 = sbr.rel (0) target = $region29
  $region28: #{tpu_custom_call.1} parent=0 // pred_region
    _
  $region29: #{tpu_custom_call.1} parent=0 // pred_fallthru
    _
  // Predicated region
  $region30: #{tpu_custom_call.1} parent=0 // pred_check
    _
  $region31: #{tpu_custom_call.1} parent=0 // pred_check_branch
    %34 = sbr.rel (0) target = $region33
  $region32: #{tpu_custom_call.1} parent=0 // pred_region
    _
  $region33: #{tpu_custom_call.1} parent=0 // pred_fallthru
    _
  // Predicated region
  $region34: #{tpu_custom_call.1} parent=0 // pred_check
    _
  $region35: #{tpu_custom_call.1} parent=0 // pred_check_branch
    %36 = sbr.rel (0) target = $region37
  $region36: #{tpu_custom_call.1} parent=0 // pred_region
    _
  $region37: #{tpu_custom_call.1} parent=0 // pred_fallthru
    _
  // Predicated region
  $region38: #{tpu_custom_call.1} parent=0 // pred_check
    _
  $region39: #{tpu_custom_call.1} parent=0 // pred_check_branch
    %38 = sbr.rel (0) target = $region41
  $region40: #{tpu_custom_call.1} parent=0 // pred_region
    _
  $region41: #{tpu_custom_call.1} parent=0 // pred_fallthru
    _
  // Predicated region
  $region42: #{tpu_custom_call.1} parent=0 // pred_check
    _
  $region43: #{tpu_custom_call.1} parent=0 // pred_check_branch
    %40 = sbr.rel (0) target = $region45
  $region44: #{tpu_custom_call.1} parent=0 // pred_region
    _
  $region45: #{tpu_custom_call.1} parent=0 // pred_fallthru
    _
  // Predicated region
  $region46: #{tpu_custom_call.1} parent=0 // pred_check
    _
  $region47: #{tpu_custom_call.1} parent=0 // pred_check_branch
    %42 = sbr.rel (0) target = $region49
  $region48: #{tpu_custom_call.1} parent=0 // pred_region
    _
  $region49: #{tpu_custom_call.1} parent=0 // pred_fallthru
    _
  // Predicated region
  $region50: #{tpu_custom_call.1} parent=0 // pred_check
    _
  $region51: #{tpu_custom_call.1} parent=0 // pred_check_branch
    %44 = sbr.rel (0) target = $region53
  $region52: #{tpu_custom_call.1} parent=0 // pred_region
    _
  $region53: #{tpu_custom_call.1} parent=0 // pred_fallthru
    _
  // Predicated region
  $region54: #{tpu_custom_call.1} parent=0 // pred_check
    _
  $region55: #{tpu_custom_call.1} parent=0 // pred_check_branch
    %46 = sbr.rel (0) target = $region57
  $region56: #{tpu_custom_call.1} parent=0 // pred_region
    _
  $region57: #{tpu_custom_call.1} parent=0 // pred_fallthru
    _
  %v47 = vld [vmem:[%s2] sm:$0xff]
  %v48 = vld [vmem:[%s2 + $0x8] sm:$0xff]
  %v49 = vld [vmem:[%s2 + $0x10] sm:$0xff]
  %v50 = vld [vmem:[%s2 + $0x18] sm:$0xff]
  %v51 = vld [vmem:[%s5] sm:$0xff]
  %v52 = vld [vmem:[%s5 + $0x8] sm:$0xff]
  %v53 = vld [vmem:[%s5 + $0x10] sm:$0xff]
  %v54 = vld [vmem:[%s5 + $0x18] sm:$0xff]
  %v55 = vld [vmem:[%s0] sm:$0xff]
  %v56 = vld [vmem:[%s0 + $0x8] sm:$0xff]
  %v57 = vld [vmem:[%s0 + $0x10] sm:$0xff]
  %v58 = vld [vmem:[%s0 + $0x18] sm:$0xff]
  %v59 = vld [vmem:[%s0 + $0x20] sm:$0xff]
  %v60 = vld [vmem:[%s0 + $0x28] sm:$0xff]
  %v61 = vld [vmem:[%s0 + $0x30] sm:$0xff]
  %v62 = vld [vmem:[%s0 + $0x38] sm:$0xff]
  %v63 = vld [vmem:[%s0 + $0x40] sm:$0xff]
  %v64 = vld [vmem:[%s0 + $0x48] sm:$0xff]
  %v65 = vld [vmem:[%s0 + $0x50] sm:$0xff]
  %v66 = vld [vmem:[%s0 + $0x58] sm:$0xff]
  %v67 = vld [vmem:[%s0 + $0x60] sm:$0xff]
  %v68 = vld [vmem:[%s0 + $0x68] sm:$0xff]
  %v69 = vld [vmem:[%s0 + $0x70] sm:$0xff]
  %v70 = vld [vmem:[%s0 + $0x78] sm:$0xff]
  %v71 = vld [vmem:[%s1] sm:$0xf]
  %v72 = vld [vmem:[%s3] sm:$0x1]
  %v74 = vlaneseq
  %v75 = vshrl.u32 %v74, 7
  %v76 = vsub.s32 0, %v75
  %v77 = vrot.slane %v72, %v76
  %vm79 = vcmask 31744
  %v81 = vsel %vm79, %v55, 0
  %v84 = vsel %vm79, %v56, 0
  %v87 = vsel %vm79, %v57, 0
  %v90 = vsel %vm79, %v58, 0
  %v93 = vsel %vm79, %v59, 0
  %v96 = vsel %vm79, %v60, 0
  %v99 = vsel %vm79, %v61, 0
  %v102 = vsel %vm79, %v62, 0
  %v105 = vsel %vm79, %v63, 0
  %v108 = vsel %vm79, %v64, 0
  %v111 = vsel %vm79, %v65, 0
  %v114 = vsel %vm79, %v66, 0
  %v117 = vsel %vm79, %v67, 0
  %v120 = vsel %vm79, %v68, 0
  %v123 = vsel %vm79, %v69, 0
  %v126 = vsel %vm79, %v70, 0
  %vm128 = vcmask 1043456
  %v130 = vsel %vm128, %v71, 0
  %132 = vmatprep.subr.mxu0 0.0
  %133 = vmatpush1.msra.mxu0 %v130
  %134 = vmatprep.subr.mxu0 0.0
  %135 = vmatpush1.msra.mxu0 0.0
  %136 = vmatprep.subr.mxu0 0.0
  %137 = vmatpush1.msra.mxu0 0.0
  %138 = vmatprep.subr.mxu0 0.0
  %139 = vmatpush1.msra.mxu0 0.0
  %140 = vmatprep.subr.mxu0 0.0
  %141 = vmatpush1.msra.mxu0 0.0
  %142 = vmatprep.subr.mxu0 0.0
  %143 = vmatpush1.msra.mxu0 0.0
  %144 = vmatprep.subr.mxu0 0.0
  %145 = vmatpush1.msra.mxu0 0.0
  %146 = vmatprep.subr.mxu0 0.0
  %147 = vmatpush1.msra.mxu0 0.0
  %148 = vmatprep.subr.mxu0 0.0
  %149 = vmatpush1.msra.mxu0 0.0
  %150 = vmatprep.subr.mxu0 0.0
  %151 = vmatpush1.msra.mxu0 0.0
  %152 = vmatprep.subr.mxu0 0.0
  %153 = vmatpush1.msra.mxu0 0.0
  %154 = vmatprep.subr.mxu0 0.0
  %155 = vmatpush1.msra.mxu0 0.0
  %156 = vmatprep.subr.mxu0 0.0
  %157 = vmatpush1.msra.mxu0 0.0
  %158 = vmatprep.subr.mxu0 0.0
  %159 = vmatpush1.msra.mxu0 0.0
  %160 = vmatprep.subr.mxu0 0.0
  %161 = vmatpush1.msra.mxu0 0.0
  %162 = vmatprep.subr.mxu0 0.0
  %163 = vmatpush1.msra.mxu0 0.0
  %164 = vmatprep.subr.mxu0 0.0
  %165 = vmatpush1.msra.mxu0 0.0
  %166 = vmatprep.subr.mxu0 0.0
  %167 = vmatpush1.msra.mxu0 0.0
  %168 = vmatprep.subr.mxu0 0.0
  %169 = vmatpush1.msra.mxu0 0.0
  %170 = vmatprep.subr.mxu0 0.0
  %171 = vmatpush1.msra.mxu0 0.0
  %172 = vmatprep.subr.mxu0 0.0
  %173 = vmatpush1.msra.mxu0 0.0
  %174 = vmatprep.subr.mxu0 0.0
  %175 = vmatpush1.msra.mxu0 0.0
  %176 = vmatprep.subr.mxu0 0.0
  %177 = vmatpush1.msra.mxu0 0.0
  %178 = vmatprep.subr.mxu0 0.0
  %179 = vmatpush1.msra.mxu0 0.0
  %180 = vmatprep.subr.mxu0 0.0
  %181 = vmatpush1.msra.mxu0 0.0
  %182 = vmatprep.subr.mxu0 0.0
  %183 = vmatpush1.msra.mxu0 0.0
  %184 = vmatprep.subr.mxu0 0.0
  %185 = vmatpush1.msra.mxu0 0.0
  %186 = vmatprep.subr.mxu0 0.0
  %187 = vmatpush1.msra.mxu0 0.0
  %188 = vmatprep.subr.mxu0 0.0
  %189 = vmatpush1.msra.mxu0 0.0
  %190 = vmatprep.subr.mxu0 0.0
  %191 = vmatpush1.msra.mxu0 0.0
  %192 = vmatprep.subr.mxu0 0.0
  %193 = vmatpush1.msra.mxu0 0.0
  %194 = vmatprep.subr.mxu0 0.0
  %195 = vmatpush1.msra.mxu0 0.0
  %196 = vmatprep.mubr.f32.mxu0 0.0
  %197 = vmatmul.mubr.f32.gmra.mrb[0].mxu0 %v81
  %v198 = vpop.f32.mrb[0].mxu0
  %v199 = vadd.f32 %v77, %v198
  %v200 = vpop.f32.mrb[0].mxu0
  %201 = vmatprep.mubr.f32.mxu0 0.0
  %202 = vmatmul.mubr.f32.gmra.mrb[0].mxu0 %v84
  %v203 = vpop.f32.mrb[0].mxu0
  %v204 = vadd.f32 %v77, %v203
  %v205 = vpop.f32.mrb[0].mxu0
  %206 = vmatprep.mubr.f32.mxu0 0.0
  %207 = vmatmul.mubr.f32.gmra.mrb[0].mxu0 %v87
  %v208 = vpop.f32.mrb[0].mxu0
  %v209 = vadd.f32 %v77, %v208
  %v210 = vpop.f32.mrb[0].mxu0
  %211 = vmatprep.mubr.f32.mxu0 0.0
  %212 = vmatmul.mubr.f32.gmra.mrb[0].mxu0 %v90
  %v213 = vpop.f32.mrb[0].mxu0
  %v214 = vadd.f32 %v77, %v213
  %v215 = vpop.f32.mrb[0].mxu0
  %216 = vmatprep.mubr.f32.mxu0 0.0
  %217 = vmatmul.mubr.f32.gmra.mrb[0].mxu0 %v93
  %v218 = vpop.f32.mrb[0].mxu0
  %v219 = vadd.f32 %v77, %v218
  %v220 = vpop.f32.mrb[0].mxu0
  %221 = vmatprep.mubr.f32.mxu0 0.0
  %222 = vmatmul.mubr.f32.gmra.mrb[0].mxu0 %v96
  %v223 = vpop.f32.mrb[0].mxu0
  %v224 = vadd.f32 %v77, %v223
  %v225 = vpop.f32.mrb[0].mxu0
  %226 = vmatprep.mubr.f32.mxu0 0.0
  %227 = vmatmul.mubr.f32.gmra.mrb[0].mxu0 %v99
  %v228 = vpop.f32.mrb[0].mxu0
  %v229 = vadd.f32 %v77, %v228
  %v230 = vpop.f32.mrb[0].mxu0
  %231 = vmatprep.mubr.f32.mxu0 0.0
  %232 = vmatmul.mubr.f32.gmra.mrb[0].mxu0 %v102
  %v233 = vpop.f32.mrb[0].mxu0
  %v234 = vadd.f32 %v77, %v233
  %v235 = vpop.f32.mrb[0].mxu0
  %236 = vmatprep.mubr.f32.mxu0 0.0
  %237 = vmatmul.mubr.f32.gmra.mrb[0].mxu0 %v105
  %v238 = vpop.f32.mrb[0].mxu0
  %v239 = vadd.f32 %v77, %v238
  %v240 = vpop.f32.mrb[0].mxu0
  %241 = vmatprep.mubr.f32.mxu0 0.0
  %242 = vmatmul.mubr.f32.gmra.mrb[0].mxu0 %v108
  %v243 = vpop.f32.mrb[0].mxu0
  %v244 = vadd.f32 %v77, %v243
  %v245 = vpop.f32.mrb[0].mxu0
  %246 = vmatprep.mubr.f32.mxu0 0.0
  %247 = vmatmul.mubr.f32.gmra.mrb[0].mxu0 %v111
  %v248 = vpop.f32.mrb[0].mxu0
  %v249 = vadd.f32 %v77, %v248
  %v250 = vpop.f32.mrb[0].mxu0
  %251 = vmatprep.mubr.f32.mxu0 0.0
  %252 = vmatmul.mubr.f32.gmra.mrb[0].mxu0 %v114
  %v253 = vpop.f32.mrb[0].mxu0
  %v254 = vadd.f32 %v77, %v253
  %v255 = vpop.f32.mrb[0].mxu0
  %256 = vmatprep.mubr.f32.mxu0 0.0
  %257 = vmatmul.mubr.f32.gmra.mrb[0].mxu0 %v117
  %v258 = vpop.f32.mrb[0].mxu0
  %v259 = vadd.f32 %v77, %v258
  %v260 = vpop.f32.mrb[0].mxu0
  %261 = vmatprep.mubr.f32.mxu0 0.0
  %262 = vmatmul.mubr.f32.gmra.mrb[0].mxu0 %v120
  %v263 = vpop.f32.mrb[0].mxu0
  %v264 = vadd.f32 %v77, %v263
  %v265 = vpop.f32.mrb[0].mxu0
  %266 = vmatprep.mubr.f32.mxu0 0.0
  %267 = vmatmul.mubr.f32.gmra.mrb[0].mxu0 %v123
  %v268 = vpop.f32.mrb[0].mxu0
  %v269 = vadd.f32 %v77, %v268
  %v270 = vpop.f32.mrb[0].mxu0
  %271 = vmatprep.mubr.f32.mxu0 0.0
  %272 = vmatmul.mubr.f32.gmra.mrb[0].mxu0 %v126
  %v273 = vpop.f32.mrb[0].mxu0
  %v274 = vadd.f32 %v77, %v273
  %v275 = vpop.f32.mrb[0].mxu0
  %276 = vdwg.mxu0
  %277 = vst [vmem:[#allocation4] sm:$0xff] %v199
  %278 = vst [vmem:[#allocation4 + $0x8] sm:$0xff] %v204
  %279 = vst [vmem:[#allocation4 + $0x10] sm:$0xff] %v209
  %280 = vst [vmem:[#allocation4 + $0x18] sm:$0xff] %v214
  %281 = vst [vmem:[#allocation4 + $0x20] sm:$0xff] %v219
  %282 = vst [vmem:[#allocation4 + $0x28] sm:$0xff] %v224
  %283 = vst [vmem:[#allocation4 + $0x30] sm:$0xff] %v229
  %284 = vst [vmem:[#allocation4 + $0x38] sm:$0xff] %v234
  %285 = vst [vmem:[#allocation4 + $0x40] sm:$0xff] %v239
  %286 = vst [vmem:[#allocation4 + $0x48] sm:$0xff] %v244
  %287 = vst [vmem:[#allocation4 + $0x50] sm:$0xff] %v249
  %288 = vst [vmem:[#allocation4 + $0x58] sm:$0xff] %v254
  %289 = vst [vmem:[#allocation4 + $0x60] sm:$0xff] %v259
  %290 = vst [vmem:[#allocation4 + $0x68] sm:$0xff] %v264
  %291 = vst [vmem:[#allocation4 + $0x70] sm:$0xff] %v269
  %292 = vst [vmem:[#allocation4 + $0x78] sm:$0xff] %v274
  %v293 = vld [vmem:[%s4] sm:$0xf]
  %v294 = vld [vmem:[%s6] sm:$0x1]
  %v296 = vlaneseq
  %v297 = vshrl.u32 %v296, 7
  %v298 = vsub.s32 0, %v297
  %v299 = vrot.slane %v294, %v298
  %v302 = vsel %vm128, %v293, 0
  %304 = vmatprep.subr.mxu0 0.0
  %305 = vmatpush1.msra.mxu0 %v302
  %306 = vmatprep.subr.mxu0 0.0
  %307 = vmatpush1.msra.mxu0 0.0
  %308 = vmatprep.subr.mxu0 0.0
  %309 = vmatpush1.msra.mxu0 0.0
  %310 = vmatprep.subr.mxu0 0.0
  %311 = vmatpush1.msra.mxu0 0.0
  %312 = vmatprep.subr.mxu0 0.0
  %313 = vmatpush1.msra.mxu0 0.0
  %314 = vmatprep.subr.mxu0 0.0
  %315 = vmatpush1.msra.mxu0 0.0
  %316 = vmatprep.subr.mxu0 0.0
  %317 = vmatpush1.msra.mxu0 0.0
  %318 = vmatprep.subr.mxu0 0.0
  %319 = vmatpush1.msra.mxu0 0.0
  %320 = vmatprep.subr.mxu0 0.0
  %321 = vmatpush1.msra.mxu0 0.0
  %322 = vmatprep.subr.mxu0 0.0
  %323 = vmatpush1.msra.mxu0 0.0
  %324 = vmatprep.subr.mxu0 0.0
  %325 = vmatpush1.msra.mxu0 0.0
  %326 = vmatprep.subr.mxu0 0.0
  %327 = vmatpush1.msra.mxu0 0.0
  %328 = vmatprep.subr.mxu0 0.0
  %329 = vmatpush1.msra.mxu0 0.0
  %330 = vmatprep.subr.mxu0 0.0
  %331 = vmatpush1.msra.mxu0 0.0
  %332 = vmatprep.subr.mxu0 0.0
  %333 = vmatpush1.msra.mxu0 0.0
  %334 = vmatprep.subr.mxu0 0.0
  %335 = vmatpush1.msra.mxu0 0.0
  %336 = vmatprep.subr.mxu0 0.0
  %337 = vmatpush1.msra.mxu0 0.0
  %338 = vmatprep.subr.mxu0 0.0
  %339 = vmatpush1.msra.mxu0 0.0
  %340 = vmatprep.subr.mxu0 0.0
  %341 = vmatpush1.msra.mxu0 0.0
  %342 = vmatprep.subr.mxu0 0.0
  %343 = vmatpush1.msra.mxu0 0.0
  %344 = vmatprep.subr.mxu0 0.0
  %345 = vmatpush1.msra.mxu0 0.0
  %346 = vmatprep.subr.mxu0 0.0
  %347 = vmatpush1.msra.mxu0 0.0
  %348 = vmatprep.subr.mxu0 0.0
  %349 = vmatpush1.msra.mxu0 0.0
  %350 = vmatprep.subr.mxu0 0.0
  %351 = vmatpush1.msra.mxu0 0.0
  %352 = vmatprep.subr.mxu0 0.0
  %353 = vmatpush1.msra.mxu0 0.0
  %354 = vmatprep.subr.mxu0 0.0
  %355 = vmatpush1.msra.mxu0 0.0
  %356 = vmatprep.subr.mxu0 0.0
  %357 = vmatpush1.msra.mxu0 0.0
  %358 = vmatprep.subr.mxu0 0.0
  %359 = vmatpush1.msra.mxu0 0.0
  %360 = vmatprep.subr.mxu0 0.0
  %361 = vmatpush1.msra.mxu0 0.0
  %362 = vmatprep.subr.mxu0 0.0
  %363 = vmatpush1.msra.mxu0 0.0
  %364 = vmatprep.subr.mxu0 0.0
  %365 = vmatpush1.msra.mxu0 0.0
  %366 = vmatprep.subr.mxu0 0.0
  %367 = vmatpush1.msra.mxu0 0.0
  %368 = vmatprep.mubr.f32.mxu0 0.0
  %369 = vmatmul.mubr.f32.gmra.mrb[0].mxu0 %v81
  %v370 = vpop.f32.mrb[0].mxu0
  %v371 = vadd.f32 %v299, %v370
  %v372 = vpop.f32.mrb[0].mxu0
  %373 = vmatprep.mubr.f32.mxu0 0.0
  %374 = vmatmul.mubr.f32.gmra.mrb[0].mxu0 %v84
  %v375 = vpop.f32.mrb[0].mxu0
  %v376 = vadd.f32 %v299, %v375
  %v377 = vpop.f32.mrb[0].mxu0
  %378 = vmatprep.mubr.f32.mxu0 0.0
  %379 = vmatmul.mubr.f32.gmra.mrb[0].mxu0 %v87
  %v380 = vpop.f32.mrb[0].mxu0
  %v381 = vadd.f32 %v299, %v380
  %v382 = vpop.f32.mrb[0].mxu0
  %383 = vmatprep.mubr.f32.mxu0 0.0
  %384 = vmatmul.mubr.f32.gmra.mrb[0].mxu0 %v90
  %v385 = vpop.f32.mrb[0].mxu0
  %v386 = vadd.f32 %v299, %v385
  %v387 = vpop.f32.mrb[0].mxu0
  %388 = vmatprep.mubr.f32.mxu0 0.0
  %389 = vmatmul.mubr.f32.gmra.mrb[0].mxu0 %v93
  %v390 = vpop.f32.mrb[0].mxu0
  %v391 = vadd.f32 %v299, %v390
  %v392 = vpop.f32.mrb[0].mxu0
  %393 = vmatprep.mubr.f32.mxu0 0.0
  %394 = vmatmul.mubr.f32.gmra.mrb[0].mxu0 %v96
  %v395 = vpop.f32.mrb[0].mxu0
  %v396 = vadd.f32 %v299, %v395
  %v397 = vpop.f32.mrb[0].mxu0
  %398 = vmatprep.mubr.f32.mxu0 0.0
  %399 = vmatmul.mubr.f32.gmra.mrb[0].mxu0 %v99
  %v400 = vpop.f32.mrb[0].mxu0
  %v401 = vadd.f32 %v299, %v400
  %v402 = vpop.f32.mrb[0].mxu0
  %403 = vmatprep.mubr.f32.mxu0 0.0
  %404 = vmatmul.mubr.f32.gmra.mrb[0].mxu0 %v102
  %v405 = vpop.f32.mrb[0].mxu0
  %v406 = vadd.f32 %v299, %v405
  %v407 = vpop.f32.mrb[0].mxu0
  %408 = vmatprep.mubr.f32.mxu0 0.0
  %409 = vmatmul.mubr.f32.gmra.mrb[0].mxu0 %v105
  %v410 = vpop.f32.mrb[0].mxu0
  %v411 = vadd.f32 %v299, %v410
  %v412 = vpop.f32.mrb[0].mxu0
  %413 = vmatprep.mubr.f32.mxu0 0.0
  %414 = vmatmul.mubr.f32.gmra.mrb[0].mxu0 %v108
  %v415 = vpop.f32.mrb[0].mxu0
  %v416 = vadd.f32 %v299, %v415
  %v417 = vpop.f32.mrb[0].mxu0
  %418 = vmatprep.mubr.f32.mxu0 0.0
  %419 = vmatmul.mubr.f32.gmra.mrb[0].mxu0 %v111
  %v420 = vpop.f32.mrb[0].mxu0
  %v421 = vadd.f32 %v299, %v420
  %v422 = vpop.f32.mrb[0].mxu0
  %423 = vmatprep.mubr.f32.mxu0 0.0
  %424 = vmatmul.mubr.f32.gmra.mrb[0].mxu0 %v114
  %v425 = vpop.f32.mrb[0].mxu0
  %v426 = vadd.f32 %v299, %v425
  %v427 = vpop.f32.mrb[0].mxu0
  %428 = vmatprep.mubr.f32.mxu0 0.0
  %429 = vmatmul.mubr.f32.gmra.mrb[0].mxu0 %v117
  %v430 = vpop.f32.mrb[0].mxu0
  %v431 = vadd.f32 %v299, %v430
  %v432 = vpop.f32.mrb[0].mxu0
  %433 = vmatprep.mubr.f32.mxu0 0.0
  %434 = vmatmul.mubr.f32.gmra.mrb[0].mxu0 %v120
  %v435 = vpop.f32.mrb[0].mxu0
  %v436 = vadd.f32 %v299, %v435
  %v437 = vpop.f32.mrb[0].mxu0
  %438 = vmatprep.mubr.f32.mxu0 0.0
  %439 = vmatmul.mubr.f32.gmra.mrb[0].mxu0 %v123
  %v440 = vpop.f32.mrb[0].mxu0
  %v441 = vadd.f32 %v299, %v440
  %v442 = vpop.f32.mrb[0].mxu0
  %443 = vmatprep.mubr.f32.mxu0 0.0
  %444 = vmatmul.mubr.f32.gmra.mrb[0].mxu0 %v126
  %v445 = vpop.f32.mrb[0].mxu0
  %v446 = vadd.f32 %v299, %v445
  %v447 = vpop.f32.mrb[0].mxu0
  %448 = vdwg.mxu0
  %449 = vst [vmem:[#allocation5] sm:$0xff] %v371
  %450 = vst [vmem:[#allocation5 + $0x8] sm:$0xff] %v376
  %451 = vst [vmem:[#allocation5 + $0x10] sm:$0xff] %v381
  %452 = vst [vmem:[#allocation5 + $0x18] sm:$0xff] %v386
  %453 = vst [vmem:[#allocation5 + $0x20] sm:$0xff] %v391
  %454 = vst [vmem:[#allocation5 + $0x28] sm:$0xff] %v396
  %455 = vst [vmem:[#allocation5 + $0x30] sm:$0xff] %v401
  %456 = vst [vmem:[#allocation5 + $0x38] sm:$0xff] %v406
  %457 = vst [vmem:[#allocation5 + $0x40] sm:$0xff] %v411
  %458 = vst [vmem:[#allocation5 + $0x48] sm:$0xff] %v416
  %459 = vst [vmem:[#allocation5 + $0x50] sm:$0xff] %v421
  %460 = vst [vmem:[#allocation5 + $0x58] sm:$0xff] %v426
  %461 = vst [vmem:[#allocation5 + $0x60] sm:$0xff] %v431
  %462 = vst [vmem:[#allocation5 + $0x68] sm:$0xff] %v436
  %463 = vst [vmem:[#allocation5 + $0x70] sm:$0xff] %v441
  %464 = vst [vmem:[#allocation5 + $0x78] sm:$0xff] %v446
  %v465 = vld [vmem:[#allocation4] sm:$0xff]
  %vm466 = vcmask 261120
  %v468 = vsel %vm466, 0.0, 0
  %470 = vmatprep.subr.mxu0 0.0
  %471 = vmatpush1.msra.mxu0 %v47
  %472 = vmatprep.subr.mxu0 0.0
  %473 = vmatpush1.msra.mxu0 %v48
  %474 = vmatprep.subr.mxu0 0.0
  %475 = vmatpush1.msra.mxu0 %v49
  %476 = vmatprep.subr.mxu0 0.0
  %477 = vmatpush1.msra.mxu0 %v50
  %478 = vmatprep.subr.mxu0 0.0
  %479 = vmatpush1.msra.mxu0 0.0
  %480 = vmatprep.subr.mxu0 0.0
  %481 = vmatpush1.msra.mxu0 0.0
  %482 = vmatprep.subr.mxu0 0.0
  %483 = vmatpush1.msra.mxu0 0.0
  %484 = vmatprep.subr.mxu0 0.0
  %485 = vmatpush1.msra.mxu0 0.0
  %486 = vmatprep.subr.mxu0 0.0
  %487 = vmatpush1.msra.mxu0 0.0
  %488 = vmatprep.subr.mxu0 0.0
  %489 = vmatpush1.msra.mxu0 0.0
  %490 = vmatprep.subr.mxu0 0.0
  %491 = vmatpush1.msra.mxu0 0.0
  %492 = vmatprep.subr.mxu0 0.0
  %493 = vmatpush1.msra.mxu0 0.0
  %494 = vmatprep.subr.mxu0 0.0
  %495 = vmatpush1.msra.mxu0 0.0
  %496 = vmatprep.subr.mxu0 0.0
  %497 = vmatpush1.msra.mxu0 0.0
  %498 = vmatprep.subr.mxu0 0.0
  %499 = vmatpush1.msra.mxu0 0.0
  %500 = vmatprep.subr.mxu0 0.0
  %501 = vmatpush1.msra.mxu0 0.0
  %502 = vmatprep.subr.mxu0 0.0
  %503 = vmatpush1.msra.mxu0 0.0
  %504 = vmatprep.subr.mxu0 0.0
  %505 = vmatpush1.msra.mxu0 0.0
  %506 = vmatprep.subr.mxu0 0.0
  %507 = vmatpush1.msra.mxu0 0.0
  %508 = vmatprep.subr.mxu0 0.0
  %509 = vmatpush1.msra.mxu0 0.0
  %510 = vmatprep.subr.mxu0 0.0
  %511 = vmatpush1.msra.mxu0 0.0
  %512 = vmatprep.subr.mxu0 0.0
  %513 = vmatpush1.msra.mxu0 0.0
  %514 = vmatprep.subr.mxu0 0.0
  %515 = vmatpush1.msra.mxu0 0.0
  %516 = vmatprep.subr.mxu0 0.0
  %517 = vmatpush1.msra.mxu0 0.0
  %518 = vmatprep.subr.mxu0 0.0
  %519 = vmatpush1.msra.mxu0 0.0
  %520 = vmatprep.subr.mxu0 0.0
  %521 = vmatpush1.msra.mxu0 0.0
  %522 = vmatprep.subr.mxu0 0.0
  %523 = vmatpush1.msra.mxu0 0.0
  %524 = vmatprep.subr.mxu0 0.0
  %525 = vmatpush1.msra.mxu0 0.0
  %526 = vmatprep.subr.mxu0 0.0
  %527 = vmatpush1.msra.mxu0 0.0
  %528 = vmatprep.subr.mxu0 0.0
  %529 = vmatpush1.msra.mxu0 0.0
  %530 = vmatprep.subr.mxu0 0.0
  %531 = vmatpush1.msra.mxu0 0.0
  %532 = vmatprep.subr.mxu0 0.0
  %533 = vmatpush1.msra.mxu0 0.0
  %534 = vmatprep.mubr.f32.mxu0 0.0
  %535 = vmatmul.mubr.f32.gmra.mrb[0].mxu0 %v468
  %v536 = vpop.f32.mrb[0].mxu0
  %v537 = vadd.f32 0.0, %v536
  %v538 = vpop.f32.mrb[0].mxu0
  %539 = vdwg.mxu0
  %v540 = vadd.f32 %v465, %v537
  %s541 = scalar_lea.vmem [#allocation5], 120
  %v542 = vld [vmem:[%s541] sm:$0xff]
  %543 = vmatprep.subr.mxu0 0.0
  %544 = vmatpush1.msra.mxu0 %v51
  %545 = vmatprep.subr.mxu0 0.0
  %546 = vmatpush1.msra.mxu0 %v52
  %547 = vmatprep.subr.mxu0 0.0
  %548 = vmatpush1.msra.mxu0 %v53
  %549 = vmatprep.subr.mxu0 0.0
  %550 = vmatpush1.msra.mxu0 %v54
  %551 = vmatprep.subr.mxu0 0.0
  %552 = vmatpush1.msra.mxu0 0.0
  %553 = vmatprep.subr.mxu0 0.0
  %554 = vmatpush1.msra.mxu0 0.0
  %555 = vmatprep.subr.mxu0 0.0
  %556 = vmatpush1.msra.mxu0 0.0
  %557 = vmatprep.subr.mxu0 0.0
  %558 = vmatpush1.msra.mxu0 0.0
  %559 = vmatprep.subr.mxu0 0.0
  %560 = vmatpush1.msra.mxu0 0.0
  %561 = vmatprep.subr.mxu0 0.0
  %562 = vmatpush1.msra.mxu0 0.0
  %563 = vmatprep.subr.mxu0 0.0
  %564 = vmatpush1.msra.mxu0 0.0
  %565 = vmatprep.subr.mxu0 0.0
  %566 = vmatpush1.msra.mxu0 0.0
  %567 = vmatprep.subr.mxu0 0.0
  %568 = vmatpush1.msra.mxu0 0.0
  %569 = vmatprep.subr.mxu0 0.0
  %570 = vmatpush1.msra.mxu0 0.0
  %571 = vmatprep.subr.mxu0 0.0
  %572 = vmatpush1.msra.mxu0 0.0
  %573 = vmatprep.subr.mxu0 0.0
  %574 = vmatpush1.msra.mxu0 0.0
  %575 = vmatprep.subr.mxu0 0.0
  %576 = vmatpush1.msra.mxu0 0.0
  %577 = vmatprep.subr.mxu0 0.0
  %578 = vmatpush1.msra.mxu0 0.0
  %579 = vmatprep.subr.mxu0 0.0
  %580 = vmatpush1.msra.mxu0 0.0
  %581 = vmatprep.subr.mxu0 0.0
  %582 = vmatpush1.msra.mxu0 0.0
  %583 = vmatprep.subr.mxu0 0.0
  %584 = vmatpush1.msra.mxu0 0.0
  %585 = vmatprep.subr.mxu0 0.0
  %586 = vmatpush1.msra.mxu0 0.0
  %587 = vmatprep.subr.mxu0 0.0
  %588 = vmatpush1.msra.mxu0 0.0
  %589 = vmatprep.subr.mxu0 0.0
  %590 = vmatpush1.msra.mxu0 0.0
  %591 = vmatprep.subr.mxu0 0.0
  %592 = vmatpush1.msra.mxu0 0.0
  %593 = vmatprep.subr.mxu0 0.0
  %594 = vmatpush1.msra.mxu0 0.0
  %595 = vmatprep.subr.mxu0 0.0
  %596 = vmatpush1.msra.mxu0 0.0
  %597 = vmatprep.subr.mxu0 0.0
  %598 = vmatpush1.msra.mxu0 0.0
  %599 = vmatprep.subr.mxu0 0.0
  %600 = vmatpush1.msra.mxu0 0.0
  %601 = vmatprep.subr.mxu0 0.0
  %602 = vmatpush1.msra.mxu0 0.0
  %603 = vmatprep.subr.mxu0 0.0
  %604 = vmatpush1.msra.mxu0 0.0
  %605 = vmatprep.subr.mxu0 0.0
  %606 = vmatpush1.msra.mxu0 0.0
  %607 = vmatprep.mubr.f32.mxu0 0.0
  %608 = vmatmul.mubr.f32.gmra.mrb[0].mxu0 %v468
  %v609 = vpop.f32.mrb[0].mxu0
  %v610 = vadd.f32 0.0, %v609
  %v611 = vpop.f32.mrb[0].mxu0
  %612 = vdwg.mxu0
  %v613 = vadd.f32 %v542, %v610
  %v614 = vxor.u32 %v540, 2147483648
  %v615 = vmul.f32 %v614, 1.442695
  %v616 = vpow.pop %v615
  %v617 = vadd.f32 %v616, 1.0
  %v618 = vrcp.pop %v617
  %v619 = vmul.f32 1.0, %v618
  %v620 = vtanh.pop %v540
  %v621 = vmul.f32 %v619, 0.0
  %623 = vrot.lane.b32.xlu0 %v620, 64
  %v624 = vpop.permute.xlu0 %623
  %v626 = vmul.f32 %v619, %v624
  %628 = vrot.lane.b32.xlu0 %v626, 32
  %v629 = vpop.permute.xlu0 %628
  %v631 = vadd.f32 %v621, %v629
  %v632 = vtanh.pop %v631
  %634 = vrot.lane.b32.xlu0 %v632, 64
  %v635 = vpop.permute.xlu0 %634
  %v637 = vmul.f32 %v619, %v635
  %v638 = vxor.u32 %v613, 2147483648
  %v639 = vmul.f32 %v638, 1.442695
  %v640 = vpow.pop %v639
  %v641 = vadd.f32 %v640, 1.0
  %v642 = vrcp.pop %v641
  %v643 = vmul.f32 1.0, %v642
  %v644 = vtanh.pop %v613
  %v645 = vmul.f32 %v643, 0.0
  %647 = vrot.lane.b32.xlu0 %v644, 64
  %v648 = vpop.permute.xlu0 %647
  %v650 = vmul.f32 %v643, %v648
  %652 = vrot.lane.b32.xlu0 %v650, 32
  %v653 = vpop.permute.xlu0 %652
  %v655 = vadd.f32 %v645, %v653
  %v656 = vtanh.pop %v655
  %658 = vrot.lane.b32.xlu0 %v656, 64
  %v659 = vpop.permute.xlu0 %658
  %v661 = vmul.f32 %v643, %v659
  %663 = vrot.lane.b32.xlu0 %v637, 32
  %v664 = vpop.permute.xlu0 %663
  %666 = vst.msk [vmem:[#allocation2] sm:$0xff] %vm466, %v664
  %668 = vrot.lane.b32.xlu0 %v661, 32
  %v669 = vpop.permute.xlu0 %668
  %s671 = scalar_lea.vmem [#allocation3], 120
  %672 = vst.msk [vmem:[%s671] sm:$0xff] %vm466, %v669
  %s673 = scalar_lea.vmem [#allocation4], 8
  %v674 = vld [vmem:[%s673] sm:$0xff]
  %v675 = vsel %vm466, %v664, 0
  %677 = vmatprep.subr.mxu0 0.0
  %678 = vmatpush1.msra.mxu0 %v47
  %679 = vmatprep.subr.mxu0 0.0
  %680 = vmatpush1.msra.mxu0 %v48
  %681 = vmatprep.subr.mxu0 0.0
  %682 = vmatpush1.msra.mxu0 %v49
  %683 = vmatprep.subr.mxu0 0.0
  %684 = vmatpush1.msra.mxu0 %v50
  %685 = vmatprep.subr.mxu0 0.0
  %686 = vmatpush1.msra.mxu0 0.0
  %687 = vmatprep.subr.mxu0 0.0
  %688 = vmatpush1.msra.mxu0 0.0
  %689 = vmatprep.subr.mxu0 0.0
  %690 = vmatpush1.msra.mxu0 0.0
  %691 = vmatprep.subr.mxu0 0.0
  %692 = vmatpush1.msra.mxu0 0.0
  %693 = vmatprep.subr.mxu0 0.0
  %694 = vmatpush1.msra.mxu0 0.0
  %695 = vmatprep.subr.mxu0 0.0
  %696 = vmatpush1.msra.mxu0 0.0
  %697 = vmatprep.subr.mxu0 0.0
  %698 = vmatpush1.msra.mxu0 0.0
  %699 = vmatprep.subr.mxu0 0.0
  %700 = vmatpush1.msra.mxu0 0.0
  %701 = vmatprep.subr.mxu0 0.0
  %702 = vmatpush1.msra.mxu0 0.0
  %703 = vmatprep.subr.mxu0 0.0
  %704 = vmatpush1.msra.mxu0 0.0
  %705 = vmatprep.subr.mxu0 0.0
  %706 = vmatpush1.msra.mxu0 0.0
  %707 = vmatprep.subr.mxu0 0.0
  %708 = vmatpush1.msra.mxu0 0.0
  %709 = vmatprep.subr.mxu0 0.0
  %710 = vmatpush1.msra.mxu0 0.0
  %711 = vmatprep.subr.mxu0 0.0
  %712 = vmatpush1.msra.mxu0 0.0
  %713 = vmatprep.subr.mxu0 0.0
  %714 = vmatpush1.msra.mxu0 0.0
  %715 = vmatprep.subr.mxu0 0.0
  %716 = vmatpush1.msra.mxu0 0.0
  %717 = vmatprep.subr.mxu0 0.0
  %718 = vmatpush1.msra.mxu0 0.0
  %719 = vmatprep.subr.mxu0 0.0
  %720 = vmatpush1.msra.mxu0 0.0
  %721 = vmatprep.subr.mxu0 0.0
  %722 = vmatpush1.msra.mxu0 0.0
  %723 = vmatprep.subr.mxu0 0.0
  %724 = vmatpush1.msra.mxu0 0.0
  %725 = vmatprep.subr.mxu0 0.0
  %726 = vmatpush1.msra.mxu0 0.0
  %727 = vmatprep.subr.mxu0 0.0
  %728 = vmatpush1.msra.mxu0 0.0
  %729 = vmatprep.subr.mxu0 0.0
  %730 = vmatpush1.msra.mxu0 0.0
  %731 = vmatprep.subr.mxu0 0.0
  %732 = vmatpush1.msra.mxu0 0.0
  %733 = vmatprep.subr.mxu0 0.0
  %734 = vmatpush1.msra.mxu0 0.0
  %735 = vmatprep.subr.mxu0 0.0
  %736 = vmatpush1.msra.mxu0 0.0
  %737 = vmatprep.subr.mxu0 0.0
  %738 = vmatpush1.msra.mxu0 0.0
  %739 = vmatprep.subr.mxu0 0.0
  %740 = vmatpush1.msra.mxu0 0.0
  %741 = vmatprep.mubr.f32.mxu0 0.0
  %742 = vmatmul.mubr.f32.gmra.mrb[0].mxu0 %v675
  %v743 = vpop.f32.mrb[0].mxu0
  %v744 = vadd.f32 0.0, %v743
  %v745 = vpop.f32.mrb[0].mxu0
  %746 = vdwg.mxu0
  %v747 = vadd.f32 %v674, %v744
  %s748 = scalar_lea.vmem [#allocation5], 112
  %v749 = vld [vmem:[%s748] sm:$0xff]
  %v750 = vsel %vm466, %v669, 0
  %752 = vmatprep.subr.mxu0 0.0
  %753 = vmatpush1.msra.mxu0 %v51
  %754 = vmatprep.subr.mxu0 0.0
  %755 = vmatpush1.msra.mxu0 %v52
  %756 = vmatprep.subr.mxu0 0.0
  %757 = vmatpush1.msra.mxu0 %v53
  %758 = vmatprep.subr.mxu0 0.0
  %759 = vmatpush1.msra.mxu0 %v54
  %760 = vmatprep.subr.mxu0 0.0
  %761 = vmatpush1.msra.mxu0 0.0
  %762 = vmatprep.subr.mxu0 0.0
  %763 = vmatpush1.msra.mxu0 0.0
  %764 = vmatprep.subr.mxu0 0.0
  %765 = vmatpush1.msra.mxu0 0.0
  %766 = vmatprep.subr.mxu0 0.0
  %767 = vmatpush1.msra.mxu0 0.0
  %768 = vmatprep.subr.mxu0 0.0
  %769 = vmatpush1.msra.mxu0 0.0
  %770 = vmatprep.subr.mxu0 0.0
  %771 = vmatpush1.msra.mxu0 0.0
  %772 = vmatprep.subr.mxu0 0.0
  %773 = vmatpush1.msra.mxu0 0.0
  %774 = vmatprep.subr.mxu0 0.0
  %775 = vmatpush1.msra.mxu0 0.0
  %776 = vmatprep.subr.mxu0 0.0
  %777 = vmatpush1.msra.mxu0 0.0
  %778 = vmatprep.subr.mxu0 0.0
  %779 = vmatpush1.msra.mxu0 0.0
  %780 = vmatprep.subr.mxu0 0.0
  %781 = vmatpush1.msra.mxu0 0.0
  %782 = vmatprep.subr.mxu0 0.0
  %783 = vmatpush1.msra.mxu0 0.0
  %784 = vmatprep.subr.mxu0 0.0
  %785 = vmatpush1.msra.mxu0 0.0
  %786 = vmatprep.subr.mxu0 0.0
  %787 = vmatpush1.msra.mxu0 0.0
  %788 = vmatprep.subr.mxu0 0.0
  %789 = vmatpush1.msra.mxu0 0.0
  %790 = vmatprep.subr.mxu0 0.0
  %791 = vmatpush1.msra.mxu0 0.0
  %792 = vmatprep.subr.mxu0 0.0
  %793 = vmatpush1.msra.mxu0 0.0
  %794 = vmatprep.subr.mxu0 0.0
  %795 = vmatpush1.msra.mxu0 0.0
  %796 = vmatprep.subr.mxu0 0.0
  %797 = vmatpush1.msra.mxu0 0.0
  %798 = vmatprep.subr.mxu0 0.0
  %799 = vmatpush1.msra.mxu0 0.0
  %800 = vmatprep.subr.mxu0 0.0
  %801 = vmatpush1.msra.mxu0 0.0
  %802 = vmatprep.subr.mxu0 0.0
  %803 = vmatpush1.msra.mxu0 0.0
  %804 = vmatprep.subr.mxu0 0.0
  %805 = vmatpush1.msra.mxu0 0.0
  %806 = vmatprep.subr.mxu0 0.0
  %807 = vmatpush1.msra.mxu0 0.0
  %808 = vmatprep.subr.mxu0 0.0
  %809 = vmatpush1.msra.mxu0 0.0
  %810 = vmatprep.subr.mxu0 0.0
  %811 = vmatpush1.msra.mxu0 0.0
  %812 = vmatprep.subr.mxu0 0.0
  %813 = vmatpush1.msra.mxu0 0.0
  %814 = vmatprep.subr.mxu0 0.0
  %815 = vmatpush1.msra.mxu0 0.0
  %816 = vmatprep.mubr.f32.mxu0 0.0
  %817 = vmatmul.mubr.f32.gmra.mrb[0].mxu0 %v750
  %v818 = vpop.f32.mrb[0].mxu0
  %v819 = vadd.f32 0.0, %v818
  %v820 = vpop.f32.mrb[0].mxu0
  %821 = vdwg.mxu0
  %v822 = vadd.f32 %v749, %v819
  %v823 = vxor.u32 %v747, 2147483648
  %v824 = vmul.f32 %v823, 1.442695
  %v825 = vpow.pop %v824
  %v826 = vadd.f32 %v825, 1.0
  %v827 = vrcp.pop %v826
  %v828 = vmul.f32 1.0, %v827
  %v829 = vtanh.pop %v747
  %v830 = vmul.f32 %v828, %v631
  %832 = vrot.lane.b32.xlu0 %v829, 64
  %v833 = vpop.permute.xlu0 %832
  %v835 = vmul.f32 %v828, %v833
  %837 = vrot.lane.b32.xlu0 %v835, 32
  %v838 = vpop.permute.xlu0 %837
  %v840 = vadd.f32 %v830, %v838
  %v841 = vtanh.pop %v840
  %843 = vrot.lane.b32.xlu0 %v841, 64
  %v844 = vpop.permute.xlu0 %843
  %v846 = vmul.f32 %v828, %v844
  %v847 = vxor.u32 %v822, 2147483648
  %v848 = vmul.f32 %v847, 1.442695
  %v849 = vpow.pop %v848
  %v850 = vadd.f32 %v849, 1.0
  %v851 = vrcp.pop %v850
  %v852 = vmul.f32 1.0, %v851
  %v853 = vtanh.pop %v822
  %v854 = vmul.f32 %v852, %v655
  %856 = vrot.lane.b32.xlu0 %v853, 64
  %v857 = vpop.permute.xlu0 %856
  %v859 = vmul.f32 %v852, %v857
  %861 = vrot.lane.b32.xlu0 %v859, 32
  %v862 = vpop.permute.xlu0 %861
  %v864 = vadd.f32 %v854, %v862
  %v865 = vtanh.pop %v864
  %867 = vrot.lane.b32.xlu0 %v865, 64
  %v868 = vpop.permute.xlu0 %867
  %v870 = vmul.f32 %v852, %v868
  %872 = vrot.lane.b32.xlu0 %v846, 32
  %v873 = vpop.permute.xlu0 %872
  %s875 = scalar_lea.vmem [#allocation2], 8
  %876 = vst.msk [vmem:[%s875] sm:$0xff] %vm466, %v873
  %878 = vrot.lane.b32.xlu0 %v870, 32
  %v879 = vpop.permute.xlu0 %878
  %s881 = scalar_lea.vmem [#allocation3], 112
  %882 = vst.msk [vmem:[%s881] sm:$0xff] %vm466, %v879
  %s883 = scalar_lea.vmem [#allocation4], 16
  %v884 = vld [vmem:[%s883] sm:$0xff]
  %v885 = vsel %vm466, %v873, 0
  %887 = vmatprep.subr.mxu0 0.0
  %888 = vmatpush1.msra.mxu0 %v47
  %889 = vmatprep.subr.mxu0 0.0
  %890 = vmatpush1.msra.mxu0 %v48
  %891 = vmatprep.subr.mxu0 0.0
  %892 = vmatpush1.msra.mxu0 %v49
  %893 = vmatprep.subr.mxu0 0.0
  %894 = vmatpush1.msra.mxu0 %v50
  %895 = vmatprep.subr.mxu0 0.0
  %896 = vmatpush1.msra.mxu0 0.0
  %897 = vmatprep.subr.mxu0 0.0
  %898 = vmatpush1.msra.mxu0 0.0
  %899 = vmatprep.subr.mxu0 0.0
  %900 = vmatpush1.msra.mxu0 0.0
  %901 = vmatprep.subr.mxu0 0.0
  %902 = vmatpush1.msra.mxu0 0.0
  %903 = vmatprep.subr.mxu0 0.0
  %904 = vmatpush1.msra.mxu0 0.0
  %905 = vmatprep.subr.mxu0 0.0
  %906 = vmatpush1.msra.mxu0 0.0
  %907 = vmatprep.subr.mxu0 0.0
  %908 = vmatpush1.msra.mxu0 0.0
  %909 = vmatprep.subr.mxu0 0.0
  %910 = vmatpush1.msra.mxu0 0.0
  %911 = vmatprep.subr.mxu0 0.0
  %912 = vmatpush1.msra.mxu0 0.0
  %913 = vmatprep.subr.mxu0 0.0
  %914 = vmatpush1.msra.mxu0 0.0
  %915 = vmatprep.subr.mxu0 0.0
  %916 = vmatpush1.msra.mxu0 0.0
  %917 = vmatprep.subr.mxu0 0.0
  %918 = vmatpush1.msra.mxu0 0.0
  %919 = vmatprep.subr.mxu0 0.0
  %920 = vmatpush1.msra.mxu0 0.0
  %921 = vmatprep.subr.mxu0 0.0
  %922 = vmatpush1.msra.mxu0 0.0
  %923 = vmatprep.subr.mxu0 0.0
  %924 = vmatpush1.msra.mxu0 0.0
  %925 = vmatprep.subr.mxu0 0.0
  %926 = vmatpush1.msra.mxu0 0.0
  %927 = vmatprep.subr.mxu0 0.0
  %928 = vmatpush1.msra.mxu0 0.0
  %929 = vmatprep.subr.mxu0 0.0
  %930 = vmatpush1.msra.mxu0 0.0
  %931 = vmatprep.subr.mxu0 0.0
  %932 = vmatpush1.msra.mxu0 0.0
  %933 = vmatprep.subr.mxu0 0.0
  %934 = vmatpush1.msra.mxu0 0.0
  %935 = vmatprep.subr.mxu0 0.0
  %936 = vmatpush1.msra.mxu0 0.0
  %937 = vmatprep.subr.mxu0 0.0
  %938 = vmatpush1.msra.mxu0 0.0
  %939 = vmatprep.subr.mxu0 0.0
  %940 = vmatpush1.msra.mxu0 0.0
  %941 = vmatprep.subr.mxu0 0.0
  %942 = vmatpush1.msra.mxu0 0.0
  %943 = vmatprep.subr.mxu0 0.0
  %944 = vmatpush1.msra.mxu0 0.0
  %945 = vmatprep.subr.mxu0 0.0
  %946 = vmatpush1.msra.mxu0 0.0
  %947 = vmatprep.subr.mxu0 0.0
  %948 = vmatpush1.msra.mxu0 0.0
  %949 = vmatprep.subr.mxu0 0.0
  %950 = vmatpush1.msra.mxu0 0.0
  %951 = vmatprep.mubr.f32.mxu0 0.0
  %952 = vmatmul.mubr.f32.gmra.mrb[0].mxu0 %v885
  %v953 = vpop.f32.mrb[0].mxu0
  %v954 = vadd.f32 0.0, %v953
  %v955 = vpop.f32.mrb[0].mxu0
  %956 = vdwg.mxu0
  %v957 = vadd.f32 %v884, %v954
  %s958 = scalar_lea.vmem [#allocation5], 104
  %v959 = vld [vmem:[%s958] sm:$0xff]
  %v960 = vsel %vm466, %v879, 0
  %962 = vmatprep.subr.mxu0 0.0
  %963 = vmatpush1.msra.mxu0 %v51
  %964 = vmatprep.subr.mxu0 0.0
  %965 = vmatpush1.msra.mxu0 %v52
  %966 = vmatprep.subr.mxu0 0.0
  %967 = vmatpush1.msra.mxu0 %v53
  %968 = vmatprep.subr.mxu0 0.0
  %969 = vmatpush1.msra.mxu0 %v54
  %970 = vmatprep.subr.mxu0 0.0
  %971 = vmatpush1.msra.mxu0 0.0
  %972 = vmatprep.subr.mxu0 0.0
  %973 = vmatpush1.msra.mxu0 0.0
  %974 = vmatprep.subr.mxu0 0.0
  %975 = vmatpush1.msra.mxu0 0.0
  %976 = vmatprep.subr.mxu0 0.0
  %977 = vmatpush1.msra.mxu0 0.0
  %978 = vmatprep.subr.mxu0 0.0
  %979 = vmatpush1.msra.mxu0 0.0
  %980 = vmatprep.subr.mxu0 0.0
  %981 = vmatpush1.msra.mxu0 0.0
  %982 = vmatprep.subr.mxu0 0.0
  %983 = vmatpush1.msra.mxu0 0.0
  %984 = vmatprep.subr.mxu0 0.0
  %985 = vmatpush1.msra.mxu0 0.0
  %986 = vmatprep.subr.mxu0 0.0
  %987 = vmatpush1.msra.mxu0 0.0
  %988 = vmatprep.subr.mxu0 0.0
  %989 = vmatpush1.msra.mxu0 0.0
  %990 = vmatprep.subr.mxu0 0.0
  %991 = vmatpush1.msra.mxu0 0.0
  %992 = vmatprep.subr.mxu0 0.0
  %993 = vmatpush1.msra.mxu0 0.0
  %994 = vmatprep.subr.mxu0 0.0
  %995 = vmatpush1.msra.mxu0 0.0
  %996 = vmatprep.subr.mxu0 0.0
  %997 = vmatpush1.msra.mxu0 0.0
  %998 = vmatprep.subr.mxu0 0.0
  %999 = vmatpush1.msra.mxu0 0.0
  %1000 = vmatprep.subr.mxu0 0.0
  %1001 = vmatpush1.msra.mxu0 0.0
  %1002 = vmatprep.subr.mxu0 0.0
  %1003 = vmatpush1.msra.mxu0 0.0
  %1004 = vmatprep.subr.mxu0 0.0
  %1005 = vmatpush1.msra.mxu0 0.0
  %1006 = vmatprep.subr.mxu0 0.0
  %1007 = vmatpush1.msra.mxu0 0.0
  %1008 = vmatprep.subr.mxu0 0.0
  %1009 = vmatpush1.msra.mxu0 0.0
  %1010 = vmatprep.subr.mxu0 0.0
  %1011 = vmatpush1.msra.mxu0 0.0
  %1012 = vmatprep.subr.mxu0 0.0
  %1013 = vmatpush1.msra.mxu0 0.0
  %1014 = vmatprep.subr.mxu0 0.0
  %1015 = vmatpush1.msra.mxu0 0.0
  %1016 = vmatprep.subr.mxu0 0.0
  %1017 = vmatpush1.msra.mxu0 0.0
  %1018 = vmatprep.subr.mxu0 0.0
  %1019 = vmatpush1.msra.mxu0 0.0
  %1020 = vmatprep.subr.mxu0 0.0
  %1021 = vmatpush1.msra.mxu0 0.0
  %1022 = vmatprep.subr.mxu0 0.0
  %1023 = vmatpush1.msra.mxu0 0.0
  %1024 = vmatprep.subr.mxu0 0.0
  %1025 = vmatpush1.msra.mxu0 0.0
  %1026 = vmatprep.mubr.f32.mxu0 0.0
  %1027 = vmatmul.mubr.f32.gmra.mrb[0].mxu0 %v960
  %v1028 = vpop.f32.mrb[0].mxu0
  %v1029 = vadd.f32 0.0, %v1028
  %v1030 = vpop.f32.mrb[0].mxu0
  %1031 = vdwg.mxu0
  %v1032 = vadd.f32 %v959, %v1029
  %v1033 = vxor.u32 %v957, 2147483648
  %v1034 = vmul.f32 %v1033, 1.442695
  %v1035 = vpow.pop %v1034
  %v1036 = vadd.f32 %v1035, 1.0
  %v1037 = vrcp.pop %v1036
  %v1038 = vmul.f32 1.0, %v1037
  %v1039 = vtanh.pop %v957
  %v1040 = vmul.f32 %v1038, %v840
  %1042 = vrot.lane.b32.xlu0 %v1039, 64
  %v1043 = vpop.permute.xlu0 %1042
  %v1045 = vmul.f32 %v1038, %v1043
  %1047 = vrot.lane.b32.xlu0 %v1045, 32
  %v1048 = vpop.permute.xlu0 %1047
  %v1050 = vadd.f32 %v1040, %v1048
  %v1051 = vtanh.pop %v1050
  %1053 = vrot.lane.b32.xlu0 %v1051, 64
  %v1054 = vpop.permute.xlu0 %1053
  %v1056 = vmul.f32 %v1038, %v1054
  %v1057 = vxor.u32 %v1032, 2147483648
  %v1058 = vmul.f32 %v1057, 1.442695
  %v1059 = vpow.pop %v1058
  %v1060 = vadd.f32 %v1059, 1.0
  %v1061 = vrcp.pop %v1060
  %v1062 = vmul.f32 1.0, %v1061
  %v1063 = vtanh.pop %v1032
  %v1064 = vmul.f32 %v1062, %v864
  %1066 = vrot.lane.b32.xlu0 %v1063, 64
  %v1067 = vpop.permute.xlu0 %1066
  %v1069 = vmul.f32 %v1062, %v1067
  %1071 = vrot.lane.b32.xlu0 %v1069, 32
  %v1072 = vpop.permute.xlu0 %1071
  %v1074 = vadd.f32 %v1064, %v1072
  %v1075 = vtanh.pop %v1074
  %1077 = vrot.lane.b32.xlu0 %v1075, 64
  %v1078 = vpop.permute.xlu0 %1077
  %v1080 = vmul.f32 %v1062, %v1078
  %1082 = vrot.lane.b32.xlu0 %v1056, 32
  %v1083 = vpop.permute.xlu0 %1082
  %s1085 = scalar_lea.vmem [#allocation2], 16
  %1086 = vst.msk [vmem:[%s1085] sm:$0xff] %vm466, %v1083
  %1088 = vrot.lane.b32.xlu0 %v1080, 32
  %v1089 = vpop.permute.xlu0 %1088
  %s1091 = scalar_lea.vmem [#allocation3], 104
  %1092 = vst.msk [vmem:[%s1091] sm:$0xff] %vm466, %v1089
  %s1093 = scalar_lea.vmem [#allocation4], 24
  %v1094 = vld [vmem:[%s1093] sm:$0xff]
  %v1095 = vsel %vm466, %v1083, 0
  %1097 = vmatprep.subr.mxu0 0.0
  %1098 = vmatpush1.msra.mxu0 %v47
  %1099 = vmatprep.subr.mxu0 0.0
  %1100 = vmatpush1.msra.mxu0 %v48
  %1101 = vmatprep.subr.mxu0 0.0
  %1102 = vmatpush1.msra.mxu0 %v49
  %1103 = vmatprep.subr.mxu0 0.0
  %1104 = vmatpush1.msra.mxu0 %v50
  %1105 = vmatprep.subr.mxu0 0.0
  %1106 = vmatpush1.msra.mxu0 0.0
  %1107 = vmatprep.subr.mxu0 0.0
  %1108 = vmatpush1.msra.mxu0 0.0
  %1109 = vmatprep.subr.mxu0 0.0
  %1110 = vmatpush1.msra.mxu0 0.0
  %1111 = vmatprep.subr.mxu0 0.0
  %1112 = vmatpush1.msra.mxu0 0.0
  %1113 = vmatprep.subr.mxu0 0.0
  %1114 = vmatpush1.msra.mxu0 0.0
  %1115 = vmatprep.subr.mxu0 0.0
  %1116 = vmatpush1.msra.mxu0 0.0
  %1117 = vmatprep.subr.mxu0 0.0
  %1118 = vmatpush1.msra.mxu0 0.0
  %1119 = vmatprep.subr.mxu0 0.0
  %1120 = vmatpush1.msra.mxu0 0.0
  %1121 = vmatprep.subr.mxu0 0.0
  %1122 = vmatpush1.msra.mxu0 0.0
  %1123 = vmatprep.subr.mxu0 0.0
  %1124 = vmatpush1.msra.mxu0 0.0
  %1125 = vmatprep.subr.mxu0 0.0
  %1126 = vmatpush1.msra.mxu0 0.0
  %1127 = vmatprep.subr.mxu0 0.0
  %1128 = vmatpush1.msra.mxu0 0.0
  %1129 = vmatprep.subr.mxu0 0.0
  %1130 = vmatpush1.msra.mxu0 0.0
  %1131 = vmatprep.subr.mxu0 0.0
  %1132 = vmatpush1.msra.mxu0 0.0
  %1133 = vmatprep.subr.mxu0 0.0
  %1134 = vmatpush1.msra.mxu0 0.0
  %1135 = vmatprep.subr.mxu0 0.0
  %1136 = vmatpush1.msra.mxu0 0.0
  %1137 = vmatprep.subr.mxu0 0.0
  %1138 = vmatpush1.msra.mxu0 0.0
  %1139 = vmatprep.subr.mxu0 0.0
  %1140 = vmatpush1.msra.mxu0 0.0
  %1141 = vmatprep.subr.mxu0 0.0
  %1142 = vmatpush1.msra.mxu0 0.0
  %1143 = vmatprep.subr.mxu0 0.0
  %1144 = vmatpush1.msra.mxu0 0.0
  %1145 = vmatprep.subr.mxu0 0.0
  %1146 = vmatpush1.msra.mxu0 0.0
  %1147 = vmatprep.subr.mxu0 0.0
  %1148 = vmatpush1.msra.mxu0 0.0
  %1149 = vmatprep.subr.mxu0 0.0
  %1150 = vmatpush1.msra.mxu0 0.0
  %1151 = vmatprep.subr.mxu0 0.0
  %1152 = vmatpush1.msra.mxu0 0.0
  %1153 = vmatprep.subr.mxu0 0.0
  %1154 = vmatpush1.msra.mxu0 0.0
  %1155 = vmatprep.subr.mxu0 0.0
  %1156 = vmatpush1.msra.mxu0 0.0
  %1157 = vmatprep.subr.mxu0 0.0
  %1158 = vmatpush1.msra.mxu0 0.0
  %1159 = vmatprep.subr.mxu0 0.0
  %1160 = vmatpush1.msra.mxu0 0.0
  %1161 = vmatprep.mubr.f32.mxu0 0.0
  %1162 = vmatmul.mubr.f32.gmra.mrb[0].mxu0 %v1095
  %v1163 = vpop.f32.mrb[0].mxu0
  %v1164 = vadd.f32 0.0, %v1163
  %v1165 = vpop.f32.mrb[0].mxu0
  %1166 = vdwg.mxu0
  %v1167 = vadd.f32 %v1094, %v1164
  %s1168 = scalar_lea.vmem [#allocation5], 96
  %v1169 = vld [vmem:[%s1168] sm:$0xff]
  %v1170 = vsel %vm466, %v1089, 0
  %1172 = vmatprep.subr.mxu0 0.0
  %1173 = vmatpush1.msra.mxu0 %v51
  %1174 = vmatprep.subr.mxu0 0.0
  %1175 = vmatpush1.msra.mxu0 %v52
  %1176 = vmatprep.subr.mxu0 0.0
  %1177 = vmatpush1.msra.mxu0 %v53
  %1178 = vmatprep.subr.mxu0 0.0
  %1179 = vmatpush1.msra.mxu0 %v54
  %1180 = vmatprep.subr.mxu0 0.0
  %1181 = vmatpush1.msra.mxu0 0.0
  %1182 = vmatprep.subr.mxu0 0.0
  %1183 = vmatpush1.msra.mxu0 0.0
  %1184 = vmatprep.subr.mxu0 0.0
  %1185 = vmatpush1.msra.mxu0 0.0
  %1186 = vmatprep.subr.mxu0 0.0
  %1187 = vmatpush1.msra.mxu0 0.0
  %1188 = vmatprep.subr.mxu0 0.0
  %1189 = vmatpush1.msra.mxu0 0.0
  %1190 = vmatprep.subr.mxu0 0.0
  %1191 = vmatpush1.msra.mxu0 0.0
  %1192 = vmatprep.subr.mxu0 0.0
  %1193 = vmatpush1.msra.mxu0 0.0
  %1194 = vmatprep.subr.mxu0 0.0
  %1195 = vmatpush1.msra.mxu0 0.0
  %1196 = vmatprep.subr.mxu0 0.0
  %1197 = vmatpush1.msra.mxu0 0.0
  %1198 = vmatprep.subr.mxu0 0.0
  %1199 = vmatpush1.msra.mxu0 0.0
  %1200 = vmatprep.subr.mxu0 0.0
  %1201 = vmatpush1.msra.mxu0 0.0
  %1202 = vmatprep.subr.mxu0 0.0
  %1203 = vmatpush1.msra.mxu0 0.0
  %1204 = vmatprep.subr.mxu0 0.0
  %1205 = vmatpush1.msra.mxu0 0.0
  %1206 = vmatprep.subr.mxu0 0.0
  %1207 = vmatpush1.msra.mxu0 0.0
  %1208 = vmatprep.subr.mxu0 0.0
  %1209 = vmatpush1.msra.mxu0 0.0
  %1210 = vmatprep.subr.mxu0 0.0
  %1211 = vmatpush1.msra.mxu0 0.0
  %1212 = vmatprep.subr.mxu0 0.0
  %1213 = vmatpush1.msra.mxu0 0.0
  %1214 = vmatprep.subr.mxu0 0.0
  %1215 = vmatpush1.msra.mxu0 0.0
  %1216 = vmatprep.subr.mxu0 0.0
  %1217 = vmatpush1.msra.mxu0 0.0
  %1218 = vmatprep.subr.mxu0 0.0
  %1219 = vmatpush1.msra.mxu0 0.0
  %1220 = vmatprep.subr.mxu0 0.0
  %1221 = vmatpush1.msra.mxu0 0.0
  %1222 = vmatprep.subr.mxu0 0.0
  %1223 = vmatpush1.msra.mxu0 0.0
  %1224 = vmatprep.subr.mxu0 0.0
  %1225 = vmatpush1.msra.mxu0 0.0
  %1226 = vmatprep.subr.mxu0 0.0
  %1227 = vmatpush1.msra.mxu0 0.0
  %1228 = vmatprep.subr.mxu0 0.0
  %1229 = vmatpush1.msra.mxu0 0.0
  %1230 = vmatprep.subr.mxu0 0.0
  %1231 = vmatpush1.msra.mxu0 0.0
  %1232 = vmatprep.subr.mxu0 0.0
  %1233 = vmatpush1.msra.mxu0 0.0
  %1234 = vmatprep.subr.mxu0 0.0
  %1235 = vmatpush1.msra.mxu0 0.0
  %1236 = vmatprep.mubr.f32.mxu0 0.0
  %1237 = vmatmul.mubr.f32.gmra.mrb[0].mxu0 %v1170
  %v1238 = vpop.f32.mrb[0].mxu0
  %v1239 = vadd.f32 0.0, %v1238
  %v1240 = vpop.f32.mrb[0].mxu0
  %1241 = vdwg.mxu0
  %v1242 = vadd.f32 %v1169, %v1239
  %v1243 = vxor.u32 %v1167, 2147483648
  %v1244 = vmul.f32 %v1243, 1.442695
  %v1245 = vpow.pop %v1244
  %v1246 = vadd.f32 %v1245, 1.0
  %v1247 = vrcp.pop %v1246
  %v1248 = vmul.f32 1.0, %v1247
  %v1249 = vtanh.pop %v1167
  %v1250 = vmul.f32 %v1248, %v1050
  %1252 = vrot.lane.b32.xlu0 %v1249, 64
  %v1253 = vpop.permute.xlu0 %1252
  %v1255 = vmul.f32 %v1248, %v1253
  %1257 = vrot.lane.b32.xlu0 %v1255, 32
  %v1258 = vpop.permute.xlu0 %1257
  %v1260 = vadd.f32 %v1250, %v1258
  %v1261 = vtanh.pop %v1260
  %1263 = vrot.lane.b32.xlu0 %v1261, 64
  %v1264 = vpop.permute.xlu0 %1263
  %v1266 = vmul.f32 %v1248, %v1264
  %v1267 = vxor.u32 %v1242, 2147483648
  %v1268 = vmul.f32 %v1267, 1.442695
  %v1269 = vpow.pop %v1268
  %v1270 = vadd.f32 %v1269, 1.0
  %v1271 = vrcp.pop %v1270
  %v1272 = vmul.f32 1.0, %v1271
  %v1273 = vtanh.pop %v1242
  %v1274 = vmul.f32 %v1272, %v1074
  %1276 = vrot.lane.b32.xlu0 %v1273, 64
  %v1277 = vpop.permute.xlu0 %1276
  %v1279 = vmul.f32 %v1272, %v1277
  %1281 = vrot.lane.b32.xlu0 %v1279, 32
  %v1282 = vpop.permute.xlu0 %1281
  %v1284 = vadd.f32 %v1274, %v1282
  %v1285 = vtanh.pop %v1284
  %1287 = vrot.lane.b32.xlu0 %v1285, 64
  %v1288 = vpop.permute.xlu0 %1287
  %v1290 = vmul.f32 %v1272, %v1288
  %1292 = vrot.lane.b32.xlu0 %v1266, 32
  %v1293 = vpop.permute.xlu0 %1292
  %s1295 = scalar_lea.vmem [#allocation2], 24
  %1296 = vst.msk [vmem:[%s1295] sm:$0xff] %vm466, %v1293
  %1298 = vrot.lane.b32.xlu0 %v1290, 32
  %v1299 = vpop.permute.xlu0 %1298
  %s1301 = scalar_lea.vmem [#allocation3], 96
  %1302 = vst.msk [vmem:[%s1301] sm:$0xff] %vm466, %v1299
  %s1303 = scalar_lea.vmem [#allocation4], 32
  %v1304 = vld [vmem:[%s1303] sm:$0xff]
  %v1305 = vsel %vm466, %v1293, 0
  %1307 = vmatprep.subr.mxu0 0.0
  %1308 = vmatpush1.msra.mxu0 %v47
  %1309 = vmatprep.subr.mxu0 0.0
  %1310 = vmatpush1.msra.mxu0 %v48
  %1311 = vmatprep.subr.mxu0 0.0
  %1312 = vmatpush1.msra.mxu0 %v49
  %1313 = vmatprep.subr.mxu0 0.0
  %1314 = vmatpush1.msra.mxu0 %v50
  %1315 = vmatprep.subr.mxu0 0.0
  %1316 = vmatpush1.msra.mxu0 0.0
  %1317 = vmatprep.subr.mxu0 0.0
  %1318 = vmatpush1.msra.mxu0 0.0
  %1319 = vmatprep.subr.mxu0 0.0
  %1320 = vmatpush1.msra.mxu0 0.0
  %1321 = vmatprep.subr.mxu0 0.0
  %1322 = vmatpush1.msra.mxu0 0.0
  %1323 = vmatprep.subr.mxu0 0.0
  %1324 = vmatpush1.msra.mxu0 0.0
  %1325 = vmatprep.subr.mxu0 0.0
  %1326 = vmatpush1.msra.mxu0 0.0
  %1327 = vmatprep.subr.mxu0 0.0
  %1328 = vmatpush1.msra.mxu0 0.0
  %1329 = vmatprep.subr.mxu0 0.0
  %1330 = vmatpush1.msra.mxu0 0.0
  %1331 = vmatprep.subr.mxu0 0.0
  %1332 = vmatpush1.msra.mxu0 0.0
  %1333 = vmatprep.subr.mxu0 0.0
  %1334 = vmatpush1.msra.mxu0 0.0
  %1335 = vmatprep.subr.mxu0 0.0
  %1336 = vmatpush1.msra.mxu0 0.0
  %1337 = vmatprep.subr.mxu0 0.0
  %1338 = vmatpush1.msra.mxu0 0.0
  %1339 = vmatprep.subr.mxu0 0.0
  %1340 = vmatpush1.msra.mxu0 0.0
  %1341 = vmatprep.subr.mxu0 0.0
  %1342 = vmatpush1.msra.mxu0 0.0
  %1343 = vmatprep.subr.mxu0 0.0
  %1344 = vmatpush1.msra.mxu0 0.0
  %1345 = vmatprep.subr.mxu0 0.0
  %1346 = vmatpush1.msra.mxu0 0.0
  %1347 = vmatprep.subr.mxu0 0.0
  %1348 = vmatpush1.msra.mxu0 0.0
  %1349 = vmatprep.subr.mxu0 0.0
  %1350 = vmatpush1.msra.mxu0 0.0
  %1351 = vmatprep.subr.mxu0 0.0
  %1352 = vmatpush1.msra.mxu0 0.0
  %1353 = vmatprep.subr.mxu0 0.0
  %1354 = vmatpush1.msra.mxu0 0.0
  %1355 = vmatprep.subr.mxu0 0.0
  %1356 = vmatpush1.msra.mxu0 0.0
  %1357 = vmatprep.subr.mxu0 0.0
  %1358 = vmatpush1.msra.mxu0 0.0
  %1359 = vmatprep.subr.mxu0 0.0
  %1360 = vmatpush1.msra.mxu0 0.0
  %1361 = vmatprep.subr.mxu0 0.0
  %1362 = vmatpush1.msra.mxu0 0.0
  %1363 = vmatprep.subr.mxu0 0.0
  %1364 = vmatpush1.msra.mxu0 0.0
  %1365 = vmatprep.subr.mxu0 0.0
  %1366 = vmatpush1.msra.mxu0 0.0
  %1367 = vmatprep.subr.mxu0 0.0
  %1368 = vmatpush1.msra.mxu0 0.0
  %1369 = vmatprep.subr.mxu0 0.0
  %1370 = vmatpush1.msra.mxu0 0.0
  %1371 = vmatprep.mubr.f32.mxu0 0.0
  %1372 = vmatmul.mubr.f32.gmra.mrb[0].mxu0 %v1305
  %v1373 = vpop.f32.mrb[0].mxu0
  %v1374 = vadd.f32 0.0, %v1373
  %v1375 = vpop.f32.mrb[0].mxu0
  %1376 = vdwg.mxu0
  %v1377 = vadd.f32 %v1304, %v1374
  %s1378 = scalar_lea.vmem [#allocation5], 88
  %v1379 = vld [vmem:[%s1378] sm:$0xff]
  %v1380 = vsel %vm466, %v1299, 0
  %1382 = vmatprep.subr.mxu0 0.0
  %1383 = vmatpush1.msra.mxu0 %v51
  %1384 = vmatprep.subr.mxu0 0.0
  %1385 = vmatpush1.msra.mxu0 %v52
  %1386 = vmatprep.subr.mxu0 0.0
  %1387 = vmatpush1.msra.mxu0 %v53
  %1388 = vmatprep.subr.mxu0 0.0
  %1389 = vmatpush1.msra.mxu0 %v54
  %1390 = vmatprep.subr.mxu0 0.0
  %1391 = vmatpush1.msra.mxu0 0.0
  %1392 = vmatprep.subr.mxu0 0.0
  %1393 = vmatpush1.msra.mxu0 0.0
  %1394 = vmatprep.subr.mxu0 0.0
  %1395 = vmatpush1.msra.mxu0 0.0
  %1396 = vmatprep.subr.mxu0 0.0
  %1397 = vmatpush1.msra.mxu0 0.0
  %1398 = vmatprep.subr.mxu0 0.0
  %1399 = vmatpush1.msra.mxu0 0.0
  %1400 = vmatprep.subr.mxu0 0.0
  %1401 = vmatpush1.msra.mxu0 0.0
  %1402 = vmatprep.subr.mxu0 0.0
  %1403 = vmatpush1.msra.mxu0 0.0
  %1404 = vmatprep.subr.mxu0 0.0
  %1405 = vmatpush1.msra.mxu0 0.0
  %1406 = vmatprep.subr.mxu0 0.0
  %1407 = vmatpush1.msra.mxu0 0.0
  %1408 = vmatprep.subr.mxu0 0.0
  %1409 = vmatpush1.msra.mxu0 0.0
  %1410 = vmatprep.subr.mxu0 0.0
  %1411 = vmatpush1.msra.mxu0 0.0
  %1412 = vmatprep.subr.mxu0 0.0
  %1413 = vmatpush1.msra.mxu0 0.0
  %1414 = vmatprep.subr.mxu0 0.0
  %1415 = vmatpush1.msra.mxu0 0.0
  %1416 = vmatprep.subr.mxu0 0.0
  %1417 = vmatpush1.msra.mxu0 0.0
  %1418 = vmatprep.subr.mxu0 0.0
  %1419 = vmatpush1.msra.mxu0 0.0
  %1420 = vmatprep.subr.mxu0 0.0
  %1421 = vmatpush1.msra.mxu0 0.0
  %1422 = vmatprep.subr.mxu0 0.0
  %1423 = vmatpush1.msra.mxu0 0.0
  %1424 = vmatprep.subr.mxu0 0.0
  %1425 = vmatpush1.msra.mxu0 0.0
  %1426 = vmatprep.subr.mxu0 0.0
  %1427 = vmatpush1.msra.mxu0 0.0
  %1428 = vmatprep.subr.mxu0 0.0
  %1429 = vmatpush1.msra.mxu0 0.0
  %1430 = vmatprep.subr.mxu0 0.0
  %1431 = vmatpush1.msra.mxu0 0.0
  %1432 = vmatprep.subr.mxu0 0.0
  %1433 = vmatpush1.msra.mxu0 0.0
  %1434 = vmatprep.subr.mxu0 0.0
  %1435 = vmatpush1.msra.mxu0 0.0
  %1436 = vmatprep.subr.mxu0 0.0
  %1437 = vmatpush1.msra.mxu0 0.0
  %1438 = vmatprep.subr.mxu0 0.0
  %1439 = vmatpush1.msra.mxu0 0.0
  %1440 = vmatprep.subr.mxu0 0.0
  %1441 = vmatpush1.msra.mxu0 0.0
  %1442 = vmatprep.subr.mxu0 0.0
  %1443 = vmatpush1.msra.mxu0 0.0
  %1444 = vmatprep.subr.mxu0 0.0
  %1445 = vmatpush1.msra.mxu0 0.0
  %1446 = vmatprep.mubr.f32.mxu0 0.0
  %1447 = vmatmul.mubr.f32.gmra.mrb[0].mxu0 %v1380
  %v1448 = vpop.f32.mrb[0].mxu0
  %v1449 = vadd.f32 0.0, %v1448
  %v1450 = vpop.f32.mrb[0].mxu0
  %1451 = vdwg.mxu0
  %v1452 = vadd.f32 %v1379, %v1449
  %v1453 = vxor.u32 %v1377, 2147483648
  %v1454 = vmul.f32 %v1453, 1.442695
  %v1455 = vpow.pop %v1454
  %v1456 = vadd.f32 %v1455, 1.0
  %v1457 = vrcp.pop %v1456
  %v1458 = vmul.f32 1.0, %v1457
  %v1459 = vtanh.pop %v1377
  %v1460 = vmul.f32 %v1458, %v1260
  %1462 = vrot.lane.b32.xlu0 %v1459, 64
  %v1463 = vpop.permute.xlu0 %1462
  %v1465 = vmul.f32 %v1458, %v1463
  %1467 = vrot.lane.b32.xlu0 %v1465, 32
  %v1468 = vpop.permute.xlu0 %1467
  %v1470 = vadd.f32 %v1460, %v1468
  %v1471 = vtanh.pop %v1470
  %1473 = vrot.lane.b32.xlu0 %v1471, 64
  %v1474 = vpop.permute.xlu0 %1473
  %v1476 = vmul.f32 %v1458, %v1474
  %v1477 = vxor.u32 %v1452, 2147483648
  %v1478 = vmul.f32 %v1477, 1.442695
  %v1479 = vpow.pop %v1478
  %v1480 = vadd.f32 %v1479, 1.0
  %v1481 = vrcp.pop %v1480
  %v1482 = vmul.f32 1.0, %v1481
  %v1483 = vtanh.pop %v1452
  %v1484 = vmul.f32 %v1482, %v1284
  %1486 = vrot.lane.b32.xlu0 %v1483, 64
  %v1487 = vpop.permute.xlu0 %1486
  %v1489 = vmul.f32 %v1482, %v1487
  %1491 = vrot.lane.b32.xlu0 %v1489, 32
  %v1492 = vpop.permute.xlu0 %1491
  %v1494 = vadd.f32 %v1484, %v1492
  %v1495 = vtanh.pop %v1494
  %1497 = vrot.lane.b32.xlu0 %v1495, 64
  %v1498 = vpop.permute.xlu0 %1497
  %v1500 = vmul.f32 %v1482, %v1498
  %1502 = vrot.lane.b32.xlu0 %v1476, 32
  %v1503 = vpop.permute.xlu0 %1502
  %s1505 = scalar_lea.vmem [#allocation2], 32
  %1506 = vst.msk [vmem:[%s1505] sm:$0xff] %vm466, %v1503
  %1508 = vrot.lane.b32.xlu0 %v1500, 32
  %v1509 = vpop.permute.xlu0 %1508
  %s1511 = scalar_lea.vmem [#allocation3], 88
  %1512 = vst.msk [vmem:[%s1511] sm:$0xff] %vm466, %v1509
  %s1513 = scalar_lea.vmem [#allocation4], 40
  %v1514 = vld [vmem:[%s1513] sm:$0xff]
  %v1515 = vsel %vm466, %v1503, 0
  %1517 = vmatprep.subr.mxu0 0.0
  %1518 = vmatpush1.msra.mxu0 %v47
  %1519 = vmatprep.subr.mxu0 0.0
  %1520 = vmatpush1.msra.mxu0 %v48
  %1521 = vmatprep.subr.mxu0 0.0
  %1522 = vmatpush1.msra.mxu0 %v49
  %1523 = vmatprep.subr.mxu0 0.0
  %1524 = vmatpush1.msra.mxu0 %v50
  %1525 = vmatprep.subr.mxu0 0.0
  %1526 = vmatpush1.msra.mxu0 0.0
  %1527 = vmatprep.subr.mxu0 0.0
  %1528 = vmatpush1.msra.mxu0 0.0
  %1529 = vmatprep.subr.mxu0 0.0
  %1530 = vmatpush1.msra.mxu0 0.0
  %1531 = vmatprep.subr.mxu0 0.0
  %1532 = vmatpush1.msra.mxu0 0.0
  %1533 = vmatprep.subr.mxu0 0.0
  %1534 = vmatpush1.msra.mxu0 0.0
  %1535 = vmatprep.subr.mxu0 0.0
  %1536 = vmatpush1.msra.mxu0 0.0
  %1537 = vmatprep.subr.mxu0 0.0
  %1538 = vmatpush1.msra.mxu0 0.0
  %1539 = vmatprep.subr.mxu0 0.0
  %1540 = vmatpush1.msra.mxu0 0.0
  %1541 = vmatprep.subr.mxu0 0.0
  %1542 = vmatpush1.msra.mxu0 0.0
  %1543 = vmatprep.subr.mxu0 0.0
  %1544 = vmatpush1.msra.mxu0 0.0
  %1545 = vmatprep.subr.mxu0 0.0
  %1546 = vmatpush1.msra.mxu0 0.0
  %1547 = vmatprep.subr.mxu0 0.0
  %1548 = vmatpush1.msra.mxu0 0.0
  %1549 = vmatprep.subr.mxu0 0.0
  %1550 = vmatpush1.msra.mxu0 0.0
  %1551 = vmatprep.subr.mxu0 0.0
  %1552 = vmatpush1.msra.mxu0 0.0
  %1553 = vmatprep.subr.mxu0 0.0
  %1554 = vmatpush1.msra.mxu0 0.0
  %1555 = vmatprep.subr.mxu0 0.0
  %1556 = vmatpush1.msra.mxu0 0.0
  %1557 = vmatprep.subr.mxu0 0.0
  %1558 = vmatpush1.msra.mxu0 0.0
  %1559 = vmatprep.subr.mxu0 0.0
  %1560 = vmatpush1.msra.mxu0 0.0
  %1561 = vmatprep.subr.mxu0 0.0
  %1562 = vmatpush1.msra.mxu0 0.0
  %1563 = vmatprep.subr.mxu0 0.0
  %1564 = vmatpush1.msra.mxu0 0.0
  %1565 = vmatprep.subr.mxu0 0.0
  %1566 = vmatpush1.msra.mxu0 0.0
  %1567 = vmatprep.subr.mxu0 0.0
  %1568 = vmatpush1.msra.mxu0 0.0
  %1569 = vmatprep.subr.mxu0 0.0
  %1570 = vmatpush1.msra.mxu0 0.0
  %1571 = vmatprep.subr.mxu0 0.0
  %1572 = vmatpush1.msra.mxu0 0.0
  %1573 = vmatprep.subr.mxu0 0.0
  %1574 = vmatpush1.msra.mxu0 0.0
  %1575 = vmatprep.subr.mxu0 0.0
  %1576 = vmatpush1.msra.mxu0 0.0
  %1577 = vmatprep.subr.mxu0 0.0
  %1578 = vmatpush1.msra.mxu0 0.0
  %1579 = vmatprep.subr.mxu0 0.0
  %1580 = vmatpush1.msra.mxu0 0.0
  %1581 = vmatprep.mubr.f32.mxu0 0.0
  %1582 = vmatmul.mubr.f32.gmra.mrb[0].mxu0 %v1515
  %v1583 = vpop.f32.mrb[0].mxu0
  %v1584 = vadd.f32 0.0, %v1583
  %v1585 = vpop.f32.mrb[0].mxu0
  %1586 = vdwg.mxu0
  %v1587 = vadd.f32 %v1514, %v1584
  %s1588 = scalar_lea.vmem [#allocation5], 80
  %v1589 = vld [vmem:[%s1588] sm:$0xff]
  %v1590 = vsel %vm466, %v1509, 0
  %1592 = vmatprep.subr.mxu0 0.0
  %1593 = vmatpush1.msra.mxu0 %v51
  %1594 = vmatprep.subr.mxu0 0.0
  %1595 = vmatpush1.msra.mxu0 %v52
  %1596 = vmatprep.subr.mxu0 0.0
  %1597 = vmatpush1.msra.mxu0 %v53
  %1598 = vmatprep.subr.mxu0 0.0
  %1599 = vmatpush1.msra.mxu0 %v54
  %1600 = vmatprep.subr.mxu0 0.0
  %1601 = vmatpush1.msra.mxu0 0.0
  %1602 = vmatprep.subr.mxu0 0.0
  %1603 = vmatpush1.msra.mxu0 0.0
  %1604 = vmatprep.subr.mxu0 0.0
  %1605 = vmatpush1.msra.mxu0 0.0
  %1606 = vmatprep.subr.mxu0 0.0
  %1607 = vmatpush1.msra.mxu0 0.0
  %1608 = vmatprep.subr.mxu0 0.0
  %1609 = vmatpush1.msra.mxu0 0.0
  %1610 = vmatprep.subr.mxu0 0.0
  %1611 = vmatpush1.msra.mxu0 0.0
  %1612 = vmatprep.subr.mxu0 0.0
  %1613 = vmatpush1.msra.mxu0 0.0
  %1614 = vmatprep.subr.mxu0 0.0
  %1615 = vmatpush1.msra.mxu0 0.0
  %1616 = vmatprep.subr.mxu0 0.0
  %1617 = vmatpush1.msra.mxu0 0.0
  %1618 = vmatprep.subr.mxu0 0.0
  %1619 = vmatpush1.msra.mxu0 0.0
  %1620 = vmatprep.subr.mxu0 0.0
  %1621 = vmatpush1.msra.mxu0 0.0
  %1622 = vmatprep.subr.mxu0 0.0
  %1623 = vmatpush1.msra.mxu0 0.0
  %1624 = vmatprep.subr.mxu0 0.0
  %1625 = vmatpush1.msra.mxu0 0.0
  %1626 = vmatprep.subr.mxu0 0.0
  %1627 = vmatpush1.msra.mxu0 0.0
  %1628 = vmatprep.subr.mxu0 0.0
  %1629 = vmatpush1.msra.mxu0 0.0
  %1630 = vmatprep.subr.mxu0 0.0
  %1631 = vmatpush1.msra.mxu0 0.0
  %1632 = vmatprep.subr.mxu0 0.0
  %1633 = vmatpush1.msra.mxu0 0.0
  %1634 = vmatprep.subr.mxu0 0.0
  %1635 = vmatpush1.msra.mxu0 0.0
  %1636 = vmatprep.subr.mxu0 0.0
  %1637 = vmatpush1.msra.mxu0 0.0
  %1638 = vmatprep.subr.mxu0 0.0
  %1639 = vmatpush1.msra.mxu0 0.0
  %1640 = vmatprep.subr.mxu0 0.0
  %1641 = vmatpush1.msra.mxu0 0.0
  %1642 = vmatprep.subr.mxu0 0.0
  %1643 = vmatpush1.msra.mxu0 0.0
  %1644 = vmatprep.subr.mxu0 0.0
  %1645 = vmatpush1.msra.mxu0 0.0
  %1646 = vmatprep.subr.mxu0 0.0
  %1647 = vmatpush1.msra.mxu0 0.0
  %1648 = vmatprep.subr.mxu0 0.0
  %1649 = vmatpush1.msra.mxu0 0.0
  %1650 = vmatprep.subr.mxu0 0.0
  %1651 = vmatpush1.msra.mxu0 0.0
  %1652 = vmatprep.subr.mxu0 0.0
  %1653 = vmatpush1.msra.mxu0 0.0
  %1654 = vmatprep.subr.mxu0 0.0
  %1655 = vmatpush1.msra.mxu0 0.0
  %1656 = vmatprep.mubr.f32.mxu0 0.0
  %1657 = vmatmul.mubr.f32.gmra.mrb[0].mxu0 %v1590
  %v1658 = vpop.f32.mrb[0].mxu0
  %v1659 = vadd.f32 0.0, %v1658
  %v1660 = vpop.f32.mrb[0].mxu0
  %1661 = vdwg.mxu0
  %v1662 = vadd.f32 %v1589, %v1659
  %v1663 = vxor.u32 %v1587, 2147483648
  %v1664 = vmul.f32 %v1663, 1.442695
  %v1665 = vpow.pop %v1664
  %v1666 = vadd.f32 %v1665, 1.0
  %v1667 = vrcp.pop %v1666
  %v1668 = vmul.f32 1.0, %v1667
  %v1669 = vtanh.pop %v1587
  %v1670 = vmul.f32 %v1668, %v1470
  %1672 = vrot.lane.b32.xlu0 %v1669, 64
  %v1673 = vpop.permute.xlu0 %1672
  %v1675 = vmul.f32 %v1668, %v1673
  %1677 = vrot.lane.b32.xlu0 %v1675, 32
  %v1678 = vpop.permute.xlu0 %1677
  %v1680 = vadd.f32 %v1670, %v1678
  %v1681 = vtanh.pop %v1680
  %1683 = vrot.lane.b32.xlu0 %v1681, 64
  %v1684 = vpop.permute.xlu0 %1683
  %v1686 = vmul.f32 %v1668, %v1684
  %v1687 = vxor.u32 %v1662, 2147483648
  %v1688 = vmul.f32 %v1687, 1.442695
  %v1689 = vpow.pop %v1688
  %v1690 = vadd.f32 %v1689, 1.0
  %v1691 = vrcp.pop %v1690
  %v1692 = vmul.f32 1.0, %v1691
  %v1693 = vtanh.pop %v1662
  %v1694 = vmul.f32 %v1692, %v1494
  %1696 = vrot.lane.b32.xlu0 %v1693, 64
  %v1697 = vpop.permute.xlu0 %1696
  %v1699 = vmul.f32 %v1692, %v1697
  %1701 = vrot.lane.b32.xlu0 %v1699, 32
  %v1702 = vpop.permute.xlu0 %1701
  %v1704 = vadd.f32 %v1694, %v1702
  %v1705 = vtanh.pop %v1704
  %1707 = vrot.lane.b32.xlu0 %v1705, 64
  %v1708 = vpop.permute.xlu0 %1707
  %v1710 = vmul.f32 %v1692, %v1708
  %1712 = vrot.lane.b32.xlu0 %v1686, 32
  %v1713 = vpop.permute.xlu0 %1712
  %s1715 = scalar_lea.vmem [#allocation2], 40
  %1716 = vst.msk [vmem:[%s1715] sm:$0xff] %vm466, %v1713
  %1718 = vrot.lane.b32.xlu0 %v1710, 32
  %v1719 = vpop.permute.xlu0 %1718
  %s1721 = scalar_lea.vmem [#allocation3], 80
  %1722 = vst.msk [vmem:[%s1721] sm:$0xff] %vm466, %v1719
  %s1723 = scalar_lea.vmem [#allocation4], 48
  %v1724 = vld [vmem:[%s1723] sm:$0xff]
  %v1725 = vsel %vm466, %v1713, 0
  %1727 = vmatprep.subr.mxu0 0.0
  %1728 = vmatpush1.msra.mxu0 %v47
  %1729 = vmatprep.subr.mxu0 0.0
  %1730 = vmatpush1.msra.mxu0 %v48
  %1731 = vmatprep.subr.mxu0 0.0
  %1732 = vmatpush1.msra.mxu0 %v49
  %1733 = vmatprep.subr.mxu0 0.0
  %1734 = vmatpush1.msra.mxu0 %v50
  %1735 = vmatprep.subr.mxu0 0.0
  %1736 = vmatpush1.msra.mxu0 0.0
  %1737 = vmatprep.subr.mxu0 0.0
  %1738 = vmatpush1.msra.mxu0 0.0
  %1739 = vmatprep.subr.mxu0 0.0
  %1740 = vmatpush1.msra.mxu0 0.0
  %1741 = vmatprep.subr.mxu0 0.0
  %1742 = vmatpush1.msra.mxu0 0.0
  %1743 = vmatprep.subr.mxu0 0.0
  %1744 = vmatpush1.msra.mxu0 0.0
  %1745 = vmatprep.subr.mxu0 0.0
  %1746 = vmatpush1.msra.mxu0 0.0
  %1747 = vmatprep.subr.mxu0 0.0
  %1748 = vmatpush1.msra.mxu0 0.0
  %1749 = vmatprep.subr.mxu0 0.0
  %1750 = vmatpush1.msra.mxu0 0.0
  %1751 = vmatprep.subr.mxu0 0.0
  %1752 = vmatpush1.msra.mxu0 0.0
  %1753 = vmatprep.subr.mxu0 0.0
  %1754 = vmatpush1.msra.mxu0 0.0
  %1755 = vmatprep.subr.mxu0 0.0
  %1756 = vmatpush1.msra.mxu0 0.0
  %1757 = vmatprep.subr.mxu0 0.0
  %1758 = vmatpush1.msra.mxu0 0.0
  %1759 = vmatprep.subr.mxu0 0.0
  %1760 = vmatpush1.msra.mxu0 0.0
  %1761 = vmatprep.subr.mxu0 0.0
  %1762 = vmatpush1.msra.mxu0 0.0
  %1763 = vmatprep.subr.mxu0 0.0
  %1764 = vmatpush1.msra.mxu0 0.0
  %1765 = vmatprep.subr.mxu0 0.0
  %1766 = vmatpush1.msra.mxu0 0.0
  %1767 = vmatprep.subr.mxu0 0.0
  %1768 = vmatpush1.msra.mxu0 0.0
  %1769 = vmatprep.subr.mxu0 0.0
  %1770 = vmatpush1.msra.mxu0 0.0
  %1771 = vmatprep.subr.mxu0 0.0
  %1772 = vmatpush1.msra.mxu0 0.0
  %1773 = vmatprep.subr.mxu0 0.0
  %1774 = vmatpush1.msra.mxu0 0.0
  %1775 = vmatprep.subr.mxu0 0.0
  %1776 = vmatpush1.msra.mxu0 0.0
  %1777 = vmatprep.subr.mxu0 0.0
  %1778 = vmatpush1.msra.mxu0 0.0
  %1779 = vmatprep.subr.mxu0 0.0
  %1780 = vmatpush1.msra.mxu0 0.0
  %1781 = vmatprep.subr.mxu0 0.0
  %1782 = vmatpush1.msra.mxu0 0.0
  %1783 = vmatprep.subr.mxu0 0.0
  %1784 = vmatpush1.msra.mxu0 0.0
  %1785 = vmatprep.subr.mxu0 0.0
  %1786 = vmatpush1.msra.mxu0 0.0
  %1787 = vmatprep.subr.mxu0 0.0
  %1788 = vmatpush1.msra.mxu0 0.0
  %1789 = vmatprep.subr.mxu0 0.0
  %1790 = vmatpush1.msra.mxu0 0.0
  %1791 = vmatprep.mubr.f32.mxu0 0.0
  %1792 = vmatmul.mubr.f32.gmra.mrb[0].mxu0 %v1725
  %v1793 = vpop.f32.mrb[0].mxu0
  %v1794 = vadd.f32 0.0, %v1793
  %v1795 = vpop.f32.mrb[0].mxu0
  %1796 = vdwg.mxu0
  %v1797 = vadd.f32 %v1724, %v1794
  %s1798 = scalar_lea.vmem [#allocation5], 72
  %v1799 = vld [vmem:[%s1798] sm:$0xff]
  %v1800 = vsel %vm466, %v1719, 0
  %1802 = vmatprep.subr.mxu0 0.0
  %1803 = vmatpush1.msra.mxu0 %v51
  %1804 = vmatprep.subr.mxu0 0.0
  %1805 = vmatpush1.msra.mxu0 %v52
  %1806 = vmatprep.subr.mxu0 0.0
  %1807 = vmatpush1.msra.mxu0 %v53
  %1808 = vmatprep.subr.mxu0 0.0
  %1809 = vmatpush1.msra.mxu0 %v54
  %1810 = vmatprep.subr.mxu0 0.0
  %1811 = vmatpush1.msra.mxu0 0.0
  %1812 = vmatprep.subr.mxu0 0.0
  %1813 = vmatpush1.msra.mxu0 0.0
  %1814 = vmatprep.subr.mxu0 0.0
  %1815 = vmatpush1.msra.mxu0 0.0
  %1816 = vmatprep.subr.mxu0 0.0
  %1817 = vmatpush1.msra.mxu0 0.0
  %1818 = vmatprep.subr.mxu0 0.0
  %1819 = vmatpush1.msra.mxu0 0.0
  %1820 = vmatprep.subr.mxu0 0.0
  %1821 = vmatpush1.msra.mxu0 0.0
  %1822 = vmatprep.subr.mxu0 0.0
  %1823 = vmatpush1.msra.mxu0 0.0
  %1824 = vmatprep.subr.mxu0 0.0
  %1825 = vmatpush1.msra.mxu0 0.0
  %1826 = vmatprep.subr.mxu0 0.0
  %1827 = vmatpush1.msra.mxu0 0.0
  %1828 = vmatprep.subr.mxu0 0.0
  %1829 = vmatpush1.msra.mxu0 0.0
  %1830 = vmatprep.subr.mxu0 0.0
  %1831 = vmatpush1.msra.mxu0 0.0
  %1832 = vmatprep.subr.mxu0 0.0
  %1833 = vmatpush1.msra.mxu0 0.0
  %1834 = vmatprep.subr.mxu0 0.0
  %1835 = vmatpush1.msra.mxu0 0.0
  %1836 = vmatprep.subr.mxu0 0.0
  %1837 = vmatpush1.msra.mxu0 0.0
  %1838 = vmatprep.subr.mxu0 0.0
  %1839 = vmatpush1.msra.mxu0 0.0
  %1840 = vmatprep.subr.mxu0 0.0
  %1841 = vmatpush1.msra.mxu0 0.0
  %1842 = vmatprep.subr.mxu0 0.0
  %1843 = vmatpush1.msra.mxu0 0.0
  %1844 = vmatprep.subr.mxu0 0.0
  %1845 = vmatpush1.msra.mxu0 0.0
  %1846 = vmatprep.subr.mxu0 0.0
  %1847 = vmatpush1.msra.mxu0 0.0
  %1848 = vmatprep.subr.mxu0 0.0
  %1849 = vmatpush1.msra.mxu0 0.0
  %1850 = vmatprep.subr.mxu0 0.0
  %1851 = vmatpush1.msra.mxu0 0.0
  %1852 = vmatprep.subr.mxu0 0.0
  %1853 = vmatpush1.msra.mxu0 0.0
  %1854 = vmatprep.subr.mxu0 0.0
  %1855 = vmatpush1.msra.mxu0 0.0
  %1856 = vmatprep.subr.mxu0 0.0
  %1857 = vmatpush1.msra.mxu0 0.0
  %1858 = vmatprep.subr.mxu0 0.0
  %1859 = vmatpush1.msra.mxu0 0.0
  %1860 = vmatprep.subr.mxu0 0.0
  %1861 = vmatpush1.msra.mxu0 0.0
  %1862 = vmatprep.subr.mxu0 0.0
  %1863 = vmatpush1.msra.mxu0 0.0
  %1864 = vmatprep.subr.mxu0 0.0
  %1865 = vmatpush1.msra.mxu0 0.0
  %1866 = vmatprep.mubr.f32.mxu0 0.0
  %1867 = vmatmul.mubr.f32.gmra.mrb[0].mxu0 %v1800
  %v1868 = vpop.f32.mrb[0].mxu0
  %v1869 = vadd.f32 0.0, %v1868
  %v1870 = vpop.f32.mrb[0].mxu0
  %1871 = vdwg.mxu0
  %v1872 = vadd.f32 %v1799, %v1869
  %v1873 = vxor.u32 %v1797, 2147483648
  %v1874 = vmul.f32 %v1873, 1.442695
  %v1875 = vpow.pop %v1874
  %v1876 = vadd.f32 %v1875, 1.0
  %v1877 = vrcp.pop %v1876
  %v1878 = vmul.f32 1.0, %v1877
  %v1879 = vtanh.pop %v1797
  %v1880 = vmul.f32 %v1878, %v1680
  %1882 = vrot.lane.b32.xlu0 %v1879, 64
  %v1883 = vpop.permute.xlu0 %1882
  %v1885 = vmul.f32 %v1878, %v1883
  %1887 = vrot.lane.b32.xlu0 %v1885, 32
  %v1888 = vpop.permute.xlu0 %1887
  %v1890 = vadd.f32 %v1880, %v1888
  %v1891 = vtanh.pop %v1890
  %1893 = vrot.lane.b32.xlu0 %v1891, 64
  %v1894 = vpop.permute.xlu0 %1893
  %v1896 = vmul.f32 %v1878, %v1894
  %v1897 = vxor.u32 %v1872, 2147483648
  %v1898 = vmul.f32 %v1897, 1.442695
  %v1899 = vpow.pop %v1898
  %v1900 = vadd.f32 %v1899, 1.0
  %v1901 = vrcp.pop %v1900
  %v1902 = vmul.f32 1.0, %v1901
  %v1903 = vtanh.pop %v1872
  %v1904 = vmul.f32 %v1902, %v1704
  %1906 = vrot.lane.b32.xlu0 %v1903, 64
  %v1907 = vpop.permute.xlu0 %1906
  %v1909 = vmul.f32 %v1902, %v1907
  %1911 = vrot.lane.b32.xlu0 %v1909, 32
  %v1912 = vpop.permute.xlu0 %1911
  %v1914 = vadd.f32 %v1904, %v1912
  %v1915 = vtanh.pop %v1914
  %1917 = vrot.lane.b32.xlu0 %v1915, 64
  %v1918 = vpop.permute.xlu0 %1917
  %v1920 = vmul.f32 %v1902, %v1918
  %1922 = vrot.lane.b32.xlu0 %v1896, 32
  %v1923 = vpop.permute.xlu0 %1922
  %s1925 = scalar_lea.vmem [#allocation2], 48
  %1926 = vst.msk [vmem:[%s1925] sm:$0xff] %vm466, %v1923
  %1928 = vrot.lane.b32.xlu0 %v1920, 32
  %v1929 = vpop.permute.xlu0 %1928
  %s1931 = scalar_lea.vmem [#allocation3], 72
  %1932 = vst.msk [vmem:[%s1931] sm:$0xff] %vm466, %v1929
  %s1933 = scalar_lea.vmem [#allocation4], 56
  %v1934 = vld [vmem:[%s1933] sm:$0xff]
  %v1935 = vsel %vm466, %v1923, 0
  %1937 = vmatprep.subr.mxu0 0.0
  %1938 = vmatpush1.msra.mxu0 %v47
  %1939 = vmatprep.subr.mxu0 0.0
  %1940 = vmatpush1.msra.mxu0 %v48
  %1941 = vmatprep.subr.mxu0 0.0
  %1942 = vmatpush1.msra.mxu0 %v49
  %1943 = vmatprep.subr.mxu0 0.0
  %1944 = vmatpush1.msra.mxu0 %v50
  %1945 = vmatprep.subr.mxu0 0.0
  %1946 = vmatpush1.msra.mxu0 0.0
  %1947 = vmatprep.subr.mxu0 0.0
  %1948 = vmatpush1.msra.mxu0 0.0
  %1949 = vmatprep.subr.mxu0 0.0
  %1950 = vmatpush1.msra.mxu0 0.0
  %1951 = vmatprep.subr.mxu0 0.0
  %1952 = vmatpush1.msra.mxu0 0.0
  %1953 = vmatprep.subr.mxu0 0.0
  %1954 = vmatpush1.msra.mxu0 0.0
  %1955 = vmatprep.subr.mxu0 0.0
  %1956 = vmatpush1.msra.mxu0 0.0
  %1957 = vmatprep.subr.mxu0 0.0
  %1958 = vmatpush1.msra.mxu0 0.0
  %1959 = vmatprep.subr.mxu0 0.0
  %1960 = vmatpush1.msra.mxu0 0.0
  %1961 = vmatprep.subr.mxu0 0.0
  %1962 = vmatpush1.msra.mxu0 0.0
  %1963 = vmatprep.subr.mxu0 0.0
  %1964 = vmatpush1.msra.mxu0 0.0
  %1965 = vmatprep.subr.mxu0 0.0
  %1966 = vmatpush1.msra.mxu0 0.0
  %1967 = vmatprep.subr.mxu0 0.0
  %1968 = vmatpush1.msra.mxu0 0.0
  %1969 = vmatprep.subr.mxu0 0.0
  %1970 = vmatpush1.msra.mxu0 0.0
  %1971 = vmatprep.subr.mxu0 0.0
  %1972 = vmatpush1.msra.mxu0 0.0
  %1973 = vmatprep.subr.mxu0 0.0
  %1974 = vmatpush1.msra.mxu0 0.0
  %1975 = vmatprep.subr.mxu0 0.0
  %1976 = vmatpush1.msra.mxu0 0.0
  %1977 = vmatprep.subr.mxu0 0.0
  %1978 = vmatpush1.msra.mxu0 0.0
  %1979 = vmatprep.subr.mxu0 0.0
  %1980 = vmatpush1.msra.mxu0 0.0
  %1981 = vmatprep.subr.mxu0 0.0
  %1982 = vmatpush1.msra.mxu0 0.0
  %1983 = vmatprep.subr.mxu0 0.0
  %1984 = vmatpush1.msra.mxu0 0.0
  %1985 = vmatprep.subr.mxu0 0.0
  %1986 = vmatpush1.msra.mxu0 0.0
  %1987 = vmatprep.subr.mxu0 0.0
  %1988 = vmatpush1.msra.mxu0 0.0
  %1989 = vmatprep.subr.mxu0 0.0
  %1990 = vmatpush1.msra.mxu0 0.0
  %1991 = vmatprep.subr.mxu0 0.0
  %1992 = vmatpush1.msra.mxu0 0.0
  %1993 = vmatprep.subr.mxu0 0.0
  %1994 = vmatpush1.msra.mxu0 0.0
  %1995 = vmatprep.subr.mxu0 0.0
  %1996 = vmatpush1.msra.mxu0 0.0
  %1997 = vmatprep.subr.mxu0 0.0
  %1998 = vmatpush1.msra.mxu0 0.0
  %1999 = vmatprep.subr.mxu0 0.0
  %2000 = vmatpush1.msra.mxu0 0.0
  %2001 = vmatprep.mubr.f32.mxu0 0.0
  %2002 = vmatmul.mubr.f32.gmra.mrb[0].mxu0 %v1935
  %v2003 = vpop.f32.mrb[0].mxu0
  %v2004 = vadd.f32 0.0, %v2003
  %v2005 = vpop.f32.mrb[0].mxu0
  %2006 = vdwg.mxu0
  %v2007 = vadd.f32 %v1934, %v2004
  %s2008 = scalar_lea.vmem [#allocation5], 64
  %v2009 = vld [vmem:[%s2008] sm:$0xff]
  %v2010 = vsel %vm466, %v1929, 0
  %2012 = vmatprep.subr.mxu0 0.0
  %2013 = vmatpush1.msra.mxu0 %v51
  %2014 = vmatprep.subr.mxu0 0.0
  %2015 = vmatpush1.msra.mxu0 %v52
  %2016 = vmatprep.subr.mxu0 0.0
  %2017 = vmatpush1.msra.mxu0 %v53
  %2018 = vmatprep.subr.mxu0 0.0
  %2019 = vmatpush1.msra.mxu0 %v54
  %2020 = vmatprep.subr.mxu0 0.0
  %2021 = vmatpush1.msra.mxu0 0.0
  %2022 = vmatprep.subr.mxu0 0.0
  %2023 = vmatpush1.msra.mxu0 0.0
  %2024 = vmatprep.subr.mxu0 0.0
  %2025 = vmatpush1.msra.mxu0 0.0
  %2026 = vmatprep.subr.mxu0 0.0
  %2027 = vmatpush1.msra.mxu0 0.0
  %2028 = vmatprep.subr.mxu0 0.0
  %2029 = vmatpush1.msra.mxu0 0.0
  %2030 = vmatprep.subr.mxu0 0.0
  %2031 = vmatpush1.msra.mxu0 0.0
  %2032 = vmatprep.subr.mxu0 0.0
  %2033 = vmatpush1.msra.mxu0 0.0
  %2034 = vmatprep.subr.mxu0 0.0
  %2035 = vmatpush1.msra.mxu0 0.0
  %2036 = vmatprep.subr.mxu0 0.0
  %2037 = vmatpush1.msra.mxu0 0.0
  %2038 = vmatprep.subr.mxu0 0.0
  %2039 = vmatpush1.msra.mxu0 0.0
  %2040 = vmatprep.subr.mxu0 0.0
  %2041 = vmatpush1.msra.mxu0 0.0
  %2042 = vmatprep.subr.mxu0 0.0
  %2043 = vmatpush1.msra.mxu0 0.0
  %2044 = vmatprep.subr.mxu0 0.0
  %2045 = vmatpush1.msra.mxu0 0.0
  %2046 = vmatprep.subr.mxu0 0.0
  %2047 = vmatpush1.msra.mxu0 0.0
  %2048 = vmatprep.subr.mxu0 0.0
  %2049 = vmatpush1.msra.mxu0 0.0
  %2050 = vmatprep.subr.mxu0 0.0
  %2051 = vmatpush1.msra.mxu0 0.0
  %2052 = vmatprep.subr.mxu0 0.0
  %2053 = vmatpush1.msra.mxu0 0.0
  %2054 = vmatprep.subr.mxu0 0.0
  %2055 = vmatpush1.msra.mxu0 0.0
  %2056 = vmatprep.subr.mxu0 0.0
  %2057 = vmatpush1.msra.mxu0 0.0
  %2058 = vmatprep.subr.mxu0 0.0
  %2059 = vmatpush1.msra.mxu0 0.0
  %2060 = vmatprep.subr.mxu0 0.0
  %2061 = vmatpush1.msra.mxu0 0.0
  %2062 = vmatprep.subr.mxu0 0.0
  %2063 = vmatpush1.msra.mxu0 0.0
  %2064 = vmatprep.subr.mxu0 0.0
  %2065 = vmatpush1.msra.mxu0 0.0
  %2066 = vmatprep.subr.mxu0 0.0
  %2067 = vmatpush1.msra.mxu0 0.0
  %2068 = vmatprep.subr.mxu0 0.0
  %2069 = vmatpush1.msra.mxu0 0.0
  %2070 = vmatprep.subr.mxu0 0.0
  %2071 = vmatpush1.msra.mxu0 0.0
  %2072 = vmatprep.subr.mxu0 0.0
  %2073 = vmatpush1.msra.mxu0 0.0
  %2074 = vmatprep.subr.mxu0 0.0
  %2075 = vmatpush1.msra.mxu0 0.0
  %2076 = vmatprep.mubr.f32.mxu0 0.0
  %2077 = vmatmul.mubr.f32.gmra.mrb[0].mxu0 %v2010
  %v2078 = vpop.f32.mrb[0].mxu0
  %v2079 = vadd.f32 0.0, %v2078
  %v2080 = vpop.f32.mrb[0].mxu0
  %2081 = vdwg.mxu0
  %v2082 = vadd.f32 %v2009, %v2079
  %v2083 = vxor.u32 %v2007, 2147483648
  %v2084 = vmul.f32 %v2083, 1.442695
  %v2085 = vpow.pop %v2084
  %v2086 = vadd.f32 %v2085, 1.0
  %v2087 = vrcp.pop %v2086
  %v2088 = vmul.f32 1.0, %v2087
  %v2089 = vtanh.pop %v2007
  %v2090 = vmul.f32 %v2088, %v1890
  %2092 = vrot.lane.b32.xlu0 %v2089, 64
  %v2093 = vpop.permute.xlu0 %2092
  %v2095 = vmul.f32 %v2088, %v2093
  %2097 = vrot.lane.b32.xlu0 %v2095, 32
  %v2098 = vpop.permute.xlu0 %2097
  %v2100 = vadd.f32 %v2090, %v2098
  %v2101 = vtanh.pop %v2100
  %2103 = vrot.lane.b32.xlu0 %v2101, 64
  %v2104 = vpop.permute.xlu0 %2103
  %v2106 = vmul.f32 %v2088, %v2104
  %v2107 = vxor.u32 %v2082, 2147483648
  %v2108 = vmul.f32 %v2107, 1.442695
  %v2109 = vpow.pop %v2108
  %v2110 = vadd.f32 %v2109, 1.0
  %v2111 = vrcp.pop %v2110
  %v2112 = vmul.f32 1.0, %v2111
  %v2113 = vtanh.pop %v2082
  %v2114 = vmul.f32 %v2112, %v1914
  %2116 = vrot.lane.b32.xlu0 %v2113, 64
  %v2117 = vpop.permute.xlu0 %2116
  %v2119 = vmul.f32 %v2112, %v2117
  %2121 = vrot.lane.b32.xlu0 %v2119, 32
  %v2122 = vpop.permute.xlu0 %2121
  %v2124 = vadd.f32 %v2114, %v2122
  %v2125 = vtanh.pop %v2124
  %2127 = vrot.lane.b32.xlu0 %v2125, 64
  %v2128 = vpop.permute.xlu0 %2127
  %v2130 = vmul.f32 %v2112, %v2128
  %2132 = vrot.lane.b32.xlu0 %v2106, 32
  %v2133 = vpop.permute.xlu0 %2132
  %s2135 = scalar_lea.vmem [#allocation2], 56
  %2136 = vst.msk [vmem:[%s2135] sm:$0xff] %vm466, %v2133
  %2138 = vrot.lane.b32.xlu0 %v2130, 32
  %v2139 = vpop.permute.xlu0 %2138
  %s2141 = scalar_lea.vmem [#allocation3], 64
  %2142 = vst.msk [vmem:[%s2141] sm:$0xff] %vm466, %v2139
  %s2143 = scalar_lea.vmem [#allocation4], 64
  %v2144 = vld [vmem:[%s2143] sm:$0xff]
  %v2145 = vsel %vm466, %v2133, 0
  %2147 = vmatprep.subr.mxu0 0.0
  %2148 = vmatpush1.msra.mxu0 %v47
  %2149 = vmatprep.subr.mxu0 0.0
  %2150 = vmatpush1.msra.mxu0 %v48
  %2151 = vmatprep.subr.mxu0 0.0
  %2152 = vmatpush1.msra.mxu0 %v49
  %2153 = vmatprep.subr.mxu0 0.0
  %2154 = vmatpush1.msra.mxu0 %v50
  %2155 = vmatprep.subr.mxu0 0.0
  %2156 = vmatpush1.msra.mxu0 0.0
  %2157 = vmatprep.subr.mxu0 0.0
  %2158 = vmatpush1.msra.mxu0 0.0
  %2159 = vmatprep.subr.mxu0 0.0
  %2160 = vmatpush1.msra.mxu0 0.0
  %2161 = vmatprep.subr.mxu0 0.0
  %2162 = vmatpush1.msra.mxu0 0.0
  %2163 = vmatprep.subr.mxu0 0.0
  %2164 = vmatpush1.msra.mxu0 0.0
  %2165 = vmatprep.subr.mxu0 0.0
  %2166 = vmatpush1.msra.mxu0 0.0
  %2167 = vmatprep.subr.mxu0 0.0
  %2168 = vmatpush1.msra.mxu0 0.0
  %2169 = vmatprep.subr.mxu0 0.0
  %2170 = vmatpush1.msra.mxu0 0.0
  %2171 = vmatprep.subr.mxu0 0.0
  %2172 = vmatpush1.msra.mxu0 0.0
  %2173 = vmatprep.subr.mxu0 0.0
  %2174 = vmatpush1.msra.mxu0 0.0
  %2175 = vmatprep.subr.mxu0 0.0
  %2176 = vmatpush1.msra.mxu0 0.0
  %2177 = vmatprep.subr.mxu0 0.0
  %2178 = vmatpush1.msra.mxu0 0.0
  %2179 = vmatprep.subr.mxu0 0.0
  %2180 = vmatpush1.msra.mxu0 0.0
  %2181 = vmatprep.subr.mxu0 0.0
  %2182 = vmatpush1.msra.mxu0 0.0
  %2183 = vmatprep.subr.mxu0 0.0
  %2184 = vmatpush1.msra.mxu0 0.0
  %2185 = vmatprep.subr.mxu0 0.0
  %2186 = vmatpush1.msra.mxu0 0.0
  %2187 = vmatprep.subr.mxu0 0.0
  %2188 = vmatpush1.msra.mxu0 0.0
  %2189 = vmatprep.subr.mxu0 0.0
  %2190 = vmatpush1.msra.mxu0 0.0
  %2191 = vmatprep.subr.mxu0 0.0
  %2192 = vmatpush1.msra.mxu0 0.0
  %2193 = vmatprep.subr.mxu0 0.0
  %2194 = vmatpush1.msra.mxu0 0.0
  %2195 = vmatprep.subr.mxu0 0.0
  %2196 = vmatpush1.msra.mxu0 0.0
  %2197 = vmatprep.subr.mxu0 0.0
  %2198 = vmatpush1.msra.mxu0 0.0
  %2199 = vmatprep.subr.mxu0 0.0
  %2200 = vmatpush1.msra.mxu0 0.0
  %2201 = vmatprep.subr.mxu0 0.0
  %2202 = vmatpush1.msra.mxu0 0.0
  %2203 = vmatprep.subr.mxu0 0.0
  %2204 = vmatpush1.msra.mxu0 0.0
  %2205 = vmatprep.subr.mxu0 0.0
  %2206 = vmatpush1.msra.mxu0 0.0
  %2207 = vmatprep.subr.mxu0 0.0
  %2208 = vmatpush1.msra.mxu0 0.0
  %2209 = vmatprep.subr.mxu0 0.0
  %2210 = vmatpush1.msra.mxu0 0.0
  %2211 = vmatprep.mubr.f32.mxu0 0.0
  %2212 = vmatmul.mubr.f32.gmra.mrb[0].mxu0 %v2145
  %v2213 = vpop.f32.mrb[0].mxu0
  %v2214 = vadd.f32 0.0, %v2213
  %v2215 = vpop.f32.mrb[0].mxu0
  %2216 = vdwg.mxu0
  %v2217 = vadd.f32 %v2144, %v2214
  %s2218 = scalar_lea.vmem [#allocation5], 56
  %v2219 = vld [vmem:[%s2218] sm:$0xff]
  %v2220 = vsel %vm466, %v2139, 0
  %2222 = vmatprep.subr.mxu0 0.0
  %2223 = vmatpush1.msra.mxu0 %v51
  %2224 = vmatprep.subr.mxu0 0.0
  %2225 = vmatpush1.msra.mxu0 %v52
  %2226 = vmatprep.subr.mxu0 0.0
  %2227 = vmatpush1.msra.mxu0 %v53
  %2228 = vmatprep.subr.mxu0 0.0
  %2229 = vmatpush1.msra.mxu0 %v54
  %2230 = vmatprep.subr.mxu0 0.0
  %2231 = vmatpush1.msra.mxu0 0.0
  %2232 = vmatprep.subr.mxu0 0.0
  %2233 = vmatpush1.msra.mxu0 0.0
  %2234 = vmatprep.subr.mxu0 0.0
  %2235 = vmatpush1.msra.mxu0 0.0
  %2236 = vmatprep.subr.mxu0 0.0
  %2237 = vmatpush1.msra.mxu0 0.0
  %2238 = vmatprep.subr.mxu0 0.0
  %2239 = vmatpush1.msra.mxu0 0.0
  %2240 = vmatprep.subr.mxu0 0.0
  %2241 = vmatpush1.msra.mxu0 0.0
  %2242 = vmatprep.subr.mxu0 0.0
  %2243 = vmatpush1.msra.mxu0 0.0
  %2244 = vmatprep.subr.mxu0 0.0
  %2245 = vmatpush1.msra.mxu0 0.0
  %2246 = vmatprep.subr.mxu0 0.0
  %2247 = vmatpush1.msra.mxu0 0.0
  %2248 = vmatprep.subr.mxu0 0.0
  %2249 = vmatpush1.msra.mxu0 0.0
  %2250 = vmatprep.subr.mxu0 0.0
  %2251 = vmatpush1.msra.mxu0 0.0
  %2252 = vmatprep.subr.mxu0 0.0
  %2253 = vmatpush1.msra.mxu0 0.0
  %2254 = vmatprep.subr.mxu0 0.0
  %2255 = vmatpush1.msra.mxu0 0.0
  %2256 = vmatprep.subr.mxu0 0.0
  %2257 = vmatpush1.msra.mxu0 0.0
  %2258 = vmatprep.subr.mxu0 0.0
  %2259 = vmatpush1.msra.mxu0 0.0
  %2260 = vmatprep.subr.mxu0 0.0
  %2261 = vmatpush1.msra.mxu0 0.0
  %2262 = vmatprep.subr.mxu0 0.0
  %2263 = vmatpush1.msra.mxu0 0.0
  %2264 = vmatprep.subr.mxu0 0.0
  %2265 = vmatpush1.msra.mxu0 0.0
  %2266 = vmatprep.subr.mxu0 0.0
  %2267 = vmatpush1.msra.mxu0 0.0
  %2268 = vmatprep.subr.mxu0 0.0
  %2269 = vmatpush1.msra.mxu0 0.0
  %2270 = vmatprep.subr.mxu0 0.0
  %2271 = vmatpush1.msra.mxu0 0.0
  %2272 = vmatprep.subr.mxu0 0.0
  %2273 = vmatpush1.msra.mxu0 0.0
  %2274 = vmatprep.subr.mxu0 0.0
  %2275 = vmatpush1.msra.mxu0 0.0
  %2276 = vmatprep.subr.mxu0 0.0
  %2277 = vmatpush1.msra.mxu0 0.0
  %2278 = vmatprep.subr.mxu0 0.0
  %2279 = vmatpush1.msra.mxu0 0.0
  %2280 = vmatprep.subr.mxu0 0.0
  %2281 = vmatpush1.msra.mxu0 0.0
  %2282 = vmatprep.subr.mxu0 0.0
  %2283 = vmatpush1.msra.mxu0 0.0
  %2284 = vmatprep.subr.mxu0 0.0
  %2285 = vmatpush1.msra.mxu0 0.0
  %2286 = vmatprep.mubr.f32.mxu0 0.0
  %2287 = vmatmul.mubr.f32.gmra.mrb[0].mxu0 %v2220
  %v2288 = vpop.f32.mrb[0].mxu0
  %v2289 = vadd.f32 0.0, %v2288
  %v2290 = vpop.f32.mrb[0].mxu0
  %2291 = vdwg.mxu0
  %v2292 = vadd.f32 %v2219, %v2289
  %v2293 = vxor.u32 %v2217, 2147483648
  %v2294 = vmul.f32 %v2293, 1.442695
  %v2295 = vpow.pop %v2294
  %v2296 = vadd.f32 %v2295, 1.0
  %v2297 = vrcp.pop %v2296
  %v2298 = vmul.f32 1.0, %v2297
  %v2299 = vtanh.pop %v2217
  %v2300 = vmul.f32 %v2298, %v2100
  %2302 = vrot.lane.b32.xlu0 %v2299, 64
  %v2303 = vpop.permute.xlu0 %2302
  %v2305 = vmul.f32 %v2298, %v2303
  %2307 = vrot.lane.b32.xlu0 %v2305, 32
  %v2308 = vpop.permute.xlu0 %2307
  %v2310 = vadd.f32 %v2300, %v2308
  %v2311 = vtanh.pop %v2310
  %2313 = vrot.lane.b32.xlu0 %v2311, 64
  %v2314 = vpop.permute.xlu0 %2313
  %v2316 = vmul.f32 %v2298, %v2314
  %v2317 = vxor.u32 %v2292, 2147483648
  %v2318 = vmul.f32 %v2317, 1.442695
  %v2319 = vpow.pop %v2318
  %v2320 = vadd.f32 %v2319, 1.0
  %v2321 = vrcp.pop %v2320
  %v2322 = vmul.f32 1.0, %v2321
  %v2323 = vtanh.pop %v2292
  %v2324 = vmul.f32 %v2322, %v2124
  %2326 = vrot.lane.b32.xlu0 %v2323, 64
  %v2327 = vpop.permute.xlu0 %2326
  %v2329 = vmul.f32 %v2322, %v2327
  %2331 = vrot.lane.b32.xlu0 %v2329, 32
  %v2332 = vpop.permute.xlu0 %2331
  %v2334 = vadd.f32 %v2324, %v2332
  %v2335 = vtanh.pop %v2334
  %2337 = vrot.lane.b32.xlu0 %v2335, 64
  %v2338 = vpop.permute.xlu0 %2337
  %v2340 = vmul.f32 %v2322, %v2338
  %2342 = vrot.lane.b32.xlu0 %v2316, 32
  %v2343 = vpop.permute.xlu0 %2342
  %s2345 = scalar_lea.vmem [#allocation2], 64
  %2346 = vst.msk [vmem:[%s2345] sm:$0xff] %vm466, %v2343
  %2348 = vrot.lane.b32.xlu0 %v2340, 32
  %v2349 = vpop.permute.xlu0 %2348
  %s2351 = scalar_lea.vmem [#allocation3], 56
  %2352 = vst.msk [vmem:[%s2351] sm:$0xff] %vm466, %v2349
  %s2353 = scalar_lea.vmem [#allocation4], 72
  %v2354 = vld [vmem:[%s2353] sm:$0xff]
  %v2355 = vsel %vm466, %v2343, 0
  %2357 = vmatprep.subr.mxu0 0.0
  %2358 = vmatpush1.msra.mxu0 %v47
  %2359 = vmatprep.subr.mxu0 0.0
  %2360 = vmatpush1.msra.mxu0 %v48
  %2361 = vmatprep.subr.mxu0 0.0
  %2362 = vmatpush1.msra.mxu0 %v49
  %2363 = vmatprep.subr.mxu0 0.0
  %2364 = vmatpush1.msra.mxu0 %v50
  %2365 = vmatprep.subr.mxu0 0.0
  %2366 = vmatpush1.msra.mxu0 0.0
  %2367 = vmatprep.subr.mxu0 0.0
  %2368 = vmatpush1.msra.mxu0 0.0
  %2369 = vmatprep.subr.mxu0 0.0
  %2370 = vmatpush1.msra.mxu0 0.0
  %2371 = vmatprep.subr.mxu0 0.0
  %2372 = vmatpush1.msra.mxu0 0.0
  %2373 = vmatprep.subr.mxu0 0.0
  %2374 = vmatpush1.msra.mxu0 0.0
  %2375 = vmatprep.subr.mxu0 0.0
  %2376 = vmatpush1.msra.mxu0 0.0
  %2377 = vmatprep.subr.mxu0 0.0
  %2378 = vmatpush1.msra.mxu0 0.0
  %2379 = vmatprep.subr.mxu0 0.0
  %2380 = vmatpush1.msra.mxu0 0.0
  %2381 = vmatprep.subr.mxu0 0.0
  %2382 = vmatpush1.msra.mxu0 0.0
  %2383 = vmatprep.subr.mxu0 0.0
  %2384 = vmatpush1.msra.mxu0 0.0
  %2385 = vmatprep.subr.mxu0 0.0
  %2386 = vmatpush1.msra.mxu0 0.0
  %2387 = vmatprep.subr.mxu0 0.0
  %2388 = vmatpush1.msra.mxu0 0.0
  %2389 = vmatprep.subr.mxu0 0.0
  %2390 = vmatpush1.msra.mxu0 0.0
  %2391 = vmatprep.subr.mxu0 0.0
  %2392 = vmatpush1.msra.mxu0 0.0
  %2393 = vmatprep.subr.mxu0 0.0
  %2394 = vmatpush1.msra.mxu0 0.0
  %2395 = vmatprep.subr.mxu0 0.0
  %2396 = vmatpush1.msra.mxu0 0.0
  %2397 = vmatprep.subr.mxu0 0.0
  %2398 = vmatpush1.msra.mxu0 0.0
  %2399 = vmatprep.subr.mxu0 0.0
  %2400 = vmatpush1.msra.mxu0 0.0
  %2401 = vmatprep.subr.mxu0 0.0
  %2402 = vmatpush1.msra.mxu0 0.0
  %2403 = vmatprep.subr.mxu0 0.0
  %2404 = vmatpush1.msra.mxu0 0.0
  %2405 = vmatprep.subr.mxu0 0.0
  %2406 = vmatpush1.msra.mxu0 0.0
  %2407 = vmatprep.subr.mxu0 0.0
  %2408 = vmatpush1.msra.mxu0 0.0
  %2409 = vmatprep.subr.mxu0 0.0
  %2410 = vmatpush1.msra.mxu0 0.0
  %2411 = vmatprep.subr.mxu0 0.0
  %2412 = vmatpush1.msra.mxu0 0.0
  %2413 = vmatprep.subr.mxu0 0.0
  %2414 = vmatpush1.msra.mxu0 0.0
  %2415 = vmatprep.subr.mxu0 0.0
  %2416 = vmatpush1.msra.mxu0 0.0
  %2417 = vmatprep.subr.mxu0 0.0
  %2418 = vmatpush1.msra.mxu0 0.0
  %2419 = vmatprep.subr.mxu0 0.0
  %2420 = vmatpush1.msra.mxu0 0.0
  %2421 = vmatprep.mubr.f32.mxu0 0.0
  %2422 = vmatmul.mubr.f32.gmra.mrb[0].mxu0 %v2355
  %v2423 = vpop.f32.mrb[0].mxu0
  %v2424 = vadd.f32 0.0, %v2423
  %v2425 = vpop.f32.mrb[0].mxu0
  %2426 = vdwg.mxu0
  %v2427 = vadd.f32 %v2354, %v2424
  %s2428 = scalar_lea.vmem [#allocation5], 48
  %v2429 = vld [vmem:[%s2428] sm:$0xff]
  %v2430 = vsel %vm466, %v2349, 0
  %2432 = vmatprep.subr.mxu0 0.0
  %2433 = vmatpush1.msra.mxu0 %v51
  %2434 = vmatprep.subr.mxu0 0.0
  %2435 = vmatpush1.msra.mxu0 %v52
  %2436 = vmatprep.subr.mxu0 0.0
  %2437 = vmatpush1.msra.mxu0 %v53
  %2438 = vmatprep.subr.mxu0 0.0
  %2439 = vmatpush1.msra.mxu0 %v54
  %2440 = vmatprep.subr.mxu0 0.0
  %2441 = vmatpush1.msra.mxu0 0.0
  %2442 = vmatprep.subr.mxu0 0.0
  %2443 = vmatpush1.msra.mxu0 0.0
  %2444 = vmatprep.subr.mxu0 0.0
  %2445 = vmatpush1.msra.mxu0 0.0
  %2446 = vmatprep.subr.mxu0 0.0
  %2447 = vmatpush1.msra.mxu0 0.0
  %2448 = vmatprep.subr.mxu0 0.0
  %2449 = vmatpush1.msra.mxu0 0.0
  %2450 = vmatprep.subr.mxu0 0.0
  %2451 = vmatpush1.msra.mxu0 0.0
  %2452 = vmatprep.subr.mxu0 0.0
  %2453 = vmatpush1.msra.mxu0 0.0
  %2454 = vmatprep.subr.mxu0 0.0
  %2455 = vmatpush1.msra.mxu0 0.0
  %2456 = vmatprep.subr.mxu0 0.0
  %2457 = vmatpush1.msra.mxu0 0.0
  %2458 = vmatprep.subr.mxu0 0.0
  %2459 = vmatpush1.msra.mxu0 0.0
  %2460 = vmatprep.subr.mxu0 0.0
  %2461 = vmatpush1.msra.mxu0 0.0
  %2462 = vmatprep.subr.mxu0 0.0
  %2463 = vmatpush1.msra.mxu0 0.0
  %2464 = vmatprep.subr.mxu0 0.0
  %2465 = vmatpush1.msra.mxu0 0.0
  %2466 = vmatprep.subr.mxu0 0.0
  %2467 = vmatpush1.msra.mxu0 0.0
  %2468 = vmatprep.subr.mxu0 0.0
  %2469 = vmatpush1.msra.mxu0 0.0
  %2470 = vmatprep.subr.mxu0 0.0
  %2471 = vmatpush1.msra.mxu0 0.0
  %2472 = vmatprep.subr.mxu0 0.0
  %2473 = vmatpush1.msra.mxu0 0.0
  %2474 = vmatprep.subr.mxu0 0.0
  %2475 = vmatpush1.msra.mxu0 0.0
  %2476 = vmatprep.subr.mxu0 0.0
  %2477 = vmatpush1.msra.mxu0 0.0
  %2478 = vmatprep.subr.mxu0 0.0
  %2479 = vmatpush1.msra.mxu0 0.0
  %2480 = vmatprep.subr.mxu0 0.0
  %2481 = vmatpush1.msra.mxu0 0.0
  %2482 = vmatprep.subr.mxu0 0.0
  %2483 = vmatpush1.msra.mxu0 0.0
  %2484 = vmatprep.subr.mxu0 0.0
  %2485 = vmatpush1.msra.mxu0 0.0
  %2486 = vmatprep.subr.mxu0 0.0
  %2487 = vmatpush1.msra.mxu0 0.0
  %2488 = vmatprep.subr.mxu0 0.0
  %2489 = vmatpush1.msra.mxu0 0.0
  %2490 = vmatprep.subr.mxu0 0.0
  %2491 = vmatpush1.msra.mxu0 0.0
  %2492 = vmatprep.subr.mxu0 0.0
  %2493 = vmatpush1.msra.mxu0 0.0
  %2494 = vmatprep.subr.mxu0 0.0
  %2495 = vmatpush1.msra.mxu0 0.0
  %2496 = vmatprep.mubr.f32.mxu0 0.0
  %2497 = vmatmul.mubr.f32.gmra.mrb[0].mxu0 %v2430
  %v2498 = vpop.f32.mrb[0].mxu0
  %v2499 = vadd.f32 0.0, %v2498
  %v2500 = vpop.f32.mrb[0].mxu0
  %2501 = vdwg.mxu0
  %v2502 = vadd.f32 %v2429, %v2499
  %v2503 = vxor.u32 %v2427, 2147483648
  %v2504 = vmul.f32 %v2503, 1.442695
  %v2505 = vpow.pop %v2504
  %v2506 = vadd.f32 %v2505, 1.0
  %v2507 = vrcp.pop %v2506
  %v2508 = vmul.f32 1.0, %v2507
  %v2509 = vtanh.pop %v2427
  %v2510 = vmul.f32 %v2508, %v2310
  %2512 = vrot.lane.b32.xlu0 %v2509, 64
  %v2513 = vpop.permute.xlu0 %2512
  %v2515 = vmul.f32 %v2508, %v2513
  %2517 = vrot.lane.b32.xlu0 %v2515, 32
  %v2518 = vpop.permute.xlu0 %2517
  %v2520 = vadd.f32 %v2510, %v2518
  %v2521 = vtanh.pop %v2520
  %2523 = vrot.lane.b32.xlu0 %v2521, 64
  %v2524 = vpop.permute.xlu0 %2523
  %v2526 = vmul.f32 %v2508, %v2524
  %v2527 = vxor.u32 %v2502, 2147483648
  %v2528 = vmul.f32 %v2527, 1.442695
  %v2529 = vpow.pop %v2528
  %v2530 = vadd.f32 %v2529, 1.0
  %v2531 = vrcp.pop %v2530
  %v2532 = vmul.f32 1.0, %v2531
  %v2533 = vtanh.pop %v2502
  %v2534 = vmul.f32 %v2532, %v2334
  %2536 = vrot.lane.b32.xlu0 %v2533, 64
  %v2537 = vpop.permute.xlu0 %2536
  %v2539 = vmul.f32 %v2532, %v2537
  %2541 = vrot.lane.b32.xlu0 %v2539, 32
  %v2542 = vpop.permute.xlu0 %2541
  %v2544 = vadd.f32 %v2534, %v2542
  %v2545 = vtanh.pop %v2544
  %2547 = vrot.lane.b32.xlu0 %v2545, 64
  %v2548 = vpop.permute.xlu0 %2547
  %v2550 = vmul.f32 %v2532, %v2548
  %2552 = vrot.lane.b32.xlu0 %v2526, 32
  %v2553 = vpop.permute.xlu0 %2552
  %s2555 = scalar_lea.vmem [#allocation2], 72
  %2556 = vst.msk [vmem:[%s2555] sm:$0xff] %vm466, %v2553
  %2558 = vrot.lane.b32.xlu0 %v2550, 32
  %v2559 = vpop.permute.xlu0 %2558
  %s2561 = scalar_lea.vmem [#allocation3], 48
  %2562 = vst.msk [vmem:[%s2561] sm:$0xff] %vm466, %v2559
  %s2563 = scalar_lea.vmem [#allocation4], 80
  %v2564 = vld [vmem:[%s2563] sm:$0xff]
  %v2565 = vsel %vm466, %v2553, 0
  %2567 = vmatprep.subr.mxu0 0.0
  %2568 = vmatpush1.msra.mxu0 %v47
  %2569 = vmatprep.subr.mxu0 0.0
  %2570 = vmatpush1.msra.mxu0 %v48
  %2571 = vmatprep.subr.mxu0 0.0
  %2572 = vmatpush1.msra.mxu0 %v49
  %2573 = vmatprep.subr.mxu0 0.0
  %2574 = vmatpush1.msra.mxu0 %v50
  %2575 = vmatprep.subr.mxu0 0.0
  %2576 = vmatpush1.msra.mxu0 0.0
  %2577 = vmatprep.subr.mxu0 0.0
  %2578 = vmatpush1.msra.mxu0 0.0
  %2579 = vmatprep.subr.mxu0 0.0
  %2580 = vmatpush1.msra.mxu0 0.0
  %2581 = vmatprep.subr.mxu0 0.0
  %2582 = vmatpush1.msra.mxu0 0.0
  %2583 = vmatprep.subr.mxu0 0.0
  %2584 = vmatpush1.msra.mxu0 0.0
  %2585 = vmatprep.subr.mxu0 0.0
  %2586 = vmatpush1.msra.mxu0 0.0
  %2587 = vmatprep.subr.mxu0 0.0
  %2588 = vmatpush1.msra.mxu0 0.0
  %2589 = vmatprep.subr.mxu0 0.0
  %2590 = vmatpush1.msra.mxu0 0.0
  %2591 = vmatprep.subr.mxu0 0.0
  %2592 = vmatpush1.msra.mxu0 0.0
  %2593 = vmatprep.subr.mxu0 0.0
  %2594 = vmatpush1.msra.mxu0 0.0
  %2595 = vmatprep.subr.mxu0 0.0
  %2596 = vmatpush1.msra.mxu0 0.0
  %2597 = vmatprep.subr.mxu0 0.0
  %2598 = vmatpush1.msra.mxu0 0.0
  %2599 = vmatprep.subr.mxu0 0.0
  %2600 = vmatpush1.msra.mxu0 0.0
  %2601 = vmatprep.subr.mxu0 0.0
  %2602 = vmatpush1.msra.mxu0 0.0
  %2603 = vmatprep.subr.mxu0 0.0
  %2604 = vmatpush1.msra.mxu0 0.0
  %2605 = vmatprep.subr.mxu0 0.0
  %2606 = vmatpush1.msra.mxu0 0.0
  %2607 = vmatprep.subr.mxu0 0.0
  %2608 = vmatpush1.msra.mxu0 0.0
  %2609 = vmatprep.subr.mxu0 0.0
  %2610 = vmatpush1.msra.mxu0 0.0
  %2611 = vmatprep.subr.mxu0 0.0
  %2612 = vmatpush1.msra.mxu0 0.0
  %2613 = vmatprep.subr.mxu0 0.0
  %2614 = vmatpush1.msra.mxu0 0.0
  %2615 = vmatprep.subr.mxu0 0.0
  %2616 = vmatpush1.msra.mxu0 0.0
  %2617 = vmatprep.subr.mxu0 0.0
  %2618 = vmatpush1.msra.mxu0 0.0
  %2619 = vmatprep.subr.mxu0 0.0
  %2620 = vmatpush1.msra.mxu0 0.0
  %2621 = vmatprep.subr.mxu0 0.0
  %2622 = vmatpush1.msra.mxu0 0.0
  %2623 = vmatprep.subr.mxu0 0.0
  %2624 = vmatpush1.msra.mxu0 0.0
  %2625 = vmatprep.subr.mxu0 0.0
  %2626 = vmatpush1.msra.mxu0 0.0
  %2627 = vmatprep.subr.mxu0 0.0
  %2628 = vmatpush1.msra.mxu0 0.0
  %2629 = vmatprep.subr.mxu0 0.0
  %2630 = vmatpush1.msra.mxu0 0.0
  %2631 = vmatprep.mubr.f32.mxu0 0.0
  %2632 = vmatmul.mubr.f32.gmra.mrb[0].mxu0 %v2565
  %v2633 = vpop.f32.mrb[0].mxu0
  %v2634 = vadd.f32 0.0, %v2633
  %v2635 = vpop.f32.mrb[0].mxu0
  %2636 = vdwg.mxu0
  %v2637 = vadd.f32 %v2564, %v2634
  %s2638 = scalar_lea.vmem [#allocation5], 40
  %v2639 = vld [vmem:[%s2638] sm:$0xff]
  %v2640 = vsel %vm466, %v2559, 0
  %2642 = vmatprep.subr.mxu0 0.0
  %2643 = vmatpush1.msra.mxu0 %v51
  %2644 = vmatprep.subr.mxu0 0.0
  %2645 = vmatpush1.msra.mxu0 %v52
  %2646 = vmatprep.subr.mxu0 0.0
  %2647 = vmatpush1.msra.mxu0 %v53
  %2648 = vmatprep.subr.mxu0 0.0
  %2649 = vmatpush1.msra.mxu0 %v54
  %2650 = vmatprep.subr.mxu0 0.0
  %2651 = vmatpush1.msra.mxu0 0.0
  %2652 = vmatprep.subr.mxu0 0.0
  %2653 = vmatpush1.msra.mxu0 0.0
  %2654 = vmatprep.subr.mxu0 0.0
  %2655 = vmatpush1.msra.mxu0 0.0
  %2656 = vmatprep.subr.mxu0 0.0
  %2657 = vmatpush1.msra.mxu0 0.0
  %2658 = vmatprep.subr.mxu0 0.0
  %2659 = vmatpush1.msra.mxu0 0.0
  %2660 = vmatprep.subr.mxu0 0.0
  %2661 = vmatpush1.msra.mxu0 0.0
  %2662 = vmatprep.subr.mxu0 0.0
  %2663 = vmatpush1.msra.mxu0 0.0
  %2664 = vmatprep.subr.mxu0 0.0
  %2665 = vmatpush1.msra.mxu0 0.0
  %2666 = vmatprep.subr.mxu0 0.0
  %2667 = vmatpush1.msra.mxu0 0.0
  %2668 = vmatprep.subr.mxu0 0.0
  %2669 = vmatpush1.msra.mxu0 0.0
  %2670 = vmatprep.subr.mxu0 0.0
  %2671 = vmatpush1.msra.mxu0 0.0
  %2672 = vmatprep.subr.mxu0 0.0
  %2673 = vmatpush1.msra.mxu0 0.0
  %2674 = vmatprep.subr.mxu0 0.0
  %2675 = vmatpush1.msra.mxu0 0.0
  %2676 = vmatprep.subr.mxu0 0.0
  %2677 = vmatpush1.msra.mxu0 0.0
  %2678 = vmatprep.subr.mxu0 0.0
  %2679 = vmatpush1.msra.mxu0 0.0
  %2680 = vmatprep.subr.mxu0 0.0
  %2681 = vmatpush1.msra.mxu0 0.0
  %2682 = vmatprep.subr.mxu0 0.0
  %2683 = vmatpush1.msra.mxu0 0.0
  %2684 = vmatprep.subr.mxu0 0.0
  %2685 = vmatpush1.msra.mxu0 0.0
  %2686 = vmatprep.subr.mxu0 0.0
  %2687 = vmatpush1.msra.mxu0 0.0
  %2688 = vmatprep.subr.mxu0 0.0
  %2689 = vmatpush1.msra.mxu0 0.0
  %2690 = vmatprep.subr.mxu0 0.0
  %2691 = vmatpush1.msra.mxu0 0.0
  %2692 = vmatprep.subr.mxu0 0.0
  %2693 = vmatpush1.msra.mxu0 0.0
  %2694 = vmatprep.subr.mxu0 0.0
  %2695 = vmatpush1.msra.mxu0 0.0
  %2696 = vmatprep.subr.mxu0 0.0
  %2697 = vmatpush1.msra.mxu0 0.0
  %2698 = vmatprep.subr.mxu0 0.0
  %2699 = vmatpush1.msra.mxu0 0.0
  %2700 = vmatprep.subr.mxu0 0.0
  %2701 = vmatpush1.msra.mxu0 0.0
  %2702 = vmatprep.subr.mxu0 0.0
  %2703 = vmatpush1.msra.mxu0 0.0
  %2704 = vmatprep.subr.mxu0 0.0
  %2705 = vmatpush1.msra.mxu0 0.0
  %2706 = vmatprep.mubr.f32.mxu0 0.0
  %2707 = vmatmul.mubr.f32.gmra.mrb[0].mxu0 %v2640
  %v2708 = vpop.f32.mrb[0].mxu0
  %v2709 = vadd.f32 0.0, %v2708
  %v2710 = vpop.f32.mrb[0].mxu0
  %2711 = vdwg.mxu0
  %v2712 = vadd.f32 %v2639, %v2709
  %v2713 = vxor.u32 %v2637, 2147483648
  %v2714 = vmul.f32 %v2713, 1.442695
  %v2715 = vpow.pop %v2714
  %v2716 = vadd.f32 %v2715, 1.0
  %v2717 = vrcp.pop %v2716
  %v2718 = vmul.f32 1.0, %v2717
  %v2719 = vtanh.pop %v2637
  %v2720 = vmul.f32 %v2718, %v2520
  %2722 = vrot.lane.b32.xlu0 %v2719, 64
  %v2723 = vpop.permute.xlu0 %2722
  %v2725 = vmul.f32 %v2718, %v2723
  %2727 = vrot.lane.b32.xlu0 %v2725, 32
  %v2728 = vpop.permute.xlu0 %2727
  %v2730 = vadd.f32 %v2720, %v2728
  %v2731 = vtanh.pop %v2730
  %2733 = vrot.lane.b32.xlu0 %v2731, 64
  %v2734 = vpop.permute.xlu0 %2733
  %v2736 = vmul.f32 %v2718, %v2734
  %v2737 = vxor.u32 %v2712, 2147483648
  %v2738 = vmul.f32 %v2737, 1.442695
  %v2739 = vpow.pop %v2738
  %v2740 = vadd.f32 %v2739, 1.0
  %v2741 = vrcp.pop %v2740
  %v2742 = vmul.f32 1.0, %v2741
  %v2743 = vtanh.pop %v2712
  %v2744 = vmul.f32 %v2742, %v2544
  %2746 = vrot.lane.b32.xlu0 %v2743, 64
  %v2747 = vpop.permute.xlu0 %2746
  %v2749 = vmul.f32 %v2742, %v2747
  %2751 = vrot.lane.b32.xlu0 %v2749, 32
  %v2752 = vpop.permute.xlu0 %2751
  %v2754 = vadd.f32 %v2744, %v2752
  %v2755 = vtanh.pop %v2754
  %2757 = vrot.lane.b32.xlu0 %v2755, 64
  %v2758 = vpop.permute.xlu0 %2757
  %v2760 = vmul.f32 %v2742, %v2758
  %2762 = vrot.lane.b32.xlu0 %v2736, 32
  %v2763 = vpop.permute.xlu0 %2762
  %s2765 = scalar_lea.vmem [#allocation2], 80
  %2766 = vst.msk [vmem:[%s2765] sm:$0xff] %vm466, %v2763
  %2768 = vrot.lane.b32.xlu0 %v2760, 32
  %v2769 = vpop.permute.xlu0 %2768
  %s2771 = scalar_lea.vmem [#allocation3], 40
  %2772 = vst.msk [vmem:[%s2771] sm:$0xff] %vm466, %v2769
  %s2773 = scalar_lea.vmem [#allocation4], 88
  %v2774 = vld [vmem:[%s2773] sm:$0xff]
  %v2775 = vsel %vm466, %v2763, 0
  %2777 = vmatprep.subr.mxu0 0.0
  %2778 = vmatpush1.msra.mxu0 %v47
  %2779 = vmatprep.subr.mxu0 0.0
  %2780 = vmatpush1.msra.mxu0 %v48
  %2781 = vmatprep.subr.mxu0 0.0
  %2782 = vmatpush1.msra.mxu0 %v49
  %2783 = vmatprep.subr.mxu0 0.0
  %2784 = vmatpush1.msra.mxu0 %v50
  %2785 = vmatprep.subr.mxu0 0.0
  %2786 = vmatpush1.msra.mxu0 0.0
  %2787 = vmatprep.subr.mxu0 0.0
  %2788 = vmatpush1.msra.mxu0 0.0
  %2789 = vmatprep.subr.mxu0 0.0
  %2790 = vmatpush1.msra.mxu0 0.0
  %2791 = vmatprep.subr.mxu0 0.0
  %2792 = vmatpush1.msra.mxu0 0.0
  %2793 = vmatprep.subr.mxu0 0.0
  %2794 = vmatpush1.msra.mxu0 0.0
  %2795 = vmatprep.subr.mxu0 0.0
  %2796 = vmatpush1.msra.mxu0 0.0
  %2797 = vmatprep.subr.mxu0 0.0
  %2798 = vmatpush1.msra.mxu0 0.0
  %2799 = vmatprep.subr.mxu0 0.0
  %2800 = vmatpush1.msra.mxu0 0.0
  %2801 = vmatprep.subr.mxu0 0.0
  %2802 = vmatpush1.msra.mxu0 0.0
  %2803 = vmatprep.subr.mxu0 0.0
  %2804 = vmatpush1.msra.mxu0 0.0
  %2805 = vmatprep.subr.mxu0 0.0
  %2806 = vmatpush1.msra.mxu0 0.0
  %2807 = vmatprep.subr.mxu0 0.0
  %2808 = vmatpush1.msra.mxu0 0.0
  %2809 = vmatprep.subr.mxu0 0.0
  %2810 = vmatpush1.msra.mxu0 0.0
  %2811 = vmatprep.subr.mxu0 0.0
  %2812 = vmatpush1.msra.mxu0 0.0
  %2813 = vmatprep.subr.mxu0 0.0
  %2814 = vmatpush1.msra.mxu0 0.0
  %2815 = vmatprep.subr.mxu0 0.0
  %2816 = vmatpush1.msra.mxu0 0.0
  %2817 = vmatprep.subr.mxu0 0.0
  %2818 = vmatpush1.msra.mxu0 0.0
  %2819 = vmatprep.subr.mxu0 0.0
  %2820 = vmatpush1.msra.mxu0 0.0
  %2821 = vmatprep.subr.mxu0 0.0
  %2822 = vmatpush1.msra.mxu0 0.0
  %2823 = vmatprep.subr.mxu0 0.0
  %2824 = vmatpush1.msra.mxu0 0.0
  %2825 = vmatprep.subr.mxu0 0.0
  %2826 = vmatpush1.msra.mxu0 0.0
  %2827 = vmatprep.subr.mxu0 0.0
  %2828 = vmatpush1.msra.mxu0 0.0
  %2829 = vmatprep.subr.mxu0 0.0
  %2830 = vmatpush1.msra.mxu0 0.0
  %2831 = vmatprep.subr.mxu0 0.0
  %2832 = vmatpush1.msra.mxu0 0.0
  %2833 = vmatprep.subr.mxu0 0.0
  %2834 = vmatpush1.msra.mxu0 0.0
  %2835 = vmatprep.subr.mxu0 0.0
  %2836 = vmatpush1.msra.mxu0 0.0
  %2837 = vmatprep.subr.mxu0 0.0
  %2838 = vmatpush1.msra.mxu0 0.0
  %2839 = vmatprep.subr.mxu0 0.0
  %2840 = vmatpush1.msra.mxu0 0.0
  %2841 = vmatprep.mubr.f32.mxu0 0.0
  %2842 = vmatmul.mubr.f32.gmra.mrb[0].mxu0 %v2775
  %v2843 = vpop.f32.mrb[0].mxu0
  %v2844 = vadd.f32 0.0, %v2843
  %v2845 = vpop.f32.mrb[0].mxu0
  %2846 = vdwg.mxu0
  %v2847 = vadd.f32 %v2774, %v2844
  %s2848 = scalar_lea.vmem [#allocation5], 32
  %v2849 = vld [vmem:[%s2848] sm:$0xff]
  %v2850 = vsel %vm466, %v2769, 0
  %2852 = vmatprep.subr.mxu0 0.0
  %2853 = vmatpush1.msra.mxu0 %v51
  %2854 = vmatprep.subr.mxu0 0.0
  %2855 = vmatpush1.msra.mxu0 %v52
  %2856 = vmatprep.subr.mxu0 0.0
  %2857 = vmatpush1.msra.mxu0 %v53
  %2858 = vmatprep.subr.mxu0 0.0
  %2859 = vmatpush1.msra.mxu0 %v54
  %2860 = vmatprep.subr.mxu0 0.0
  %2861 = vmatpush1.msra.mxu0 0.0
  %2862 = vmatprep.subr.mxu0 0.0
  %2863 = vmatpush1.msra.mxu0 0.0
  %2864 = vmatprep.subr.mxu0 0.0
  %2865 = vmatpush1.msra.mxu0 0.0
  %2866 = vmatprep.subr.mxu0 0.0
  %2867 = vmatpush1.msra.mxu0 0.0
  %2868 = vmatprep.subr.mxu0 0.0
  %2869 = vmatpush1.msra.mxu0 0.0
  %2870 = vmatprep.subr.mxu0 0.0
  %2871 = vmatpush1.msra.mxu0 0.0
  %2872 = vmatprep.subr.mxu0 0.0
  %2873 = vmatpush1.msra.mxu0 0.0
  %2874 = vmatprep.subr.mxu0 0.0
  %2875 = vmatpush1.msra.mxu0 0.0
  %2876 = vmatprep.subr.mxu0 0.0
  %2877 = vmatpush1.msra.mxu0 0.0
  %2878 = vmatprep.subr.mxu0 0.0
  %2879 = vmatpush1.msra.mxu0 0.0
  %2880 = vmatprep.subr.mxu0 0.0
  %2881 = vmatpush1.msra.mxu0 0.0
  %2882 = vmatprep.subr.mxu0 0.0
  %2883 = vmatpush1.msra.mxu0 0.0
  %2884 = vmatprep.subr.mxu0 0.0
  %2885 = vmatpush1.msra.mxu0 0.0
  %2886 = vmatprep.subr.mxu0 0.0
  %2887 = vmatpush1.msra.mxu0 0.0
  %2888 = vmatprep.subr.mxu0 0.0
  %2889 = vmatpush1.msra.mxu0 0.0
  %2890 = vmatprep.subr.mxu0 0.0
  %2891 = vmatpush1.msra.mxu0 0.0
  %2892 = vmatprep.subr.mxu0 0.0
  %2893 = vmatpush1.msra.mxu0 0.0
  %2894 = vmatprep.subr.mxu0 0.0
  %2895 = vmatpush1.msra.mxu0 0.0
  %2896 = vmatprep.subr.mxu0 0.0
  %2897 = vmatpush1.msra.mxu0 0.0
  %2898 = vmatprep.subr.mxu0 0.0
  %2899 = vmatpush1.msra.mxu0 0.0
  %2900 = vmatprep.subr.mxu0 0.0
  %2901 = vmatpush1.msra.mxu0 0.0
  %2902 = vmatprep.subr.mxu0 0.0
  %2903 = vmatpush1.msra.mxu0 0.0
  %2904 = vmatprep.subr.mxu0 0.0
  %2905 = vmatpush1.msra.mxu0 0.0
  %2906 = vmatprep.subr.mxu0 0.0
  %2907 = vmatpush1.msra.mxu0 0.0
  %2908 = vmatprep.subr.mxu0 0.0
  %2909 = vmatpush1.msra.mxu0 0.0
  %2910 = vmatprep.subr.mxu0 0.0
  %2911 = vmatpush1.msra.mxu0 0.0
  %2912 = vmatprep.subr.mxu0 0.0
  %2913 = vmatpush1.msra.mxu0 0.0
  %2914 = vmatprep.subr.mxu0 0.0
  %2915 = vmatpush1.msra.mxu0 0.0
  %2916 = vmatprep.mubr.f32.mxu0 0.0
  %2917 = vmatmul.mubr.f32.gmra.mrb[0].mxu0 %v2850
  %v2918 = vpop.f32.mrb[0].mxu0
  %v2919 = vadd.f32 0.0, %v2918
  %v2920 = vpop.f32.mrb[0].mxu0
  %2921 = vdwg.mxu0
  %v2922 = vadd.f32 %v2849, %v2919
  %v2923 = vxor.u32 %v2847, 2147483648
  %v2924 = vmul.f32 %v2923, 1.442695
  %v2925 = vpow.pop %v2924
  %v2926 = vadd.f32 %v2925, 1.0
  %v2927 = vrcp.pop %v2926
  %v2928 = vmul.f32 1.0, %v2927
  %v2929 = vtanh.pop %v2847
  %v2930 = vmul.f32 %v2928, %v2730
  %2932 = vrot.lane.b32.xlu0 %v2929, 64
  %v2933 = vpop.permute.xlu0 %2932
  %v2935 = vmul.f32 %v2928, %v2933
  %2937 = vrot.lane.b32.xlu0 %v2935, 32
  %v2938 = vpop.permute.xlu0 %2937
  %v2940 = vadd.f32 %v2930, %v2938
  %v2941 = vtanh.pop %v2940
  %2943 = vrot.lane.b32.xlu0 %v2941, 64
  %v2944 = vpop.permute.xlu0 %2943
  %v2946 = vmul.f32 %v2928, %v2944
  %v2947 = vxor.u32 %v2922, 2147483648
  %v2948 = vmul.f32 %v2947, 1.442695
  %v2949 = vpow.pop %v2948
  %v2950 = vadd.f32 %v2949, 1.0
  %v2951 = vrcp.pop %v2950
  %v2952 = vmul.f32 1.0, %v2951
  %v2953 = vtanh.pop %v2922
  %v2954 = vmul.f32 %v2952, %v2754
  %2956 = vrot.lane.b32.xlu0 %v2953, 64
  %v2957 = vpop.permute.xlu0 %2956
  %v2959 = vmul.f32 %v2952, %v2957
  %2961 = vrot.lane.b32.xlu0 %v2959, 32
  %v2962 = vpop.permute.xlu0 %2961
  %v2964 = vadd.f32 %v2954, %v2962
  %v2965 = vtanh.pop %v2964
  %2967 = vrot.lane.b32.xlu0 %v2965, 64
  %v2968 = vpop.permute.xlu0 %2967
  %v2970 = vmul.f32 %v2952, %v2968
  %2972 = vrot.lane.b32.xlu0 %v2946, 32
  %v2973 = vpop.permute.xlu0 %2972
  %s2975 = scalar_lea.vmem [#allocation2], 88
  %2976 = vst.msk [vmem:[%s2975] sm:$0xff] %vm466, %v2973
  %2978 = vrot.lane.b32.xlu0 %v2970, 32
  %v2979 = vpop.permute.xlu0 %2978
  %s2981 = scalar_lea.vmem [#allocation3], 32
  %2982 = vst.msk [vmem:[%s2981] sm:$0xff] %vm466, %v2979
  %s2983 = scalar_lea.vmem [#allocation4], 96
  %v2984 = vld [vmem:[%s2983] sm:$0xff]
  %v2985 = vsel %vm466, %v2973, 0
  %2987 = vmatprep.subr.mxu0 0.0
  %2988 = vmatpush1.msra.mxu0 %v47
  %2989 = vmatprep.subr.mxu0 0.0
  %2990 = vmatpush1.msra.mxu0 %v48
  %2991 = vmatprep.subr.mxu0 0.0
  %2992 = vmatpush1.msra.mxu0 %v49
  %2993 = vmatprep.subr.mxu0 0.0
  %2994 = vmatpush1.msra.mxu0 %v50
  %2995 = vmatprep.subr.mxu0 0.0
  %2996 = vmatpush1.msra.mxu0 0.0
  %2997 = vmatprep.subr.mxu0 0.0
  %2998 = vmatpush1.msra.mxu0 0.0
  %2999 = vmatprep.subr.mxu0 0.0
  %3000 = vmatpush1.msra.mxu0 0.0
  %3001 = vmatprep.subr.mxu0 0.0
  %3002 = vmatpush1.msra.mxu0 0.0
  %3003 = vmatprep.subr.mxu0 0.0
  %3004 = vmatpush1.msra.mxu0 0.0
  %3005 = vmatprep.subr.mxu0 0.0
  %3006 = vmatpush1.msra.mxu0 0.0
  %3007 = vmatprep.subr.mxu0 0.0
  %3008 = vmatpush1.msra.mxu0 0.0
  %3009 = vmatprep.subr.mxu0 0.0
  %3010 = vmatpush1.msra.mxu0 0.0
  %3011 = vmatprep.subr.mxu0 0.0
  %3012 = vmatpush1.msra.mxu0 0.0
  %3013 = vmatprep.subr.mxu0 0.0
  %3014 = vmatpush1.msra.mxu0 0.0
  %3015 = vmatprep.subr.mxu0 0.0
  %3016 = vmatpush1.msra.mxu0 0.0
  %3017 = vmatprep.subr.mxu0 0.0
  %3018 = vmatpush1.msra.mxu0 0.0
  %3019 = vmatprep.subr.mxu0 0.0
  %3020 = vmatpush1.msra.mxu0 0.0
  %3021 = vmatprep.subr.mxu0 0.0
  %3022 = vmatpush1.msra.mxu0 0.0
  %3023 = vmatprep.subr.mxu0 0.0
  %3024 = vmatpush1.msra.mxu0 0.0
  %3025 = vmatprep.subr.mxu0 0.0
  %3026 = vmatpush1.msra.mxu0 0.0
  %3027 = vmatprep.subr.mxu0 0.0
  %3028 = vmatpush1.msra.mxu0 0.0
  %3029 = vmatprep.subr.mxu0 0.0
  %3030 = vmatpush1.msra.mxu0 0.0
  %3031 = vmatprep.subr.mxu0 0.0
  %3032 = vmatpush1.msra.mxu0 0.0
  %3033 = vmatprep.subr.mxu0 0.0
  %3034 = vmatpush1.msra.mxu0 0.0
  %3035 = vmatprep.subr.mxu0 0.0
  %3036 = vmatpush1.msra.mxu0 0.0
  %3037 = vmatprep.subr.mxu0 0.0
  %3038 = vmatpush1.msra.mxu0 0.0
  %3039 = vmatprep.subr.mxu0 0.0
  %3040 = vmatpush1.msra.mxu0 0.0
  %3041 = vmatprep.subr.mxu0 0.0
  %3042 = vmatpush1.msra.mxu0 0.0
  %3043 = vmatprep.subr.mxu0 0.0
  %3044 = vmatpush1.msra.mxu0 0.0
  %3045 = vmatprep.subr.mxu0 0.0
  %3046 = vmatpush1.msra.mxu0 0.0
  %3047 = vmatprep.subr.mxu0 0.0
  %3048 = vmatpush1.msra.mxu0 0.0
  %3049 = vmatprep.subr.mxu0 0.0
  %3050 = vmatpush1.msra.mxu0 0.0
  %3051 = vmatprep.mubr.f32.mxu0 0.0
  %3052 = vmatmul.mubr.f32.gmra.mrb[0].mxu0 %v2985
  %v3053 = vpop.f32.mrb[0].mxu0
  %v3054 = vadd.f32 0.0, %v3053
  %v3055 = vpop.f32.mrb[0].mxu0
  %3056 = vdwg.mxu0
  %v3057 = vadd.f32 %v2984, %v3054
  %s3058 = scalar_lea.vmem [#allocation5], 24
  %v3059 = vld [vmem:[%s3058] sm:$0xff]
  %v3060 = vsel %vm466, %v2979, 0
  %3062 = vmatprep.subr.mxu0 0.0
  %3063 = vmatpush1.msra.mxu0 %v51
  %3064 = vmatprep.subr.mxu0 0.0
  %3065 = vmatpush1.msra.mxu0 %v52
  %3066 = vmatprep.subr.mxu0 0.0
  %3067 = vmatpush1.msra.mxu0 %v53
  %3068 = vmatprep.subr.mxu0 0.0
  %3069 = vmatpush1.msra.mxu0 %v54
  %3070 = vmatprep.subr.mxu0 0.0
  %3071 = vmatpush1.msra.mxu0 0.0
  %3072 = vmatprep.subr.mxu0 0.0
  %3073 = vmatpush1.msra.mxu0 0.0
  %3074 = vmatprep.subr.mxu0 0.0
  %3075 = vmatpush1.msra.mxu0 0.0
  %3076 = vmatprep.subr.mxu0 0.0
  %3077 = vmatpush1.msra.mxu0 0.0
  %3078 = vmatprep.subr.mxu0 0.0
  %3079 = vmatpush1.msra.mxu0 0.0
  %3080 = vmatprep.subr.mxu0 0.0
  %3081 = vmatpush1.msra.mxu0 0.0
  %3082 = vmatprep.subr.mxu0 0.0
  %3083 = vmatpush1.msra.mxu0 0.0
  %3084 = vmatprep.subr.mxu0 0.0
  %3085 = vmatpush1.msra.mxu0 0.0
  %3086 = vmatprep.subr.mxu0 0.0
  %3087 = vmatpush1.msra.mxu0 0.0
  %3088 = vmatprep.subr.mxu0 0.0
  %3089 = vmatpush1.msra.mxu0 0.0
  %3090 = vmatprep.subr.mxu0 0.0
  %3091 = vmatpush1.msra.mxu0 0.0
  %3092 = vmatprep.subr.mxu0 0.0
  %3093 = vmatpush1.msra.mxu0 0.0
  %3094 = vmatprep.subr.mxu0 0.0
  %3095 = vmatpush1.msra.mxu0 0.0
  %3096 = vmatprep.subr.mxu0 0.0
  %3097 = vmatpush1.msra.mxu0 0.0
  %3098 = vmatprep.subr.mxu0 0.0
  %3099 = vmatpush1.msra.mxu0 0.0
  %3100 = vmatprep.subr.mxu0 0.0
  %3101 = vmatpush1.msra.mxu0 0.0
  %3102 = vmatprep.subr.mxu0 0.0
  %3103 = vmatpush1.msra.mxu0 0.0
  %3104 = vmatprep.subr.mxu0 0.0
  %3105 = vmatpush1.msra.mxu0 0.0
  %3106 = vmatprep.subr.mxu0 0.0
  %3107 = vmatpush1.msra.mxu0 0.0
  %3108 = vmatprep.subr.mxu0 0.0
  %3109 = vmatpush1.msra.mxu0 0.0
  %3110 = vmatprep.subr.mxu0 0.0
  %3111 = vmatpush1.msra.mxu0 0.0
  %3112 = vmatprep.subr.mxu0 0.0
  %3113 = vmatpush1.msra.mxu0 0.0
  %3114 = vmatprep.subr.mxu0 0.0
  %3115 = vmatpush1.msra.mxu0 0.0
  %3116 = vmatprep.subr.mxu0 0.0
  %3117 = vmatpush1.msra.mxu0 0.0
  %3118 = vmatprep.subr.mxu0 0.0
  %3119 = vmatpush1.msra.mxu0 0.0
  %3120 = vmatprep.subr.mxu0 0.0
  %3121 = vmatpush1.msra.mxu0 0.0
  %3122 = vmatprep.subr.mxu0 0.0
  %3123 = vmatpush1.msra.mxu0 0.0
  %3124 = vmatprep.subr.mxu0 0.0
  %3125 = vmatpush1.msra.mxu0 0.0
  %3126 = vmatprep.mubr.f32.mxu0 0.0
  %3127 = vmatmul.mubr.f32.gmra.mrb[0].mxu0 %v3060
  %v3128 = vpop.f32.mrb[0].mxu0
  %v3129 = vadd.f32 0.0, %v3128
  %v3130 = vpop.f32.mrb[0].mxu0
  %3131 = vdwg.mxu0
  %v3132 = vadd.f32 %v3059, %v3129
  %v3133 = vxor.u32 %v3057, 2147483648
  %v3134 = vmul.f32 %v3133, 1.442695
  %v3135 = vpow.pop %v3134
  %v3136 = vadd.f32 %v3135, 1.0
  %v3137 = vrcp.pop %v3136
  %v3138 = vmul.f32 1.0, %v3137
  %v3139 = vtanh.pop %v3057
  %v3140 = vmul.f32 %v3138, %v2940
  %3142 = vrot.lane.b32.xlu0 %v3139, 64
  %v3143 = vpop.permute.xlu0 %3142
  %v3145 = vmul.f32 %v3138, %v3143
  %3147 = vrot.lane.b32.xlu0 %v3145, 32
  %v3148 = vpop.permute.xlu0 %3147
  %v3150 = vadd.f32 %v3140, %v3148
  %v3151 = vtanh.pop %v3150
  %3153 = vrot.lane.b32.xlu0 %v3151, 64
  %v3154 = vpop.permute.xlu0 %3153
  %v3156 = vmul.f32 %v3138, %v3154
  %v3157 = vxor.u32 %v3132, 2147483648
  %v3158 = vmul.f32 %v3157, 1.442695
  %v3159 = vpow.pop %v3158
  %v3160 = vadd.f32 %v3159, 1.0
  %v3161 = vrcp.pop %v3160
  %v3162 = vmul.f32 1.0, %v3161
  %v3163 = vtanh.pop %v3132
  %v3164 = vmul.f32 %v3162, %v2964
  %3166 = vrot.lane.b32.xlu0 %v3163, 64
  %v3167 = vpop.permute.xlu0 %3166
  %v3169 = vmul.f32 %v3162, %v3167
  %3171 = vrot.lane.b32.xlu0 %v3169, 32
  %v3172 = vpop.permute.xlu0 %3171
  %v3174 = vadd.f32 %v3164, %v3172
  %v3175 = vtanh.pop %v3174
  %3177 = vrot.lane.b32.xlu0 %v3175, 64
  %v3178 = vpop.permute.xlu0 %3177
  %v3180 = vmul.f32 %v3162, %v3178
  %3182 = vrot.lane.b32.xlu0 %v3156, 32
  %v3183 = vpop.permute.xlu0 %3182
  %s3185 = scalar_lea.vmem [#allocation2], 96
  %3186 = vst.msk [vmem:[%s3185] sm:$0xff] %vm466, %v3183
  %3188 = vrot.lane.b32.xlu0 %v3180, 32
  %v3189 = vpop.permute.xlu0 %3188
  %s3191 = scalar_lea.vmem [#allocation3], 24
  %3192 = vst.msk [vmem:[%s3191] sm:$0xff] %vm466, %v3189
  %s3193 = scalar_lea.vmem [#allocation4], 104
  %v3194 = vld [vmem:[%s3193] sm:$0xff]
  %v3195 = vsel %vm466, %v3183, 0
  %3197 = vmatprep.subr.mxu0 0.0
  %3198 = vmatpush1.msra.mxu0 %v47
  %3199 = vmatprep.subr.mxu0 0.0
  %3200 = vmatpush1.msra.mxu0 %v48
  %3201 = vmatprep.subr.mxu0 0.0
  %3202 = vmatpush1.msra.mxu0 %v49
  %3203 = vmatprep.subr.mxu0 0.0
  %3204 = vmatpush1.msra.mxu0 %v50
  %3205 = vmatprep.subr.mxu0 0.0
  %3206 = vmatpush1.msra.mxu0 0.0
  %3207 = vmatprep.subr.mxu0 0.0
  %3208 = vmatpush1.msra.mxu0 0.0
  %3209 = vmatprep.subr.mxu0 0.0
  %3210 = vmatpush1.msra.mxu0 0.0
  %3211 = vmatprep.subr.mxu0 0.0
  %3212 = vmatpush1.msra.mxu0 0.0
  %3213 = vmatprep.subr.mxu0 0.0
  %3214 = vmatpush1.msra.mxu0 0.0
  %3215 = vmatprep.subr.mxu0 0.0
  %3216 = vmatpush1.msra.mxu0 0.0
  %3217 = vmatprep.subr.mxu0 0.0
  %3218 = vmatpush1.msra.mxu0 0.0
  %3219 = vmatprep.subr.mxu0 0.0
  %3220 = vmatpush1.msra.mxu0 0.0
  %3221 = vmatprep.subr.mxu0 0.0
  %3222 = vmatpush1.msra.mxu0 0.0
  %3223 = vmatprep.subr.mxu0 0.0
  %3224 = vmatpush1.msra.mxu0 0.0
  %3225 = vmatprep.subr.mxu0 0.0
  %3226 = vmatpush1.msra.mxu0 0.0
  %3227 = vmatprep.subr.mxu0 0.0
  %3228 = vmatpush1.msra.mxu0 0.0
  %3229 = vmatprep.subr.mxu0 0.0
  %3230 = vmatpush1.msra.mxu0 0.0
  %3231 = vmatprep.subr.mxu0 0.0
  %3232 = vmatpush1.msra.mxu0 0.0
  %3233 = vmatprep.subr.mxu0 0.0
  %3234 = vmatpush1.msra.mxu0 0.0
  %3235 = vmatprep.subr.mxu0 0.0
  %3236 = vmatpush1.msra.mxu0 0.0
  %3237 = vmatprep.subr.mxu0 0.0
  %3238 = vmatpush1.msra.mxu0 0.0
  %3239 = vmatprep.subr.mxu0 0.0
  %3240 = vmatpush1.msra.mxu0 0.0
  %3241 = vmatprep.subr.mxu0 0.0
  %3242 = vmatpush1.msra.mxu0 0.0
  %3243 = vmatprep.subr.mxu0 0.0
  %3244 = vmatpush1.msra.mxu0 0.0
  %3245 = vmatprep.subr.mxu0 0.0
  %3246 = vmatpush1.msra.mxu0 0.0
  %3247 = vmatprep.subr.mxu0 0.0
  %3248 = vmatpush1.msra.mxu0 0.0
  %3249 = vmatprep.subr.mxu0 0.0
  %3250 = vmatpush1.msra.mxu0 0.0
  %3251 = vmatprep.subr.mxu0 0.0
  %3252 = vmatpush1.msra.mxu0 0.0
  %3253 = vmatprep.subr.mxu0 0.0
  %3254 = vmatpush1.msra.mxu0 0.0
  %3255 = vmatprep.subr.mxu0 0.0
  %3256 = vmatpush1.msra.mxu0 0.0
  %3257 = vmatprep.subr.mxu0 0.0
  %3258 = vmatpush1.msra.mxu0 0.0
  %3259 = vmatprep.subr.mxu0 0.0
  %3260 = vmatpush1.msra.mxu0 0.0
  %3261 = vmatprep.mubr.f32.mxu0 0.0
  %3262 = vmatmul.mubr.f32.gmra.mrb[0].mxu0 %v3195
  %v3263 = vpop.f32.mrb[0].mxu0
  %v3264 = vadd.f32 0.0, %v3263
  %v3265 = vpop.f32.mrb[0].mxu0
  %3266 = vdwg.mxu0
  %v3267 = vadd.f32 %v3194, %v3264
  %s3268 = scalar_lea.vmem [#allocation5], 16
  %v3269 = vld [vmem:[%s3268] sm:$0xff]
  %v3270 = vsel %vm466, %v3189, 0
  %3272 = vmatprep.subr.mxu0 0.0
  %3273 = vmatpush1.msra.mxu0 %v51
  %3274 = vmatprep.subr.mxu0 0.0
  %3275 = vmatpush1.msra.mxu0 %v52
  %3276 = vmatprep.subr.mxu0 0.0
  %3277 = vmatpush1.msra.mxu0 %v53
  %3278 = vmatprep.subr.mxu0 0.0
  %3279 = vmatpush1.msra.mxu0 %v54
  %3280 = vmatprep.subr.mxu0 0.0
  %3281 = vmatpush1.msra.mxu0 0.0
  %3282 = vmatprep.subr.mxu0 0.0
  %3283 = vmatpush1.msra.mxu0 0.0
  %3284 = vmatprep.subr.mxu0 0.0
  %3285 = vmatpush1.msra.mxu0 0.0
  %3286 = vmatprep.subr.mxu0 0.0
  %3287 = vmatpush1.msra.mxu0 0.0
  %3288 = vmatprep.subr.mxu0 0.0
  %3289 = vmatpush1.msra.mxu0 0.0
  %3290 = vmatprep.subr.mxu0 0.0
  %3291 = vmatpush1.msra.mxu0 0.0
  %3292 = vmatprep.subr.mxu0 0.0
  %3293 = vmatpush1.msra.mxu0 0.0
  %3294 = vmatprep.subr.mxu0 0.0
  %3295 = vmatpush1.msra.mxu0 0.0
  %3296 = vmatprep.subr.mxu0 0.0
  %3297 = vmatpush1.msra.mxu0 0.0
  %3298 = vmatprep.subr.mxu0 0.0
  %3299 = vmatpush1.msra.mxu0 0.0
  %3300 = vmatprep.subr.mxu0 0.0
  %3301 = vmatpush1.msra.mxu0 0.0
  %3302 = vmatprep.subr.mxu0 0.0
  %3303 = vmatpush1.msra.mxu0 0.0
  %3304 = vmatprep.subr.mxu0 0.0
  %3305 = vmatpush1.msra.mxu0 0.0
  %3306 = vmatprep.subr.mxu0 0.0
  %3307 = vmatpush1.msra.mxu0 0.0
  %3308 = vmatprep.subr.mxu0 0.0
  %3309 = vmatpush1.msra.mxu0 0.0
  %3310 = vmatprep.subr.mxu0 0.0
  %3311 = vmatpush1.msra.mxu0 0.0
  %3312 = vmatprep.subr.mxu0 0.0
  %3313 = vmatpush1.msra.mxu0 0.0
  %3314 = vmatprep.subr.mxu0 0.0
  %3315 = vmatpush1.msra.mxu0 0.0
  %3316 = vmatprep.subr.mxu0 0.0
  %3317 = vmatpush1.msra.mxu0 0.0
  %3318 = vmatprep.subr.mxu0 0.0
  %3319 = vmatpush1.msra.mxu0 0.0
  %3320 = vmatprep.subr.mxu0 0.0
  %3321 = vmatpush1.msra.mxu0 0.0
  %3322 = vmatprep.subr.mxu0 0.0
  %3323 = vmatpush1.msra.mxu0 0.0
  %3324 = vmatprep.subr.mxu0 0.0
  %3325 = vmatpush1.msra.mxu0 0.0
  %3326 = vmatprep.subr.mxu0 0.0
  %3327 = vmatpush1.msra.mxu0 0.0
  %3328 = vmatprep.subr.mxu0 0.0
  %3329 = vmatpush1.msra.mxu0 0.0
  %3330 = vmatprep.subr.mxu0 0.0
  %3331 = vmatpush1.msra.mxu0 0.0
  %3332 = vmatprep.subr.mxu0 0.0
  %3333 = vmatpush1.msra.mxu0 0.0
  %3334 = vmatprep.subr.mxu0 0.0
  %3335 = vmatpush1.msra.mxu0 0.0
  %3336 = vmatprep.mubr.f32.mxu0 0.0
  %3337 = vmatmul.mubr.f32.gmra.mrb[0].mxu0 %v3270
  %v3338 = vpop.f32.mrb[0].mxu0
  %v3339 = vadd.f32 0.0, %v3338
  %v3340 = vpop.f32.mrb[0].mxu0
  %3341 = vdwg.mxu0
  %v3342 = vadd.f32 %v3269, %v3339
  %v3343 = vxor.u32 %v3267, 2147483648
  %v3344 = vmul.f32 %v3343, 1.442695
  %v3345 = vpow.pop %v3344
  %v3346 = vadd.f32 %v3345, 1.0
  %v3347 = vrcp.pop %v3346
  %v3348 = vmul.f32 1.0, %v3347
  %v3349 = vtanh.pop %v3267
  %v3350 = vmul.f32 %v3348, %v3150
  %3352 = vrot.lane.b32.xlu0 %v3349, 64
  %v3353 = vpop.permute.xlu0 %3352
  %v3355 = vmul.f32 %v3348, %v3353
  %3357 = vrot.lane.b32.xlu0 %v3355, 32
  %v3358 = vpop.permute.xlu0 %3357
  %v3360 = vadd.f32 %v3350, %v3358
  %v3361 = vtanh.pop %v3360
  %3363 = vrot.lane.b32.xlu0 %v3361, 64
  %v3364 = vpop.permute.xlu0 %3363
  %v3366 = vmul.f32 %v3348, %v3364
  %v3367 = vxor.u32 %v3342, 2147483648
  %v3368 = vmul.f32 %v3367, 1.442695
  %v3369 = vpow.pop %v3368
  %v3370 = vadd.f32 %v3369, 1.0
  %v3371 = vrcp.pop %v3370
  %v3372 = vmul.f32 1.0, %v3371
  %v3373 = vtanh.pop %v3342
  %v3374 = vmul.f32 %v3372, %v3174
  %3376 = vrot.lane.b32.xlu0 %v3373, 64
  %v3377 = vpop.permute.xlu0 %3376
  %v3379 = vmul.f32 %v3372, %v3377
  %3381 = vrot.lane.b32.xlu0 %v3379, 32
  %v3382 = vpop.permute.xlu0 %3381
  %v3384 = vadd.f32 %v3374, %v3382
  %v3385 = vtanh.pop %v3384
  %3387 = vrot.lane.b32.xlu0 %v3385, 64
  %v3388 = vpop.permute.xlu0 %3387
  %v3390 = vmul.f32 %v3372, %v3388
  %3392 = vrot.lane.b32.xlu0 %v3366, 32
  %v3393 = vpop.permute.xlu0 %3392
  %s3395 = scalar_lea.vmem [#allocation2], 104
  %3396 = vst.msk [vmem:[%s3395] sm:$0xff] %vm466, %v3393
  %3398 = vrot.lane.b32.xlu0 %v3390, 32
  %v3399 = vpop.permute.xlu0 %3398
  %s3401 = scalar_lea.vmem [#allocation3], 16
  %3402 = vst.msk [vmem:[%s3401] sm:$0xff] %vm466, %v3399
  %s3403 = scalar_lea.vmem [#allocation4], 112
  %v3404 = vld [vmem:[%s3403] sm:$0xff]
  %v3405 = vsel %vm466, %v3393, 0
  %3407 = vmatprep.subr.mxu0 0.0
  %3408 = vmatpush1.msra.mxu0 %v47
  %3409 = vmatprep.subr.mxu0 0.0
  %3410 = vmatpush1.msra.mxu0 %v48
  %3411 = vmatprep.subr.mxu0 0.0
  %3412 = vmatpush1.msra.mxu0 %v49
  %3413 = vmatprep.subr.mxu0 0.0
  %3414 = vmatpush1.msra.mxu0 %v50
  %3415 = vmatprep.subr.mxu0 0.0
  %3416 = vmatpush1.msra.mxu0 0.0
  %3417 = vmatprep.subr.mxu0 0.0
  %3418 = vmatpush1.msra.mxu0 0.0
  %3419 = vmatprep.subr.mxu0 0.0
  %3420 = vmatpush1.msra.mxu0 0.0
  %3421 = vmatprep.subr.mxu0 0.0
  %3422 = vmatpush1.msra.mxu0 0.0
  %3423 = vmatprep.subr.mxu0 0.0
  %3424 = vmatpush1.msra.mxu0 0.0
  %3425 = vmatprep.subr.mxu0 0.0
  %3426 = vmatpush1.msra.mxu0 0.0
  %3427 = vmatprep.subr.mxu0 0.0
  %3428 = vmatpush1.msra.mxu0 0.0
  %3429 = vmatprep.subr.mxu0 0.0
  %3430 = vmatpush1.msra.mxu0 0.0
  %3431 = vmatprep.subr.mxu0 0.0
  %3432 = vmatpush1.msra.mxu0 0.0
  %3433 = vmatprep.subr.mxu0 0.0
  %3434 = vmatpush1.msra.mxu0 0.0
  %3435 = vmatprep.subr.mxu0 0.0
  %3436 = vmatpush1.msra.mxu0 0.0
  %3437 = vmatprep.subr.mxu0 0.0
  %3438 = vmatpush1.msra.mxu0 0.0
  %3439 = vmatprep.subr.mxu0 0.0
  %3440 = vmatpush1.msra.mxu0 0.0
  %3441 = vmatprep.subr.mxu0 0.0
  %3442 = vmatpush1.msra.mxu0 0.0
  %3443 = vmatprep.subr.mxu0 0.0
  %3444 = vmatpush1.msra.mxu0 0.0
  %3445 = vmatprep.subr.mxu0 0.0
  %3446 = vmatpush1.msra.mxu0 0.0
  %3447 = vmatprep.subr.mxu0 0.0
  %3448 = vmatpush1.msra.mxu0 0.0
  %3449 = vmatprep.subr.mxu0 0.0
  %3450 = vmatpush1.msra.mxu0 0.0
  %3451 = vmatprep.subr.mxu0 0.0
  %3452 = vmatpush1.msra.mxu0 0.0
  %3453 = vmatprep.subr.mxu0 0.0
  %3454 = vmatpush1.msra.mxu0 0.0
  %3455 = vmatprep.subr.mxu0 0.0
  %3456 = vmatpush1.msra.mxu0 0.0
  %3457 = vmatprep.subr.mxu0 0.0
  %3458 = vmatpush1.msra.mxu0 0.0
  %3459 = vmatprep.subr.mxu0 0.0
  %3460 = vmatpush1.msra.mxu0 0.0
  %3461 = vmatprep.subr.mxu0 0.0
  %3462 = vmatpush1.msra.mxu0 0.0
  %3463 = vmatprep.subr.mxu0 0.0
  %3464 = vmatpush1.msra.mxu0 0.0
  %3465 = vmatprep.subr.mxu0 0.0
  %3466 = vmatpush1.msra.mxu0 0.0
  %3467 = vmatprep.subr.mxu0 0.0
  %3468 = vmatpush1.msra.mxu0 0.0
  %3469 = vmatprep.subr.mxu0 0.0
  %3470 = vmatpush1.msra.mxu0 0.0
  %3471 = vmatprep.mubr.f32.mxu0 0.0
  %3472 = vmatmul.mubr.f32.gmra.mrb[0].mxu0 %v3405
  %v3473 = vpop.f32.mrb[0].mxu0
  %v3474 = vadd.f32 0.0, %v3473
  %v3475 = vpop.f32.mrb[0].mxu0
  %3476 = vdwg.mxu0
  %v3477 = vadd.f32 %v3404, %v3474
  %s3478 = scalar_lea.vmem [#allocation5], 8
  %v3479 = vld [vmem:[%s3478] sm:$0xff]
  %v3480 = vsel %vm466, %v3399, 0
  %3482 = vmatprep.subr.mxu0 0.0
  %3483 = vmatpush1.msra.mxu0 %v51
  %3484 = vmatprep.subr.mxu0 0.0
  %3485 = vmatpush1.msra.mxu0 %v52
  %3486 = vmatprep.subr.mxu0 0.0
  %3487 = vmatpush1.msra.mxu0 %v53
  %3488 = vmatprep.subr.mxu0 0.0
  %3489 = vmatpush1.msra.mxu0 %v54
  %3490 = vmatprep.subr.mxu0 0.0
  %3491 = vmatpush1.msra.mxu0 0.0
  %3492 = vmatprep.subr.mxu0 0.0
  %3493 = vmatpush1.msra.mxu0 0.0
  %3494 = vmatprep.subr.mxu0 0.0
  %3495 = vmatpush1.msra.mxu0 0.0
  %3496 = vmatprep.subr.mxu0 0.0
  %3497 = vmatpush1.msra.mxu0 0.0
  %3498 = vmatprep.subr.mxu0 0.0
  %3499 = vmatpush1.msra.mxu0 0.0
  %3500 = vmatprep.subr.mxu0 0.0
  %3501 = vmatpush1.msra.mxu0 0.0
  %3502 = vmatprep.subr.mxu0 0.0
  %3503 = vmatpush1.msra.mxu0 0.0
  %3504 = vmatprep.subr.mxu0 0.0
  %3505 = vmatpush1.msra.mxu0 0.0
  %3506 = vmatprep.subr.mxu0 0.0
  %3507 = vmatpush1.msra.mxu0 0.0
  %3508 = vmatprep.subr.mxu0 0.0
  %3509 = vmatpush1.msra.mxu0 0.0
  %3510 = vmatprep.subr.mxu0 0.0
  %3511 = vmatpush1.msra.mxu0 0.0
  %3512 = vmatprep.subr.mxu0 0.0
  %3513 = vmatpush1.msra.mxu0 0.0
  %3514 = vmatprep.subr.mxu0 0.0
  %3515 = vmatpush1.msra.mxu0 0.0
  %3516 = vmatprep.subr.mxu0 0.0
  %3517 = vmatpush1.msra.mxu0 0.0
  %3518 = vmatprep.subr.mxu0 0.0
  %3519 = vmatpush1.msra.mxu0 0.0
  %3520 = vmatprep.subr.mxu0 0.0
  %3521 = vmatpush1.msra.mxu0 0.0
  %3522 = vmatprep.subr.mxu0 0.0
  %3523 = vmatpush1.msra.mxu0 0.0
  %3524 = vmatprep.subr.mxu0 0.0
  %3525 = vmatpush1.msra.mxu0 0.0
  %3526 = vmatprep.subr.mxu0 0.0
  %3527 = vmatpush1.msra.mxu0 0.0
  %3528 = vmatprep.subr.mxu0 0.0
  %3529 = vmatpush1.msra.mxu0 0.0
  %3530 = vmatprep.subr.mxu0 0.0
  %3531 = vmatpush1.msra.mxu0 0.0
  %3532 = vmatprep.subr.mxu0 0.0
  %3533 = vmatpush1.msra.mxu0 0.0
  %3534 = vmatprep.subr.mxu0 0.0
  %3535 = vmatpush1.msra.mxu0 0.0
  %3536 = vmatprep.subr.mxu0 0.0
  %3537 = vmatpush1.msra.mxu0 0.0
  %3538 = vmatprep.subr.mxu0 0.0
  %3539 = vmatpush1.msra.mxu0 0.0
  %3540 = vmatprep.subr.mxu0 0.0
  %3541 = vmatpush1.msra.mxu0 0.0
  %3542 = vmatprep.subr.mxu0 0.0
  %3543 = vmatpush1.msra.mxu0 0.0
  %3544 = vmatprep.subr.mxu0 0.0
  %3545 = vmatpush1.msra.mxu0 0.0
  %3546 = vmatprep.mubr.f32.mxu0 0.0
  %3547 = vmatmul.mubr.f32.gmra.mrb[0].mxu0 %v3480
  %v3548 = vpop.f32.mrb[0].mxu0
  %v3549 = vadd.f32 0.0, %v3548
  %v3550 = vpop.f32.mrb[0].mxu0
  %3551 = vdwg.mxu0
  %v3552 = vadd.f32 %v3479, %v3549
  %v3553 = vxor.u32 %v3477, 2147483648
  %v3554 = vmul.f32 %v3553, 1.442695
  %v3555 = vpow.pop %v3554
  %v3556 = vadd.f32 %v3555, 1.0
  %v3557 = vrcp.pop %v3556
  %v3558 = vmul.f32 1.0, %v3557
  %v3559 = vtanh.pop %v3477
  %v3560 = vmul.f32 %v3558, %v3360
  %3562 = vrot.lane.b32.xlu0 %v3559, 64
  %v3563 = vpop.permute.xlu0 %3562
  %v3565 = vmul.f32 %v3558, %v3563
  %3567 = vrot.lane.b32.xlu0 %v3565, 32
  %v3568 = vpop.permute.xlu0 %3567
  %v3570 = vadd.f32 %v3560, %v3568
  %v3571 = vtanh.pop %v3570
  %3573 = vrot.lane.b32.xlu0 %v3571, 64
  %v3574 = vpop.permute.xlu0 %3573
  %v3576 = vmul.f32 %v3558, %v3574
  %v3577 = vxor.u32 %v3552, 2147483648
  %v3578 = vmul.f32 %v3577, 1.442695
  %v3579 = vpow.pop %v3578
  %v3580 = vadd.f32 %v3579, 1.0
  %v3581 = vrcp.pop %v3580
  %v3582 = vmul.f32 1.0, %v3581
  %v3583 = vtanh.pop %v3552
  %v3584 = vmul.f32 %v3582, %v3384
  %3586 = vrot.lane.b32.xlu0 %v3583, 64
  %v3587 = vpop.permute.xlu0 %3586
  %v3589 = vmul.f32 %v3582, %v3587
  %3591 = vrot.lane.b32.xlu0 %v3589, 32
  %v3592 = vpop.permute.xlu0 %3591
  %v3594 = vadd.f32 %v3584, %v3592
  %v3595 = vtanh.pop %v3594
  %3597 = vrot.lane.b32.xlu0 %v3595, 64
  %v3598 = vpop.permute.xlu0 %3597
  %v3600 = vmul.f32 %v3582, %v3598
  %3602 = vrot.lane.b32.xlu0 %v3576, 32
  %v3603 = vpop.permute.xlu0 %3602
  %s3605 = scalar_lea.vmem [#allocation2], 112
  %3606 = vst.msk [vmem:[%s3605] sm:$0xff] %vm466, %v3603
  %3608 = vrot.lane.b32.xlu0 %v3600, 32
  %v3609 = vpop.permute.xlu0 %3608
  %s3611 = scalar_lea.vmem [#allocation3], 8
  %3612 = vst.msk [vmem:[%s3611] sm:$0xff] %vm466, %v3609
  %s3613 = scalar_lea.vmem [#allocation4], 120
  %v3614 = vld [vmem:[%s3613] sm:$0xff]
  %v3615 = vsel %vm466, %v3603, 0
  %3617 = vmatprep.subr.mxu0 0.0
  %3618 = vmatpush1.msra.mxu0 %v47
  %3619 = vmatprep.subr.mxu0 0.0
  %3620 = vmatpush1.msra.mxu0 %v48
  %3621 = vmatprep.subr.mxu0 0.0
  %3622 = vmatpush1.msra.mxu0 %v49
  %3623 = vmatprep.subr.mxu0 0.0
  %3624 = vmatpush1.msra.mxu0 %v50
  %3625 = vmatprep.subr.mxu0 0.0
  %3626 = vmatpush1.msra.mxu0 0.0
  %3627 = vmatprep.subr.mxu0 0.0
  %3628 = vmatpush1.msra.mxu0 0.0
  %3629 = vmatprep.subr.mxu0 0.0
  %3630 = vmatpush1.msra.mxu0 0.0
  %3631 = vmatprep.subr.mxu0 0.0
  %3632 = vmatpush1.msra.mxu0 0.0
  %3633 = vmatprep.subr.mxu0 0.0
  %3634 = vmatpush1.msra.mxu0 0.0
  %3635 = vmatprep.subr.mxu0 0.0
  %3636 = vmatpush1.msra.mxu0 0.0
  %3637 = vmatprep.subr.mxu0 0.0
  %3638 = vmatpush1.msra.mxu0 0.0
  %3639 = vmatprep.subr.mxu0 0.0
  %3640 = vmatpush1.msra.mxu0 0.0
  %3641 = vmatprep.subr.mxu0 0.0
  %3642 = vmatpush1.msra.mxu0 0.0
  %3643 = vmatprep.subr.mxu0 0.0
  %3644 = vmatpush1.msra.mxu0 0.0
  %3645 = vmatprep.subr.mxu0 0.0
  %3646 = vmatpush1.msra.mxu0 0.0
  %3647 = vmatprep.subr.mxu0 0.0
  %3648 = vmatpush1.msra.mxu0 0.0
  %3649 = vmatprep.subr.mxu0 0.0
  %3650 = vmatpush1.msra.mxu0 0.0
  %3651 = vmatprep.subr.mxu0 0.0
  %3652 = vmatpush1.msra.mxu0 0.0
  %3653 = vmatprep.subr.mxu0 0.0
  %3654 = vmatpush1.msra.mxu0 0.0
  %3655 = vmatprep.subr.mxu0 0.0
  %3656 = vmatpush1.msra.mxu0 0.0
  %3657 = vmatprep.subr.mxu0 0.0
  %3658 = vmatpush1.msra.mxu0 0.0
  %3659 = vmatprep.subr.mxu0 0.0
  %3660 = vmatpush1.msra.mxu0 0.0
  %3661 = vmatprep.subr.mxu0 0.0
  %3662 = vmatpush1.msra.mxu0 0.0
  %3663 = vmatprep.subr.mxu0 0.0
  %3664 = vmatpush1.msra.mxu0 0.0
  %3665 = vmatprep.subr.mxu0 0.0
  %3666 = vmatpush1.msra.mxu0 0.0
  %3667 = vmatprep.subr.mxu0 0.0
  %3668 = vmatpush1.msra.mxu0 0.0
  %3669 = vmatprep.subr.mxu0 0.0
  %3670 = vmatpush1.msra.mxu0 0.0
  %3671 = vmatprep.subr.mxu0 0.0
  %3672 = vmatpush1.msra.mxu0 0.0
  %3673 = vmatprep.subr.mxu0 0.0
  %3674 = vmatpush1.msra.mxu0 0.0
  %3675 = vmatprep.subr.mxu0 0.0
  %3676 = vmatpush1.msra.mxu0 0.0
  %3677 = vmatprep.subr.mxu0 0.0
  %3678 = vmatpush1.msra.mxu0 0.0
  %3679 = vmatprep.subr.mxu0 0.0
  %3680 = vmatpush1.msra.mxu0 0.0
  %3681 = vmatprep.mubr.f32.mxu0 0.0
  %3682 = vmatmul.mubr.f32.gmra.mrb[0].mxu0 %v3615
  %v3683 = vpop.f32.mrb[0].mxu0
  %v3684 = vadd.f32 0.0, %v3683
  %v3685 = vpop.f32.mrb[0].mxu0
  %3686 = vdwg.mxu0
  %v3687 = vadd.f32 %v3614, %v3684
  %v3688 = vld [vmem:[#allocation5] sm:$0xff]
  %v3689 = vsel %vm466, %v3609, 0
  %3691 = vmatprep.subr.mxu0 0.0
  %3692 = vmatpush1.msra.mxu0 %v51
  %3693 = vmatprep.subr.mxu0 0.0
  %3694 = vmatpush1.msra.mxu0 %v52
  %3695 = vmatprep.subr.mxu0 0.0
  %3696 = vmatpush1.msra.mxu0 %v53
  %3697 = vmatprep.subr.mxu0 0.0
  %3698 = vmatpush1.msra.mxu0 %v54
  %3699 = vmatprep.subr.mxu0 0.0
  %3700 = vmatpush1.msra.mxu0 0.0
  %3701 = vmatprep.subr.mxu0 0.0
  %3702 = vmatpush1.msra.mxu0 0.0
  %3703 = vmatprep.subr.mxu0 0.0
  %3704 = vmatpush1.msra.mxu0 0.0
  %3705 = vmatprep.subr.mxu0 0.0
  %3706 = vmatpush1.msra.mxu0 0.0
  %3707 = vmatprep.subr.mxu0 0.0
  %3708 = vmatpush1.msra.mxu0 0.0
  %3709 = vmatprep.subr.mxu0 0.0
  %3710 = vmatpush1.msra.mxu0 0.0
  %3711 = vmatprep.subr.mxu0 0.0
  %3712 = vmatpush1.msra.mxu0 0.0
  %3713 = vmatprep.subr.mxu0 0.0
  %3714 = vmatpush1.msra.mxu0 0.0
  %3715 = vmatprep.subr.mxu0 0.0
  %3716 = vmatpush1.msra.mxu0 0.0
  %3717 = vmatprep.subr.mxu0 0.0
  %3718 = vmatpush1.msra.mxu0 0.0
  %3719 = vmatprep.subr.mxu0 0.0
  %3720 = vmatpush1.msra.mxu0 0.0
  %3721 = vmatprep.subr.mxu0 0.0
  %3722 = vmatpush1.msra.mxu0 0.0
  %3723 = vmatprep.subr.mxu0 0.0
  %3724 = vmatpush1.msra.mxu0 0.0
  %3725 = vmatprep.subr.mxu0 0.0
  %3726 = vmatpush1.msra.mxu0 0.0
  %3727 = vmatprep.subr.mxu0 0.0
  %3728 = vmatpush1.msra.mxu0 0.0
  %3729 = vmatprep.subr.mxu0 0.0
  %3730 = vmatpush1.msra.mxu0 0.0
  %3731 = vmatprep.subr.mxu0 0.0
  %3732 = vmatpush1.msra.mxu0 0.0
  %3733 = vmatprep.subr.mxu0 0.0
  %3734 = vmatpush1.msra.mxu0 0.0
  %3735 = vmatprep.subr.mxu0 0.0
  %3736 = vmatpush1.msra.mxu0 0.0
  %3737 = vmatprep.subr.mxu0 0.0
  %3738 = vmatpush1.msra.mxu0 0.0
  %3739 = vmatprep.subr.mxu0 0.0
  %3740 = vmatpush1.msra.mxu0 0.0
  %3741 = vmatprep.subr.mxu0 0.0
  %3742 = vmatpush1.msra.mxu0 0.0
  %3743 = vmatprep.subr.mxu0 0.0
  %3744 = vmatpush1.msra.mxu0 0.0
  %3745 = vmatprep.subr.mxu0 0.0
  %3746 = vmatpush1.msra.mxu0 0.0
  %3747 = vmatprep.subr.mxu0 0.0
  %3748 = vmatpush1.msra.mxu0 0.0
  %3749 = vmatprep.subr.mxu0 0.0
  %3750 = vmatpush1.msra.mxu0 0.0
  %3751 = vmatprep.subr.mxu0 0.0
  %3752 = vmatpush1.msra.mxu0 0.0
  %3753 = vmatprep.subr.mxu0 0.0
  %3754 = vmatpush1.msra.mxu0 0.0
  %3755 = vmatprep.mubr.f32.mxu0 0.0
  %3756 = vmatmul.mubr.f32.gmra.mrb[0].mxu0 %v3689
  %v3757 = vpop.f32.mrb[0].mxu0
  %v3758 = vadd.f32 0.0, %v3757
  %v3759 = vpop.f32.mrb[0].mxu0
  %3760 = vdwg.mxu0
  %v3761 = vadd.f32 %v3688, %v3758
  %v3762 = vxor.u32 %v3687, 2147483648
  %v3763 = vmul.f32 %v3762, 1.442695
  %v3764 = vpow.pop %v3763
  %v3765 = vadd.f32 %v3764, 1.0
  %v3766 = vrcp.pop %v3765
  %v3767 = vmul.f32 1.0, %v3766
  %v3768 = vtanh.pop %v3687
  %v3769 = vmul.f32 %v3767, %v3570
  %3771 = vrot.lane.b32.xlu0 %v3768, 64
  %v3772 = vpop.permute.xlu0 %3771
  %v3774 = vmul.f32 %v3767, %v3772
  %3776 = vrot.lane.b32.xlu0 %v3774, 32
  %v3777 = vpop.permute.xlu0 %3776
  %v3779 = vadd.f32 %v3769, %v3777
  %v3780 = vtanh.pop %v3779
  %3782 = vrot.lane.b32.xlu0 %v3780, 64
  %v3783 = vpop.permute.xlu0 %3782
  %v3785 = vmul.f32 %v3767, %v3783
  %v3786 = vxor.u32 %v3761, 2147483648
  %v3787 = vmul.f32 %v3786, 1.442695
  %v3788 = vpow.pop %v3787
  %v3789 = vadd.f32 %v3788, 1.0
  %v3790 = vrcp.pop %v3789
  %v3791 = vmul.f32 1.0, %v3790
  %v3792 = vtanh.pop %v3761
  %v3793 = vmul.f32 %v3791, %v3594
  %3795 = vrot.lane.b32.xlu0 %v3792, 64
  %v3796 = vpop.permute.xlu0 %3795
  %v3798 = vmul.f32 %v3791, %v3796
  %3800 = vrot.lane.b32.xlu0 %v3798, 32
  %v3801 = vpop.permute.xlu0 %3800
  %v3803 = vadd.f32 %v3793, %v3801
  %v3804 = vtanh.pop %v3803
  %3806 = vrot.lane.b32.xlu0 %v3804, 64
  %v3807 = vpop.permute.xlu0 %3806
  %v3809 = vmul.f32 %v3791, %v3807
  %3811 = vrot.lane.b32.xlu0 %v3785, 32
  %v3812 = vpop.permute.xlu0 %3811
  %s3814 = scalar_lea.vmem [#allocation2], 120
  %3815 = vst.msk [vmem:[%s3814] sm:$0xff] %vm466, %v3812
  %3817 = vrot.lane.b32.xlu0 %v3809, 32
  %v3818 = vpop.permute.xlu0 %3817
  %3820 = vst.msk [vmem:[#allocation3] sm:$0xff] %vm466, %v3818
  %v3821 = vld [vmem:[#allocation2] sm:$0xff]
  %v3822 = vld [vmem:[#allocation2 + $0x8] sm:$0xff]
  %v3823 = vld [vmem:[#allocation2 + $0x10] sm:$0xff]
  %v3824 = vld [vmem:[#allocation2 + $0x18] sm:$0xff]
  %v3825 = vld [vmem:[#allocation2 + $0x20] sm:$0xff]
  %v3826 = vld [vmem:[#allocation2 + $0x28] sm:$0xff]
  %v3827 = vld [vmem:[#allocation2 + $0x30] sm:$0xff]
  %v3828 = vld [vmem:[#allocation2 + $0x38] sm:$0xff]
  %v3829 = vld [vmem:[#allocation2 + $0x40] sm:$0xff]
  %v3830 = vld [vmem:[#allocation2 + $0x48] sm:$0xff]
  %v3831 = vld [vmem:[#allocation2 + $0x50] sm:$0xff]
  %v3832 = vld [vmem:[#allocation2 + $0x58] sm:$0xff]
  %v3833 = vld [vmem:[#allocation2 + $0x60] sm:$0xff]
  %v3834 = vld [vmem:[#allocation2 + $0x68] sm:$0xff]
  %v3835 = vld [vmem:[#allocation2 + $0x70] sm:$0xff]
  %v3836 = vld [vmem:[#allocation2 + $0x78] sm:$0xff]
  %v3837 = vld [vmem:[#allocation3] sm:$0xff]
  %v3838 = vld [vmem:[#allocation3 + $0x8] sm:$0xff]
  %v3839 = vld [vmem:[#allocation3 + $0x10] sm:$0xff]
  %v3840 = vld [vmem:[#allocation3 + $0x18] sm:$0xff]
  %v3841 = vld [vmem:[#allocation3 + $0x20] sm:$0xff]
  %v3842 = vld [vmem:[#allocation3 + $0x28] sm:$0xff]
  %v3843 = vld [vmem:[#allocation3 + $0x30] sm:$0xff]
  %v3844 = vld [vmem:[#allocation3 + $0x38] sm:$0xff]
  %v3845 = vld [vmem:[#allocation3 + $0x40] sm:$0xff]
  %v3846 = vld [vmem:[#allocation3 + $0x48] sm:$0xff]
  %v3847 = vld [vmem:[#allocation3 + $0x50] sm:$0xff]
  %v3848 = vld [vmem:[#allocation3 + $0x58] sm:$0xff]
  %v3849 = vld [vmem:[#allocation3 + $0x60] sm:$0xff]
  %v3850 = vld [vmem:[#allocation3 + $0x68] sm:$0xff]
  %v3851 = vld [vmem:[#allocation3 + $0x70] sm:$0xff]
  %v3852 = vld [vmem:[#allocation3 + $0x78] sm:$0xff]
  %v3853 = vld [vmem:[%s7] sm:$0xff]
  %v3854 = vld [vmem:[%s7 + $0x8] sm:$0xff]
  %v3855 = vld [vmem:[%s7 + $0x10] sm:$0xff]
  %v3856 = vld [vmem:[%s7 + $0x18] sm:$0xff]
  %v3857 = vld [vmem:[%s8] sm:$0xff]
  %v3858 = vld [vmem:[%s8 + $0x8] sm:$0xff]
  %v3859 = vld [vmem:[%s8 + $0x10] sm:$0xff]
  %v3860 = vld [vmem:[%s8 + $0x18] sm:$0xff]
  %v3862 = vsel %vm466, %v3837, 0
  %v3865 = vsel %vm466, %v3838, 0
  %v3868 = vsel %vm466, %v3839, 0
  %v3871 = vsel %vm466, %v3840, 0
  %v3874 = vsel %vm466, %v3841, 0
  %v3877 = vsel %vm466, %v3842, 0
  %v3880 = vsel %vm466, %v3843, 0
  %v3883 = vsel %vm466, %v3844, 0
  %v3886 = vsel %vm466, %v3845, 0
  %v3889 = vsel %vm466, %v3846, 0
  %v3892 = vsel %vm466, %v3847, 0
  %v3895 = vsel %vm466, %v3848, 0
  %v3898 = vsel %vm466, %v3849, 0
  %v3901 = vsel %vm466, %v3850, 0
  %v3904 = vsel %vm466, %v3851, 0
  %v3907 = vsel %vm466, %v3852, 0
  %3909 = vmatprep.subr.mxu0 0.0
  %3910 = vmatpush1.msra.mxu0 %v3857
  %3911 = vmatprep.subr.mxu0 0.0
  %3912 = vmatpush1.msra.mxu0 %v3858
  %3913 = vmatprep.subr.mxu0 0.0
  %3914 = vmatpush1.msra.mxu0 %v3859
  %3915 = vmatprep.subr.mxu0 0.0
  %3916 = vmatpush1.msra.mxu0 %v3860
  %3917 = vmatprep.subr.mxu0 0.0
  %3918 = vmatpush1.msra.mxu0 0.0
  %3919 = vmatprep.subr.mxu0 0.0
  %3920 = vmatpush1.msra.mxu0 0.0
  %3921 = vmatprep.subr.mxu0 0.0
  %3922 = vmatpush1.msra.mxu0 0.0
  %3923 = vmatprep.subr.mxu0 0.0
  %3924 = vmatpush1.msra.mxu0 0.0
  %3925 = vmatprep.subr.mxu0 0.0
  %3926 = vmatpush1.msra.mxu0 0.0
  %3927 = vmatprep.subr.mxu0 0.0
  %3928 = vmatpush1.msra.mxu0 0.0
  %3929 = vmatprep.subr.mxu0 0.0
  %3930 = vmatpush1.msra.mxu0 0.0
  %3931 = vmatprep.subr.mxu0 0.0
  %3932 = vmatpush1.msra.mxu0 0.0
  %3933 = vmatprep.subr.mxu0 0.0
  %3934 = vmatpush1.msra.mxu0 0.0
  %3935 = vmatprep.subr.mxu0 0.0
  %3936 = vmatpush1.msra.mxu0 0.0
  %3937 = vmatprep.subr.mxu0 0.0
  %3938 = vmatpush1.msra.mxu0 0.0
  %3939 = vmatprep.subr.mxu0 0.0
  %3940 = vmatpush1.msra.mxu0 0.0
  %3941 = vmatprep.subr.mxu0 0.0
  %3942 = vmatpush1.msra.mxu0 0.0
  %3943 = vmatprep.subr.mxu0 0.0
  %3944 = vmatpush1.msra.mxu0 0.0
  %3945 = vmatprep.subr.mxu0 0.0
  %3946 = vmatpush1.msra.mxu0 0.0
  %3947 = vmatprep.subr.mxu0 0.0
  %3948 = vmatpush1.msra.mxu0 0.0
  %3949 = vmatprep.subr.mxu0 0.0
  %3950 = vmatpush1.msra.mxu0 0.0
  %3951 = vmatprep.subr.mxu0 0.0
  %3952 = vmatpush1.msra.mxu0 0.0
  %3953 = vmatprep.subr.mxu0 0.0
  %3954 = vmatpush1.msra.mxu0 0.0
  %3955 = vmatprep.subr.mxu0 0.0
  %3956 = vmatpush1.msra.mxu0 0.0
  %3957 = vmatprep.subr.mxu0 0.0
  %3958 = vmatpush1.msra.mxu0 0.0
  %3959 = vmatprep.subr.mxu0 0.0
  %3960 = vmatpush1.msra.mxu0 0.0
  %3961 = vmatprep.subr.mxu0 0.0
  %3962 = vmatpush1.msra.mxu0 0.0
  %3963 = vmatprep.subr.mxu0 0.0
  %3964 = vmatpush1.msra.mxu0 0.0
  %3965 = vmatprep.subr.mxu0 0.0
  %3966 = vmatpush1.msra.mxu0 0.0
  %3967 = vmatprep.subr.mxu0 0.0
  %3968 = vmatpush1.msra.mxu0 0.0
  %3969 = vmatprep.subr.mxu0 0.0
  %3970 = vmatpush1.msra.mxu0 0.0
  %3971 = vmatprep.subr.mxu0 0.0
  %3972 = vmatpush1.msra.mxu0 0.0
  %3973 = vmatprep.mubr.f32.mxu0 0.0
  %3974 = vmatmul.mubr.f32.gmra.mrb[0].mxu0 %v3862
  %v3975 = vpop.f32.mrb[0].mxu0
  %v3976 = vadd.f32 0.0, %v3975
  %v3977 = vpop.f32.mrb[0].mxu0
  %3978 = vmatprep.mubr.f32.mxu0 0.0
  %3979 = vmatmul.mubr.f32.gmra.mrb[0].mxu0 %v3865
  %v3980 = vpop.f32.mrb[0].mxu0
  %v3981 = vadd.f32 0.0, %v3980
  %v3982 = vpop.f32.mrb[0].mxu0
  %3983 = vmatprep.mubr.f32.mxu0 0.0
  %3984 = vmatmul.mubr.f32.gmra.mrb[0].mxu0 %v3868
  %v3985 = vpop.f32.mrb[0].mxu0
  %v3986 = vadd.f32 0.0, %v3985
  %v3987 = vpop.f32.mrb[0].mxu0
  %3988 = vmatprep.mubr.f32.mxu0 0.0
  %3989 = vmatmul.mubr.f32.gmra.mrb[0].mxu0 %v3871
  %v3990 = vpop.f32.mrb[0].mxu0
  %v3991 = vadd.f32 0.0, %v3990
  %v3992 = vpop.f32.mrb[0].mxu0
  %3993 = vmatprep.mubr.f32.mxu0 0.0
  %3994 = vmatmul.mubr.f32.gmra.mrb[0].mxu0 %v3874
  %v3995 = vpop.f32.mrb[0].mxu0
  %v3996 = vadd.f32 0.0, %v3995
  %v3997 = vpop.f32.mrb[0].mxu0
  %3998 = vmatprep.mubr.f32.mxu0 0.0
  %3999 = vmatmul.mubr.f32.gmra.mrb[0].mxu0 %v3877
  %v4000 = vpop.f32.mrb[0].mxu0
  %v4001 = vadd.f32 0.0, %v4000
  %v4002 = vpop.f32.mrb[0].mxu0
  %4003 = vmatprep.mubr.f32.mxu0 0.0
  %4004 = vmatmul.mubr.f32.gmra.mrb[0].mxu0 %v3880
  %v4005 = vpop.f32.mrb[0].mxu0
  %v4006 = vadd.f32 0.0, %v4005
  %v4007 = vpop.f32.mrb[0].mxu0
  %4008 = vmatprep.mubr.f32.mxu0 0.0
  %4009 = vmatmul.mubr.f32.gmra.mrb[0].mxu0 %v3883
  %v4010 = vpop.f32.mrb[0].mxu0
  %v4011 = vadd.f32 0.0, %v4010
  %v4012 = vpop.f32.mrb[0].mxu0
  %4013 = vmatprep.mubr.f32.mxu0 0.0
  %4014 = vmatmul.mubr.f32.gmra.mrb[0].mxu0 %v3886
  %v4015 = vpop.f32.mrb[0].mxu0
  %v4016 = vadd.f32 0.0, %v4015
  %v4017 = vpop.f32.mrb[0].mxu0
  %4018 = vmatprep.mubr.f32.mxu0 0.0
  %4019 = vmatmul.mubr.f32.gmra.mrb[0].mxu0 %v3889
  %v4020 = vpop.f32.mrb[0].mxu0
  %v4021 = vadd.f32 0.0, %v4020
  %v4022 = vpop.f32.mrb[0].mxu0
  %4023 = vmatprep.mubr.f32.mxu0 0.0
  %4024 = vmatmul.mubr.f32.gmra.mrb[0].mxu0 %v3892
  %v4025 = vpop.f32.mrb[0].mxu0
  %v4026 = vadd.f32 0.0, %v4025
  %v4027 = vpop.f32.mrb[0].mxu0
  %4028 = vmatprep.mubr.f32.mxu0 0.0
  %4029 = vmatmul.mubr.f32.gmra.mrb[0].mxu0 %v3895
  %v4030 = vpop.f32.mrb[0].mxu0
  %v4031 = vadd.f32 0.0, %v4030
  %v4032 = vpop.f32.mrb[0].mxu0
  %4033 = vmatprep.mubr.f32.mxu0 0.0
  %4034 = vmatmul.mubr.f32.gmra.mrb[0].mxu0 %v3898
  %v4035 = vpop.f32.mrb[0].mxu0
  %v4036 = vadd.f32 0.0, %v4035
  %v4037 = vpop.f32.mrb[0].mxu0
  %4038 = vmatprep.mubr.f32.mxu0 0.0
  %4039 = vmatmul.mubr.f32.gmra.mrb[0].mxu0 %v3901
  %v4040 = vpop.f32.mrb[0].mxu0
  %v4041 = vadd.f32 0.0, %v4040
  %v4042 = vpop.f32.mrb[0].mxu0
  %4043 = vmatprep.mubr.f32.mxu0 0.0
  %4044 = vmatmul.mubr.f32.gmra.mrb[0].mxu0 %v3904
  %v4045 = vpop.f32.mrb[0].mxu0
  %v4046 = vadd.f32 0.0, %v4045
  %v4047 = vpop.f32.mrb[0].mxu0
  %4048 = vmatprep.mubr.f32.mxu0 0.0
  %4049 = vmatmul.mubr.f32.gmra.mrb[0].mxu0 %v3907
  %v4050 = vpop.f32.mrb[0].mxu0
  %v4051 = vadd.f32 0.0, %v4050
  %v4052 = vpop.f32.mrb[0].mxu0
  %4053 = vdwg.mxu0
  %v4055 = vsel %vm466, %v3821, 0
  %v4058 = vsel %vm466, %v3822, 0
  %v4061 = vsel %vm466, %v3823, 0
  %v4064 = vsel %vm466, %v3824, 0
  %v4067 = vsel %vm466, %v3825, 0
  %v4070 = vsel %vm466, %v3826, 0
  %v4073 = vsel %vm466, %v3827, 0
  %v4076 = vsel %vm466, %v3828, 0
  %v4079 = vsel %vm466, %v3829, 0
  %v4082 = vsel %vm466, %v3830, 0
  %v4085 = vsel %vm466, %v3831, 0
  %v4088 = vsel %vm466, %v3832, 0
  %v4091 = vsel %vm466, %v3833, 0
  %v4094 = vsel %vm466, %v3834, 0
  %v4097 = vsel %vm466, %v3835, 0
  %v4100 = vsel %vm466, %v3836, 0
  %4102 = vmatprep.subr.mxu0 0.0
  %4103 = vmatpush1.msra.mxu0 %v3853
  %4104 = vmatprep.subr.mxu0 0.0
  %4105 = vmatpush1.msra.mxu0 %v3854
  %4106 = vmatprep.subr.mxu0 0.0
  %4107 = vmatpush1.msra.mxu0 %v3855
  %4108 = vmatprep.subr.mxu0 0.0
  %4109 = vmatpush1.msra.mxu0 %v3856
  %4110 = vmatprep.subr.mxu0 0.0
  %4111 = vmatpush1.msra.mxu0 0.0
  %4112 = vmatprep.subr.mxu0 0.0
  %4113 = vmatpush1.msra.mxu0 0.0
  %4114 = vmatprep.subr.mxu0 0.0
  %4115 = vmatpush1.msra.mxu0 0.0
  %4116 = vmatprep.subr.mxu0 0.0
  %4117 = vmatpush1.msra.mxu0 0.0
  %4118 = vmatprep.subr.mxu0 0.0
  %4119 = vmatpush1.msra.mxu0 0.0
  %4120 = vmatprep.subr.mxu0 0.0
  %4121 = vmatpush1.msra.mxu0 0.0
  %4122 = vmatprep.subr.mxu0 0.0
  %4123 = vmatpush1.msra.mxu0 0.0
  %4124 = vmatprep.subr.mxu0 0.0
  %4125 = vmatpush1.msra.mxu0 0.0
  %4126 = vmatprep.subr.mxu0 0.0
  %4127 = vmatpush1.msra.mxu0 0.0
  %4128 = vmatprep.subr.mxu0 0.0
  %4129 = vmatpush1.msra.mxu0 0.0
  %4130 = vmatprep.subr.mxu0 0.0
  %4131 = vmatpush1.msra.mxu0 0.0
  %4132 = vmatprep.subr.mxu0 0.0
  %4133 = vmatpush1.msra.mxu0 0.0
  %4134 = vmatprep.subr.mxu0 0.0
  %4135 = vmatpush1.msra.mxu0 0.0
  %4136 = vmatprep.subr.mxu0 0.0
  %4137 = vmatpush1.msra.mxu0 0.0
  %4138 = vmatprep.subr.mxu0 0.0
  %4139 = vmatpush1.msra.mxu0 0.0
  %4140 = vmatprep.subr.mxu0 0.0
  %4141 = vmatpush1.msra.mxu0 0.0
  %4142 = vmatprep.subr.mxu0 0.0
  %4143 = vmatpush1.msra.mxu0 0.0
  %4144 = vmatprep.subr.mxu0 0.0
  %4145 = vmatpush1.msra.mxu0 0.0
  %4146 = vmatprep.subr.mxu0 0.0
  %4147 = vmatpush1.msra.mxu0 0.0
  %4148 = vmatprep.subr.mxu0 0.0
  %4149 = vmatpush1.msra.mxu0 0.0
  %4150 = vmatprep.subr.mxu0 0.0
  %4151 = vmatpush1.msra.mxu0 0.0
  %4152 = vmatprep.subr.mxu0 0.0
  %4153 = vmatpush1.msra.mxu0 0.0
  %4154 = vmatprep.subr.mxu0 0.0
  %4155 = vmatpush1.msra.mxu0 0.0
  %4156 = vmatprep.subr.mxu0 0.0
  %4157 = vmatpush1.msra.mxu0 0.0
  %4158 = vmatprep.subr.mxu0 0.0
  %4159 = vmatpush1.msra.mxu0 0.0
  %4160 = vmatprep.subr.mxu0 0.0
  %4161 = vmatpush1.msra.mxu0 0.0
  %4162 = vmatprep.subr.mxu0 0.0
  %4163 = vmatpush1.msra.mxu0 0.0
  %4164 = vmatprep.subr.mxu0 0.0
  %4165 = vmatpush1.msra.mxu0 0.0
  %4166 = vmatprep.mubr.f32.mxu0 0.0
  %4167 = vmatmul.mubr.f32.gmra.mrb[0].mxu0 %v4055
  %v4168 = vpop.f32.mrb[0].mxu0
  %v4169 = vadd.f32 %v3976, %v4168
  %v4170 = vpop.f32.mrb[0].mxu0
  %4171 = vmatprep.mubr.f32.mxu0 0.0
  %4172 = vmatmul.mubr.f32.gmra.mrb[0].mxu0 %v4058
  %v4173 = vpop.f32.mrb[0].mxu0
  %v4174 = vadd.f32 %v3981, %v4173
  %v4175 = vpop.f32.mrb[0].mxu0
  %4176 = vmatprep.mubr.f32.mxu0 0.0
  %4177 = vmatmul.mubr.f32.gmra.mrb[0].mxu0 %v4061
  %v4178 = vpop.f32.mrb[0].mxu0
  %v4179 = vadd.f32 %v3986, %v4178
  %v4180 = vpop.f32.mrb[0].mxu0
  %4181 = vmatprep.mubr.f32.mxu0 0.0
  %4182 = vmatmul.mubr.f32.gmra.mrb[0].mxu0 %v4064
  %v4183 = vpop.f32.mrb[0].mxu0
  %v4184 = vadd.f32 %v3991, %v4183
  %v4185 = vpop.f32.mrb[0].mxu0
  %4186 = vmatprep.mubr.f32.mxu0 0.0
  %4187 = vmatmul.mubr.f32.gmra.mrb[0].mxu0 %v4067
  %v4188 = vpop.f32.mrb[0].mxu0
  %v4189 = vadd.f32 %v3996, %v4188
  %v4190 = vpop.f32.mrb[0].mxu0
  %4191 = vmatprep.mubr.f32.mxu0 0.0
  %4192 = vmatmul.mubr.f32.gmra.mrb[0].mxu0 %v4070
  %v4193 = vpop.f32.mrb[0].mxu0
  %v4194 = vadd.f32 %v4001, %v4193
  %v4195 = vpop.f32.mrb[0].mxu0
  %4196 = vmatprep.mubr.f32.mxu0 0.0
  %4197 = vmatmul.mubr.f32.gmra.mrb[0].mxu0 %v4073
  %v4198 = vpop.f32.mrb[0].mxu0
  %v4199 = vadd.f32 %v4006, %v4198
  %v4200 = vpop.f32.mrb[0].mxu0
  %4201 = vmatprep.mubr.f32.mxu0 0.0
  %4202 = vmatmul.mubr.f32.gmra.mrb[0].mxu0 %v4076
  %v4203 = vpop.f32.mrb[0].mxu0
  %v4204 = vadd.f32 %v4011, %v4203
  %v4205 = vpop.f32.mrb[0].mxu0
  %4206 = vmatprep.mubr.f32.mxu0 0.0
  %4207 = vmatmul.mubr.f32.gmra.mrb[0].mxu0 %v4079
  %v4208 = vpop.f32.mrb[0].mxu0
  %v4209 = vadd.f32 %v4016, %v4208
  %v4210 = vpop.f32.mrb[0].mxu0
  %4211 = vmatprep.mubr.f32.mxu0 0.0
  %4212 = vmatmul.mubr.f32.gmra.mrb[0].mxu0 %v4082
  %v4213 = vpop.f32.mrb[0].mxu0
  %v4214 = vadd.f32 %v4021, %v4213
  %v4215 = vpop.f32.mrb[0].mxu0
  %4216 = vmatprep.mubr.f32.mxu0 0.0
  %4217 = vmatmul.mubr.f32.gmra.mrb[0].mxu0 %v4085
  %v4218 = vpop.f32.mrb[0].mxu0
  %v4219 = vadd.f32 %v4026, %v4218
  %v4220 = vpop.f32.mrb[0].mxu0
  %4221 = vmatprep.mubr.f32.mxu0 0.0
  %4222 = vmatmul.mubr.f32.gmra.mrb[0].mxu0 %v4088
  %v4223 = vpop.f32.mrb[0].mxu0
  %v4224 = vadd.f32 %v4031, %v4223
  %v4225 = vpop.f32.mrb[0].mxu0
  %4226 = vmatprep.mubr.f32.mxu0 0.0
  %4227 = vmatmul.mubr.f32.gmra.mrb[0].mxu0 %v4091
  %v4228 = vpop.f32.mrb[0].mxu0
  %v4229 = vadd.f32 %v4036, %v4228
  %v4230 = vpop.f32.mrb[0].mxu0
  %4231 = vmatprep.mubr.f32.mxu0 0.0
  %4232 = vmatmul.mubr.f32.gmra.mrb[0].mxu0 %v4094
  %v4233 = vpop.f32.mrb[0].mxu0
  %v4234 = vadd.f32 %v4041, %v4233
  %v4235 = vpop.f32.mrb[0].mxu0
  %4236 = vmatprep.mubr.f32.mxu0 0.0
  %4237 = vmatmul.mubr.f32.gmra.mrb[0].mxu0 %v4097
  %v4238 = vpop.f32.mrb[0].mxu0
  %v4239 = vadd.f32 %v4046, %v4238
  %v4240 = vpop.f32.mrb[0].mxu0
  %4241 = vmatprep.mubr.f32.mxu0 0.0
  %4242 = vmatmul.mubr.f32.gmra.mrb[0].mxu0 %v4100
  %v4243 = vpop.f32.mrb[0].mxu0
  %v4244 = vadd.f32 %v4051, %v4243
  %v4245 = vpop.f32.mrb[0].mxu0
  %4246 = vdwg.mxu0
  %v4247 = vld [vmem:[%s9] sm:$0x1]
  %v4249 = vlaneseq
  %v4250 = vshrl.u32 %v4249, 7
  %v4251 = vsub.s32 0, %v4250
  %v4252 = vrot.slane %v4247, %v4251
  %v4254 = vadd.f32 %v4169, %v4252
  %v4255 = vadd.f32 %v4174, %v4252
  %v4256 = vadd.f32 %v4179, %v4252
  %v4257 = vadd.f32 %v4184, %v4252
  %v4258 = vadd.f32 %v4189, %v4252
  %v4259 = vadd.f32 %v4194, %v4252
  %v4260 = vadd.f32 %v4199, %v4252
  %v4261 = vadd.f32 %v4204, %v4252
  %v4262 = vadd.f32 %v4209, %v4252
  %v4263 = vadd.f32 %v4214, %v4252
  %v4264 = vadd.f32 %v4219, %v4252
  %v4265 = vadd.f32 %v4224, %v4252
  %v4266 = vadd.f32 %v4229, %v4252
  %v4267 = vadd.f32 %v4234, %v4252
  %v4268 = vadd.f32 %v4239, %v4252
  %v4269 = vadd.f32 %v4244, %v4252
  %v4270 = vld [vmem:[%s10] sm:$0xf]
  %v4271 = vld [vmem:[%s11] sm:$0x1]
  %v4273 = vlaneseq
  %v4274 = vshrl.u32 %v4273, 7
  %v4275 = vsub.s32 0, %v4274
  %v4276 = vrot.slane %v4271, %v4275
  %v4279 = vsel %vm128, %v4270, 0
  %4281 = vmatprep.subr.mxu0 0.0
  %4282 = vmatpush1.msra.mxu0 %v4279
  %4283 = vmatprep.subr.mxu0 0.0
  %4284 = vmatpush1.msra.mxu0 0.0
  %4285 = vmatprep.subr.mxu0 0.0
  %4286 = vmatpush1.msra.mxu0 0.0
  %4287 = vmatprep.subr.mxu0 0.0
  %4288 = vmatpush1.msra.mxu0 0.0
  %4289 = vmatprep.subr.mxu0 0.0
  %4290 = vmatpush1.msra.mxu0 0.0
  %4291 = vmatprep.subr.mxu0 0.0
  %4292 = vmatpush1.msra.mxu0 0.0
  %4293 = vmatprep.subr.mxu0 0.0
  %4294 = vmatpush1.msra.mxu0 0.0
  %4295 = vmatprep.subr.mxu0 0.0
  %4296 = vmatpush1.msra.mxu0 0.0
  %4297 = vmatprep.subr.mxu0 0.0
  %4298 = vmatpush1.msra.mxu0 0.0
  %4299 = vmatprep.subr.mxu0 0.0
  %4300 = vmatpush1.msra.mxu0 0.0
  %4301 = vmatprep.subr.mxu0 0.0
  %4302 = vmatpush1.msra.mxu0 0.0
  %4303 = vmatprep.subr.mxu0 0.0
  %4304 = vmatpush1.msra.mxu0 0.0
  %4305 = vmatprep.subr.mxu0 0.0
  %4306 = vmatpush1.msra.mxu0 0.0
  %4307 = vmatprep.subr.mxu0 0.0
  %4308 = vmatpush1.msra.mxu0 0.0
  %4309 = vmatprep.subr.mxu0 0.0
  %4310 = vmatpush1.msra.mxu0 0.0
  %4311 = vmatprep.subr.mxu0 0.0
  %4312 = vmatpush1.msra.mxu0 0.0
  %4313 = vmatprep.subr.mxu0 0.0
  %4314 = vmatpush1.msra.mxu0 0.0
  %4315 = vmatprep.subr.mxu0 0.0
  %4316 = vmatpush1.msra.mxu0 0.0
  %4317 = vmatprep.subr.mxu0 0.0
  %4318 = vmatpush1.msra.mxu0 0.0
  %4319 = vmatprep.subr.mxu0 0.0
  %4320 = vmatpush1.msra.mxu0 0.0
  %4321 = vmatprep.subr.mxu0 0.0
  %4322 = vmatpush1.msra.mxu0 0.0
  %4323 = vmatprep.subr.mxu0 0.0
  %4324 = vmatpush1.msra.mxu0 0.0
  %4325 = vmatprep.subr.mxu0 0.0
  %4326 = vmatpush1.msra.mxu0 0.0
  %4327 = vmatprep.subr.mxu0 0.0
  %4328 = vmatpush1.msra.mxu0 0.0
  %4329 = vmatprep.subr.mxu0 0.0
  %4330 = vmatpush1.msra.mxu0 0.0
  %4331 = vmatprep.subr.mxu0 0.0
  %4332 = vmatpush1.msra.mxu0 0.0
  %4333 = vmatprep.subr.mxu0 0.0
  %4334 = vmatpush1.msra.mxu0 0.0
  %4335 = vmatprep.subr.mxu0 0.0
  %4336 = vmatpush1.msra.mxu0 0.0
  %4337 = vmatprep.subr.mxu0 0.0
  %4338 = vmatpush1.msra.mxu0 0.0
  %4339 = vmatprep.subr.mxu0 0.0
  %4340 = vmatpush1.msra.mxu0 0.0
  %4341 = vmatprep.subr.mxu0 0.0
  %4342 = vmatpush1.msra.mxu0 0.0
  %4343 = vmatprep.subr.mxu0 0.0
  %4344 = vmatpush1.msra.mxu0 0.0
  %4345 = vmatprep.mubr.f32.mxu0 0.0
  %4346 = vmatmul.mubr.f32.gmra.mrb[0].mxu0 %v81
  %v4347 = vpop.f32.mrb[0].mxu0
  %v4348 = vadd.f32 %v4276, %v4347
  %v4349 = vpop.f32.mrb[0].mxu0
  %4350 = vmatprep.mubr.f32.mxu0 0.0
  %4351 = vmatmul.mubr.f32.gmra.mrb[0].mxu0 %v84
  %v4352 = vpop.f32.mrb[0].mxu0
  %v4353 = vadd.f32 %v4276, %v4352
  %v4354 = vpop.f32.mrb[0].mxu0
  %4355 = vmatprep.mubr.f32.mxu0 0.0
  %4356 = vmatmul.mubr.f32.gmra.mrb[0].mxu0 %v87
  %v4357 = vpop.f32.mrb[0].mxu0
  %v4358 = vadd.f32 %v4276, %v4357
  %v4359 = vpop.f32.mrb[0].mxu0
  %4360 = vmatprep.mubr.f32.mxu0 0.0
  %4361 = vmatmul.mubr.f32.gmra.mrb[0].mxu0 %v90
  %v4362 = vpop.f32.mrb[0].mxu0
  %v4363 = vadd.f32 %v4276, %v4362
  %v4364 = vpop.f32.mrb[0].mxu0
  %4365 = vmatprep.mubr.f32.mxu0 0.0
  %4366 = vmatmul.mubr.f32.gmra.mrb[0].mxu0 %v93
  %v4367 = vpop.f32.mrb[0].mxu0
  %v4368 = vadd.f32 %v4276, %v4367
  %v4369 = vpop.f32.mrb[0].mxu0
  %4370 = vmatprep.mubr.f32.mxu0 0.0
  %4371 = vmatmul.mubr.f32.gmra.mrb[0].mxu0 %v96
  %v4372 = vpop.f32.mrb[0].mxu0
  %v4373 = vadd.f32 %v4276, %v4372
  %v4374 = vpop.f32.mrb[0].mxu0
  %4375 = vmatprep.mubr.f32.mxu0 0.0
  %4376 = vmatmul.mubr.f32.gmra.mrb[0].mxu0 %v99
  %v4377 = vpop.f32.mrb[0].mxu0
  %v4378 = vadd.f32 %v4276, %v4377
  %v4379 = vpop.f32.mrb[0].mxu0
  %4380 = vmatprep.mubr.f32.mxu0 0.0
  %4381 = vmatmul.mubr.f32.gmra.mrb[0].mxu0 %v102
  %v4382 = vpop.f32.mrb[0].mxu0
  %v4383 = vadd.f32 %v4276, %v4382
  %v4384 = vpop.f32.mrb[0].mxu0
  %4385 = vmatprep.mubr.f32.mxu0 0.0
  %4386 = vmatmul.mubr.f32.gmra.mrb[0].mxu0 %v105
  %v4387 = vpop.f32.mrb[0].mxu0
  %v4388 = vadd.f32 %v4276, %v4387
  %v4389 = vpop.f32.mrb[0].mxu0
  %4390 = vmatprep.mubr.f32.mxu0 0.0
  %4391 = vmatmul.mubr.f32.gmra.mrb[0].mxu0 %v108
  %v4392 = vpop.f32.mrb[0].mxu0
  %v4393 = vadd.f32 %v4276, %v4392
  %v4394 = vpop.f32.mrb[0].mxu0
  %4395 = vmatprep.mubr.f32.mxu0 0.0
  %4396 = vmatmul.mubr.f32.gmra.mrb[0].mxu0 %v111
  %v4397 = vpop.f32.mrb[0].mxu0
  %v4398 = vadd.f32 %v4276, %v4397
  %v4399 = vpop.f32.mrb[0].mxu0
  %4400 = vmatprep.mubr.f32.mxu0 0.0
  %4401 = vmatmul.mubr.f32.gmra.mrb[0].mxu0 %v114
  %v4402 = vpop.f32.mrb[0].mxu0
  %v4403 = vadd.f32 %v4276, %v4402
  %v4404 = vpop.f32.mrb[0].mxu0
  %4405 = vmatprep.mubr.f32.mxu0 0.0
  %4406 = vmatmul.mubr.f32.gmra.mrb[0].mxu0 %v117
  %v4407 = vpop.f32.mrb[0].mxu0
  %v4408 = vadd.f32 %v4276, %v4407
  %v4409 = vpop.f32.mrb[0].mxu0
  %4410 = vmatprep.mubr.f32.mxu0 0.0
  %4411 = vmatmul.mubr.f32.gmra.mrb[0].mxu0 %v120
  %v4412 = vpop.f32.mrb[0].mxu0
  %v4413 = vadd.f32 %v4276, %v4412
  %v4414 = vpop.f32.mrb[0].mxu0
  %4415 = vmatprep.mubr.f32.mxu0 0.0
  %4416 = vmatmul.mubr.f32.gmra.mrb[0].mxu0 %v123
  %v4417 = vpop.f32.mrb[0].mxu0
  %v4418 = vadd.f32 %v4276, %v4417
  %v4419 = vpop.f32.mrb[0].mxu0
  %4420 = vmatprep.mubr.f32.mxu0 0.0
  %4421 = vmatmul.mubr.f32.gmra.mrb[0].mxu0 %v126
  %v4422 = vpop.f32.mrb[0].mxu0
  %v4423 = vadd.f32 %v4276, %v4422
  %v4424 = vpop.f32.mrb[0].mxu0
  %4425 = vdwg.mxu0
  %v4426 = vadd.f32 %v4254, %v4348
  %v4427 = vadd.f32 %v4255, %v4353
  %v4428 = vadd.f32 %v4256, %v4358
  %v4429 = vadd.f32 %v4257, %v4363
  %v4430 = vadd.f32 %v4258, %v4368
  %v4431 = vadd.f32 %v4259, %v4373
  %v4432 = vadd.f32 %v4260, %v4378
  %v4433 = vadd.f32 %v4261, %v4383
  %v4434 = vadd.f32 %v4262, %v4388
  %v4435 = vadd.f32 %v4263, %v4393
  %v4436 = vadd.f32 %v4264, %v4398
  %v4437 = vadd.f32 %v4265, %v4403
  %v4438 = vadd.f32 %v4266, %v4408
  %v4439 = vadd.f32 %v4267, %v4413
  %v4440 = vadd.f32 %v4268, %v4418
  %v4441 = vadd.f32 %v4269, %v4423
  %v4442 = vmul.f32 %v4426, 0.70710856
  %v4443 = vmul.f32 %v4427, 0.70710856
  %v4444 = vmul.f32 %v4428, 0.70710856
  %v4445 = vmul.f32 %v4429, 0.70710856
  %v4446 = vmul.f32 %v4430, 0.70710856
  %v4447 = vmul.f32 %v4431, 0.70710856
  %v4448 = vmul.f32 %v4432, 0.70710856
  %v4449 = vmul.f32 %v4433, 0.70710856
  %v4450 = vmul.f32 %v4434, 0.70710856
  %v4451 = vmul.f32 %v4435, 0.70710856
  %v4452 = vmul.f32 %v4436, 0.70710856
  %v4453 = vmul.f32 %v4437, 0.70710856
  %v4454 = vmul.f32 %v4438, 0.70710856
  %v4455 = vmul.f32 %v4439, 0.70710856
  %v4456 = vmul.f32 %v4440, 0.70710856
  %v4457 = vmul.f32 %v4441, 0.70710856
  %v4458 = vtanh.pop %v4442
  %v4459 = vtanh.pop %v4443
  %v4460 = vtanh.pop %v4444
  %v4461 = vtanh.pop %v4445
  %v4462 = vtanh.pop %v4446
  %v4463 = vtanh.pop %v4447
  %v4464 = vtanh.pop %v4448
  %v4465 = vtanh.pop %v4449
  %v4466 = vtanh.pop %v4450
  %v4467 = vtanh.pop %v4451
  %v4468 = vtanh.pop %v4452
  %v4469 = vtanh.pop %v4453
  %v4470 = vtanh.pop %v4454
  %v4471 = vtanh.pop %v4455
  %v4472 = vtanh.pop %v4456
  %v4473 = vtanh.pop %v4457
  %v4474 = vld [vmem:[%s12] sm:$0xff]
  %v4475 = vld [vmem:[%s12 + $0x8] sm:$0xff]
  %v4476 = vld [vmem:[%s12 + $0x10] sm:$0xff]
  %v4477 = vld [vmem:[%s12 + $0x18] sm:$0xff]
  %v4478 = vld [vmem:[%s13] sm:$0x1]
  %v4480 = vlaneseq
  %v4481 = vshrl.u32 %v4480, 7
  %v4482 = vsub.s32 0, %v4481
  %v4483 = vrot.slane %v4478, %v4482
  %v4486 = vsel %vm466, %v4458, 0
  %v4489 = vsel %vm466, %v4459, 0
  %v4492 = vsel %vm466, %v4460, 0
  %v4495 = vsel %vm466, %v4461, 0
  %v4498 = vsel %vm466, %v4462, 0
  %v4501 = vsel %vm466, %v4463, 0
  %v4504 = vsel %vm466, %v4464, 0
  %v4507 = vsel %vm466, %v4465, 0
  %v4510 = vsel %vm466, %v4466, 0
  %v4513 = vsel %vm466, %v4467, 0
  %v4516 = vsel %vm466, %v4468, 0
  %v4519 = vsel %vm466, %v4469, 0
  %v4522 = vsel %vm466, %v4470, 0
  %v4525 = vsel %vm466, %v4471, 0
  %v4528 = vsel %vm466, %v4472, 0
  %v4531 = vsel %vm466, %v4473, 0
  %4533 = vmatprep.subr.mxu0 0.0
  %4534 = vmatpush1.msra.mxu0 %v4474
  %4535 = vmatprep.subr.mxu0 0.0
  %4536 = vmatpush1.msra.mxu0 %v4475
  %4537 = vmatprep.subr.mxu0 0.0
  %4538 = vmatpush1.msra.mxu0 %v4476
  %4539 = vmatprep.subr.mxu0 0.0
  %4540 = vmatpush1.msra.mxu0 %v4477
  %4541 = vmatprep.subr.mxu0 0.0
  %4542 = vmatpush1.msra.mxu0 0.0
  %4543 = vmatprep.subr.mxu0 0.0
  %4544 = vmatpush1.msra.mxu0 0.0
  %4545 = vmatprep.subr.mxu0 0.0
  %4546 = vmatpush1.msra.mxu0 0.0
  %4547 = vmatprep.subr.mxu0 0.0
  %4548 = vmatpush1.msra.mxu0 0.0
  %4549 = vmatprep.subr.mxu0 0.0
  %4550 = vmatpush1.msra.mxu0 0.0
  %4551 = vmatprep.subr.mxu0 0.0
  %4552 = vmatpush1.msra.mxu0 0.0
  %4553 = vmatprep.subr.mxu0 0.0
  %4554 = vmatpush1.msra.mxu0 0.0
  %4555 = vmatprep.subr.mxu0 0.0
  %4556 = vmatpush1.msra.mxu0 0.0
  %4557 = vmatprep.subr.mxu0 0.0
  %4558 = vmatpush1.msra.mxu0 0.0
  %4559 = vmatprep.subr.mxu0 0.0
  %4560 = vmatpush1.msra.mxu0 0.0
  %4561 = vmatprep.subr.mxu0 0.0
  %4562 = vmatpush1.msra.mxu0 0.0
  %4563 = vmatprep.subr.mxu0 0.0
  %4564 = vmatpush1.msra.mxu0 0.0
  %4565 = vmatprep.subr.mxu0 0.0
  %4566 = vmatpush1.msra.mxu0 0.0
  %4567 = vmatprep.subr.mxu0 0.0
  %4568 = vmatpush1.msra.mxu0 0.0
  %4569 = vmatprep.subr.mxu0 0.0
  %4570 = vmatpush1.msra.mxu0 0.0
  %4571 = vmatprep.subr.mxu0 0.0
  %4572 = vmatpush1.msra.mxu0 0.0
  %4573 = vmatprep.subr.mxu0 0.0
  %4574 = vmatpush1.msra.mxu0 0.0
  %4575 = vmatprep.subr.mxu0 0.0
  %4576 = vmatpush1.msra.mxu0 0.0
  %4577 = vmatprep.subr.mxu0 0.0
  %4578 = vmatpush1.msra.mxu0 0.0
  %4579 = vmatprep.subr.mxu0 0.0
  %4580 = vmatpush1.msra.mxu0 0.0
  %4581 = vmatprep.subr.mxu0 0.0
  %4582 = vmatpush1.msra.mxu0 0.0
  %4583 = vmatprep.subr.mxu0 0.0
  %4584 = vmatpush1.msra.mxu0 0.0
  %4585 = vmatprep.subr.mxu0 0.0
  %4586 = vmatpush1.msra.mxu0 0.0
  %4587 = vmatprep.subr.mxu0 0.0
  %4588 = vmatpush1.msra.mxu0 0.0
  %4589 = vmatprep.subr.mxu0 0.0
  %4590 = vmatpush1.msra.mxu0 0.0
  %4591 = vmatprep.subr.mxu0 0.0
  %4592 = vmatpush1.msra.mxu0 0.0
  %4593 = vmatprep.subr.mxu0 0.0
  %4594 = vmatpush1.msra.mxu0 0.0
  %4595 = vmatprep.subr.mxu0 0.0
  %4596 = vmatpush1.msra.mxu0 0.0
  %4597 = vmatprep.mubr.f32.mxu0 0.0
  %4598 = vmatmul.mubr.f32.gmra.mrb[0].mxu0 %v4486
  %v4599 = vpop.f32.mrb[0].mxu0
  %v4600 = vadd.f32 %v4483, %v4599
  %v4601 = vpop.f32.mrb[0].mxu0
  %4602 = vmatprep.mubr.f32.mxu0 0.0
  %4603 = vmatmul.mubr.f32.gmra.mrb[0].mxu0 %v4489
  %v4604 = vpop.f32.mrb[0].mxu0
  %v4605 = vadd.f32 %v4483, %v4604
  %v4606 = vpop.f32.mrb[0].mxu0
  %4607 = vmatprep.mubr.f32.mxu0 0.0
  %4608 = vmatmul.mubr.f32.gmra.mrb[0].mxu0 %v4492
  %v4609 = vpop.f32.mrb[0].mxu0
  %v4610 = vadd.f32 %v4483, %v4609
  %v4611 = vpop.f32.mrb[0].mxu0
  %4612 = vmatprep.mubr.f32.mxu0 0.0
  %4613 = vmatmul.mubr.f32.gmra.mrb[0].mxu0 %v4495
  %v4614 = vpop.f32.mrb[0].mxu0
  %v4615 = vadd.f32 %v4483, %v4614
  %v4616 = vpop.f32.mrb[0].mxu0
  %4617 = vmatprep.mubr.f32.mxu0 0.0
  %4618 = vmatmul.mubr.f32.gmra.mrb[0].mxu0 %v4498
  %v4619 = vpop.f32.mrb[0].mxu0
  %v4620 = vadd.f32 %v4483, %v4619
  %v4621 = vpop.f32.mrb[0].mxu0
  %4622 = vmatprep.mubr.f32.mxu0 0.0
  %4623 = vmatmul.mubr.f32.gmra.mrb[0].mxu0 %v4501
  %v4624 = vpop.f32.mrb[0].mxu0
  %v4625 = vadd.f32 %v4483, %v4624
  %v4626 = vpop.f32.mrb[0].mxu0
  %4627 = vmatprep.mubr.f32.mxu0 0.0
  %4628 = vmatmul.mubr.f32.gmra.mrb[0].mxu0 %v4504
  %v4629 = vpop.f32.mrb[0].mxu0
  %v4630 = vadd.f32 %v4483, %v4629
  %v4631 = vpop.f32.mrb[0].mxu0
  %4632 = vmatprep.mubr.f32.mxu0 0.0
  %4633 = vmatmul.mubr.f32.gmra.mrb[0].mxu0 %v4507
  %v4634 = vpop.f32.mrb[0].mxu0
  %v4635 = vadd.f32 %v4483, %v4634
  %v4636 = vpop.f32.mrb[0].mxu0
  %4637 = vmatprep.mubr.f32.mxu0 0.0
  %4638 = vmatmul.mubr.f32.gmra.mrb[0].mxu0 %v4510
  %v4639 = vpop.f32.mrb[0].mxu0
  %v4640 = vadd.f32 %v4483, %v4639
  %v4641 = vpop.f32.mrb[0].mxu0
  %4642 = vmatprep.mubr.f32.mxu0 0.0
  %4643 = vmatmul.mubr.f32.gmra.mrb[0].mxu0 %v4513
  %v4644 = vpop.f32.mrb[0].mxu0
  %v4645 = vadd.f32 %v4483, %v4644
  %v4646 = vpop.f32.mrb[0].mxu0
  %4647 = vmatprep.mubr.f32.mxu0 0.0
  %4648 = vmatmul.mubr.f32.gmra.mrb[0].mxu0 %v4516
  %v4649 = vpop.f32.mrb[0].mxu0
  %v4650 = vadd.f32 %v4483, %v4649
  %v4651 = vpop.f32.mrb[0].mxu0
  %4652 = vmatprep.mubr.f32.mxu0 0.0
  %4653 = vmatmul.mubr.f32.gmra.mrb[0].mxu0 %v4519
  %v4654 = vpop.f32.mrb[0].mxu0
  %v4655 = vadd.f32 %v4483, %v4654
  %v4656 = vpop.f32.mrb[0].mxu0
  %4657 = vmatprep.mubr.f32.mxu0 0.0
  %4658 = vmatmul.mubr.f32.gmra.mrb[0].mxu0 %v4522
  %v4659 = vpop.f32.mrb[0].mxu0
  %v4660 = vadd.f32 %v4483, %v4659
  %v4661 = vpop.f32.mrb[0].mxu0
  %4662 = vmatprep.mubr.f32.mxu0 0.0
  %4663 = vmatmul.mubr.f32.gmra.mrb[0].mxu0 %v4525
  %v4664 = vpop.f32.mrb[0].mxu0
  %v4665 = vadd.f32 %v4483, %v4664
  %v4666 = vpop.f32.mrb[0].mxu0
  %4667 = vmatprep.mubr.f32.mxu0 0.0
  %4668 = vmatmul.mubr.f32.gmra.mrb[0].mxu0 %v4528
  %v4669 = vpop.f32.mrb[0].mxu0
  %v4670 = vadd.f32 %v4483, %v4669
  %v4671 = vpop.f32.mrb[0].mxu0
  %4672 = vmatprep.mubr.f32.mxu0 0.0
  %4673 = vmatmul.mubr.f32.gmra.mrb[0].mxu0 %v4531
  %v4674 = vpop.f32.mrb[0].mxu0
  %v4675 = vadd.f32 %v4483, %v4674
  %v4676 = vpop.f32.mrb[0].mxu0
  %4677 = vdwg.mxu0
  %4678 = vst.msk [vmem:[%s14] sm:$0xff] %vm79, %v4600
  %4679 = vst.msk [vmem:[%s14 + $0x8] sm:$0xff] %vm79, %v4605
  %4680 = vst.msk [vmem:[%s14 + $0x10] sm:$0xff] %vm79, %v4610
  %4681 = vst.msk [vmem:[%s14 + $0x18] sm:$0xff] %vm79, %v4615
  %4682 = vst.msk [vmem:[%s14 + $0x20] sm:$0xff] %vm79, %v4620
  %4683 = vst.msk [vmem:[%s14 + $0x28] sm:$0xff] %vm79, %v4625
  %4684 = vst.msk [vmem:[%s14 + $0x30] sm:$0xff] %vm79, %v4630
  %4685 = vst.msk [vmem:[%s14 + $0x38] sm:$0xff] %vm79, %v4635
  %4686 = vst.msk [vmem:[%s14 + $0x40] sm:$0xff] %vm79, %v4640
  %4687 = vst.msk [vmem:[%s14 + $0x48] sm:$0xff] %vm79, %v4645
  %4688 = vst.msk [vmem:[%s14 + $0x50] sm:$0xff] %vm79, %v4650
  %4689 = vst.msk [vmem:[%s14 + $0x58] sm:$0xff] %vm79, %v4655
  %4690 = vst.msk [vmem:[%s14 + $0x60] sm:$0xff] %vm79, %v4660
  %4691 = vst.msk [vmem:[%s14 + $0x68] sm:$0xff] %vm79, %v4665
  %4692 = vst.msk [vmem:[%s14 + $0x70] sm:$0xff] %vm79, %v4670
  %4693 = vst.msk [vmem:[%s14 + $0x78] sm:$0xff] %vm79, %v4675
  // Predicated region
  $region58: #{tpu_custom_call.1} parent=0 // pred_check
    _
  $region59: #{tpu_custom_call.1} parent=0 // pred_check_branch
    %4695 = sbr.rel (0) target = $region61
  $region60: #{tpu_custom_call.1} parent=0 // pred_region
    _
  $region61: #{tpu_custom_call.1} parent=0 // pred_fallthru
    _
  // Predicated region
  $region62: #{tpu_custom_call.1} parent=0 // pred_check
    _
  $region63: #{tpu_custom_call.1} parent=0 // pred_check_branch
    %4697 = sbr.rel (0) target = $region65
  $region64: #{tpu_custom_call.1} parent=0 // pred_region
    _
  $region65: #{tpu_custom_call.1} parent=0 // pred_fallthru
    _

</llo_original>
